<compile_context>
chip_gen: v7x
topology: tpu7x:2x2x1
jax: 0.10.0
libtpu: 0.0.40
codegen_flags: <defaults>
</compile_context>

<pallas_src>
import math
import numpy as np
import jax
import jax.numpy as jnp
from jax.experimental import pallas as pl
from jax.experimental.pallas import tpu as pltpu

D = 768           # hidden size
H = 12            # attention heads
HD = D // H       # head dim = 64
FF = 3072         # MLP hidden size
EPS = 1e-6        # LayerNorm eps
VMEM_LIMIT = 48 << 20   # <= v7x's 64 MiB per TC; above the default scoped limits


def _layernorm(x, g, b):
    mu = jnp.mean(x, axis=-1, keepdims=True)
    var = jnp.mean((x - mu) ** 2, axis=-1, keepdims=True)
    return (x - mu) * jax.lax.rsqrt(var + EPS) * g + b


# --------------------------------------------------------------------------
# Kernel 1: x -> LayerNorm -> fused-QKV MHSA -> out proj -> +x
# Grid: (B // Bt,) -- Bt batch elements per step, "parallel" (megacore on v7x).
# --------------------------------------------------------------------------
def attn_block_kernel(x_ref, g_ref, b_ref, wqkv_ref, bqkv_ref, wo_ref, bo_ref, o_ref):
    Bt, S, _ = x_ref.shape
    N = Bt * S
    x = x_ref[...].reshape(N, D).astype(jnp.float32)           # (N, D)
    xn = _layernorm(x, g_ref[...], b_ref[...])                  # (N, D) f32

    # Fused Q/K/V projection: single MXU pass over (D, 3D), bf16 inputs, f32 accumulate.
    qkv = jnp.dot(xn.astype(jnp.bfloat16), wqkv_ref[...],
                  preferred_element_type=jnp.float32) + bqkv_ref[...]     # (N, 3D) f32

    scale = 1.0 / math.sqrt(HD)   # 0.125 (exact power of 2) -> fold into q before bf16 cast

    def split_heads(t):           # (N, D) f32 -> (Bt*H, S, HD) bf16, heads as batch dim
        return jnp.transpose(t.reshape(Bt, S, H, HD), (0, 2, 1, 3)
                             ).reshape(Bt * H, S, HD).astype(jnp.bfloat16)

    qh = split_heads(qkv[:, 0 * D:1 * D] * scale)
    kh = split_heads(qkv[:, 1 * D:2 * D])
    vh = split_heads(qkv[:, 2 * D:3 * D])

    # Batched per-(batch, head) score matmul, softmax in f32 (exact division).
    s = jnp.einsum('bqd,bkd->bqk', qh, kh, preferred_element_type=jnp.float32)
    s = s - jnp.max(s, axis=-1, keepdims=True)
    e = jnp.exp(s)
    p = e / jnp.sum(e, axis=-1, keepdims=True)

    ctx = jnp.einsum('bqk,bkd->bqd', p.astype(jnp.bfloat16), vh,
                     preferred_element_type=jnp.float32)                   # (Bt*H, S, HD)
    ctx = jnp.transpose(ctx.reshape(Bt, H, S, HD), (0, 2, 1, 3)).reshape(N, D)

    attn_out = jnp.dot(ctx.astype(jnp.bfloat16), wo_ref[...],
                       preferred_element_type=jnp.float32) + bo_ref[...]
    o_ref[...] = (x + attn_out).reshape(Bt, S, D).astype(o_ref.dtype)


# --------------------------------------------------------------------------
# Kernel 2: y -> LayerNorm -> fc1 -> GELU -> fc2 -> +y
# Grid: (row_tiles,) "parallel".  W1/W2 are grid-invariant (VMEM resident, fetched once).
# --------------------------------------------------------------------------
def mlp_block_kernel(y_ref, g_ref, b_ref, w1_ref, b1_ref, w2_ref, b2_ref, o_ref):
    y = y_ref[...].astype(jnp.float32)                          # (tm, D)
    xn = _layernorm(y, g_ref[...], b_ref[...])
    h = jnp.dot(xn.astype(jnp.bfloat16), w1_ref[...],
                preferred_element_type=jnp.float32) + b1_ref[...]          # (tm, FF)
    h = jax.nn.gelu(h, approximate=False)            # exact (erf) GELU = torch default
    out = jnp.dot(h.astype(jnp.bfloat16), w2_ref[...],
                  preferred_element_type=jnp.float32) + b2_ref[...]        # (tm, D)
    o_ref[...] = (y + out).astype(o_ref.dtype)


# --------------------------------------------------------------------------
# One-time parameter preparation (hoisted out of the forward path)
# --------------------------------------------------------------------------
def prepare_params(p):
    bf16 = jnp.bfloat16
    return dict(
        ln1_g=p['ln1_g'], ln1_b=p['ln1_b'],
        ln2_g=p['ln2_g'], ln2_b=p['ln2_b'],
        # Fused QKV weight/bias; weights streamed as bf16 (halves DMA bytes).
        wqkv=jnp.concatenate([p['wq'], p['wk'], p['wv']], axis=1).astype(bf16),  # (D, 3D)
        bqkv=jnp.concatenate([p['bq'], p['bk'], p['bv']], axis=1),               # (1, 3D) f32
        wo=p['wo'].astype(bf16), bo=p['bo'],
        w1=p['w1'].astype(bf16), b1=p['b1'],
        w2=p['w2'].astype(bf16), b2=p['b2'],
    )


def _pick_bt(B):
    # Largest Bt in {4,2,1} dividing B while keeping >=2 grid steps (v7x has 2 TCs).
    for bt in (4, 2, 1):
        if B % bt == 0 and B // bt >= 2:
            return bt
    return 1


# --------------------------------------------------------------------------
# Wrapper (expects prepared params from prepare_params())
# --------------------------------------------------------------------------
def block_forward(x, pp):
    B, S, _ = x.shape

    # ---- attention half ----
    Bt = _pick_bt(B)
    y = pl.pallas_call(
        attn_block_kernel,
        out_shape=jax.ShapeDtypeStruct((B, S, D), x.dtype),
        grid_spec=pltpu.PrefetchScalarGridSpec(
            num_scalar_prefetch=0,
            grid=(B // Bt,),
            in_specs=[
                pl.BlockSpec((Bt, S, D), lambda b: (b, 0, 0)),     # x tile (Bt batches)
                pl.BlockSpec((1, D), lambda b: (0, 0)),            # ln1 gamma
                pl.BlockSpec((1, D), lambda b: (0, 0)),            # ln1 beta
                pl.BlockSpec((D, 3 * D), lambda b: (0, 0)),        # fused QKV weight (bf16)
                pl.BlockSpec((1, 3 * D), lambda b: (0, 0)),        # fused QKV bias
                pl.BlockSpec((D, D), lambda b: (0, 0)),            # out-proj weight (bf16)
                pl.BlockSpec((1, D), lambda b: (0, 0)),            # out-proj bias
            ],
            out_specs=pl.BlockSpec((Bt, S, D), lambda b: (b, 0, 0)),
        ),
        compiler_params=pltpu.CompilerParams(
            dimension_semantics=("parallel",),
            vmem_limit_bytes=VMEM_LIMIT),
    )(x, pp['ln1_g'], pp['ln1_b'], pp['wqkv'], pp['bqkv'], pp['wo'], pp['bo'])

    # ---- MLP half: flatten tokens, pad rows to an MXU-friendly tile multiple ----
    N = B * S
    tm = 256 if N >= 256 else 128
    Np = pl.cdiv(N, tm) * tm
    y2 = y.reshape(N, D)
    if Np != N:
        # Zero-padded rows: LayerNorm gives beta (finite), results are sliced off below.
        y2 = jnp.pad(y2, ((0, Np - N), (0, 0)))

    out = pl.pallas_call(
        mlp_block_kernel,
        out_shape=jax.ShapeDtypeStruct((Np, D), x.dtype),
        grid_spec=pltpu.PrefetchScalarGridSpec(
            num_scalar_prefetch=0,
            grid=(Np // tm,),
            in_specs=[
                pl.BlockSpec((tm, D), lambda r: (r, 0)),           # y row tile
                pl.BlockSpec((1, D), lambda r: (0, 0)),            # ln2 gamma
                pl.BlockSpec((1, D), lambda r: (0, 0)),            # ln2 beta
                pl.BlockSpec((D, FF), lambda r: (0, 0)),           # W1 full (bf16, resident)
                pl.BlockSpec((1, FF), lambda r: (0, 0)),           # b1
                pl.BlockSpec((FF, D), lambda r: (0, 0)),           # W2 full (bf16, resident)
                pl.BlockSpec((1, D), lambda r: (0, 0)),            # b2
            ],
            out_specs=pl.BlockSpec((tm, D), lambda r: (r, 0)),
        ),
        compiler_params=pltpu.CompilerParams(
            dimension_semantics=("parallel",),
            vmem_limit_bytes=VMEM_LIMIT),
    )(y2, pp['ln2_g'], pp['ln2_b'], pp['w1'], pp['b1'], pp['w2'], pp['b2'])

    out = out[:N].reshape(B, S, D)
    weights = None   # Block(vis=False): attention probs are not returned
    return out, weights


# --------------------------------------------------------------------------
# Deterministic parameter init (shapes as in the PyTorch module __init__)
# --------------------------------------------------------------------------
def init_params(key):
    ks = jax.random.split(key, 9)

    def w(k, shape, scale=0.02):
        return (scale * jax.random.normal(k, shape)).astype(jnp.float32)

    return dict(
        ln1_g=jnp.ones((1, D), jnp.float32), ln1_b=jnp.zeros((1, D), jnp.float32),
        ln2_g=jnp.ones((1, D), jnp.float32), ln2_b=jnp.zeros((1, D), jnp.float32),
        wq=w(ks[0], (D, D)), bq=w(ks[1], (1, D), 0.01),
        wk=w(ks[2], (D, D)), bk=jnp.zeros((1, D), jnp.float32),
        wv=w(ks[3], (D, D)), bv=jnp.zeros((1, D), jnp.float32),
        wo=w(ks[4], (D, D)), bo=jnp.zeros((1, D), jnp.float32),
        w1=w(ks[5], (D, FF)), b1=w(ks[6], (1, FF), 1e-6),
        w2=w(ks[7], (FF, D)), b2=w(ks[8], (1, D), 1e-6),
    )


# --------------------------------------------------------------------------
# Pure-JAX f32 reference (mirrors the PyTorch forward) for a correctness check
# --------------------------------------------------------------------------
def block_reference(x, p):
    B, S, _ = x.shape
    xn = _layernorm(x, p['ln1_g'], p['ln1_b'])
    x2 = xn.reshape(B * S, D)
    q = (x2 @ p['wq'] + p['bq']).reshape(B, S, H, HD).transpose(0, 2, 1, 3)
    k = (x2 @ p['wk'] + p['bk']).reshape(B, S, H, HD).transpose(0, 2, 1, 3)
    v = (x2 @ p['wv'] + p['bv']).reshape(B, S, H, HD).transpose(0, 2, 1, 3)
    s = jnp.einsum('bhqd,bhkd->bhqk', q, k) / math.sqrt(HD)
    pr = jax.nn.softmax(s, axis=-1)
    ctx = jnp.einsum('bhqk,bhkd->bhqd', pr, v).transpose(0, 2, 1, 3).reshape(B * S, D)
    y = x + (ctx @ p['wo'] + p['bo']).reshape(B, S, D)
    yn = _layernorm(y, p['ln2_g'], p['ln2_b'])
    h = jax.nn.gelu(yn.reshape(B * S, D) @ p['w1'] + p['b1'], approximate=False)
    return y + (h @ p['w2'] + p['b2']).reshape(B, S, D)


if __name__ == "__main__":
    key = jax.random.PRNGKey(0)
    pkey, xkey = jax.random.split(key)
    params = init_params(pkey)
    prepped = prepare_params(params)      # one-time weight fusion / bf16 cast

    B, S = 2, 8
    x = jax.random.normal(xkey, (B, S, D), dtype=jnp.float32)

    out, weights = block_forward(x, prepped)
    out = jax.block_until_ready(out)

    ref = block_reference(x, params)
    # bf16 MXU inputs (f32 accumulation) vs pure-f32 reference -> allow ~1e-2 deviation.
    np.testing.assert_allclose(np.asarray(out), np.asarray(ref), rtol=2e-2, atol=2e-2)

    print("KERNEL_OK")
</pallas_src>

<mosaic_0001>
module attributes {stable_mosaic.version = 11 : i64} {
  func.func @attn_block_kernel(%arg0: i32, %arg1: memref<1x8x768xf32, #tpu.memory_space<vmem>>, %arg2: memref<1x768xf32, #tpu.memory_space<vmem>>, %arg3: memref<1x768xf32, #tpu.memory_space<vmem>>, %arg4: memref<768x2304xbf16, #tpu.memory_space<vmem>>, %arg5: memref<1x2304xf32, #tpu.memory_space<vmem>>, %arg6: memref<768x768xbf16, #tpu.memory_space<vmem>>, %arg7: memref<1x768xf32, #tpu.memory_space<vmem>>, %arg8: memref<1x8x768xf32, #tpu.memory_space<vmem>>) attributes {dimension_semantics = [#tpu.dimension_semantics<parallel>], iteration_bounds = array<i64: 2>, scalar_prefetch = 0 : i64, scratch_operands = 0 : i64, tpu.core_type = #tpu.core_type<tc>, window_params = [{transform_indices = @transform_0, window_bounds = array<i64: 1, 8, 768>}, {pipeline_mode = #tpu.pipeline_mode<synchronous>, transform_indices = @transform_1, window_bounds = array<i64: 1, 768>}, {pipeline_mode = #tpu.pipeline_mode<synchronous>, transform_indices = @transform_2, window_bounds = array<i64: 1, 768>}, {pipeline_mode = #tpu.pipeline_mode<synchronous>, transform_indices = @transform_3, window_bounds = array<i64: 768, 2304>}, {pipeline_mode = #tpu.pipeline_mode<synchronous>, transform_indices = @transform_4, window_bounds = array<i64: 1, 2304>}, {pipeline_mode = #tpu.pipeline_mode<synchronous>, transform_indices = @transform_5, window_bounds = array<i64: 768, 768>}, {pipeline_mode = #tpu.pipeline_mode<synchronous>, transform_indices = @transform_6, window_bounds = array<i64: 1, 768>}, {transform_indices = @transform_7, window_bounds = array<i64: 1, 8, 768>}]} {
    %c0 = arith.constant 0 : index
    %c0_0 = arith.constant 0 : index
    %c0_1 = arith.constant 0 : index
    %0 = vector.load %arg1[%c0, %c0_0, %c0_1] : memref<1x8x768xf32, #tpu.memory_space<vmem>>, vector<1x8x768xf32>
    %1 = vector.shape_cast %0 : vector<1x8x768xf32> to vector<8x768xf32>
    %c0_2 = arith.constant 0 : index
    %c0_3 = arith.constant 0 : index
    %2 = vector.load %arg2[%c0_2, %c0_3] : memref<1x768xf32, #tpu.memory_space<vmem>>, vector<1x768xf32>
    %c0_4 = arith.constant 0 : index
    %c0_5 = arith.constant 0 : index
    %3 = vector.load %arg3[%c0_4, %c0_5] : memref<1x768xf32, #tpu.memory_space<vmem>>, vector<1x768xf32>
    %cst = arith.constant dense<0.000000e+00> : vector<8xf32>
    %4 = vector.multi_reduction <add>, %1, %cst [1] : vector<8x768xf32> to vector<8xf32>
    %5 = vector.shape_cast %4 : vector<8xf32> to vector<8x1xf32>
    %cst_6 = arith.constant 7.680000e+02 : f32
    %6 = vector.broadcast %cst_6 : f32 to vector<8x1xf32>
    %7 = arith.divf %5, %6 : vector<8x1xf32>
    %8 = vector.broadcast %7 : vector<8x1xf32> to vector<8x768xf32>
    %9 = arith.subf %1, %8 : vector<8x768xf32>
    %10 = arith.mulf %9, %9 : vector<8x768xf32>
    %cst_7 = arith.constant dense<0.000000e+00> : vector<8xf32>
    %11 = vector.multi_reduction <add>, %10, %cst_7 [1] : vector<8x768xf32> to vector<8xf32>
    %12 = vector.shape_cast %11 : vector<8xf32> to vector<8x1xf32>
    %cst_8 = arith.constant 7.680000e+02 : f32
    %13 = vector.broadcast %cst_8 : f32 to vector<8x1xf32>
    %14 = arith.divf %12, %13 : vector<8x1xf32>
    %15 = vector.broadcast %7 : vector<8x1xf32> to vector<8x768xf32>
    %16 = arith.subf %1, %15 : vector<8x768xf32>
    %cst_9 = arith.constant 9.99999997E-7 : f32
    %17 = vector.broadcast %cst_9 : f32 to vector<8x1xf32>
    %18 = arith.addf %14, %17 : vector<8x1xf32>
    %19 = math.rsqrt %18 : vector<8x1xf32>
    %20 = vector.broadcast %19 : vector<8x1xf32> to vector<8x768xf32>
    %21 = arith.mulf %16, %20 : vector<8x768xf32>
    %22 = vector.broadcast %2 : vector<1x768xf32> to vector<8x768xf32>
    %23 = arith.mulf %21, %22 : vector<8x768xf32>
    %24 = vector.broadcast %3 : vector<1x768xf32> to vector<8x768xf32>
    %25 = arith.addf %23, %24 : vector<8x768xf32>
    %26 = arith.truncf %25 : vector<8x768xf32> to vector<8x768xbf16>
    %c0_10 = arith.constant 0 : index
    %c0_11 = arith.constant 0 : index
    %27 = vector.load %arg4[%c0_10, %c0_11] : memref<768x2304xbf16, #tpu.memory_space<vmem>>, vector<768x2304xbf16>
    %cst_12 = arith.constant dense<0.000000e+00> : vector<8x2304xf32>
    %28 = tpu.matmul %26, %27, %cst_12 {dimension_numbers = #tpu.dot_dimension_numbers<[1], [0], [0], [1], [0, 0, 1, 1], [], []>} : vector<8x768xbf16>, vector<768x2304xbf16>, vector<8x2304xf32> -> vector<8x2304xf32>
    %c0_13 = arith.constant 0 : index
    %c0_14 = arith.constant 0 : index
    %29 = vector.load %arg5[%c0_13, %c0_14] : memref<1x2304xf32, #tpu.memory_space<vmem>>, vector<1x2304xf32>
    %30 = vector.broadcast %29 : vector<1x2304xf32> to vector<8x2304xf32>
    %31 = arith.addf %28, %30 : vector<8x2304xf32>
    %32 = vector.extract_strided_slice %31 {offsets = [0, 0], sizes = [8, 768], strides = [1, 1]} : vector<8x2304xf32> to vector<8x768xf32>
    %cst_15 = arith.constant 1.250000e-01 : f32
    %33 = vector.broadcast %cst_15 : f32 to vector<8x768xf32>
    %34 = arith.mulf %32, %33 : vector<8x768xf32>
    %35 = vector.shape_cast %34 : vector<8x768xf32> to vector<1x8x12x64xf32>
    %36 = tpu.transpose %35, [0, 2, 1, 3] : vector<1x8x12x64xf32> -> vector<1x12x8x64xf32>
    %37 = vector.shape_cast %36 : vector<1x12x8x64xf32> to vector<12x8x64xf32>
    %38 = arith.truncf %37 : vector<12x8x64xf32> to vector<12x8x64xbf16>
    %39 = vector.extract_strided_slice %31 {offsets = [0, 768], sizes = [8, 768], strides = [1, 1]} : vector<8x2304xf32> to vector<8x768xf32>
    %40 = vector.shape_cast %39 : vector<8x768xf32> to vector<1x8x12x64xf32>
    %41 = tpu.transpose %40, [0, 2, 1, 3] : vector<1x8x12x64xf32> -> vector<1x12x8x64xf32>
    %42 = vector.shape_cast %41 : vector<1x12x8x64xf32> to vector<12x8x64xf32>
    %43 = arith.truncf %42 : vector<12x8x64xf32> to vector<12x8x64xbf16>
    %44 = vector.extract_strided_slice %31 {offsets = [0, 1536], sizes = [8, 768], strides = [1, 1]} : vector<8x2304xf32> to vector<8x768xf32>
    %45 = vector.shape_cast %44 : vector<8x768xf32> to vector<1x8x12x64xf32>
    %46 = tpu.transpose %45, [0, 2, 1, 3] : vector<1x8x12x64xf32> -> vector<1x12x8x64xf32>
    %47 = vector.shape_cast %46 : vector<1x12x8x64xf32> to vector<12x8x64xf32>
    %48 = arith.truncf %47 : vector<12x8x64xf32> to vector<12x8x64xbf16>
    "tpu.trace_start"() <{level = 10 : i32, message = "bqd,bkd->bqk"}> : () -> ()
    %cst_16 = arith.constant dense<0.000000e+00> : vector<12x8x8xf32>
    %49 = tpu.matmul %38, %43, %cst_16 {dimension_numbers = #tpu.dot_dimension_numbers<[2], [2], [1], [1], [0, 0, 0, 1, 1, 1], [0], [0]>} : vector<12x8x64xbf16>, vector<12x8x64xbf16>, vector<12x8x8xf32> -> vector<12x8x8xf32>
    "tpu.trace_stop"() : () -> ()
    %cst_17 = arith.constant dense<0xFF800000> : vector<12x8xf32>
    %50 = vector.multi_reduction <maximumf>, %49, %cst_17 [2] : vector<12x8x8xf32> to vector<12x8xf32>
    %51 = vector.shape_cast %50 : vector<12x8xf32> to vector<12x8x1xf32>
    %52 = vector.broadcast %51 : vector<12x8x1xf32> to vector<12x8x8xf32>
    %53 = arith.subf %49, %52 : vector<12x8x8xf32>
    %54 = math.exp %53 : vector<12x8x8xf32>
    %cst_18 = arith.constant dense<0.000000e+00> : vector<12x8xf32>
    %55 = vector.multi_reduction <add>, %54, %cst_18 [2] : vector<12x8x8xf32> to vector<12x8xf32>
    %56 = vector.shape_cast %55 : vector<12x8xf32> to vector<12x8x1xf32>
    %57 = vector.broadcast %56 : vector<12x8x1xf32> to vector<12x8x8xf32>
    %58 = arith.divf %54, %57 : vector<12x8x8xf32>
    %59 = arith.truncf %58 : vector<12x8x8xf32> to vector<12x8x8xbf16>
    "tpu.trace_start"() <{level = 10 : i32, message = "bqk,bkd->bqd"}> : () -> ()
    %cst_19 = arith.constant dense<0.000000e+00> : vector<12x8x64xf32>
    %60 = tpu.matmul %59, %48, %cst_19 {dimension_numbers = #tpu.dot_dimension_numbers<[2], [1], [1], [2], [0, 0, 0, 1, 1, 2], [0], [0]>} : vector<12x8x8xbf16>, vector<12x8x64xbf16>, vector<12x8x64xf32> -> vector<12x8x64xf32>
    "tpu.trace_stop"() : () -> ()
    %61 = vector.shape_cast %60 : vector<12x8x64xf32> to vector<1x12x8x64xf32>
    %62 = tpu.transpose %61, [0, 2, 1, 3] : vector<1x12x8x64xf32> -> vector<1x8x12x64xf32>
    %63 = vector.shape_cast %62 : vector<1x8x12x64xf32> to vector<8x768xf32>
    %64 = arith.truncf %63 : vector<8x768xf32> to vector<8x768xbf16>
    %c0_20 = arith.constant 0 : index
    %c0_21 = arith.constant 0 : index
    %65 = vector.load %arg6[%c0_20, %c0_21] : memref<768x768xbf16, #tpu.memory_space<vmem>>, vector<768x768xbf16>
    %cst_22 = arith.constant dense<0.000000e+00> : vector<8x768xf32>
    %66 = tpu.matmul %64, %65, %cst_22 {dimension_numbers = #tpu.dot_dimension_numbers<[1], [0], [0], [1], [0, 0, 1, 1], [], []>} : vector<8x768xbf16>, vector<768x768xbf16>, vector<8x768xf32> -> vector<8x768xf32>
    %c0_23 = arith.constant 0 : index
    %c0_24 = arith.constant 0 : index
    %67 = vector.load %arg7[%c0_23, %c0_24] : memref<1x768xf32, #tpu.memory_space<vmem>>, vector<1x768xf32>
    %68 = vector.broadcast %67 : vector<1x768xf32> to vector<8x768xf32>
    %69 = arith.addf %66, %68 : vector<8x768xf32>
    %70 = arith.addf %1, %69 : vector<8x768xf32>
    %71 = vector.shape_cast %70 : vector<8x768xf32> to vector<1x8x768xf32>
    %c0_25 = arith.constant 0 : index
    %c0_26 = arith.constant 0 : index
    %c0_27 = arith.constant 0 : index
    %72 = vector.load %arg8[%c0_25, %c0_26, %c0_27] : memref<1x8x768xf32, #tpu.memory_space<vmem>>, vector<1x8x768xf32>
    tpu.vector_store %arg8[%c0_25, %c0_26, %c0_27], %71 {strides = array<i32>} : memref<1x8x768xf32, #tpu.memory_space<vmem>>, vector<1x8x768xf32>,
    return
  }
  func.func @transform_0(%arg0: i32) -> (i32, i32, i32) {
    %c0_i32 = arith.constant 0 : i32
    %c0_i32_0 = arith.constant 0 : i32
    %c0_i32_1 = arith.constant 0 : i32
    return %arg0, %c0_i32, %c0_i32_0 : i32, i32, i32
  }
  func.func @transform_1(%arg0: i32) -> (i32, i32) {
    %c0_i32 = arith.constant 0 : i32
    %c0_i32_0 = arith.constant 0 : i32
    %c0_i32_1 = arith.constant 0 : i32
    return %c0_i32, %c0_i32_0 : i32, i32
  }
  func.func @transform_2(%arg0: i32) -> (i32, i32) {
    %c0_i32 = arith.constant 0 : i32
    %c0_i32_0 = arith.constant 0 : i32
    %c0_i32_1 = arith.constant 0 : i32
    return %c0_i32, %c0_i32_0 : i32, i32
  }
  func.func @transform_3(%arg0: i32) -> (i32, i32) {
    %c0_i32 = arith.constant 0 : i32
    %c0_i32_0 = arith.constant 0 : i32
    %c0_i32_1 = arith.constant 0 : i32
    return %c0_i32, %c0_i32_0 : i32, i32
  }
  func.func @transform_4(%arg0: i32) -> (i32, i32) {
    %c0_i32 = arith.constant 0 : i32
    %c0_i32_0 = arith.constant 0 : i32
    %c0_i32_1 = arith.constant 0 : i32
    return %c0_i32, %c0_i32_0 : i32, i32
  }
  func.func @transform_5(%arg0: i32) -> (i32, i32) {
    %c0_i32 = arith.constant 0 : i32
    %c0_i32_0 = arith.constant 0 : i32
    %c0_i32_1 = arith.constant 0 : i32
    return %c0_i32, %c0_i32_0 : i32, i32
  }
  func.func @transform_6(%arg0: i32) -> (i32, i32) {
    %c0_i32 = arith.constant 0 : i32
    %c0_i32_0 = arith.constant 0 : i32
    %c0_i32_1 = arith.constant 0 : i32
    return %c0_i32, %c0_i32_0 : i32, i32
  }
  func.func @transform_7(%arg0: i32) -> (i32, i32, i32) {
    %c0_i32 = arith.constant 0 : i32
    %c0_i32_0 = arith.constant 0 : i32
    %c0_i32_1 = arith.constant 0 : i32
    return %arg0, %c0_i32, %c0_i32_0 : i32, i32, i32
  }
}

</mosaic_0001>

<llo_original>
// kernel: tpu_custom_call.1
$region0: #{tpu_custom_call.1}
  #allocation0 [shape = 'u32[]', space=smem, size = 0x4, offset = 0x4, fixed_abs, tag = 'smem constant byte address 0x4 - core index']
  #allocation1 [shape = 'u32[144,128]{1,0:T(1,128)}', space=vmem, size = 0x12000, scoped, tag = 'internal scratch']
  %s0 = inlined_call_operand.hbm [shape: f32[2,8,768], index: 0, kind: input, shape index: {}]
  %s1 = inlined_call_operand.hbm [shape: f32[1,768], index: 1, kind: input, shape index: {}]
  %s2 = inlined_call_operand.hbm [shape: f32[1,768], index: 2, kind: input, shape index: {}]
  %s3 = inlined_call_operand.hbm [shape: bf16[768,2304], index: 3, kind: input, shape index: {}]
  %s4 = inlined_call_operand.hbm [shape: f32[1,2304], index: 4, kind: input, shape index: {}]
  %s5 = inlined_call_operand.hbm [shape: bf16[768,768], index: 5, kind: input, shape index: {}]
  %s6 = inlined_call_operand.hbm [shape: f32[1,768], index: 6, kind: input, shape index: {}]
  %s7 = inlined_call_operand.hbm [shape: f32[2,8,768], index: 7, kind: output, shape index: {}]
  %s8 = sld [smem:[#allocation0]]
  $region89: #{tpu_custom_call.1} parent=0
    _
  %s10 = ssub.s32 1, %s8
  %s11 = scalar_select 0, %s10, %s8
  $region1: #{tpu_custom_call.1} parent=0
    #allocation2 [shape = 'u8[49152]{0}', space=vmem, size = 0xc000, scoped, tag = 'input window, operand 0']
    #allocation3 [shape = 's32[2]{0}', space=sflag, size = 0x8, scoped, tag = 'scoped memory for tpu_custom_call.1']
    #allocation4 [shape = 's32[2]{0}', space=sflag, size = 0x8, scoped, tag = 'scoped memory for tpu_custom_call.1']
    #allocation5 [shape = 'u8[3072]{0}', space=vmem, size = 0xc00, scoped, tag = 'input window, operand 1, single buffered']
    #allocation6 [shape = 's32[1]{0}', space=sflag, size = 0x4, scoped, tag = 'scoped memory for tpu_custom_call.1']
    #allocation7 [shape = 'u8[3072]{0}', space=vmem, size = 0xc00, scoped, tag = 'input window, operand 2, single buffered']
    #allocation8 [shape = 'u8[3538944]{0}', space=vmem, size = 0x360000, scoped, tag = 'input window, operand 3, single buffered']
    #allocation9 [shape = 's32[1]{0}', space=sflag, size = 0x4, scoped, tag = 'scoped memory for tpu_custom_call.1']
    #allocation10 [shape = 'u8[9216]{0}', space=vmem, size = 0x2400, scoped, tag = 'input window, operand 4, single buffered']
    #allocation11 [shape = 'u8[1179648]{0}', space=vmem, size = 0x120000, scoped, tag = 'input window, operand 5, single buffered']
    #allocation12 [shape = 's32[1]{0}', space=sflag, size = 0x4, scoped, tag = 'scoped memory for tpu_custom_call.1']
    #allocation13 [shape = 'u8[3072]{0}', space=vmem, size = 0xc00, scoped, tag = 'input window, operand 6, single buffered']
    #allocation14 [shape = 'u8[49152]{0}', space=vmem, size = 0xc000, scoped, tag = 'output window, operand 0']
    %12 = vsyncpa [#allocation3], 0
    %s13 = scalar_lea.sflag [#allocation3], 1
    %14 = vsyncpa %s13, 0
    %15 = vsyncpa [#allocation6], 0
    %16 = vsyncpa [#allocation9], 0
    %17 = vsyncpa [#allocation12], 0
    %18 = vsyncpa [#allocation4], 0
    %s19 = scalar_lea.sflag [#allocation4], 1
    %20 = vsyncpa %s19, 0
    loop: start=0, step=1, limit=4
    $region2: #{tpu_custom_call.1} parent=1 // loop_pre_header
      _
    $region3: #{tpu_custom_call.1} parent=1 // loop_header
      %s22 = sphi 0, %s26
      %p23 = scmp.ge.s32.totalorder %s22, 4
      %s32 = sphi 0, %s34
      %s35 = sphi 0, %s32
      %s36 = sphi 0, %s35
      %s52 = sphi 0, %s36
      %s56 = sphi 0, %s56
      %s58 = sphi 0, %s56
      %s59 = sphi 0, %s58
      %s73 = sphi 0, %s59
      %s77 = sphi 0, %s77
      %s79 = sphi 0, %s77
      %s80 = sphi 0, %s79
      %s94 = sphi 0, %s80
      %s98 = sphi 0, %s98
      %s100 = sphi 0, %s98
      %s101 = sphi 0, %s100
      %s115 = sphi 0, %s101
      %s119 = sphi 0, %s119
      %s121 = sphi 0, %s119
      %s122 = sphi 0, %s121
      %s136 = sphi 0, %s122
      %s140 = sphi 0, %s140
      %s142 = sphi 0, %s140
      %s143 = sphi 0, %s142
      %s157 = sphi 0, %s143
      %s161 = sphi 0, %s161
      %s163 = sphi 0, %s161
      %s164 = sphi 0, %s163
      %s178 = sphi 0, %s164
      %s184 = sphi 0, %s186
      %s187 = sphi 0, %s184
      %s188 = sphi 0, %s187
      %s204 = sphi 0, %s188
    $region4: #{tpu_custom_call.1} parent=1 // loop_header_branch
      %25 = sbr.rel (%p23) target = $region8
    $region5: #{tpu_custom_call.1} parent=1 // loop_body
      %s27 = ssub.s32 %s22, 1
      %s28 = ssub.s32 %s22, 2
      %s29 = sadd.s32 %s22, 1
      %s30 = ssub.s32 %s22, %s29
      %p31 = scmp.eq.s32.totalorder %s30, 0
      %s33 = sadd.s32 %s32, 1
      %s34 = scalar_select %p31, %s32, %s33
      %p37 = pneg %p31
      %p38 = scmp.eq.s32.totalorder %s22, 1
      %p39 = por %p37, %p38
      %p40 = scmp.ne.s32.totalorder %s32, %s35
      %p41 = scmp.eq.s32.totalorder %s22, 0
      %p42 = por %p40, %p41
      %p43 = scmp.ne.s32.totalorder %s32, %s35
      %p44 = scmp.eq.s32.totalorder %s27, 1
      %p45 = por %p43, %p44
      %p46 = scmp.ne.s32.totalorder %s35, %s36
      %p47 = scmp.eq.s32.totalorder %s27, 0
      %p48 = por %p46, %p47
      %p49 = scmp.ne.s32.totalorder %s35, %s36
      %p50 = scmp.eq.s32.totalorder %s28, 1
      %p51 = por %p49, %p50
      %p53 = scmp.ne.s32.totalorder %s36, %s52
      %p54 = scmp.eq.s32.totalorder %s28, 0
      %p55 = por %p53, %p54
      %s57 = sadd.s32 %s56, 1
      %p60 = scmp.eq.s32.totalorder %s22, 1
      %p61 = scmp.ne.s32.totalorder %s56, %s58
      %p62 = scmp.eq.s32.totalorder %s22, 0
      %p63 = por %p61, %p62
      %p64 = scmp.ne.s32.totalorder %s56, %s58
      %p65 = scmp.eq.s32.totalorder %s27, 1
      %p66 = por %p64, %p65
      %p67 = scmp.ne.s32.totalorder %s58, %s59
      %p68 = scmp.eq.s32.totalorder %s27, 0
      %p69 = por %p67, %p68
      %p70 = scmp.ne.s32.totalorder %s58, %s59
      %p71 = scmp.eq.s32.totalorder %s28, 1
      %p72 = por %p70, %p71
      %p74 = scmp.ne.s32.totalorder %s59, %s73
      %p75 = scmp.eq.s32.totalorder %s28, 0
      %p76 = por %p74, %p75
      %s78 = sadd.s32 %s77, 1
      %p81 = scmp.eq.s32.totalorder %s22, 1
      %p82 = scmp.ne.s32.totalorder %s77, %s79
      %p83 = scmp.eq.s32.totalorder %s22, 0
      %p84 = por %p82, %p83
      %p85 = scmp.ne.s32.totalorder %s77, %s79
      %p86 = scmp.eq.s32.totalorder %s27, 1
      %p87 = por %p85, %p86
      %p88 = scmp.ne.s32.totalorder %s79, %s80
      %p89 = scmp.eq.s32.totalorder %s27, 0
      %p90 = por %p88, %p89
      %p91 = scmp.ne.s32.totalorder %s79, %s80
      %p92 = scmp.eq.s32.totalorder %s28, 1
      %p93 = por %p91, %p92
      %p95 = scmp.ne.s32.totalorder %s80, %s94
      %p96 = scmp.eq.s32.totalorder %s28, 0
      %p97 = por %p95, %p96
      %s99 = sadd.s32 %s98, 1
      %p102 = scmp.eq.s32.totalorder %s22, 1
      %p103 = scmp.ne.s32.totalorder %s98, %s100
      %p104 = scmp.eq.s32.totalorder %s22, 0
      %p105 = por %p103, %p104
      %p106 = scmp.ne.s32.totalorder %s98, %s100
      %p107 = scmp.eq.s32.totalorder %s27, 1
      %p108 = por %p106, %p107
      %p109 = scmp.ne.s32.totalorder %s100, %s101
      %p110 = scmp.eq.s32.totalorder %s27, 0
      %p111 = por %p109, %p110
      %p112 = scmp.ne.s32.totalorder %s100, %s101
      %p113 = scmp.eq.s32.totalorder %s28, 1
      %p114 = por %p112, %p113
      %p116 = scmp.ne.s32.totalorder %s101, %s115
      %p117 = scmp.eq.s32.totalorder %s28, 0
      %p118 = por %p116, %p117
      %s120 = sadd.s32 %s119, 1
      %p123 = scmp.eq.s32.totalorder %s22, 1
      %p124 = scmp.ne.s32.totalorder %s119, %s121
      %p125 = scmp.eq.s32.totalorder %s22, 0
      %p126 = por %p124, %p125
      %p127 = scmp.ne.s32.totalorder %s119, %s121
      %p128 = scmp.eq.s32.totalorder %s27, 1
      %p129 = por %p127, %p128
      %p130 = scmp.ne.s32.totalorder %s121, %s122
      %p131 = scmp.eq.s32.totalorder %s27, 0
      %p132 = por %p130, %p131
      %p133 = scmp.ne.s32.totalorder %s121, %s122
      %p134 = scmp.eq.s32.totalorder %s28, 1
      %p135 = por %p133, %p134
      %p137 = scmp.ne.s32.totalorder %s122, %s136
      %p138 = scmp.eq.s32.totalorder %s28, 0
      %p139 = por %p137, %p138
      %s141 = sadd.s32 %s140, 1
      %p144 = scmp.eq.s32.totalorder %s22, 1
      %p145 = scmp.ne.s32.totalorder %s140, %s142
      %p146 = scmp.eq.s32.totalorder %s22, 0
      %p147 = por %p145, %p146
      %p148 = scmp.ne.s32.totalorder %s140, %s142
      %p149 = scmp.eq.s32.totalorder %s27, 1
      %p150 = por %p148, %p149
      %p151 = scmp.ne.s32.totalorder %s142, %s143
      %p152 = scmp.eq.s32.totalorder %s27, 0
      %p153 = por %p151, %p152
      %p154 = scmp.ne.s32.totalorder %s142, %s143
      %p155 = scmp.eq.s32.totalorder %s28, 1
      %p156 = por %p154, %p155
      %p158 = scmp.ne.s32.totalorder %s143, %s157
      %p159 = scmp.eq.s32.totalorder %s28, 0
      %p160 = por %p158, %p159
      %s162 = sadd.s32 %s161, 1
      %p165 = scmp.eq.s32.totalorder %s22, 1
      %p166 = scmp.ne.s32.totalorder %s161, %s163
      %p167 = scmp.eq.s32.totalorder %s22, 0
      %p168 = por %p166, %p167
      %p169 = scmp.ne.s32.totalorder %s161, %s163
      %p170 = scmp.eq.s32.totalorder %s27, 1
      %p171 = por %p169, %p170
      %p172 = scmp.ne.s32.totalorder %s163, %s164
      %p173 = scmp.eq.s32.totalorder %s27, 0
      %p174 = por %p172, %p173
      %p175 = scmp.ne.s32.totalorder %s163, %s164
      %p176 = scmp.eq.s32.totalorder %s28, 1
      %p177 = por %p175, %p176
      %p179 = scmp.ne.s32.totalorder %s164, %s178
      %p180 = scmp.eq.s32.totalorder %s28, 0
      %p181 = por %p179, %p180
      %s182 = ssub.s32 %s22, %s29
      %p183 = scmp.eq.s32.totalorder %s182, 0
      %s185 = sadd.s32 %s184, 1
      %s186 = scalar_select %p183, %s184, %s185
      %p189 = pneg %p183
      %p190 = scmp.eq.s32.totalorder %s22, 1
      %p191 = por %p189, %p190
      %p192 = scmp.ne.s32.totalorder %s184, %s187
      %p193 = scmp.eq.s32.totalorder %s22, 0
      %p194 = por %p192, %p193
      %p195 = scmp.ne.s32.totalorder %s184, %s187
      %p196 = scmp.eq.s32.totalorder %s27, 1
      %p197 = por %p195, %p196
      %p198 = scmp.ne.s32.totalorder %s187, %s188
      %p199 = scmp.eq.s32.totalorder %s27, 0
      %p200 = por %p198, %p199
      %p201 = scmp.ne.s32.totalorder %s187, %s188
      %p202 = scmp.eq.s32.totalorder %s28, 1
      %p203 = por %p201, %p202
      %p205 = scmp.ne.s32.totalorder %s188, %s204
      %p206 = scmp.eq.s32.totalorder %s28, 0
      %p207 = por %p205, %p206
      %p208 = scmp.le.s32.totalorder 1, %s22
      %p209 = scmp.lt.s32.totalorder %s22, 3
      %p210 = pnand %p208, %p209
      %p211 = pneg %p210
      // Predicated region
      $region9: #{tpu_custom_call.1} parent=5 // pred_check
        _
      $region10: #{tpu_custom_call.1} parent=5 // pred_check_branch
        %213 = sbr.rel (%p210) target = $region12
      $region11: #{tpu_custom_call.1} parent=5 // pred_region
        %s214 = ssub.s32 %s22, 1
        // Predicated region
        $region13: #{tpu_custom_call.1} parent=11 // pred_check
          %p215 = pneg %p69
        $region14: #{tpu_custom_call.1} parent=11 // pred_check_branch
          %217 = sbr.rel (%p215) target = $region16
        $region15: #{tpu_custom_call.1} parent=11 // pred_region
          %s219 = ssub.s32 96, 96
          %220 = vsyncadd [#allocation6], %s219
          %s222 = sshll.u32 [#allocation5], 4
          %s223 = int_to_ptr.vmem [resolvable:$true] %s222
          %225 = dma.hbm_to_vmem [thread:$0]  %s1, 96, %s223, [#allocation6]
        $region16: #{tpu_custom_call.1} parent=11 // pred_fallthru
          _
        // Predicated region
        $region17: #{tpu_custom_call.1} parent=11 // pred_check
          %p226 = pneg %p90
        $region18: #{tpu_custom_call.1} parent=11 // pred_check_branch
          %228 = sbr.rel (%p226) target = $region20
        $region19: #{tpu_custom_call.1} parent=11 // pred_region
          %s230 = ssub.s32 96, 96
          %231 = vsyncadd [#allocation6], %s230
          %s233 = sshll.u32 [#allocation7], 4
          %s234 = int_to_ptr.vmem [resolvable:$true] %s233
          %236 = dma.hbm_to_vmem [thread:$0]  %s2, 96, %s234, [#allocation6]
        $region20: #{tpu_custom_call.1} parent=11 // pred_fallthru
          _
        // Predicated region
        $region21: #{tpu_custom_call.1} parent=11 // pred_check
          %p237 = pneg %p111
        $region22: #{tpu_custom_call.1} parent=11 // pred_check_branch
          %239 = sbr.rel (%p237) target = $region24
        $region23: #{tpu_custom_call.1} parent=11 // pred_region
          %s241 = ssub.s32 110592, 110592
          %242 = vsyncadd [#allocation9], %s241
          %s243 = sshll.u32 [#allocation8], 4
          %s244 = int_to_ptr.vmem [resolvable:$true] %s243
          %249 = dma.hbm_to_vmem [thread:$0]  %s3, 110592, %s244, [#allocation9], 1152, 1152, 72
        $region24: #{tpu_custom_call.1} parent=11 // pred_fallthru
          _
        // Predicated region
        $region25: #{tpu_custom_call.1} parent=11 // pred_check
          %p250 = pneg %p132
        $region26: #{tpu_custom_call.1} parent=11 // pred_check_branch
          %252 = sbr.rel (%p250) target = $region28
        $region27: #{tpu_custom_call.1} parent=11 // pred_region
          %s254 = ssub.s32 288, 288
          %255 = vsyncadd [#allocation9], %s254
          %s257 = sshll.u32 [#allocation10], 4
          %s258 = int_to_ptr.vmem [resolvable:$true] %s257
          %260 = dma.hbm_to_vmem [thread:$0]  %s4, 288, %s258, [#allocation9]
        $region28: #{tpu_custom_call.1} parent=11 // pred_fallthru
          _
        // Predicated region
        $region29: #{tpu_custom_call.1} parent=11 // pred_check
          %p261 = pneg %p153
        $region30: #{tpu_custom_call.1} parent=11 // pred_check_branch
          %263 = sbr.rel (%p261) target = $region32
        $region31: #{tpu_custom_call.1} parent=11 // pred_region
          %s265 = ssub.s32 36864, 36864
          %266 = vsyncadd [#allocation12], %s265
          %s267 = sshll.u32 [#allocation11], 4
          %s268 = int_to_ptr.vmem [resolvable:$true] %s267
          %273 = dma.hbm_to_vmem [thread:$0]  %s5, 36864, %s268, [#allocation12], 384, 384, 24
        $region32: #{tpu_custom_call.1} parent=11 // pred_fallthru
          _
        // Predicated region
        $region33: #{tpu_custom_call.1} parent=11 // pred_check
          %p274 = pneg %p174
        $region34: #{tpu_custom_call.1} parent=11 // pred_check_branch
          %276 = sbr.rel (%p274) target = $region36
        $region35: #{tpu_custom_call.1} parent=11 // pred_region
          %s278 = ssub.s32 96, 96
          %279 = vsyncadd [#allocation12], %s278
          %s281 = sshll.u32 [#allocation13], 4
          %s282 = int_to_ptr.vmem [resolvable:$true] %s281
          %284 = dma.hbm_to_vmem [thread:$0]  %s6, 96, %s282, [#allocation12]
        $region36: #{tpu_custom_call.1} parent=11 // pred_fallthru
          _
      $region12: #{tpu_custom_call.1} parent=5 // pred_fallthru
        _
      %p285 = scmp.lt.s32.totalorder %s22, 2
      // Predicated region
      $region37: #{tpu_custom_call.1} parent=5 // pred_check
        %p286 = pneg %p285
      $region38: #{tpu_custom_call.1} parent=5 // pred_check_branch
        %288 = sbr.rel (%p286) target = $region40
      $region39: #{tpu_custom_call.1} parent=5 // pred_region
        // Predicated region
        $region41: #{tpu_custom_call.1} parent=39 // pred_check
          %p289 = pneg %p42
        $region42: #{tpu_custom_call.1} parent=39 // pred_check_branch
          %291 = sbr.rel (%p289) target = $region44
        $region43: #{tpu_custom_call.1} parent=39 // pred_region
          %s292 = sand.u32 %s32, 1
          %s293 = scalar_lea.sflag [#allocation3], %s292
          %s294 = sand.u32 %s32, 1
          %s295 = smul.addr %s294, 48
          %s296 = scalar_lea.vmem [#allocation2], %s295
          %s298 = ssub.s32 768, 768
          %299 = vsyncadd %s293, %s298
          %s300 = smul.addr %s22, 6
          %s301 = smul.addr %s300, 128
          %s302 = scalar_lea.hbm %s0, %s301
          %s304 = sshll.u32 %s296, 4
          %s305 = int_to_ptr.vmem [resolvable:$true] %s304
          %307 = dma.hbm_to_vmem [thread:$0]  %s302, 768, %s305, %s293
        $region44: #{tpu_custom_call.1} parent=39 // pred_fallthru
          _
      $region40: #{tpu_custom_call.1} parent=5 // pred_fallthru
        _
      %p308 = scmp.le.s32.totalorder 1, %s22
      %p309 = scmp.lt.s32.totalorder %s22, 3
      %p310 = pnand %p308, %p309
      %p311 = pneg %p310
      // Predicated region
      $region45: #{tpu_custom_call.1} parent=5 // pred_check
        _
      $region46: #{tpu_custom_call.1} parent=5 // pred_check_branch
        %313 = sbr.rel (%p310) target = $region48
      $region47: #{tpu_custom_call.1} parent=5 // pred_region
        %s314 = ssub.s32 %s22, 1
        %s315 = sand.u32 %s35, 1
        %s316 = scalar_lea.sflag [#allocation3], %s315
        %s317 = sand.u32 %s35, 1
        %s318 = smul.addr %s317, 48
        %s319 = scalar_lea.vmem [#allocation2], %s318
        // Predicated region
        $region49: #{tpu_custom_call.1} parent=47 // pred_check
          %p320 = pneg %p48
        $region50: #{tpu_custom_call.1} parent=47 // pred_check_branch
          %322 = sbr.rel (%p320) target = $region52
        $region51: #{tpu_custom_call.1} parent=47 // pred_region
          %323 = dma.done %s316, 768
        $region52: #{tpu_custom_call.1} parent=47 // pred_fallthru
          _
        // Predicated region
        $region53: #{tpu_custom_call.1} parent=47 // pred_check
          %p324 = pneg %p69
        $region54: #{tpu_custom_call.1} parent=47 // pred_check_branch
          %326 = sbr.rel (%p324) target = $region56
        $region55: #{tpu_custom_call.1} parent=47 // pred_region
          %327 = dma.done [#allocation6], 96
        $region56: #{tpu_custom_call.1} parent=47 // pred_fallthru
          _
        // Predicated region
        $region57: #{tpu_custom_call.1} parent=47 // pred_check
          %p328 = pneg %p90
        $region58: #{tpu_custom_call.1} parent=47 // pred_check_branch
          %330 = sbr.rel (%p328) target = $region60
        $region59: #{tpu_custom_call.1} parent=47 // pred_region
          %331 = dma.done [#allocation6], 96
        $region60: #{tpu_custom_call.1} parent=47 // pred_fallthru
          _
        // Predicated region
        $region61: #{tpu_custom_call.1} parent=47 // pred_check
          %p332 = pneg %p111
        $region62: #{tpu_custom_call.1} parent=47 // pred_check_branch
          %334 = sbr.rel (%p332) target = $region64
        $region63: #{tpu_custom_call.1} parent=47 // pred_region
          %335 = dma.done [#allocation9], 110592
        $region64: #{tpu_custom_call.1} parent=47 // pred_fallthru
          _
        // Predicated region
        $region65: #{tpu_custom_call.1} parent=47 // pred_check
          %p336 = pneg %p132
        $region66: #{tpu_custom_call.1} parent=47 // pred_check_branch
          %338 = sbr.rel (%p336) target = $region68
        $region67: #{tpu_custom_call.1} parent=47 // pred_region
          %339 = dma.done [#allocation9], 288
        $region68: #{tpu_custom_call.1} parent=47 // pred_fallthru
          _
        // Predicated region
        $region69: #{tpu_custom_call.1} parent=47 // pred_check
          %p340 = pneg %p153
        $region70: #{tpu_custom_call.1} parent=47 // pred_check_branch
          %342 = sbr.rel (%p340) target = $region72
        $region71: #{tpu_custom_call.1} parent=47 // pred_region
          %343 = dma.done [#allocation12], 36864
        $region72: #{tpu_custom_call.1} parent=47 // pred_fallthru
          _
        // Predicated region
        $region73: #{tpu_custom_call.1} parent=47 // pred_check
          %p344 = pneg %p174
        $region74: #{tpu_custom_call.1} parent=47 // pred_check_branch
          %346 = sbr.rel (%p344) target = $region76
        $region75: #{tpu_custom_call.1} parent=47 // pred_region
          %347 = dma.done [#allocation12], 96
        $region76: #{tpu_custom_call.1} parent=47 // pred_fallthru
          _
        %s348 = sand.u32 %s35, 1
        %s349 = scalar_lea.sflag [#allocation3], %s348
        %s350 = sand.u32 %s35, 1
        %s351 = smul.addr %s350, 48
        %s352 = scalar_lea.vmem [#allocation2], %s351
        %p353 = pneg %p48
        %p354 = pneg %p45
        %p355 = pneg %p69
        %p356 = pneg %p66
        %p357 = pneg %p90
        %p358 = pneg %p87
        %p359 = pneg %p111
        %p360 = pneg %p108
        %p361 = pneg %p132
        %p362 = pneg %p129
        %p363 = pneg %p153
        %p364 = pneg %p150
        %p365 = pneg %p174
        %p366 = pneg %p171
        %p367 = pneg %p200
        %p368 = pneg %p197
        %s369 = sand.u32 %s187, 1
        %s370 = scalar_lea.sflag [#allocation4], %s369
        %s371 = sand.u32 %s187, 1
        %s372 = smul.addr %s371, 48
        %s373 = scalar_lea.vmem [#allocation14], %s372
        %v375 = vld [vmem:[%s319] sm:$0xff]
        %v376 = vld [vmem:[%s319 + $0x8] sm:$0xff]
        %v377 = vld [vmem:[%s319 + $0x10] sm:$0xff]
        %v378 = vld [vmem:[%s319 + $0x18] sm:$0xff]
        %v379 = vld [vmem:[%s319 + $0x20] sm:$0xff]
        %v380 = vld [vmem:[%s319 + $0x28] sm:$0xff]
        %v381 = vld [vmem:[#allocation5] sm:$0x3f]
        %v382 = vld [vmem:[#allocation7] sm:$0x3f]
        %v383 = vadd.f32 %v375, %v376
        %v384 = vadd.f32 %v383, %v377
        %v385 = vadd.f32 %v384, %v378
        %v386 = vadd.f32 %v385, %v379
        %v387 = vadd.f32 %v386, %v380
        %388 = vadd.xlane.f32.xlu0 %v387
        %v389 = vpop.xlane.xlu0 %388
        %v390 = vrcp.pop 768.0
        %v391 = vmul.f32 %v389, %v390
        %v392 = vsub.f32 %v375, %v391
        %v393 = vsub.f32 %v376, %v391
        %v394 = vsub.f32 %v377, %v391
        %v395 = vsub.f32 %v378, %v391
        %v396 = vsub.f32 %v379, %v391
        %v397 = vsub.f32 %v380, %v391
        %v398 = vmul.f32 %v392, %v392
        %v399 = vmul.f32 %v393, %v393
        %v400 = vmul.f32 %v394, %v394
        %v401 = vmul.f32 %v395, %v395
        %v402 = vmul.f32 %v396, %v396
        %v403 = vmul.f32 %v397, %v397
        %v404 = vadd.f32 %v398, %v399
        %v405 = vadd.f32 %v404, %v400
        %v406 = vadd.f32 %v405, %v401
        %v407 = vadd.f32 %v406, %v402
        %v408 = vadd.f32 %v407, %v403
        %409 = vadd.xlane.f32.xlu0 %v408
        %v410 = vpop.xlane.xlu0 %409
        %v411 = vmul.f32 %v410, %v390
        %v412 = vadd.f32 %v411, 1e-06
        %v413 = vrsqrt.pop %v412
        %v414 = vmul.f32 %v392, %v413
        %v415 = vmul.f32 %v393, %v413
        %v416 = vmul.f32 %v394, %v413
        %v417 = vmul.f32 %v395, %v413
        %v418 = vmul.f32 %v396, %v413
        %v419 = vmul.f32 %v397, %v413
        %v421 = vlaneseq
        %v422 = vshrl.u32 %v421, 7
        %v423 = vsub.s32 0, %v422
        %v424 = vrot.slane %v381, %v423
        %v425 = vlaneseq
        %v426 = vshrl.u32 %v425, 7
        %v427 = vsub.s32 1, %v426
        %v428 = vrot.slane %v381, %v427
        %v429 = vlaneseq
        %v430 = vshrl.u32 %v429, 7
        %v431 = vsub.s32 2, %v430
        %v432 = vrot.slane %v381, %v431
        %v433 = vlaneseq
        %v434 = vshrl.u32 %v433, 7
        %v435 = vsub.s32 3, %v434
        %v436 = vrot.slane %v381, %v435
        %v437 = vlaneseq
        %v438 = vshrl.u32 %v437, 7
        %v439 = vsub.s32 4, %v438
        %v440 = vrot.slane %v381, %v439
        %v441 = vlaneseq
        %v442 = vshrl.u32 %v441, 7
        %v443 = vsub.s32 5, %v442
        %v444 = vrot.slane %v381, %v443
        %v451 = vmul.f32 %v414, %v424
        %v452 = vmul.f32 %v415, %v428
        %v453 = vmul.f32 %v416, %v432
        %v454 = vmul.f32 %v417, %v436
        %v455 = vmul.f32 %v418, %v440
        %v456 = vmul.f32 %v419, %v444
        %v458 = vlaneseq
        %v459 = vshrl.u32 %v458, 7
        %v460 = vsub.s32 0, %v459
        %v461 = vrot.slane %v382, %v460
        %v462 = vlaneseq
        %v463 = vshrl.u32 %v462, 7
        %v464 = vsub.s32 1, %v463
        %v465 = vrot.slane %v382, %v464
        %v466 = vlaneseq
        %v467 = vshrl.u32 %v466, 7
        %v468 = vsub.s32 2, %v467
        %v469 = vrot.slane %v382, %v468
        %v470 = vlaneseq
        %v471 = vshrl.u32 %v470, 7
        %v472 = vsub.s32 3, %v471
        %v473 = vrot.slane %v382, %v472
        %v474 = vlaneseq
        %v475 = vshrl.u32 %v474, 7
        %v476 = vsub.s32 4, %v475
        %v477 = vrot.slane %v382, %v476
        %v478 = vlaneseq
        %v479 = vshrl.u32 %v478, 7
        %v480 = vsub.s32 5, %v479
        %v481 = vrot.slane %v382, %v480
        %v488 = vadd.f32 %v451, %v461
        %v489 = vadd.f32 %v452, %v465
        %v490 = vadd.f32 %v453, %v469
        %v491 = vadd.f32 %v454, %v473
        %v492 = vadd.f32 %v455, %v477
        %v493 = vadd.f32 %v456, %v481
        %v494 = vpack.c.bf16 %v488, %v488
        %v495 = vpack.c.bf16 %v489, %v489
        %v496 = vpack.c.bf16 %v490, %v490
        %v497 = vpack.c.bf16 %v491, %v491
        %v498 = vpack.c.bf16 %v492, %v492
        %v499 = vpack.c.bf16 %v493, %v493
        %v500 = vld [vmem:[#allocation8] sm:$0xff]
        %v501 = vld [vmem:[#allocation8 + $0x8] sm:$0xff]
        %v502 = vld [vmem:[#allocation8 + $0x10] sm:$0xff]
        %v503 = vld [vmem:[#allocation8 + $0x18] sm:$0xff]
        %v504 = vld [vmem:[#allocation8 + $0x20] sm:$0xff]
        %v505 = vld [vmem:[#allocation8 + $0x28] sm:$0xff]
        %v506 = vld [vmem:[#allocation8 + $0x30] sm:$0xff]
        %v507 = vld [vmem:[#allocation8 + $0x38] sm:$0xff]
        %v508 = vld [vmem:[#allocation8 + $0x40] sm:$0xff]
        %v509 = vld [vmem:[#allocation8 + $0x48] sm:$0xff]
        %v510 = vld [vmem:[#allocation8 + $0x50] sm:$0xff]
        %v511 = vld [vmem:[#allocation8 + $0x58] sm:$0xff]
        %v512 = vld [vmem:[#allocation8 + $0x60] sm:$0xff]
        %v513 = vld [vmem:[#allocation8 + $0x68] sm:$0xff]
        %v514 = vld [vmem:[#allocation8 + $0x70] sm:$0xff]
        %v515 = vld [vmem:[#allocation8 + $0x78] sm:$0xff]
        %v516 = vld [vmem:[#allocation8 + $0x80] sm:$0xff]
        %v517 = vld [vmem:[#allocation8 + $0x88] sm:$0xff]
        %v518 = vld [vmem:[#allocation8 + $0x90] sm:$0xff]
        %v519 = vld [vmem:[#allocation8 + $0x98] sm:$0xff]
        %v520 = vld [vmem:[#allocation8 + $0xa0] sm:$0xff]
        %v521 = vld [vmem:[#allocation8 + $0xa8] sm:$0xff]
        %v522 = vld [vmem:[#allocation8 + $0xb0] sm:$0xff]
        %v523 = vld [vmem:[#allocation8 + $0xb8] sm:$0xff]
        %v524 = vld [vmem:[#allocation8 + $0xc0] sm:$0xff]
        %v525 = vld [vmem:[#allocation8 + $0xc8] sm:$0xff]
        %v526 = vld [vmem:[#allocation8 + $0xd0] sm:$0xff]
        %v527 = vld [vmem:[#allocation8 + $0xd8] sm:$0xff]
        %v528 = vld [vmem:[#allocation8 + $0xe0] sm:$0xff]
        %v529 = vld [vmem:[#allocation8 + $0xe8] sm:$0xff]
        %v530 = vld [vmem:[#allocation8 + $0xf0] sm:$0xff]
        %v531 = vld [vmem:[#allocation8 + $0xf8] sm:$0xff]
        %v532 = vld [vmem:[#allocation8 + $0x100] sm:$0xff]
        %v533 = vld [vmem:[#allocation8 + $0x108] sm:$0xff]
        %v534 = vld [vmem:[#allocation8 + $0x110] sm:$0xff]
        %v535 = vld [vmem:[#allocation8 + $0x118] sm:$0xff]
        %v536 = vld [vmem:[#allocation8 + $0x120] sm:$0xff]
        %v537 = vld [vmem:[#allocation8 + $0x128] sm:$0xff]
        %v538 = vld [vmem:[#allocation8 + $0x130] sm:$0xff]
        %v539 = vld [vmem:[#allocation8 + $0x138] sm:$0xff]
        %v540 = vld [vmem:[#allocation8 + $0x140] sm:$0xff]
        %v541 = vld [vmem:[#allocation8 + $0x148] sm:$0xff]
        %v542 = vld [vmem:[#allocation8 + $0x150] sm:$0xff]
        %v543 = vld [vmem:[#allocation8 + $0x158] sm:$0xff]
        %v544 = vld [vmem:[#allocation8 + $0x160] sm:$0xff]
        %v545 = vld [vmem:[#allocation8 + $0x168] sm:$0xff]
        %v546 = vld [vmem:[#allocation8 + $0x170] sm:$0xff]
        %v547 = vld [vmem:[#allocation8 + $0x178] sm:$0xff]
        %v548 = vld [vmem:[#allocation8 + $0x180] sm:$0xff]
        %v549 = vld [vmem:[#allocation8 + $0x188] sm:$0xff]
        %v550 = vld [vmem:[#allocation8 + $0x190] sm:$0xff]
        %v551 = vld [vmem:[#allocation8 + $0x198] sm:$0xff]
        %v552 = vld [vmem:[#allocation8 + $0x1a0] sm:$0xff]
        %v553 = vld [vmem:[#allocation8 + $0x1a8] sm:$0xff]
        %v554 = vld [vmem:[#allocation8 + $0x1b0] sm:$0xff]
        %v555 = vld [vmem:[#allocation8 + $0x1b8] sm:$0xff]
        %v556 = vld [vmem:[#allocation8 + $0x1c0] sm:$0xff]
        %v557 = vld [vmem:[#allocation8 + $0x1c8] sm:$0xff]
        %v558 = vld [vmem:[#allocation8 + $0x1d0] sm:$0xff]
        %v559 = vld [vmem:[#allocation8 + $0x1d8] sm:$0xff]
        %v560 = vld [vmem:[#allocation8 + $0x1e0] sm:$0xff]
        %v561 = vld [vmem:[#allocation8 + $0x1e8] sm:$0xff]
        %v562 = vld [vmem:[#allocation8 + $0x1f0] sm:$0xff]
        %v563 = vld [vmem:[#allocation8 + $0x1f8] sm:$0xff]
        %v564 = vld [vmem:[#allocation8 + $0x200] sm:$0xff]
        %v565 = vld [vmem:[#allocation8 + $0x208] sm:$0xff]
        %v566 = vld [vmem:[#allocation8 + $0x210] sm:$0xff]
        %v567 = vld [vmem:[#allocation8 + $0x218] sm:$0xff]
        %v568 = vld [vmem:[#allocation8 + $0x220] sm:$0xff]
        %v569 = vld [vmem:[#allocation8 + $0x228] sm:$0xff]
        %v570 = vld [vmem:[#allocation8 + $0x230] sm:$0xff]
        %v571 = vld [vmem:[#allocation8 + $0x238] sm:$0xff]
        %v572 = vld [vmem:[#allocation8 + $0x240] sm:$0xff]
        %v573 = vld [vmem:[#allocation8 + $0x248] sm:$0xff]
        %v574 = vld [vmem:[#allocation8 + $0x250] sm:$0xff]
        %v575 = vld [vmem:[#allocation8 + $0x258] sm:$0xff]
        %v576 = vld [vmem:[#allocation8 + $0x260] sm:$0xff]
        %v577 = vld [vmem:[#allocation8 + $0x268] sm:$0xff]
        %v578 = vld [vmem:[#allocation8 + $0x270] sm:$0xff]
        %v579 = vld [vmem:[#allocation8 + $0x278] sm:$0xff]
        %v580 = vld [vmem:[#allocation8 + $0x280] sm:$0xff]
        %v581 = vld [vmem:[#allocation8 + $0x288] sm:$0xff]
        %v582 = vld [vmem:[#allocation8 + $0x290] sm:$0xff]
        %v583 = vld [vmem:[#allocation8 + $0x298] sm:$0xff]
        %v584 = vld [vmem:[#allocation8 + $0x2a0] sm:$0xff]
        %v585 = vld [vmem:[#allocation8 + $0x2a8] sm:$0xff]
        %v586 = vld [vmem:[#allocation8 + $0x2b0] sm:$0xff]
        %v587 = vld [vmem:[#allocation8 + $0x2b8] sm:$0xff]
        %v588 = vld [vmem:[#allocation8 + $0x2c0] sm:$0xff]
        %v589 = vld [vmem:[#allocation8 + $0x2c8] sm:$0xff]
        %v590 = vld [vmem:[#allocation8 + $0x2d0] sm:$0xff]
        %v591 = vld [vmem:[#allocation8 + $0x2d8] sm:$0xff]
        %v592 = vld [vmem:[#allocation8 + $0x2e0] sm:$0xff]
        %v593 = vld [vmem:[#allocation8 + $0x2e8] sm:$0xff]
        %v594 = vld [vmem:[#allocation8 + $0x2f0] sm:$0xff]
        %v595 = vld [vmem:[#allocation8 + $0x2f8] sm:$0xff]
        %v596 = vld [vmem:[#allocation8 + $0x300] sm:$0xff]
        %v597 = vld [vmem:[#allocation8 + $0x308] sm:$0xff]
        %v598 = vld [vmem:[#allocation8 + $0x310] sm:$0xff]
        %v599 = vld [vmem:[#allocation8 + $0x318] sm:$0xff]
        %v600 = vld [vmem:[#allocation8 + $0x320] sm:$0xff]
        %v601 = vld [vmem:[#allocation8 + $0x328] sm:$0xff]
        %v602 = vld [vmem:[#allocation8 + $0x330] sm:$0xff]
        %v603 = vld [vmem:[#allocation8 + $0x338] sm:$0xff]
        %v604 = vld [vmem:[#allocation8 + $0x340] sm:$0xff]
        %v605 = vld [vmem:[#allocation8 + $0x348] sm:$0xff]
        %v606 = vld [vmem:[#allocation8 + $0x350] sm:$0xff]
        %v607 = vld [vmem:[#allocation8 + $0x358] sm:$0xff]
        %v608 = vld [vmem:[#allocation8 + $0x360] sm:$0xff]
        %v609 = vld [vmem:[#allocation8 + $0x368] sm:$0xff]
        %v610 = vld [vmem:[#allocation8 + $0x370] sm:$0xff]
        %v611 = vld [vmem:[#allocation8 + $0x378] sm:$0xff]
        %v612 = vld [vmem:[#allocation8 + $0x380] sm:$0xff]
        %v613 = vld [vmem:[#allocation8 + $0x388] sm:$0xff]
        %v614 = vld [vmem:[#allocation8 + $0x390] sm:$0xff]
        %v615 = vld [vmem:[#allocation8 + $0x398] sm:$0xff]
        %v616 = vld [vmem:[#allocation8 + $0x3a0] sm:$0xff]
        %v617 = vld [vmem:[#allocation8 + $0x3a8] sm:$0xff]
        %v618 = vld [vmem:[#allocation8 + $0x3b0] sm:$0xff]
        %v619 = vld [vmem:[#allocation8 + $0x3b8] sm:$0xff]
        %v620 = vld [vmem:[#allocation8 + $0x3c0] sm:$0xff]
        %v621 = vld [vmem:[#allocation8 + $0x3c8] sm:$0xff]
        %v622 = vld [vmem:[#allocation8 + $0x3d0] sm:$0xff]
        %v623 = vld [vmem:[#allocation8 + $0x3d8] sm:$0xff]
        %v624 = vld [vmem:[#allocation8 + $0x3e0] sm:$0xff]
        %v625 = vld [vmem:[#allocation8 + $0x3e8] sm:$0xff]
        %v626 = vld [vmem:[#allocation8 + $0x3f0] sm:$0xff]
        %v627 = vld [vmem:[#allocation8 + $0x3f8] sm:$0xff]
        %v628 = vld [vmem:[#allocation8 + $0x400] sm:$0xff]
        %v629 = vld [vmem:[#allocation8 + $0x408] sm:$0xff]
        %v630 = vld [vmem:[#allocation8 + $0x410] sm:$0xff]
        %v631 = vld [vmem:[#allocation8 + $0x418] sm:$0xff]
        %v632 = vld [vmem:[#allocation8 + $0x420] sm:$0xff]
        %v633 = vld [vmem:[#allocation8 + $0x428] sm:$0xff]
        %v634 = vld [vmem:[#allocation8 + $0x430] sm:$0xff]
        %v635 = vld [vmem:[#allocation8 + $0x438] sm:$0xff]
        %v636 = vld [vmem:[#allocation8 + $0x440] sm:$0xff]
        %v637 = vld [vmem:[#allocation8 + $0x448] sm:$0xff]
        %v638 = vld [vmem:[#allocation8 + $0x450] sm:$0xff]
        %v639 = vld [vmem:[#allocation8 + $0x458] sm:$0xff]
        %v640 = vld [vmem:[#allocation8 + $0x460] sm:$0xff]
        %v641 = vld [vmem:[#allocation8 + $0x468] sm:$0xff]
        %v642 = vld [vmem:[#allocation8 + $0x470] sm:$0xff]
        %v643 = vld [vmem:[#allocation8 + $0x478] sm:$0xff]
        %v644 = vld [vmem:[#allocation8 + $0x480] sm:$0xff]
        %v645 = vld [vmem:[#allocation8 + $0x488] sm:$0xff]
        %v646 = vld [vmem:[#allocation8 + $0x490] sm:$0xff]
        %v647 = vld [vmem:[#allocation8 + $0x498] sm:$0xff]
        %v648 = vld [vmem:[#allocation8 + $0x4a0] sm:$0xff]
        %v649 = vld [vmem:[#allocation8 + $0x4a8] sm:$0xff]
        %v650 = vld [vmem:[#allocation8 + $0x4b0] sm:$0xff]
        %v651 = vld [vmem:[#allocation8 + $0x4b8] sm:$0xff]
        %v652 = vld [vmem:[#allocation8 + $0x4c0] sm:$0xff]
        %v653 = vld [vmem:[#allocation8 + $0x4c8] sm:$0xff]
        %v654 = vld [vmem:[#allocation8 + $0x4d0] sm:$0xff]
        %v655 = vld [vmem:[#allocation8 + $0x4d8] sm:$0xff]
        %v656 = vld [vmem:[#allocation8 + $0x4e0] sm:$0xff]
        %v657 = vld [vmem:[#allocation8 + $0x4e8] sm:$0xff]
        %v658 = vld [vmem:[#allocation8 + $0x4f0] sm:$0xff]
        %v659 = vld [vmem:[#allocation8 + $0x4f8] sm:$0xff]
        %v660 = vld [vmem:[#allocation8 + $0x500] sm:$0xff]
        %v661 = vld [vmem:[#allocation8 + $0x508] sm:$0xff]
        %v662 = vld [vmem:[#allocation8 + $0x510] sm:$0xff]
        %v663 = vld [vmem:[#allocation8 + $0x518] sm:$0xff]
        %v664 = vld [vmem:[#allocation8 + $0x520] sm:$0xff]
        %v665 = vld [vmem:[#allocation8 + $0x528] sm:$0xff]
        %v666 = vld [vmem:[#allocation8 + $0x530] sm:$0xff]
        %v667 = vld [vmem:[#allocation8 + $0x538] sm:$0xff]
        %v668 = vld [vmem:[#allocation8 + $0x540] sm:$0xff]
        %v669 = vld [vmem:[#allocation8 + $0x548] sm:$0xff]
        %v670 = vld [vmem:[#allocation8 + $0x550] sm:$0xff]
        %v671 = vld [vmem:[#allocation8 + $0x558] sm:$0xff]
        %v672 = vld [vmem:[#allocation8 + $0x560] sm:$0xff]
        %v673 = vld [vmem:[#allocation8 + $0x568] sm:$0xff]
        %v674 = vld [vmem:[#allocation8 + $0x570] sm:$0xff]
        %v675 = vld [vmem:[#allocation8 + $0x578] sm:$0xff]
        %v676 = vld [vmem:[#allocation8 + $0x580] sm:$0xff]
        %v677 = vld [vmem:[#allocation8 + $0x588] sm:$0xff]
        %v678 = vld [vmem:[#allocation8 + $0x590] sm:$0xff]
        %v679 = vld [vmem:[#allocation8 + $0x598] sm:$0xff]
        %v680 = vld [vmem:[#allocation8 + $0x5a0] sm:$0xff]
        %v681 = vld [vmem:[#allocation8 + $0x5a8] sm:$0xff]
        %v682 = vld [vmem:[#allocation8 + $0x5b0] sm:$0xff]
        %v683 = vld [vmem:[#allocation8 + $0x5b8] sm:$0xff]
        %v684 = vld [vmem:[#allocation8 + $0x5c0] sm:$0xff]
        %v685 = vld [vmem:[#allocation8 + $0x5c8] sm:$0xff]
        %v686 = vld [vmem:[#allocation8 + $0x5d0] sm:$0xff]
        %v687 = vld [vmem:[#allocation8 + $0x5d8] sm:$0xff]
        %v688 = vld [vmem:[#allocation8 + $0x5e0] sm:$0xff]
        %v689 = vld [vmem:[#allocation8 + $0x5e8] sm:$0xff]
        %v690 = vld [vmem:[#allocation8 + $0x5f0] sm:$0xff]
        %v691 = vld [vmem:[#allocation8 + $0x5f8] sm:$0xff]
        %v692 = vld [vmem:[#allocation8 + $0x600] sm:$0xff]
        %v693 = vld [vmem:[#allocation8 + $0x608] sm:$0xff]
        %v694 = vld [vmem:[#allocation8 + $0x610] sm:$0xff]
        %v695 = vld [vmem:[#allocation8 + $0x618] sm:$0xff]
        %v696 = vld [vmem:[#allocation8 + $0x620] sm:$0xff]
        %v697 = vld [vmem:[#allocation8 + $0x628] sm:$0xff]
        %v698 = vld [vmem:[#allocation8 + $0x630] sm:$0xff]
        %v699 = vld [vmem:[#allocation8 + $0x638] sm:$0xff]
        %v700 = vld [vmem:[#allocation8 + $0x640] sm:$0xff]
        %v701 = vld [vmem:[#allocation8 + $0x648] sm:$0xff]
        %v702 = vld [vmem:[#allocation8 + $0x650] sm:$0xff]
        %v703 = vld [vmem:[#allocation8 + $0x658] sm:$0xff]
        %v704 = vld [vmem:[#allocation8 + $0x660] sm:$0xff]
        %v705 = vld [vmem:[#allocation8 + $0x668] sm:$0xff]
        %v706 = vld [vmem:[#allocation8 + $0x670] sm:$0xff]
        %v707 = vld [vmem:[#allocation8 + $0x678] sm:$0xff]
        %v708 = vld [vmem:[#allocation8 + $0x680] sm:$0xff]
        %v709 = vld [vmem:[#allocation8 + $0x688] sm:$0xff]
        %v710 = vld [vmem:[#allocation8 + $0x690] sm:$0xff]
        %v711 = vld [vmem:[#allocation8 + $0x698] sm:$0xff]
        %v712 = vld [vmem:[#allocation8 + $0x6a0] sm:$0xff]
        %v713 = vld [vmem:[#allocation8 + $0x6a8] sm:$0xff]
        %v714 = vld [vmem:[#allocation8 + $0x6b0] sm:$0xff]
        %v715 = vld [vmem:[#allocation8 + $0x6b8] sm:$0xff]
        %v716 = vld [vmem:[#allocation8 + $0x6c0] sm:$0xff]
        %v717 = vld [vmem:[#allocation8 + $0x6c8] sm:$0xff]
        %v718 = vld [vmem:[#allocation8 + $0x6d0] sm:$0xff]
        %v719 = vld [vmem:[#allocation8 + $0x6d8] sm:$0xff]
        %v720 = vld [vmem:[#allocation8 + $0x6e0] sm:$0xff]
        %v721 = vld [vmem:[#allocation8 + $0x6e8] sm:$0xff]
        %v722 = vld [vmem:[#allocation8 + $0x6f0] sm:$0xff]
        %v723 = vld [vmem:[#allocation8 + $0x6f8] sm:$0xff]
        %v724 = vld [vmem:[#allocation8 + $0x700] sm:$0xff]
        %v725 = vld [vmem:[#allocation8 + $0x708] sm:$0xff]
        %v726 = vld [vmem:[#allocation8 + $0x710] sm:$0xff]
        %v727 = vld [vmem:[#allocation8 + $0x718] sm:$0xff]
        %v728 = vld [vmem:[#allocation8 + $0x720] sm:$0xff]
        %v729 = vld [vmem:[#allocation8 + $0x728] sm:$0xff]
        %v730 = vld [vmem:[#allocation8 + $0x730] sm:$0xff]
        %v731 = vld [vmem:[#allocation8 + $0x738] sm:$0xff]
        %v732 = vld [vmem:[#allocation8 + $0x740] sm:$0xff]
        %v733 = vld [vmem:[#allocation8 + $0x748] sm:$0xff]
        %v734 = vld [vmem:[#allocation8 + $0x750] sm:$0xff]
        %v735 = vld [vmem:[#allocation8 + $0x758] sm:$0xff]
        %v736 = vld [vmem:[#allocation8 + $0x760] sm:$0xff]
        %v737 = vld [vmem:[#allocation8 + $0x768] sm:$0xff]
        %v738 = vld [vmem:[#allocation8 + $0x770] sm:$0xff]
        %v739 = vld [vmem:[#allocation8 + $0x778] sm:$0xff]
        %v740 = vld [vmem:[#allocation8 + $0x780] sm:$0xff]
        %v741 = vld [vmem:[#allocation8 + $0x788] sm:$0xff]
        %v742 = vld [vmem:[#allocation8 + $0x790] sm:$0xff]
        %v743 = vld [vmem:[#allocation8 + $0x798] sm:$0xff]
        %v744 = vld [vmem:[#allocation8 + $0x7a0] sm:$0xff]
        %v745 = vld [vmem:[#allocation8 + $0x7a8] sm:$0xff]
        %v746 = vld [vmem:[#allocation8 + $0x7b0] sm:$0xff]
        %v747 = vld [vmem:[#allocation8 + $0x7b8] sm:$0xff]
        %v748 = vld [vmem:[#allocation8 + $0x7c0] sm:$0xff]
        %v749 = vld [vmem:[#allocation8 + $0x7c8] sm:$0xff]
        %v750 = vld [vmem:[#allocation8 + $0x7d0] sm:$0xff]
        %v751 = vld [vmem:[#allocation8 + $0x7d8] sm:$0xff]
        %v752 = vld [vmem:[#allocation8 + $0x7e0] sm:$0xff]
        %v753 = vld [vmem:[#allocation8 + $0x7e8] sm:$0xff]
        %v754 = vld [vmem:[#allocation8 + $0x7f0] sm:$0xff]
        %v755 = vld [vmem:[#allocation8 + $0x7f8] sm:$0xff]
        %v756 = vld [vmem:[#allocation8 + $0x800] sm:$0xff]
        %v757 = vld [vmem:[#allocation8 + $0x808] sm:$0xff]
        %v758 = vld [vmem:[#allocation8 + $0x810] sm:$0xff]
        %v759 = vld [vmem:[#allocation8 + $0x818] sm:$0xff]
        %v760 = vld [vmem:[#allocation8 + $0x820] sm:$0xff]
        %v761 = vld [vmem:[#allocation8 + $0x828] sm:$0xff]
        %v762 = vld [vmem:[#allocation8 + $0x830] sm:$0xff]
        %v763 = vld [vmem:[#allocation8 + $0x838] sm:$0xff]
        %v764 = vld [vmem:[#allocation8 + $0x840] sm:$0xff]
        %v765 = vld [vmem:[#allocation8 + $0x848] sm:$0xff]
        %v766 = vld [vmem:[#allocation8 + $0x850] sm:$0xff]
        %v767 = vld [vmem:[#allocation8 + $0x858] sm:$0xff]
        %v768 = vld [vmem:[#allocation8 + $0x860] sm:$0xff]
        %v769 = vld [vmem:[#allocation8 + $0x868] sm:$0xff]
        %v770 = vld [vmem:[#allocation8 + $0x870] sm:$0xff]
        %v771 = vld [vmem:[#allocation8 + $0x878] sm:$0xff]
        %v772 = vld [vmem:[#allocation8 + $0x880] sm:$0xff]
        %v773 = vld [vmem:[#allocation8 + $0x888] sm:$0xff]
        %v774 = vld [vmem:[#allocation8 + $0x890] sm:$0xff]
        %v775 = vld [vmem:[#allocation8 + $0x898] sm:$0xff]
        %v776 = vld [vmem:[#allocation8 + $0x8a0] sm:$0xff]
        %v777 = vld [vmem:[#allocation8 + $0x8a8] sm:$0xff]
        %v778 = vld [vmem:[#allocation8 + $0x8b0] sm:$0xff]
        %v779 = vld [vmem:[#allocation8 + $0x8b8] sm:$0xff]
        %v780 = vld [vmem:[#allocation8 + $0x8c0] sm:$0xff]
        %v781 = vld [vmem:[#allocation8 + $0x8c8] sm:$0xff]
        %v782 = vld [vmem:[#allocation8 + $0x8d0] sm:$0xff]
        %v783 = vld [vmem:[#allocation8 + $0x8d8] sm:$0xff]
        %v784 = vld [vmem:[#allocation8 + $0x8e0] sm:$0xff]
        %v785 = vld [vmem:[#allocation8 + $0x8e8] sm:$0xff]
        %v786 = vld [vmem:[#allocation8 + $0x8f0] sm:$0xff]
        %v787 = vld [vmem:[#allocation8 + $0x8f8] sm:$0xff]
        %v788 = vld [vmem:[#allocation8 + $0x900] sm:$0xff]
        %v789 = vld [vmem:[#allocation8 + $0x908] sm:$0xff]
        %v790 = vld [vmem:[#allocation8 + $0x910] sm:$0xff]
        %v791 = vld [vmem:[#allocation8 + $0x918] sm:$0xff]
        %v792 = vld [vmem:[#allocation8 + $0x920] sm:$0xff]
        %v793 = vld [vmem:[#allocation8 + $0x928] sm:$0xff]
        %v794 = vld [vmem:[#allocation8 + $0x930] sm:$0xff]
        %v795 = vld [vmem:[#allocation8 + $0x938] sm:$0xff]
        %v796 = vld [vmem:[#allocation8 + $0x940] sm:$0xff]
        %v797 = vld [vmem:[#allocation8 + $0x948] sm:$0xff]
        %v798 = vld [vmem:[#allocation8 + $0x950] sm:$0xff]
        %v799 = vld [vmem:[#allocation8 + $0x958] sm:$0xff]
        %v800 = vld [vmem:[#allocation8 + $0x960] sm:$0xff]
        %v801 = vld [vmem:[#allocation8 + $0x968] sm:$0xff]
        %v802 = vld [vmem:[#allocation8 + $0x970] sm:$0xff]
        %v803 = vld [vmem:[#allocation8 + $0x978] sm:$0xff]
        %v804 = vld [vmem:[#allocation8 + $0x980] sm:$0xff]
        %v805 = vld [vmem:[#allocation8 + $0x988] sm:$0xff]
        %v806 = vld [vmem:[#allocation8 + $0x990] sm:$0xff]
        %v807 = vld [vmem:[#allocation8 + $0x998] sm:$0xff]
        %v808 = vld [vmem:[#allocation8 + $0x9a0] sm:$0xff]
        %v809 = vld [vmem:[#allocation8 + $0x9a8] sm:$0xff]
        %v810 = vld [vmem:[#allocation8 + $0x9b0] sm:$0xff]
        %v811 = vld [vmem:[#allocation8 + $0x9b8] sm:$0xff]
        %v812 = vld [vmem:[#allocation8 + $0x9c0] sm:$0xff]
        %v813 = vld [vmem:[#allocation8 + $0x9c8] sm:$0xff]
        %v814 = vld [vmem:[#allocation8 + $0x9d0] sm:$0xff]
        %v815 = vld [vmem:[#allocation8 + $0x9d8] sm:$0xff]
        %v816 = vld [vmem:[#allocation8 + $0x9e0] sm:$0xff]
        %v817 = vld [vmem:[#allocation8 + $0x9e8] sm:$0xff]
        %v818 = vld [vmem:[#allocation8 + $0x9f0] sm:$0xff]
        %v819 = vld [vmem:[#allocation8 + $0x9f8] sm:$0xff]
        %v820 = vld [vmem:[#allocation8 + $0xa00] sm:$0xff]
        %v821 = vld [vmem:[#allocation8 + $0xa08] sm:$0xff]
        %v822 = vld [vmem:[#allocation8 + $0xa10] sm:$0xff]
        %v823 = vld [vmem:[#allocation8 + $0xa18] sm:$0xff]
        %v824 = vld [vmem:[#allocation8 + $0xa20] sm:$0xff]
        %v825 = vld [vmem:[#allocation8 + $0xa28] sm:$0xff]
        %v826 = vld [vmem:[#allocation8 + $0xa30] sm:$0xff]
        %v827 = vld [vmem:[#allocation8 + $0xa38] sm:$0xff]
        %v828 = vld [vmem:[#allocation8 + $0xa40] sm:$0xff]
        %v829 = vld [vmem:[#allocation8 + $0xa48] sm:$0xff]
        %v830 = vld [vmem:[#allocation8 + $0xa50] sm:$0xff]
        %v831 = vld [vmem:[#allocation8 + $0xa58] sm:$0xff]
        %v832 = vld [vmem:[#allocation8 + $0xa60] sm:$0xff]
        %v833 = vld [vmem:[#allocation8 + $0xa68] sm:$0xff]
        %v834 = vld [vmem:[#allocation8 + $0xa70] sm:$0xff]
        %v835 = vld [vmem:[#allocation8 + $0xa78] sm:$0xff]
        %v836 = vld [vmem:[#allocation8 + $0xa80] sm:$0xff]
        %v837 = vld [vmem:[#allocation8 + $0xa88] sm:$0xff]
        %v838 = vld [vmem:[#allocation8 + $0xa90] sm:$0xff]
        %v839 = vld [vmem:[#allocation8 + $0xa98] sm:$0xff]
        %v840 = vld [vmem:[#allocation8 + $0xaa0] sm:$0xff]
        %v841 = vld [vmem:[#allocation8 + $0xaa8] sm:$0xff]
        %v842 = vld [vmem:[#allocation8 + $0xab0] sm:$0xff]
        %v843 = vld [vmem:[#allocation8 + $0xab8] sm:$0xff]
        %v844 = vld [vmem:[#allocation8 + $0xac0] sm:$0xff]
        %v845 = vld [vmem:[#allocation8 + $0xac8] sm:$0xff]
        %v846 = vld [vmem:[#allocation8 + $0xad0] sm:$0xff]
        %v847 = vld [vmem:[#allocation8 + $0xad8] sm:$0xff]
        %v848 = vld [vmem:[#allocation8 + $0xae0] sm:$0xff]
        %v849 = vld [vmem:[#allocation8 + $0xae8] sm:$0xff]
        %v850 = vld [vmem:[#allocation8 + $0xaf0] sm:$0xff]
        %v851 = vld [vmem:[#allocation8 + $0xaf8] sm:$0xff]
        %v852 = vld [vmem:[#allocation8 + $0xb00] sm:$0xff]
        %v853 = vld [vmem:[#allocation8 + $0xb08] sm:$0xff]
        %v854 = vld [vmem:[#allocation8 + $0xb10] sm:$0xff]
        %v855 = vld [vmem:[#allocation8 + $0xb18] sm:$0xff]
        %v856 = vld [vmem:[#allocation8 + $0xb20] sm:$0xff]
        %v857 = vld [vmem:[#allocation8 + $0xb28] sm:$0xff]
        %v858 = vld [vmem:[#allocation8 + $0xb30] sm:$0xff]
        %v859 = vld [vmem:[#allocation8 + $0xb38] sm:$0xff]
        %v860 = vld [vmem:[#allocation8 + $0xb40] sm:$0xff]
        %v861 = vld [vmem:[#allocation8 + $0xb48] sm:$0xff]
        %v862 = vld [vmem:[#allocation8 + $0xb50] sm:$0xff]
        %v863 = vld [vmem:[#allocation8 + $0xb58] sm:$0xff]
        %v864 = vld [vmem:[#allocation8 + $0xb60] sm:$0xff]
        %v865 = vld [vmem:[#allocation8 + $0xb68] sm:$0xff]
        %v866 = vld [vmem:[#allocation8 + $0xb70] sm:$0xff]
        %v867 = vld [vmem:[#allocation8 + $0xb78] sm:$0xff]
        %v868 = vld [vmem:[#allocation8 + $0xb80] sm:$0xff]
        %v869 = vld [vmem:[#allocation8 + $0xb88] sm:$0xff]
        %v870 = vld [vmem:[#allocation8 + $0xb90] sm:$0xff]
        %v871 = vld [vmem:[#allocation8 + $0xb98] sm:$0xff]
        %v872 = vld [vmem:[#allocation8 + $0xba0] sm:$0xff]
        %v873 = vld [vmem:[#allocation8 + $0xba8] sm:$0xff]
        %v874 = vld [vmem:[#allocation8 + $0xbb0] sm:$0xff]
        %v875 = vld [vmem:[#allocation8 + $0xbb8] sm:$0xff]
        %v876 = vld [vmem:[#allocation8 + $0xbc0] sm:$0xff]
        %v877 = vld [vmem:[#allocation8 + $0xbc8] sm:$0xff]
        %v878 = vld [vmem:[#allocation8 + $0xbd0] sm:$0xff]
        %v879 = vld [vmem:[#allocation8 + $0xbd8] sm:$0xff]
        %v880 = vld [vmem:[#allocation8 + $0xbe0] sm:$0xff]
        %v881 = vld [vmem:[#allocation8 + $0xbe8] sm:$0xff]
        %v882 = vld [vmem:[#allocation8 + $0xbf0] sm:$0xff]
        %v883 = vld [vmem:[#allocation8 + $0xbf8] sm:$0xff]
        %v884 = vld [vmem:[#allocation8 + $0xc00] sm:$0xff]
        %v885 = vld [vmem:[#allocation8 + $0xc08] sm:$0xff]
        %v886 = vld [vmem:[#allocation8 + $0xc10] sm:$0xff]
        %v887 = vld [vmem:[#allocation8 + $0xc18] sm:$0xff]
        %v888 = vld [vmem:[#allocation8 + $0xc20] sm:$0xff]
        %v889 = vld [vmem:[#allocation8 + $0xc28] sm:$0xff]
        %v890 = vld [vmem:[#allocation8 + $0xc30] sm:$0xff]
        %v891 = vld [vmem:[#allocation8 + $0xc38] sm:$0xff]
        %v892 = vld [vmem:[#allocation8 + $0xc40] sm:$0xff]
        %v893 = vld [vmem:[#allocation8 + $0xc48] sm:$0xff]
        %v894 = vld [vmem:[#allocation8 + $0xc50] sm:$0xff]
        %v895 = vld [vmem:[#allocation8 + $0xc58] sm:$0xff]
        %v896 = vld [vmem:[#allocation8 + $0xc60] sm:$0xff]
        %v897 = vld [vmem:[#allocation8 + $0xc68] sm:$0xff]
        %v898 = vld [vmem:[#allocation8 + $0xc70] sm:$0xff]
        %v899 = vld [vmem:[#allocation8 + $0xc78] sm:$0xff]
        %v900 = vld [vmem:[#allocation8 + $0xc80] sm:$0xff]
        %v901 = vld [vmem:[#allocation8 + $0xc88] sm:$0xff]
        %v902 = vld [vmem:[#allocation8 + $0xc90] sm:$0xff]
        %v903 = vld [vmem:[#allocation8 + $0xc98] sm:$0xff]
        %v904 = vld [vmem:[#allocation8 + $0xca0] sm:$0xff]
        %v905 = vld [vmem:[#allocation8 + $0xca8] sm:$0xff]
        %v906 = vld [vmem:[#allocation8 + $0xcb0] sm:$0xff]
        %v907 = vld [vmem:[#allocation8 + $0xcb8] sm:$0xff]
        %v908 = vld [vmem:[#allocation8 + $0xcc0] sm:$0xff]
        %v909 = vld [vmem:[#allocation8 + $0xcc8] sm:$0xff]
        %v910 = vld [vmem:[#allocation8 + $0xcd0] sm:$0xff]
        %v911 = vld [vmem:[#allocation8 + $0xcd8] sm:$0xff]
        %v912 = vld [vmem:[#allocation8 + $0xce0] sm:$0xff]
        %v913 = vld [vmem:[#allocation8 + $0xce8] sm:$0xff]
        %v914 = vld [vmem:[#allocation8 + $0xcf0] sm:$0xff]
        %v915 = vld [vmem:[#allocation8 + $0xcf8] sm:$0xff]
        %v916 = vld [vmem:[#allocation8 + $0xd00] sm:$0xff]
        %v917 = vld [vmem:[#allocation8 + $0xd08] sm:$0xff]
        %v918 = vld [vmem:[#allocation8 + $0xd10] sm:$0xff]
        %v919 = vld [vmem:[#allocation8 + $0xd18] sm:$0xff]
        %v920 = vld [vmem:[#allocation8 + $0xd20] sm:$0xff]
        %v921 = vld [vmem:[#allocation8 + $0xd28] sm:$0xff]
        %v922 = vld [vmem:[#allocation8 + $0xd30] sm:$0xff]
        %v923 = vld [vmem:[#allocation8 + $0xd38] sm:$0xff]
        %v924 = vld [vmem:[#allocation8 + $0xd40] sm:$0xff]
        %v925 = vld [vmem:[#allocation8 + $0xd48] sm:$0xff]
        %v926 = vld [vmem:[#allocation8 + $0xd50] sm:$0xff]
        %v927 = vld [vmem:[#allocation8 + $0xd58] sm:$0xff]
        %v928 = vld [vmem:[#allocation8 + $0xd60] sm:$0xff]
        %v929 = vld [vmem:[#allocation8 + $0xd68] sm:$0xff]
        %v930 = vld [vmem:[#allocation8 + $0xd70] sm:$0xff]
        %v931 = vld [vmem:[#allocation8 + $0xd78] sm:$0xff]
        %v932 = vld [vmem:[#allocation8 + $0xd80] sm:$0xff]
        %v933 = vld [vmem:[#allocation8 + $0xd88] sm:$0xff]
        %v934 = vld [vmem:[#allocation8 + $0xd90] sm:$0xff]
        %v935 = vld [vmem:[#allocation8 + $0xd98] sm:$0xff]
        %v936 = vld [vmem:[#allocation8 + $0xda0] sm:$0xff]
        %v937 = vld [vmem:[#allocation8 + $0xda8] sm:$0xff]
        %v938 = vld [vmem:[#allocation8 + $0xdb0] sm:$0xff]
        %v939 = vld [vmem:[#allocation8 + $0xdb8] sm:$0xff]
        %v940 = vld [vmem:[#allocation8 + $0xdc0] sm:$0xff]
        %v941 = vld [vmem:[#allocation8 + $0xdc8] sm:$0xff]
        %v942 = vld [vmem:[#allocation8 + $0xdd0] sm:$0xff]
        %v943 = vld [vmem:[#allocation8 + $0xdd8] sm:$0xff]
        %v944 = vld [vmem:[#allocation8 + $0xde0] sm:$0xff]
        %v945 = vld [vmem:[#allocation8 + $0xde8] sm:$0xff]
        %v946 = vld [vmem:[#allocation8 + $0xdf0] sm:$0xff]
        %v947 = vld [vmem:[#allocation8 + $0xdf8] sm:$0xff]
        %v948 = vld [vmem:[#allocation8 + $0xe00] sm:$0xff]
        %v949 = vld [vmem:[#allocation8 + $0xe08] sm:$0xff]
        %v950 = vld [vmem:[#allocation8 + $0xe10] sm:$0xff]
        %v951 = vld [vmem:[#allocation8 + $0xe18] sm:$0xff]
        %v952 = vld [vmem:[#allocation8 + $0xe20] sm:$0xff]
        %v953 = vld [vmem:[#allocation8 + $0xe28] sm:$0xff]
        %v954 = vld [vmem:[#allocation8 + $0xe30] sm:$0xff]
        %v955 = vld [vmem:[#allocation8 + $0xe38] sm:$0xff]
        %v956 = vld [vmem:[#allocation8 + $0xe40] sm:$0xff]
        %v957 = vld [vmem:[#allocation8 + $0xe48] sm:$0xff]
        %v958 = vld [vmem:[#allocation8 + $0xe50] sm:$0xff]
        %v959 = vld [vmem:[#allocation8 + $0xe58] sm:$0xff]
        %v960 = vld [vmem:[#allocation8 + $0xe60] sm:$0xff]
        %v961 = vld [vmem:[#allocation8 + $0xe68] sm:$0xff]
        %v962 = vld [vmem:[#allocation8 + $0xe70] sm:$0xff]
        %v963 = vld [vmem:[#allocation8 + $0xe78] sm:$0xff]
        %v964 = vld [vmem:[#allocation8 + $0xe80] sm:$0xff]
        %v965 = vld [vmem:[#allocation8 + $0xe88] sm:$0xff]
        %v966 = vld [vmem:[#allocation8 + $0xe90] sm:$0xff]
        %v967 = vld [vmem:[#allocation8 + $0xe98] sm:$0xff]
        %v968 = vld [vmem:[#allocation8 + $0xea0] sm:$0xff]
        %v969 = vld [vmem:[#allocation8 + $0xea8] sm:$0xff]
        %v970 = vld [vmem:[#allocation8 + $0xeb0] sm:$0xff]
        %v971 = vld [vmem:[#allocation8 + $0xeb8] sm:$0xff]
        %v972 = vld [vmem:[#allocation8 + $0xec0] sm:$0xff]
        %v973 = vld [vmem:[#allocation8 + $0xec8] sm:$0xff]
        %v974 = vld [vmem:[#allocation8 + $0xed0] sm:$0xff]
        %v975 = vld [vmem:[#allocation8 + $0xed8] sm:$0xff]
        %v976 = vld [vmem:[#allocation8 + $0xee0] sm:$0xff]
        %v977 = vld [vmem:[#allocation8 + $0xee8] sm:$0xff]
        %v978 = vld [vmem:[#allocation8 + $0xef0] sm:$0xff]
        %v979 = vld [vmem:[#allocation8 + $0xef8] sm:$0xff]
        %v980 = vld [vmem:[#allocation8 + $0xf00] sm:$0xff]
        %v981 = vld [vmem:[#allocation8 + $0xf08] sm:$0xff]
        %v982 = vld [vmem:[#allocation8 + $0xf10] sm:$0xff]
        %v983 = vld [vmem:[#allocation8 + $0xf18] sm:$0xff]
        %v984 = vld [vmem:[#allocation8 + $0xf20] sm:$0xff]
        %v985 = vld [vmem:[#allocation8 + $0xf28] sm:$0xff]
        %v986 = vld [vmem:[#allocation8 + $0xf30] sm:$0xff]
        %v987 = vld [vmem:[#allocation8 + $0xf38] sm:$0xff]
        %v988 = vld [vmem:[#allocation8 + $0xf40] sm:$0xff]
        %v989 = vld [vmem:[#allocation8 + $0xf48] sm:$0xff]
        %v990 = vld [vmem:[#allocation8 + $0xf50] sm:$0xff]
        %v991 = vld [vmem:[#allocation8 + $0xf58] sm:$0xff]
        %v992 = vld [vmem:[#allocation8 + $0xf60] sm:$0xff]
        %v993 = vld [vmem:[#allocation8 + $0xf68] sm:$0xff]
        %v994 = vld [vmem:[#allocation8 + $0xf70] sm:$0xff]
        %v995 = vld [vmem:[#allocation8 + $0xf78] sm:$0xff]
        %v996 = vld [vmem:[#allocation8 + $0xf80] sm:$0xff]
        %v997 = vld [vmem:[#allocation8 + $0xf88] sm:$0xff]
        %v998 = vld [vmem:[#allocation8 + $0xf90] sm:$0xff]
        %v999 = vld [vmem:[#allocation8 + $0xf98] sm:$0xff]
        %v1000 = vld [vmem:[#allocation8 + $0xfa0] sm:$0xff]
        %v1001 = vld [vmem:[#allocation8 + $0xfa8] sm:$0xff]
        %v1002 = vld [vmem:[#allocation8 + $0xfb0] sm:$0xff]
        %v1003 = vld [vmem:[#allocation8 + $0xfb8] sm:$0xff]
        %v1004 = vld [vmem:[#allocation8 + $0xfc0] sm:$0xff]
        %v1005 = vld [vmem:[#allocation8 + $0xfc8] sm:$0xff]
        %v1006 = vld [vmem:[#allocation8 + $0xfd0] sm:$0xff]
        %v1007 = vld [vmem:[#allocation8 + $0xfd8] sm:$0xff]
        %v1008 = vld [vmem:[#allocation8 + $0xfe0] sm:$0xff]
        %v1009 = vld [vmem:[#allocation8 + $0xfe8] sm:$0xff]
        %v1010 = vld [vmem:[#allocation8 + $0xff0] sm:$0xff]
        %v1011 = vld [vmem:[#allocation8 + $0xff8] sm:$0xff]
        %v1012 = vld [vmem:[#allocation8 + $0x1000] sm:$0xff]
        %v1013 = vld [vmem:[#allocation8 + $0x1008] sm:$0xff]
        %v1014 = vld [vmem:[#allocation8 + $0x1010] sm:$0xff]
        %v1015 = vld [vmem:[#allocation8 + $0x1018] sm:$0xff]
        %v1016 = vld [vmem:[#allocation8 + $0x1020] sm:$0xff]
        %v1017 = vld [vmem:[#allocation8 + $0x1028] sm:$0xff]
        %v1018 = vld [vmem:[#allocation8 + $0x1030] sm:$0xff]
        %v1019 = vld [vmem:[#allocation8 + $0x1038] sm:$0xff]
        %v1020 = vld [vmem:[#allocation8 + $0x1040] sm:$0xff]
        %v1021 = vld [vmem:[#allocation8 + $0x1048] sm:$0xff]
        %v1022 = vld [vmem:[#allocation8 + $0x1050] sm:$0xff]
        %v1023 = vld [vmem:[#allocation8 + $0x1058] sm:$0xff]
        %v1024 = vld [vmem:[#allocation8 + $0x1060] sm:$0xff]
        %v1025 = vld [vmem:[#allocation8 + $0x1068] sm:$0xff]
        %v1026 = vld [vmem:[#allocation8 + $0x1070] sm:$0xff]
        %v1027 = vld [vmem:[#allocation8 + $0x1078] sm:$0xff]
        %v1028 = vld [vmem:[#allocation8 + $0x1080] sm:$0xff]
        %v1029 = vld [vmem:[#allocation8 + $0x1088] sm:$0xff]
        %v1030 = vld [vmem:[#allocation8 + $0x1090] sm:$0xff]
        %v1031 = vld [vmem:[#allocation8 + $0x1098] sm:$0xff]
        %v1032 = vld [vmem:[#allocation8 + $0x10a0] sm:$0xff]
        %v1033 = vld [vmem:[#allocation8 + $0x10a8] sm:$0xff]
        %v1034 = vld [vmem:[#allocation8 + $0x10b0] sm:$0xff]
        %v1035 = vld [vmem:[#allocation8 + $0x10b8] sm:$0xff]
        %v1036 = vld [vmem:[#allocation8 + $0x10c0] sm:$0xff]
        %v1037 = vld [vmem:[#allocation8 + $0x10c8] sm:$0xff]
        %v1038 = vld [vmem:[#allocation8 + $0x10d0] sm:$0xff]
        %v1039 = vld [vmem:[#allocation8 + $0x10d8] sm:$0xff]
        %v1040 = vld [vmem:[#allocation8 + $0x10e0] sm:$0xff]
        %v1041 = vld [vmem:[#allocation8 + $0x10e8] sm:$0xff]
        %v1042 = vld [vmem:[#allocation8 + $0x10f0] sm:$0xff]
        %v1043 = vld [vmem:[#allocation8 + $0x10f8] sm:$0xff]
        %v1044 = vld [vmem:[#allocation8 + $0x1100] sm:$0xff]
        %v1045 = vld [vmem:[#allocation8 + $0x1108] sm:$0xff]
        %v1046 = vld [vmem:[#allocation8 + $0x1110] sm:$0xff]
        %v1047 = vld [vmem:[#allocation8 + $0x1118] sm:$0xff]
        %v1048 = vld [vmem:[#allocation8 + $0x1120] sm:$0xff]
        %v1049 = vld [vmem:[#allocation8 + $0x1128] sm:$0xff]
        %v1050 = vld [vmem:[#allocation8 + $0x1130] sm:$0xff]
        %v1051 = vld [vmem:[#allocation8 + $0x1138] sm:$0xff]
        %v1052 = vld [vmem:[#allocation8 + $0x1140] sm:$0xff]
        %v1053 = vld [vmem:[#allocation8 + $0x1148] sm:$0xff]
        %v1054 = vld [vmem:[#allocation8 + $0x1150] sm:$0xff]
        %v1055 = vld [vmem:[#allocation8 + $0x1158] sm:$0xff]
        %v1056 = vld [vmem:[#allocation8 + $0x1160] sm:$0xff]
        %v1057 = vld [vmem:[#allocation8 + $0x1168] sm:$0xff]
        %v1058 = vld [vmem:[#allocation8 + $0x1170] sm:$0xff]
        %v1059 = vld [vmem:[#allocation8 + $0x1178] sm:$0xff]
        %v1060 = vld [vmem:[#allocation8 + $0x1180] sm:$0xff]
        %v1061 = vld [vmem:[#allocation8 + $0x1188] sm:$0xff]
        %v1062 = vld [vmem:[#allocation8 + $0x1190] sm:$0xff]
        %v1063 = vld [vmem:[#allocation8 + $0x1198] sm:$0xff]
        %v1064 = vld [vmem:[#allocation8 + $0x11a0] sm:$0xff]
        %v1065 = vld [vmem:[#allocation8 + $0x11a8] sm:$0xff]
        %v1066 = vld [vmem:[#allocation8 + $0x11b0] sm:$0xff]
        %v1067 = vld [vmem:[#allocation8 + $0x11b8] sm:$0xff]
        %v1068 = vld [vmem:[#allocation8 + $0x11c0] sm:$0xff]
        %v1069 = vld [vmem:[#allocation8 + $0x11c8] sm:$0xff]
        %v1070 = vld [vmem:[#allocation8 + $0x11d0] sm:$0xff]
        %v1071 = vld [vmem:[#allocation8 + $0x11d8] sm:$0xff]
        %v1072 = vld [vmem:[#allocation8 + $0x11e0] sm:$0xff]
        %v1073 = vld [vmem:[#allocation8 + $0x11e8] sm:$0xff]
        %v1074 = vld [vmem:[#allocation8 + $0x11f0] sm:$0xff]
        %v1075 = vld [vmem:[#allocation8 + $0x11f8] sm:$0xff]
        %v1076 = vld [vmem:[#allocation8 + $0x1200] sm:$0xff]
        %v1077 = vld [vmem:[#allocation8 + $0x1208] sm:$0xff]
        %v1078 = vld [vmem:[#allocation8 + $0x1210] sm:$0xff]
        %v1079 = vld [vmem:[#allocation8 + $0x1218] sm:$0xff]
        %v1080 = vld [vmem:[#allocation8 + $0x1220] sm:$0xff]
        %v1081 = vld [vmem:[#allocation8 + $0x1228] sm:$0xff]
        %v1082 = vld [vmem:[#allocation8 + $0x1230] sm:$0xff]
        %v1083 = vld [vmem:[#allocation8 + $0x1238] sm:$0xff]
        %v1084 = vld [vmem:[#allocation8 + $0x1240] sm:$0xff]
        %v1085 = vld [vmem:[#allocation8 + $0x1248] sm:$0xff]
        %v1086 = vld [vmem:[#allocation8 + $0x1250] sm:$0xff]
        %v1087 = vld [vmem:[#allocation8 + $0x1258] sm:$0xff]
        %v1088 = vld [vmem:[#allocation8 + $0x1260] sm:$0xff]
        %v1089 = vld [vmem:[#allocation8 + $0x1268] sm:$0xff]
        %v1090 = vld [vmem:[#allocation8 + $0x1270] sm:$0xff]
        %v1091 = vld [vmem:[#allocation8 + $0x1278] sm:$0xff]
        %v1092 = vld [vmem:[#allocation8 + $0x1280] sm:$0xff]
        %v1093 = vld [vmem:[#allocation8 + $0x1288] sm:$0xff]
        %v1094 = vld [vmem:[#allocation8 + $0x1290] sm:$0xff]
        %v1095 = vld [vmem:[#allocation8 + $0x1298] sm:$0xff]
        %v1096 = vld [vmem:[#allocation8 + $0x12a0] sm:$0xff]
        %v1097 = vld [vmem:[#allocation8 + $0x12a8] sm:$0xff]
        %v1098 = vld [vmem:[#allocation8 + $0x12b0] sm:$0xff]
        %v1099 = vld [vmem:[#allocation8 + $0x12b8] sm:$0xff]
        %v1100 = vld [vmem:[#allocation8 + $0x12c0] sm:$0xff]
        %v1101 = vld [vmem:[#allocation8 + $0x12c8] sm:$0xff]
        %v1102 = vld [vmem:[#allocation8 + $0x12d0] sm:$0xff]
        %v1103 = vld [vmem:[#allocation8 + $0x12d8] sm:$0xff]
        %v1104 = vld [vmem:[#allocation8 + $0x12e0] sm:$0xff]
        %v1105 = vld [vmem:[#allocation8 + $0x12e8] sm:$0xff]
        %v1106 = vld [vmem:[#allocation8 + $0x12f0] sm:$0xff]
        %v1107 = vld [vmem:[#allocation8 + $0x12f8] sm:$0xff]
        %v1108 = vld [vmem:[#allocation8 + $0x1300] sm:$0xff]
        %v1109 = vld [vmem:[#allocation8 + $0x1308] sm:$0xff]
        %v1110 = vld [vmem:[#allocation8 + $0x1310] sm:$0xff]
        %v1111 = vld [vmem:[#allocation8 + $0x1318] sm:$0xff]
        %v1112 = vld [vmem:[#allocation8 + $0x1320] sm:$0xff]
        %v1113 = vld [vmem:[#allocation8 + $0x1328] sm:$0xff]
        %v1114 = vld [vmem:[#allocation8 + $0x1330] sm:$0xff]
        %v1115 = vld [vmem:[#allocation8 + $0x1338] sm:$0xff]
        %v1116 = vld [vmem:[#allocation8 + $0x1340] sm:$0xff]
        %v1117 = vld [vmem:[#allocation8 + $0x1348] sm:$0xff]
        %v1118 = vld [vmem:[#allocation8 + $0x1350] sm:$0xff]
        %v1119 = vld [vmem:[#allocation8 + $0x1358] sm:$0xff]
        %v1120 = vld [vmem:[#allocation8 + $0x1360] sm:$0xff]
        %v1121 = vld [vmem:[#allocation8 + $0x1368] sm:$0xff]
        %v1122 = vld [vmem:[#allocation8 + $0x1370] sm:$0xff]
        %v1123 = vld [vmem:[#allocation8 + $0x1378] sm:$0xff]
        %v1124 = vld [vmem:[#allocation8 + $0x1380] sm:$0xff]
        %v1125 = vld [vmem:[#allocation8 + $0x1388] sm:$0xff]
        %v1126 = vld [vmem:[#allocation8 + $0x1390] sm:$0xff]
        %v1127 = vld [vmem:[#allocation8 + $0x1398] sm:$0xff]
        %v1128 = vld [vmem:[#allocation8 + $0x13a0] sm:$0xff]
        %v1129 = vld [vmem:[#allocation8 + $0x13a8] sm:$0xff]
        %v1130 = vld [vmem:[#allocation8 + $0x13b0] sm:$0xff]
        %v1131 = vld [vmem:[#allocation8 + $0x13b8] sm:$0xff]
        %v1132 = vld [vmem:[#allocation8 + $0x13c0] sm:$0xff]
        %v1133 = vld [vmem:[#allocation8 + $0x13c8] sm:$0xff]
        %v1134 = vld [vmem:[#allocation8 + $0x13d0] sm:$0xff]
        %v1135 = vld [vmem:[#allocation8 + $0x13d8] sm:$0xff]
        %v1136 = vld [vmem:[#allocation8 + $0x13e0] sm:$0xff]
        %v1137 = vld [vmem:[#allocation8 + $0x13e8] sm:$0xff]
        %v1138 = vld [vmem:[#allocation8 + $0x13f0] sm:$0xff]
        %v1139 = vld [vmem:[#allocation8 + $0x13f8] sm:$0xff]
        %v1140 = vld [vmem:[#allocation8 + $0x1400] sm:$0xff]
        %v1141 = vld [vmem:[#allocation8 + $0x1408] sm:$0xff]
        %v1142 = vld [vmem:[#allocation8 + $0x1410] sm:$0xff]
        %v1143 = vld [vmem:[#allocation8 + $0x1418] sm:$0xff]
        %v1144 = vld [vmem:[#allocation8 + $0x1420] sm:$0xff]
        %v1145 = vld [vmem:[#allocation8 + $0x1428] sm:$0xff]
        %v1146 = vld [vmem:[#allocation8 + $0x1430] sm:$0xff]
        %v1147 = vld [vmem:[#allocation8 + $0x1438] sm:$0xff]
        %v1148 = vld [vmem:[#allocation8 + $0x1440] sm:$0xff]
        %v1149 = vld [vmem:[#allocation8 + $0x1448] sm:$0xff]
        %v1150 = vld [vmem:[#allocation8 + $0x1450] sm:$0xff]
        %v1151 = vld [vmem:[#allocation8 + $0x1458] sm:$0xff]
        %v1152 = vld [vmem:[#allocation8 + $0x1460] sm:$0xff]
        %v1153 = vld [vmem:[#allocation8 + $0x1468] sm:$0xff]
        %v1154 = vld [vmem:[#allocation8 + $0x1470] sm:$0xff]
        %v1155 = vld [vmem:[#allocation8 + $0x1478] sm:$0xff]
        %v1156 = vld [vmem:[#allocation8 + $0x1480] sm:$0xff]
        %v1157 = vld [vmem:[#allocation8 + $0x1488] sm:$0xff]
        %v1158 = vld [vmem:[#allocation8 + $0x1490] sm:$0xff]
        %v1159 = vld [vmem:[#allocation8 + $0x1498] sm:$0xff]
        %v1160 = vld [vmem:[#allocation8 + $0x14a0] sm:$0xff]
        %v1161 = vld [vmem:[#allocation8 + $0x14a8] sm:$0xff]
        %v1162 = vld [vmem:[#allocation8 + $0x14b0] sm:$0xff]
        %v1163 = vld [vmem:[#allocation8 + $0x14b8] sm:$0xff]
        %v1164 = vld [vmem:[#allocation8 + $0x14c0] sm:$0xff]
        %v1165 = vld [vmem:[#allocation8 + $0x14c8] sm:$0xff]
        %v1166 = vld [vmem:[#allocation8 + $0x14d0] sm:$0xff]
        %v1167 = vld [vmem:[#allocation8 + $0x14d8] sm:$0xff]
        %v1168 = vld [vmem:[#allocation8 + $0x14e0] sm:$0xff]
        %v1169 = vld [vmem:[#allocation8 + $0x14e8] sm:$0xff]
        %v1170 = vld [vmem:[#allocation8 + $0x14f0] sm:$0xff]
        %v1171 = vld [vmem:[#allocation8 + $0x14f8] sm:$0xff]
        %v1172 = vld [vmem:[#allocation8 + $0x1500] sm:$0xff]
        %v1173 = vld [vmem:[#allocation8 + $0x1508] sm:$0xff]
        %v1174 = vld [vmem:[#allocation8 + $0x1510] sm:$0xff]
        %v1175 = vld [vmem:[#allocation8 + $0x1518] sm:$0xff]
        %v1176 = vld [vmem:[#allocation8 + $0x1520] sm:$0xff]
        %v1177 = vld [vmem:[#allocation8 + $0x1528] sm:$0xff]
        %v1178 = vld [vmem:[#allocation8 + $0x1530] sm:$0xff]
        %v1179 = vld [vmem:[#allocation8 + $0x1538] sm:$0xff]
        %v1180 = vld [vmem:[#allocation8 + $0x1540] sm:$0xff]
        %v1181 = vld [vmem:[#allocation8 + $0x1548] sm:$0xff]
        %v1182 = vld [vmem:[#allocation8 + $0x1550] sm:$0xff]
        %v1183 = vld [vmem:[#allocation8 + $0x1558] sm:$0xff]
        %v1184 = vld [vmem:[#allocation8 + $0x1560] sm:$0xff]
        %v1185 = vld [vmem:[#allocation8 + $0x1568] sm:$0xff]
        %v1186 = vld [vmem:[#allocation8 + $0x1570] sm:$0xff]
        %v1187 = vld [vmem:[#allocation8 + $0x1578] sm:$0xff]
        %v1188 = vld [vmem:[#allocation8 + $0x1580] sm:$0xff]
        %v1189 = vld [vmem:[#allocation8 + $0x1588] sm:$0xff]
        %v1190 = vld [vmem:[#allocation8 + $0x1590] sm:$0xff]
        %v1191 = vld [vmem:[#allocation8 + $0x1598] sm:$0xff]
        %v1192 = vld [vmem:[#allocation8 + $0x15a0] sm:$0xff]
        %v1193 = vld [vmem:[#allocation8 + $0x15a8] sm:$0xff]
        %v1194 = vld [vmem:[#allocation8 + $0x15b0] sm:$0xff]
        %v1195 = vld [vmem:[#allocation8 + $0x15b8] sm:$0xff]
        %v1196 = vld [vmem:[#allocation8 + $0x15c0] sm:$0xff]
        %v1197 = vld [vmem:[#allocation8 + $0x15c8] sm:$0xff]
        %v1198 = vld [vmem:[#allocation8 + $0x15d0] sm:$0xff]
        %v1199 = vld [vmem:[#allocation8 + $0x15d8] sm:$0xff]
        %v1200 = vld [vmem:[#allocation8 + $0x15e0] sm:$0xff]
        %v1201 = vld [vmem:[#allocation8 + $0x15e8] sm:$0xff]
        %v1202 = vld [vmem:[#allocation8 + $0x15f0] sm:$0xff]
        %v1203 = vld [vmem:[#allocation8 + $0x15f8] sm:$0xff]
        %v1204 = vld [vmem:[#allocation8 + $0x1600] sm:$0xff]
        %v1205 = vld [vmem:[#allocation8 + $0x1608] sm:$0xff]
        %v1206 = vld [vmem:[#allocation8 + $0x1610] sm:$0xff]
        %v1207 = vld [vmem:[#allocation8 + $0x1618] sm:$0xff]
        %v1208 = vld [vmem:[#allocation8 + $0x1620] sm:$0xff]
        %v1209 = vld [vmem:[#allocation8 + $0x1628] sm:$0xff]
        %v1210 = vld [vmem:[#allocation8 + $0x1630] sm:$0xff]
        %v1211 = vld [vmem:[#allocation8 + $0x1638] sm:$0xff]
        %v1212 = vld [vmem:[#allocation8 + $0x1640] sm:$0xff]
        %v1213 = vld [vmem:[#allocation8 + $0x1648] sm:$0xff]
        %v1214 = vld [vmem:[#allocation8 + $0x1650] sm:$0xff]
        %v1215 = vld [vmem:[#allocation8 + $0x1658] sm:$0xff]
        %v1216 = vld [vmem:[#allocation8 + $0x1660] sm:$0xff]
        %v1217 = vld [vmem:[#allocation8 + $0x1668] sm:$0xff]
        %v1218 = vld [vmem:[#allocation8 + $0x1670] sm:$0xff]
        %v1219 = vld [vmem:[#allocation8 + $0x1678] sm:$0xff]
        %v1220 = vld [vmem:[#allocation8 + $0x1680] sm:$0xff]
        %v1221 = vld [vmem:[#allocation8 + $0x1688] sm:$0xff]
        %v1222 = vld [vmem:[#allocation8 + $0x1690] sm:$0xff]
        %v1223 = vld [vmem:[#allocation8 + $0x1698] sm:$0xff]
        %v1224 = vld [vmem:[#allocation8 + $0x16a0] sm:$0xff]
        %v1225 = vld [vmem:[#allocation8 + $0x16a8] sm:$0xff]
        %v1226 = vld [vmem:[#allocation8 + $0x16b0] sm:$0xff]
        %v1227 = vld [vmem:[#allocation8 + $0x16b8] sm:$0xff]
        %v1228 = vld [vmem:[#allocation8 + $0x16c0] sm:$0xff]
        %v1229 = vld [vmem:[#allocation8 + $0x16c8] sm:$0xff]
        %v1230 = vld [vmem:[#allocation8 + $0x16d0] sm:$0xff]
        %v1231 = vld [vmem:[#allocation8 + $0x16d8] sm:$0xff]
        %v1232 = vld [vmem:[#allocation8 + $0x16e0] sm:$0xff]
        %v1233 = vld [vmem:[#allocation8 + $0x16e8] sm:$0xff]
        %v1234 = vld [vmem:[#allocation8 + $0x16f0] sm:$0xff]
        %v1235 = vld [vmem:[#allocation8 + $0x16f8] sm:$0xff]
        %v1236 = vld [vmem:[#allocation8 + $0x1700] sm:$0xff]
        %v1237 = vld [vmem:[#allocation8 + $0x1708] sm:$0xff]
        %v1238 = vld [vmem:[#allocation8 + $0x1710] sm:$0xff]
        %v1239 = vld [vmem:[#allocation8 + $0x1718] sm:$0xff]
        %v1240 = vld [vmem:[#allocation8 + $0x1720] sm:$0xff]
        %v1241 = vld [vmem:[#allocation8 + $0x1728] sm:$0xff]
        %v1242 = vld [vmem:[#allocation8 + $0x1730] sm:$0xff]
        %v1243 = vld [vmem:[#allocation8 + $0x1738] sm:$0xff]
        %v1244 = vld [vmem:[#allocation8 + $0x1740] sm:$0xff]
        %v1245 = vld [vmem:[#allocation8 + $0x1748] sm:$0xff]
        %v1246 = vld [vmem:[#allocation8 + $0x1750] sm:$0xff]
        %v1247 = vld [vmem:[#allocation8 + $0x1758] sm:$0xff]
        %v1248 = vld [vmem:[#allocation8 + $0x1760] sm:$0xff]
        %v1249 = vld [vmem:[#allocation8 + $0x1768] sm:$0xff]
        %v1250 = vld [vmem:[#allocation8 + $0x1770] sm:$0xff]
        %v1251 = vld [vmem:[#allocation8 + $0x1778] sm:$0xff]
        %v1252 = vld [vmem:[#allocation8 + $0x1780] sm:$0xff]
        %v1253 = vld [vmem:[#allocation8 + $0x1788] sm:$0xff]
        %v1254 = vld [vmem:[#allocation8 + $0x1790] sm:$0xff]
        %v1255 = vld [vmem:[#allocation8 + $0x1798] sm:$0xff]
        %v1256 = vld [vmem:[#allocation8 + $0x17a0] sm:$0xff]
        %v1257 = vld [vmem:[#allocation8 + $0x17a8] sm:$0xff]
        %v1258 = vld [vmem:[#allocation8 + $0x17b0] sm:$0xff]
        %v1259 = vld [vmem:[#allocation8 + $0x17b8] sm:$0xff]
        %v1260 = vld [vmem:[#allocation8 + $0x17c0] sm:$0xff]
        %v1261 = vld [vmem:[#allocation8 + $0x17c8] sm:$0xff]
        %v1262 = vld [vmem:[#allocation8 + $0x17d0] sm:$0xff]
        %v1263 = vld [vmem:[#allocation8 + $0x17d8] sm:$0xff]
        %v1264 = vld [vmem:[#allocation8 + $0x17e0] sm:$0xff]
        %v1265 = vld [vmem:[#allocation8 + $0x17e8] sm:$0xff]
        %v1266 = vld [vmem:[#allocation8 + $0x17f0] sm:$0xff]
        %v1267 = vld [vmem:[#allocation8 + $0x17f8] sm:$0xff]
        %v1268 = vld [vmem:[#allocation8 + $0x1800] sm:$0xff]
        %v1269 = vld [vmem:[#allocation8 + $0x1808] sm:$0xff]
        %v1270 = vld [vmem:[#allocation8 + $0x1810] sm:$0xff]
        %v1271 = vld [vmem:[#allocation8 + $0x1818] sm:$0xff]
        %v1272 = vld [vmem:[#allocation8 + $0x1820] sm:$0xff]
        %v1273 = vld [vmem:[#allocation8 + $0x1828] sm:$0xff]
        %v1274 = vld [vmem:[#allocation8 + $0x1830] sm:$0xff]
        %v1275 = vld [vmem:[#allocation8 + $0x1838] sm:$0xff]
        %v1276 = vld [vmem:[#allocation8 + $0x1840] sm:$0xff]
        %v1277 = vld [vmem:[#allocation8 + $0x1848] sm:$0xff]
        %v1278 = vld [vmem:[#allocation8 + $0x1850] sm:$0xff]
        %v1279 = vld [vmem:[#allocation8 + $0x1858] sm:$0xff]
        %v1280 = vld [vmem:[#allocation8 + $0x1860] sm:$0xff]
        %v1281 = vld [vmem:[#allocation8 + $0x1868] sm:$0xff]
        %v1282 = vld [vmem:[#allocation8 + $0x1870] sm:$0xff]
        %v1283 = vld [vmem:[#allocation8 + $0x1878] sm:$0xff]
        %v1284 = vld [vmem:[#allocation8 + $0x1880] sm:$0xff]
        %v1285 = vld [vmem:[#allocation8 + $0x1888] sm:$0xff]
        %v1286 = vld [vmem:[#allocation8 + $0x1890] sm:$0xff]
        %v1287 = vld [vmem:[#allocation8 + $0x1898] sm:$0xff]
        %v1288 = vld [vmem:[#allocation8 + $0x18a0] sm:$0xff]
        %v1289 = vld [vmem:[#allocation8 + $0x18a8] sm:$0xff]
        %v1290 = vld [vmem:[#allocation8 + $0x18b0] sm:$0xff]
        %v1291 = vld [vmem:[#allocation8 + $0x18b8] sm:$0xff]
        %v1292 = vld [vmem:[#allocation8 + $0x18c0] sm:$0xff]
        %v1293 = vld [vmem:[#allocation8 + $0x18c8] sm:$0xff]
        %v1294 = vld [vmem:[#allocation8 + $0x18d0] sm:$0xff]
        %v1295 = vld [vmem:[#allocation8 + $0x18d8] sm:$0xff]
        %v1296 = vld [vmem:[#allocation8 + $0x18e0] sm:$0xff]
        %v1297 = vld [vmem:[#allocation8 + $0x18e8] sm:$0xff]
        %v1298 = vld [vmem:[#allocation8 + $0x18f0] sm:$0xff]
        %v1299 = vld [vmem:[#allocation8 + $0x18f8] sm:$0xff]
        %v1300 = vld [vmem:[#allocation8 + $0x1900] sm:$0xff]
        %v1301 = vld [vmem:[#allocation8 + $0x1908] sm:$0xff]
        %v1302 = vld [vmem:[#allocation8 + $0x1910] sm:$0xff]
        %v1303 = vld [vmem:[#allocation8 + $0x1918] sm:$0xff]
        %v1304 = vld [vmem:[#allocation8 + $0x1920] sm:$0xff]
        %v1305 = vld [vmem:[#allocation8 + $0x1928] sm:$0xff]
        %v1306 = vld [vmem:[#allocation8 + $0x1930] sm:$0xff]
        %v1307 = vld [vmem:[#allocation8 + $0x1938] sm:$0xff]
        %v1308 = vld [vmem:[#allocation8 + $0x1940] sm:$0xff]
        %v1309 = vld [vmem:[#allocation8 + $0x1948] sm:$0xff]
        %v1310 = vld [vmem:[#allocation8 + $0x1950] sm:$0xff]
        %v1311 = vld [vmem:[#allocation8 + $0x1958] sm:$0xff]
        %v1312 = vld [vmem:[#allocation8 + $0x1960] sm:$0xff]
        %v1313 = vld [vmem:[#allocation8 + $0x1968] sm:$0xff]
        %v1314 = vld [vmem:[#allocation8 + $0x1970] sm:$0xff]
        %v1315 = vld [vmem:[#allocation8 + $0x1978] sm:$0xff]
        %v1316 = vld [vmem:[#allocation8 + $0x1980] sm:$0xff]
        %v1317 = vld [vmem:[#allocation8 + $0x1988] sm:$0xff]
        %v1318 = vld [vmem:[#allocation8 + $0x1990] sm:$0xff]
        %v1319 = vld [vmem:[#allocation8 + $0x1998] sm:$0xff]
        %v1320 = vld [vmem:[#allocation8 + $0x19a0] sm:$0xff]
        %v1321 = vld [vmem:[#allocation8 + $0x19a8] sm:$0xff]
        %v1322 = vld [vmem:[#allocation8 + $0x19b0] sm:$0xff]
        %v1323 = vld [vmem:[#allocation8 + $0x19b8] sm:$0xff]
        %v1324 = vld [vmem:[#allocation8 + $0x19c0] sm:$0xff]
        %v1325 = vld [vmem:[#allocation8 + $0x19c8] sm:$0xff]
        %v1326 = vld [vmem:[#allocation8 + $0x19d0] sm:$0xff]
        %v1327 = vld [vmem:[#allocation8 + $0x19d8] sm:$0xff]
        %v1328 = vld [vmem:[#allocation8 + $0x19e0] sm:$0xff]
        %v1329 = vld [vmem:[#allocation8 + $0x19e8] sm:$0xff]
        %v1330 = vld [vmem:[#allocation8 + $0x19f0] sm:$0xff]
        %v1331 = vld [vmem:[#allocation8 + $0x19f8] sm:$0xff]
        %v1332 = vld [vmem:[#allocation8 + $0x1a00] sm:$0xff]
        %v1333 = vld [vmem:[#allocation8 + $0x1a08] sm:$0xff]
        %v1334 = vld [vmem:[#allocation8 + $0x1a10] sm:$0xff]
        %v1335 = vld [vmem:[#allocation8 + $0x1a18] sm:$0xff]
        %v1336 = vld [vmem:[#allocation8 + $0x1a20] sm:$0xff]
        %v1337 = vld [vmem:[#allocation8 + $0x1a28] sm:$0xff]
        %v1338 = vld [vmem:[#allocation8 + $0x1a30] sm:$0xff]
        %v1339 = vld [vmem:[#allocation8 + $0x1a38] sm:$0xff]
        %v1340 = vld [vmem:[#allocation8 + $0x1a40] sm:$0xff]
        %v1341 = vld [vmem:[#allocation8 + $0x1a48] sm:$0xff]
        %v1342 = vld [vmem:[#allocation8 + $0x1a50] sm:$0xff]
        %v1343 = vld [vmem:[#allocation8 + $0x1a58] sm:$0xff]
        %v1344 = vld [vmem:[#allocation8 + $0x1a60] sm:$0xff]
        %v1345 = vld [vmem:[#allocation8 + $0x1a68] sm:$0xff]
        %v1346 = vld [vmem:[#allocation8 + $0x1a70] sm:$0xff]
        %v1347 = vld [vmem:[#allocation8 + $0x1a78] sm:$0xff]
        %v1348 = vld [vmem:[#allocation8 + $0x1a80] sm:$0xff]
        %v1349 = vld [vmem:[#allocation8 + $0x1a88] sm:$0xff]
        %v1350 = vld [vmem:[#allocation8 + $0x1a90] sm:$0xff]
        %v1351 = vld [vmem:[#allocation8 + $0x1a98] sm:$0xff]
        %v1352 = vld [vmem:[#allocation8 + $0x1aa0] sm:$0xff]
        %v1353 = vld [vmem:[#allocation8 + $0x1aa8] sm:$0xff]
        %v1354 = vld [vmem:[#allocation8 + $0x1ab0] sm:$0xff]
        %v1355 = vld [vmem:[#allocation8 + $0x1ab8] sm:$0xff]
        %v1356 = vld [vmem:[#allocation8 + $0x1ac0] sm:$0xff]
        %v1357 = vld [vmem:[#allocation8 + $0x1ac8] sm:$0xff]
        %v1358 = vld [vmem:[#allocation8 + $0x1ad0] sm:$0xff]
        %v1359 = vld [vmem:[#allocation8 + $0x1ad8] sm:$0xff]
        %v1360 = vld [vmem:[#allocation8 + $0x1ae0] sm:$0xff]
        %v1361 = vld [vmem:[#allocation8 + $0x1ae8] sm:$0xff]
        %v1362 = vld [vmem:[#allocation8 + $0x1af0] sm:$0xff]
        %v1363 = vld [vmem:[#allocation8 + $0x1af8] sm:$0xff]
        %v1364 = vld [vmem:[#allocation10] sm:$0xff]
        %v1365 = vld [vmem:[#allocation10 + $0x8] sm:$0xff]
        %v1366 = vld [vmem:[#allocation10 + $0x10] sm:$0x3]
        %v1370 = vlaneseq
        %v1371 = vshrl.u32 %v1370, 7
        %v1372 = vsub.s32 0, %v1371
        %v1373 = vrot.slane %v1364, %v1372
        %v1374 = vlaneseq
        %v1375 = vshrl.u32 %v1374, 7
        %v1376 = vsub.s32 1, %v1375
        %v1377 = vrot.slane %v1364, %v1376
        %v1378 = vlaneseq
        %v1379 = vshrl.u32 %v1378, 7
        %v1380 = vsub.s32 2, %v1379
        %v1381 = vrot.slane %v1364, %v1380
        %v1382 = vlaneseq
        %v1383 = vshrl.u32 %v1382, 7
        %v1384 = vsub.s32 3, %v1383
        %v1385 = vrot.slane %v1364, %v1384
        %v1386 = vlaneseq
        %v1387 = vshrl.u32 %v1386, 7
        %v1388 = vsub.s32 4, %v1387
        %v1389 = vrot.slane %v1364, %v1388
        %v1390 = vlaneseq
        %v1391 = vshrl.u32 %v1390, 7
        %v1392 = vsub.s32 5, %v1391
        %v1393 = vrot.slane %v1364, %v1392
        %v1394 = vlaneseq
        %v1395 = vshrl.u32 %v1394, 7
        %v1396 = vsub.s32 6, %v1395
        %v1397 = vrot.slane %v1364, %v1396
        %v1398 = vlaneseq
        %v1399 = vshrl.u32 %v1398, 7
        %v1400 = vsub.s32 7, %v1399
        %v1401 = vrot.slane %v1364, %v1400
        %v1402 = vlaneseq
        %v1403 = vshrl.u32 %v1402, 7
        %v1404 = vsub.s32 0, %v1403
        %v1405 = vrot.slane %v1365, %v1404
        %v1406 = vlaneseq
        %v1407 = vshrl.u32 %v1406, 7
        %v1408 = vsub.s32 1, %v1407
        %v1409 = vrot.slane %v1365, %v1408
        %v1410 = vlaneseq
        %v1411 = vshrl.u32 %v1410, 7
        %v1412 = vsub.s32 2, %v1411
        %v1413 = vrot.slane %v1365, %v1412
        %v1414 = vlaneseq
        %v1415 = vshrl.u32 %v1414, 7
        %v1416 = vsub.s32 3, %v1415
        %v1417 = vrot.slane %v1365, %v1416
        %v1418 = vlaneseq
        %v1419 = vshrl.u32 %v1418, 7
        %v1420 = vsub.s32 4, %v1419
        %v1421 = vrot.slane %v1365, %v1420
        %v1422 = vlaneseq
        %v1423 = vshrl.u32 %v1422, 7
        %v1424 = vsub.s32 5, %v1423
        %v1425 = vrot.slane %v1365, %v1424
        %v1426 = vlaneseq
        %v1427 = vshrl.u32 %v1426, 7
        %v1428 = vsub.s32 6, %v1427
        %v1429 = vrot.slane %v1365, %v1428
        %v1430 = vlaneseq
        %v1431 = vshrl.u32 %v1430, 7
        %v1432 = vsub.s32 7, %v1431
        %v1433 = vrot.slane %v1365, %v1432
        %v1434 = vlaneseq
        %v1435 = vshrl.u32 %v1434, 7
        %v1436 = vsub.s32 0, %v1435
        %v1437 = vrot.slane %v1366, %v1436
        %v1438 = vlaneseq
        %v1439 = vshrl.u32 %v1438, 7
        %v1440 = vsub.s32 1, %v1439
        %v1441 = vrot.slane %v1366, %v1440
        %v2324 = vunpack.c.l.b16 %v500
        %v2325 = vunpack.c.h.b16 %v500
        %v2326 = vunpack.c.l.b16 %v501
        %v2327 = vunpack.c.h.b16 %v501
        %v2328 = vunpack.c.l.b16 %v502
        %v2329 = vunpack.c.h.b16 %v502
        %v2330 = vunpack.c.l.b16 %v503
        %v2331 = vunpack.c.h.b16 %v503
        %v2332 = vunpack.c.l.b16 %v504
        %v2333 = vunpack.c.h.b16 %v504
        %v2334 = vunpack.c.l.b16 %v505
        %v2335 = vunpack.c.h.b16 %v505
        %v2336 = vunpack.c.l.b16 %v506
        %v2337 = vunpack.c.h.b16 %v506
        %v2338 = vunpack.c.l.b16 %v507
        %v2339 = vunpack.c.h.b16 %v507
        %v2340 = vunpack.c.l.b16 %v508
        %v2341 = vunpack.c.h.b16 %v508
        %v2342 = vunpack.c.l.b16 %v509
        %v2343 = vunpack.c.h.b16 %v509
        %v2344 = vunpack.c.l.b16 %v510
        %v2345 = vunpack.c.h.b16 %v510
        %v2346 = vunpack.c.l.b16 %v511
        %v2347 = vunpack.c.h.b16 %v511
        %v2348 = vunpack.c.l.b16 %v512
        %v2349 = vunpack.c.h.b16 %v512
        %v2350 = vunpack.c.l.b16 %v513
        %v2351 = vunpack.c.h.b16 %v513
        %v2352 = vunpack.c.l.b16 %v514
        %v2353 = vunpack.c.h.b16 %v514
        %v2354 = vunpack.c.l.b16 %v515
        %v2355 = vunpack.c.h.b16 %v515
        %v2356 = vunpack.c.l.b16 %v516
        %v2357 = vunpack.c.h.b16 %v516
        %v2358 = vunpack.c.l.b16 %v517
        %v2359 = vunpack.c.h.b16 %v517
        %v2360 = vunpack.c.l.b16 %v518
        %v2361 = vunpack.c.h.b16 %v518
        %v2362 = vunpack.c.l.b16 %v519
        %v2363 = vunpack.c.h.b16 %v519
        %v2364 = vunpack.c.l.b16 %v520
        %v2365 = vunpack.c.h.b16 %v520
        %v2366 = vunpack.c.l.b16 %v521
        %v2367 = vunpack.c.h.b16 %v521
        %v2368 = vunpack.c.l.b16 %v522
        %v2369 = vunpack.c.h.b16 %v522
        %v2370 = vunpack.c.l.b16 %v523
        %v2371 = vunpack.c.h.b16 %v523
        %v2372 = vunpack.c.l.b16 %v524
        %v2373 = vunpack.c.h.b16 %v524
        %v2374 = vunpack.c.l.b16 %v525
        %v2375 = vunpack.c.h.b16 %v525
        %v2376 = vunpack.c.l.b16 %v526
        %v2377 = vunpack.c.h.b16 %v526
        %v2378 = vunpack.c.l.b16 %v527
        %v2379 = vunpack.c.h.b16 %v527
        %v2380 = vunpack.c.l.b16 %v528
        %v2381 = vunpack.c.h.b16 %v528
        %v2382 = vunpack.c.l.b16 %v529
        %v2383 = vunpack.c.h.b16 %v529
        %v2384 = vunpack.c.l.b16 %v530
        %v2385 = vunpack.c.h.b16 %v530
        %v2386 = vunpack.c.l.b16 %v531
        %v2387 = vunpack.c.h.b16 %v531
        %v2388 = vunpack.c.l.b16 %v532
        %v2389 = vunpack.c.h.b16 %v532
        %v2390 = vunpack.c.l.b16 %v533
        %v2391 = vunpack.c.h.b16 %v533
        %v2392 = vunpack.c.l.b16 %v534
        %v2393 = vunpack.c.h.b16 %v534
        %v2394 = vunpack.c.l.b16 %v535
        %v2395 = vunpack.c.h.b16 %v535
        %v2396 = vunpack.c.l.b16 %v536
        %v2397 = vunpack.c.h.b16 %v536
        %v2398 = vunpack.c.l.b16 %v537
        %v2399 = vunpack.c.h.b16 %v537
        %v2400 = vunpack.c.l.b16 %v538
        %v2401 = vunpack.c.h.b16 %v538
        %v2402 = vunpack.c.l.b16 %v539
        %v2403 = vunpack.c.h.b16 %v539
        %v2404 = vunpack.c.l.b16 %v540
        %v2405 = vunpack.c.h.b16 %v540
        %v2406 = vunpack.c.l.b16 %v541
        %v2407 = vunpack.c.h.b16 %v541
        %v2408 = vunpack.c.l.b16 %v542
        %v2409 = vunpack.c.h.b16 %v542
        %v2410 = vunpack.c.l.b16 %v543
        %v2411 = vunpack.c.h.b16 %v543
        %v2412 = vunpack.c.l.b16 %v544
        %v2413 = vunpack.c.h.b16 %v544
        %v2414 = vunpack.c.l.b16 %v545
        %v2415 = vunpack.c.h.b16 %v545
        %v2416 = vunpack.c.l.b16 %v546
        %v2417 = vunpack.c.h.b16 %v546
        %v2418 = vunpack.c.l.b16 %v547
        %v2419 = vunpack.c.h.b16 %v547
        %v2420 = vunpack.c.l.b16 %v548
        %v2421 = vunpack.c.h.b16 %v548
        %v2422 = vunpack.c.l.b16 %v549
        %v2423 = vunpack.c.h.b16 %v549
        %v2424 = vunpack.c.l.b16 %v550
        %v2425 = vunpack.c.h.b16 %v550
        %v2426 = vunpack.c.l.b16 %v551
        %v2427 = vunpack.c.h.b16 %v551
        %v2428 = vunpack.c.l.b16 %v552
        %v2429 = vunpack.c.h.b16 %v552
        %v2430 = vunpack.c.l.b16 %v553
        %v2431 = vunpack.c.h.b16 %v553
        %v2432 = vunpack.c.l.b16 %v554
        %v2433 = vunpack.c.h.b16 %v554
        %v2434 = vunpack.c.l.b16 %v555
        %v2435 = vunpack.c.h.b16 %v555
        %v2436 = vunpack.c.l.b16 %v556
        %v2437 = vunpack.c.h.b16 %v556
        %v2438 = vunpack.c.l.b16 %v557
        %v2439 = vunpack.c.h.b16 %v557
        %v2440 = vunpack.c.l.b16 %v558
        %v2441 = vunpack.c.h.b16 %v558
        %v2442 = vunpack.c.l.b16 %v559
        %v2443 = vunpack.c.h.b16 %v559
        %v2444 = vunpack.c.l.b16 %v560
        %v2445 = vunpack.c.h.b16 %v560
        %v2446 = vunpack.c.l.b16 %v561
        %v2447 = vunpack.c.h.b16 %v561
        %v2448 = vunpack.c.l.b16 %v562
        %v2449 = vunpack.c.h.b16 %v562
        %v2450 = vunpack.c.l.b16 %v563
        %v2451 = vunpack.c.h.b16 %v563
        %v2452 = vunpack.c.l.b16 %v564
        %v2453 = vunpack.c.h.b16 %v564
        %v2454 = vunpack.c.l.b16 %v565
        %v2455 = vunpack.c.h.b16 %v565
        %v2456 = vunpack.c.l.b16 %v566
        %v2457 = vunpack.c.h.b16 %v566
        %v2458 = vunpack.c.l.b16 %v567
        %v2459 = vunpack.c.h.b16 %v567
        %v2460 = vunpack.c.l.b16 %v568
        %v2461 = vunpack.c.h.b16 %v568
        %v2462 = vunpack.c.l.b16 %v569
        %v2463 = vunpack.c.h.b16 %v569
        %v2464 = vunpack.c.l.b16 %v570
        %v2465 = vunpack.c.h.b16 %v570
        %v2466 = vunpack.c.l.b16 %v571
        %v2467 = vunpack.c.h.b16 %v571
        %v2468 = vunpack.c.l.b16 %v572
        %v2469 = vunpack.c.h.b16 %v572
        %v2470 = vunpack.c.l.b16 %v573
        %v2471 = vunpack.c.h.b16 %v573
        %v2472 = vunpack.c.l.b16 %v574
        %v2473 = vunpack.c.h.b16 %v574
        %v2474 = vunpack.c.l.b16 %v575
        %v2475 = vunpack.c.h.b16 %v575
        %v2476 = vunpack.c.l.b16 %v576
        %v2477 = vunpack.c.h.b16 %v576
        %v2478 = vunpack.c.l.b16 %v577
        %v2479 = vunpack.c.h.b16 %v577
        %v2480 = vunpack.c.l.b16 %v578
        %v2481 = vunpack.c.h.b16 %v578
        %v2482 = vunpack.c.l.b16 %v579
        %v2483 = vunpack.c.h.b16 %v579
        %v2484 = vunpack.c.l.b16 %v580
        %v2485 = vunpack.c.h.b16 %v580
        %v2486 = vunpack.c.l.b16 %v581
        %v2487 = vunpack.c.h.b16 %v581
        %v2488 = vunpack.c.l.b16 %v582
        %v2489 = vunpack.c.h.b16 %v582
        %v2490 = vunpack.c.l.b16 %v583
        %v2491 = vunpack.c.h.b16 %v583
        %v2492 = vunpack.c.l.b16 %v584
        %v2493 = vunpack.c.h.b16 %v584
        %v2494 = vunpack.c.l.b16 %v585
        %v2495 = vunpack.c.h.b16 %v585
        %v2496 = vunpack.c.l.b16 %v586
        %v2497 = vunpack.c.h.b16 %v586
        %v2498 = vunpack.c.l.b16 %v587
        %v2499 = vunpack.c.h.b16 %v587
        %v2500 = vunpack.c.l.b16 %v588
        %v2501 = vunpack.c.h.b16 %v588
        %v2502 = vunpack.c.l.b16 %v589
        %v2503 = vunpack.c.h.b16 %v589
        %v2504 = vunpack.c.l.b16 %v590
        %v2505 = vunpack.c.h.b16 %v590
        %v2506 = vunpack.c.l.b16 %v591
        %v2507 = vunpack.c.h.b16 %v591
        %v2508 = vunpack.c.l.b16 %v592
        %v2509 = vunpack.c.h.b16 %v592
        %v2510 = vunpack.c.l.b16 %v593
        %v2511 = vunpack.c.h.b16 %v593
        %v2512 = vunpack.c.l.b16 %v594
        %v2513 = vunpack.c.h.b16 %v594
        %v2514 = vunpack.c.l.b16 %v595
        %v2515 = vunpack.c.h.b16 %v595
        %v2516 = vunpack.c.l.b16 %v596
        %v2517 = vunpack.c.h.b16 %v596
        %v2518 = vunpack.c.l.b16 %v597
        %v2519 = vunpack.c.h.b16 %v597
        %v2520 = vunpack.c.l.b16 %v598
        %v2521 = vunpack.c.h.b16 %v598
        %v2522 = vunpack.c.l.b16 %v599
        %v2523 = vunpack.c.h.b16 %v599
        %v2524 = vunpack.c.l.b16 %v600
        %v2525 = vunpack.c.h.b16 %v600
        %v2526 = vunpack.c.l.b16 %v601
        %v2527 = vunpack.c.h.b16 %v601
        %v2528 = vunpack.c.l.b16 %v602
        %v2529 = vunpack.c.h.b16 %v602
        %v2530 = vunpack.c.l.b16 %v603
        %v2531 = vunpack.c.h.b16 %v603
        %v2532 = vunpack.c.l.b16 %v604
        %v2533 = vunpack.c.h.b16 %v604
        %v2534 = vunpack.c.l.b16 %v605
        %v2535 = vunpack.c.h.b16 %v605
        %v2536 = vunpack.c.l.b16 %v606
        %v2537 = vunpack.c.h.b16 %v606
        %v2538 = vunpack.c.l.b16 %v607
        %v2539 = vunpack.c.h.b16 %v607
        %v2540 = vunpack.c.l.b16 %v608
        %v2541 = vunpack.c.h.b16 %v608
        %v2542 = vunpack.c.l.b16 %v609
        %v2543 = vunpack.c.h.b16 %v609
        %v2544 = vunpack.c.l.b16 %v610
        %v2545 = vunpack.c.h.b16 %v610
        %v2546 = vunpack.c.l.b16 %v611
        %v2547 = vunpack.c.h.b16 %v611
        %v2548 = vunpack.c.l.b16 %v612
        %v2549 = vunpack.c.h.b16 %v612
        %v2550 = vunpack.c.l.b16 %v613
        %v2551 = vunpack.c.h.b16 %v613
        %v2552 = vunpack.c.l.b16 %v614
        %v2553 = vunpack.c.h.b16 %v614
        %v2554 = vunpack.c.l.b16 %v615
        %v2555 = vunpack.c.h.b16 %v615
        %v2556 = vunpack.c.l.b16 %v616
        %v2557 = vunpack.c.h.b16 %v616
        %v2558 = vunpack.c.l.b16 %v617
        %v2559 = vunpack.c.h.b16 %v617
        %v2560 = vunpack.c.l.b16 %v618
        %v2561 = vunpack.c.h.b16 %v618
        %v2562 = vunpack.c.l.b16 %v619
        %v2563 = vunpack.c.h.b16 %v619
        %v2564 = vunpack.c.l.b16 %v620
        %v2565 = vunpack.c.h.b16 %v620
        %v2566 = vunpack.c.l.b16 %v621
        %v2567 = vunpack.c.h.b16 %v621
        %v2568 = vunpack.c.l.b16 %v622
        %v2569 = vunpack.c.h.b16 %v622
        %v2570 = vunpack.c.l.b16 %v623
        %v2571 = vunpack.c.h.b16 %v623
        %v2572 = vunpack.c.l.b16 %v624
        %v2573 = vunpack.c.h.b16 %v624
        %v2574 = vunpack.c.l.b16 %v625
        %v2575 = vunpack.c.h.b16 %v625
        %v2576 = vunpack.c.l.b16 %v626
        %v2577 = vunpack.c.h.b16 %v626
        %v2578 = vunpack.c.l.b16 %v627
        %v2579 = vunpack.c.h.b16 %v627
        %v2580 = vunpack.c.l.b16 %v628
        %v2581 = vunpack.c.h.b16 %v628
        %v2582 = vunpack.c.l.b16 %v629
        %v2583 = vunpack.c.h.b16 %v629
        %v2584 = vunpack.c.l.b16 %v630
        %v2585 = vunpack.c.h.b16 %v630
        %v2586 = vunpack.c.l.b16 %v631
        %v2587 = vunpack.c.h.b16 %v631
        %v2588 = vunpack.c.l.b16 %v632
        %v2589 = vunpack.c.h.b16 %v632
        %v2590 = vunpack.c.l.b16 %v633
        %v2591 = vunpack.c.h.b16 %v633
        %v2592 = vunpack.c.l.b16 %v634
        %v2593 = vunpack.c.h.b16 %v634
        %v2594 = vunpack.c.l.b16 %v635
        %v2595 = vunpack.c.h.b16 %v635
        %v2596 = vunpack.c.l.b16 %v636
        %v2597 = vunpack.c.h.b16 %v636
        %v2598 = vunpack.c.l.b16 %v637
        %v2599 = vunpack.c.h.b16 %v637
        %v2600 = vunpack.c.l.b16 %v638
        %v2601 = vunpack.c.h.b16 %v638
        %v2602 = vunpack.c.l.b16 %v639
        %v2603 = vunpack.c.h.b16 %v639
        %v2604 = vunpack.c.l.b16 %v640
        %v2605 = vunpack.c.h.b16 %v640
        %v2606 = vunpack.c.l.b16 %v641
        %v2607 = vunpack.c.h.b16 %v641
        %v2608 = vunpack.c.l.b16 %v642
        %v2609 = vunpack.c.h.b16 %v642
        %v2610 = vunpack.c.l.b16 %v643
        %v2611 = vunpack.c.h.b16 %v643
        %v2612 = vunpack.c.l.b16 %v644
        %v2613 = vunpack.c.h.b16 %v644
        %v2614 = vunpack.c.l.b16 %v645
        %v2615 = vunpack.c.h.b16 %v645
        %v2616 = vunpack.c.l.b16 %v646
        %v2617 = vunpack.c.h.b16 %v646
        %v2618 = vunpack.c.l.b16 %v647
        %v2619 = vunpack.c.h.b16 %v647
        %v2620 = vunpack.c.l.b16 %v648
        %v2621 = vunpack.c.h.b16 %v648
        %v2622 = vunpack.c.l.b16 %v649
        %v2623 = vunpack.c.h.b16 %v649
        %v2624 = vunpack.c.l.b16 %v650
        %v2625 = vunpack.c.h.b16 %v650
        %v2626 = vunpack.c.l.b16 %v651
        %v2627 = vunpack.c.h.b16 %v651
        %v2628 = vunpack.c.l.b16 %v652
        %v2629 = vunpack.c.h.b16 %v652
        %v2630 = vunpack.c.l.b16 %v653
        %v2631 = vunpack.c.h.b16 %v653
        %v2632 = vunpack.c.l.b16 %v654
        %v2633 = vunpack.c.h.b16 %v654
        %v2634 = vunpack.c.l.b16 %v655
        %v2635 = vunpack.c.h.b16 %v655
        %v2636 = vunpack.c.l.b16 %v656
        %v2637 = vunpack.c.h.b16 %v656
        %v2638 = vunpack.c.l.b16 %v657
        %v2639 = vunpack.c.h.b16 %v657
        %v2640 = vunpack.c.l.b16 %v658
        %v2641 = vunpack.c.h.b16 %v658
        %v2642 = vunpack.c.l.b16 %v659
        %v2643 = vunpack.c.h.b16 %v659
        %v2644 = vunpack.c.l.b16 %v660
        %v2645 = vunpack.c.h.b16 %v660
        %v2646 = vunpack.c.l.b16 %v661
        %v2647 = vunpack.c.h.b16 %v661
        %v2648 = vunpack.c.l.b16 %v662
        %v2649 = vunpack.c.h.b16 %v662
        %v2650 = vunpack.c.l.b16 %v663
        %v2651 = vunpack.c.h.b16 %v663
        %v2652 = vunpack.c.l.b16 %v664
        %v2653 = vunpack.c.h.b16 %v664
        %v2654 = vunpack.c.l.b16 %v665
        %v2655 = vunpack.c.h.b16 %v665
        %v2656 = vunpack.c.l.b16 %v666
        %v2657 = vunpack.c.h.b16 %v666
        %v2658 = vunpack.c.l.b16 %v667
        %v2659 = vunpack.c.h.b16 %v667
        %v2660 = vunpack.c.l.b16 %v668
        %v2661 = vunpack.c.h.b16 %v668
        %v2662 = vunpack.c.l.b16 %v669
        %v2663 = vunpack.c.h.b16 %v669
        %v2664 = vunpack.c.l.b16 %v670
        %v2665 = vunpack.c.h.b16 %v670
        %v2666 = vunpack.c.l.b16 %v671
        %v2667 = vunpack.c.h.b16 %v671
        %v2668 = vunpack.c.l.b16 %v672
        %v2669 = vunpack.c.h.b16 %v672
        %v2670 = vunpack.c.l.b16 %v673
        %v2671 = vunpack.c.h.b16 %v673
        %v2672 = vunpack.c.l.b16 %v674
        %v2673 = vunpack.c.h.b16 %v674
        %v2674 = vunpack.c.l.b16 %v675
        %v2675 = vunpack.c.h.b16 %v675
        %v2676 = vunpack.c.l.b16 %v676
        %v2677 = vunpack.c.h.b16 %v676
        %v2678 = vunpack.c.l.b16 %v677
        %v2679 = vunpack.c.h.b16 %v677
        %v2680 = vunpack.c.l.b16 %v678
        %v2681 = vunpack.c.h.b16 %v678
        %v2682 = vunpack.c.l.b16 %v679
        %v2683 = vunpack.c.h.b16 %v679
        %v2684 = vunpack.c.l.b16 %v680
        %v2685 = vunpack.c.h.b16 %v680
        %v2686 = vunpack.c.l.b16 %v681
        %v2687 = vunpack.c.h.b16 %v681
        %v2688 = vunpack.c.l.b16 %v682
        %v2689 = vunpack.c.h.b16 %v682
        %v2690 = vunpack.c.l.b16 %v683
        %v2691 = vunpack.c.h.b16 %v683
        %v2692 = vunpack.c.l.b16 %v684
        %v2693 = vunpack.c.h.b16 %v684
        %v2694 = vunpack.c.l.b16 %v685
        %v2695 = vunpack.c.h.b16 %v685
        %v2696 = vunpack.c.l.b16 %v686
        %v2697 = vunpack.c.h.b16 %v686
        %v2698 = vunpack.c.l.b16 %v687
        %v2699 = vunpack.c.h.b16 %v687
        %v2700 = vunpack.c.l.b16 %v688
        %v2701 = vunpack.c.h.b16 %v688
        %v2702 = vunpack.c.l.b16 %v689
        %v2703 = vunpack.c.h.b16 %v689
        %v2704 = vunpack.c.l.b16 %v690
        %v2705 = vunpack.c.h.b16 %v690
        %v2706 = vunpack.c.l.b16 %v691
        %v2707 = vunpack.c.h.b16 %v691
        %v2708 = vunpack.c.l.b16 %v692
        %v2709 = vunpack.c.h.b16 %v692
        %v2710 = vunpack.c.l.b16 %v693
        %v2711 = vunpack.c.h.b16 %v693
        %v2712 = vunpack.c.l.b16 %v694
        %v2713 = vunpack.c.h.b16 %v694
        %v2714 = vunpack.c.l.b16 %v695
        %v2715 = vunpack.c.h.b16 %v695
        %v2716 = vunpack.c.l.b16 %v696
        %v2717 = vunpack.c.h.b16 %v696
        %v2718 = vunpack.c.l.b16 %v697
        %v2719 = vunpack.c.h.b16 %v697
        %v2720 = vunpack.c.l.b16 %v698
        %v2721 = vunpack.c.h.b16 %v698
        %v2722 = vunpack.c.l.b16 %v699
        %v2723 = vunpack.c.h.b16 %v699
        %v2724 = vunpack.c.l.b16 %v700
        %v2725 = vunpack.c.h.b16 %v700
        %v2726 = vunpack.c.l.b16 %v701
        %v2727 = vunpack.c.h.b16 %v701
        %v2728 = vunpack.c.l.b16 %v702
        %v2729 = vunpack.c.h.b16 %v702
        %v2730 = vunpack.c.l.b16 %v703
        %v2731 = vunpack.c.h.b16 %v703
        %v2732 = vunpack.c.l.b16 %v704
        %v2733 = vunpack.c.h.b16 %v704
        %v2734 = vunpack.c.l.b16 %v705
        %v2735 = vunpack.c.h.b16 %v705
        %v2736 = vunpack.c.l.b16 %v706
        %v2737 = vunpack.c.h.b16 %v706
        %v2738 = vunpack.c.l.b16 %v707
        %v2739 = vunpack.c.h.b16 %v707
        %v2740 = vunpack.c.l.b16 %v708
        %v2741 = vunpack.c.h.b16 %v708
        %v2742 = vunpack.c.l.b16 %v709
        %v2743 = vunpack.c.h.b16 %v709
        %v2744 = vunpack.c.l.b16 %v710
        %v2745 = vunpack.c.h.b16 %v710
        %v2746 = vunpack.c.l.b16 %v711
        %v2747 = vunpack.c.h.b16 %v711
        %v2748 = vunpack.c.l.b16 %v712
        %v2749 = vunpack.c.h.b16 %v712
        %v2750 = vunpack.c.l.b16 %v713
        %v2751 = vunpack.c.h.b16 %v713
        %v2752 = vunpack.c.l.b16 %v714
        %v2753 = vunpack.c.h.b16 %v714
        %v2754 = vunpack.c.l.b16 %v715
        %v2755 = vunpack.c.h.b16 %v715
        %v2756 = vunpack.c.l.b16 %v716
        %v2757 = vunpack.c.h.b16 %v716
        %v2758 = vunpack.c.l.b16 %v717
        %v2759 = vunpack.c.h.b16 %v717
        %v2760 = vunpack.c.l.b16 %v718
        %v2761 = vunpack.c.h.b16 %v718
        %v2762 = vunpack.c.l.b16 %v719
        %v2763 = vunpack.c.h.b16 %v719
        %v2764 = vunpack.c.l.b16 %v720
        %v2765 = vunpack.c.h.b16 %v720
        %v2766 = vunpack.c.l.b16 %v721
        %v2767 = vunpack.c.h.b16 %v721
        %v2768 = vunpack.c.l.b16 %v722
        %v2769 = vunpack.c.h.b16 %v722
        %v2770 = vunpack.c.l.b16 %v723
        %v2771 = vunpack.c.h.b16 %v723
        %v2772 = vunpack.c.l.b16 %v724
        %v2773 = vunpack.c.h.b16 %v724
        %v2774 = vunpack.c.l.b16 %v725
        %v2775 = vunpack.c.h.b16 %v725
        %v2776 = vunpack.c.l.b16 %v726
        %v2777 = vunpack.c.h.b16 %v726
        %v2778 = vunpack.c.l.b16 %v727
        %v2779 = vunpack.c.h.b16 %v727
        %v2780 = vunpack.c.l.b16 %v728
        %v2781 = vunpack.c.h.b16 %v728
        %v2782 = vunpack.c.l.b16 %v729
        %v2783 = vunpack.c.h.b16 %v729
        %v2784 = vunpack.c.l.b16 %v730
        %v2785 = vunpack.c.h.b16 %v730
        %v2786 = vunpack.c.l.b16 %v731
        %v2787 = vunpack.c.h.b16 %v731
        %v2788 = vunpack.c.l.b16 %v732
        %v2789 = vunpack.c.h.b16 %v732
        %v2790 = vunpack.c.l.b16 %v733
        %v2791 = vunpack.c.h.b16 %v733
        %v2792 = vunpack.c.l.b16 %v734
        %v2793 = vunpack.c.h.b16 %v734
        %v2794 = vunpack.c.l.b16 %v735
        %v2795 = vunpack.c.h.b16 %v735
        %v2796 = vunpack.c.l.b16 %v736
        %v2797 = vunpack.c.h.b16 %v736
        %v2798 = vunpack.c.l.b16 %v737
        %v2799 = vunpack.c.h.b16 %v737
        %v2800 = vunpack.c.l.b16 %v738
        %v2801 = vunpack.c.h.b16 %v738
        %v2802 = vunpack.c.l.b16 %v739
        %v2803 = vunpack.c.h.b16 %v739
        %v2804 = vunpack.c.l.b16 %v740
        %v2805 = vunpack.c.h.b16 %v740
        %v2806 = vunpack.c.l.b16 %v741
        %v2807 = vunpack.c.h.b16 %v741
        %v2808 = vunpack.c.l.b16 %v742
        %v2809 = vunpack.c.h.b16 %v742
        %v2810 = vunpack.c.l.b16 %v743
        %v2811 = vunpack.c.h.b16 %v743
        %v2812 = vunpack.c.l.b16 %v744
        %v2813 = vunpack.c.h.b16 %v744
        %v2814 = vunpack.c.l.b16 %v745
        %v2815 = vunpack.c.h.b16 %v745
        %v2816 = vunpack.c.l.b16 %v746
        %v2817 = vunpack.c.h.b16 %v746
        %v2818 = vunpack.c.l.b16 %v747
        %v2819 = vunpack.c.h.b16 %v747
        %v2820 = vunpack.c.l.b16 %v748
        %v2821 = vunpack.c.h.b16 %v748
        %v2822 = vunpack.c.l.b16 %v749
        %v2823 = vunpack.c.h.b16 %v749
        %v2824 = vunpack.c.l.b16 %v750
        %v2825 = vunpack.c.h.b16 %v750
        %v2826 = vunpack.c.l.b16 %v751
        %v2827 = vunpack.c.h.b16 %v751
        %v2828 = vunpack.c.l.b16 %v752
        %v2829 = vunpack.c.h.b16 %v752
        %v2830 = vunpack.c.l.b16 %v753
        %v2831 = vunpack.c.h.b16 %v753
        %v2832 = vunpack.c.l.b16 %v754
        %v2833 = vunpack.c.h.b16 %v754
        %v2834 = vunpack.c.l.b16 %v755
        %v2835 = vunpack.c.h.b16 %v755
        %v2836 = vunpack.c.l.b16 %v756
        %v2837 = vunpack.c.h.b16 %v756
        %v2838 = vunpack.c.l.b16 %v757
        %v2839 = vunpack.c.h.b16 %v757
        %v2840 = vunpack.c.l.b16 %v758
        %v2841 = vunpack.c.h.b16 %v758
        %v2842 = vunpack.c.l.b16 %v759
        %v2843 = vunpack.c.h.b16 %v759
        %v2844 = vunpack.c.l.b16 %v760
        %v2845 = vunpack.c.h.b16 %v760
        %v2846 = vunpack.c.l.b16 %v761
        %v2847 = vunpack.c.h.b16 %v761
        %v2848 = vunpack.c.l.b16 %v762
        %v2849 = vunpack.c.h.b16 %v762
        %v2850 = vunpack.c.l.b16 %v763
        %v2851 = vunpack.c.h.b16 %v763
        %v2852 = vunpack.c.l.b16 %v764
        %v2853 = vunpack.c.h.b16 %v764
        %v2854 = vunpack.c.l.b16 %v765
        %v2855 = vunpack.c.h.b16 %v765
        %v2856 = vunpack.c.l.b16 %v766
        %v2857 = vunpack.c.h.b16 %v766
        %v2858 = vunpack.c.l.b16 %v767
        %v2859 = vunpack.c.h.b16 %v767
        %v2860 = vunpack.c.l.b16 %v768
        %v2861 = vunpack.c.h.b16 %v768
        %v2862 = vunpack.c.l.b16 %v769
        %v2863 = vunpack.c.h.b16 %v769
        %v2864 = vunpack.c.l.b16 %v770
        %v2865 = vunpack.c.h.b16 %v770
        %v2866 = vunpack.c.l.b16 %v771
        %v2867 = vunpack.c.h.b16 %v771
        %v2868 = vunpack.c.l.b16 %v772
        %v2869 = vunpack.c.h.b16 %v772
        %v2870 = vunpack.c.l.b16 %v773
        %v2871 = vunpack.c.h.b16 %v773
        %v2872 = vunpack.c.l.b16 %v774
        %v2873 = vunpack.c.h.b16 %v774
        %v2874 = vunpack.c.l.b16 %v775
        %v2875 = vunpack.c.h.b16 %v775
        %v2876 = vunpack.c.l.b16 %v776
        %v2877 = vunpack.c.h.b16 %v776
        %v2878 = vunpack.c.l.b16 %v777
        %v2879 = vunpack.c.h.b16 %v777
        %v2880 = vunpack.c.l.b16 %v778
        %v2881 = vunpack.c.h.b16 %v778
        %v2882 = vunpack.c.l.b16 %v779
        %v2883 = vunpack.c.h.b16 %v779
        %v2884 = vunpack.c.l.b16 %v780
        %v2885 = vunpack.c.h.b16 %v780
        %v2886 = vunpack.c.l.b16 %v781
        %v2887 = vunpack.c.h.b16 %v781
        %v2888 = vunpack.c.l.b16 %v782
        %v2889 = vunpack.c.h.b16 %v782
        %v2890 = vunpack.c.l.b16 %v783
        %v2891 = vunpack.c.h.b16 %v783
        %v2892 = vunpack.c.l.b16 %v784
        %v2893 = vunpack.c.h.b16 %v784
        %v2894 = vunpack.c.l.b16 %v785
        %v2895 = vunpack.c.h.b16 %v785
        %v2896 = vunpack.c.l.b16 %v786
        %v2897 = vunpack.c.h.b16 %v786
        %v2898 = vunpack.c.l.b16 %v787
        %v2899 = vunpack.c.h.b16 %v787
        %v2900 = vunpack.c.l.b16 %v788
        %v2901 = vunpack.c.h.b16 %v788
        %v2902 = vunpack.c.l.b16 %v789
        %v2903 = vunpack.c.h.b16 %v789
        %v2904 = vunpack.c.l.b16 %v790
        %v2905 = vunpack.c.h.b16 %v790
        %v2906 = vunpack.c.l.b16 %v791
        %v2907 = vunpack.c.h.b16 %v791
        %v2908 = vunpack.c.l.b16 %v792
        %v2909 = vunpack.c.h.b16 %v792
        %v2910 = vunpack.c.l.b16 %v793
        %v2911 = vunpack.c.h.b16 %v793
        %v2912 = vunpack.c.l.b16 %v794
        %v2913 = vunpack.c.h.b16 %v794
        %v2914 = vunpack.c.l.b16 %v795
        %v2915 = vunpack.c.h.b16 %v795
        %v2916 = vunpack.c.l.b16 %v796
        %v2917 = vunpack.c.h.b16 %v796
        %v2918 = vunpack.c.l.b16 %v797
        %v2919 = vunpack.c.h.b16 %v797
        %v2920 = vunpack.c.l.b16 %v798
        %v2921 = vunpack.c.h.b16 %v798
        %v2922 = vunpack.c.l.b16 %v799
        %v2923 = vunpack.c.h.b16 %v799
        %v2924 = vunpack.c.l.b16 %v800
        %v2925 = vunpack.c.h.b16 %v800
        %v2926 = vunpack.c.l.b16 %v801
        %v2927 = vunpack.c.h.b16 %v801
        %v2928 = vunpack.c.l.b16 %v802
        %v2929 = vunpack.c.h.b16 %v802
        %v2930 = vunpack.c.l.b16 %v803
        %v2931 = vunpack.c.h.b16 %v803
        %v2932 = vunpack.c.l.b16 %v804
        %v2933 = vunpack.c.h.b16 %v804
        %v2934 = vunpack.c.l.b16 %v805
        %v2935 = vunpack.c.h.b16 %v805
        %v2936 = vunpack.c.l.b16 %v806
        %v2937 = vunpack.c.h.b16 %v806
        %v2938 = vunpack.c.l.b16 %v807
        %v2939 = vunpack.c.h.b16 %v807
        %v2940 = vunpack.c.l.b16 %v808
        %v2941 = vunpack.c.h.b16 %v808
        %v2942 = vunpack.c.l.b16 %v809
        %v2943 = vunpack.c.h.b16 %v809
        %v2944 = vunpack.c.l.b16 %v810
        %v2945 = vunpack.c.h.b16 %v810
        %v2946 = vunpack.c.l.b16 %v811
        %v2947 = vunpack.c.h.b16 %v811
        %v2948 = vunpack.c.l.b16 %v812
        %v2949 = vunpack.c.h.b16 %v812
        %v2950 = vunpack.c.l.b16 %v813
        %v2951 = vunpack.c.h.b16 %v813
        %v2952 = vunpack.c.l.b16 %v814
        %v2953 = vunpack.c.h.b16 %v814
        %v2954 = vunpack.c.l.b16 %v815
        %v2955 = vunpack.c.h.b16 %v815
        %v2956 = vunpack.c.l.b16 %v816
        %v2957 = vunpack.c.h.b16 %v816
        %v2958 = vunpack.c.l.b16 %v817
        %v2959 = vunpack.c.h.b16 %v817
        %v2960 = vunpack.c.l.b16 %v818
        %v2961 = vunpack.c.h.b16 %v818
        %v2962 = vunpack.c.l.b16 %v819
        %v2963 = vunpack.c.h.b16 %v819
        %v2964 = vunpack.c.l.b16 %v820
        %v2965 = vunpack.c.h.b16 %v820
        %v2966 = vunpack.c.l.b16 %v821
        %v2967 = vunpack.c.h.b16 %v821
        %v2968 = vunpack.c.l.b16 %v822
        %v2969 = vunpack.c.h.b16 %v822
        %v2970 = vunpack.c.l.b16 %v823
        %v2971 = vunpack.c.h.b16 %v823
        %v2972 = vunpack.c.l.b16 %v824
        %v2973 = vunpack.c.h.b16 %v824
        %v2974 = vunpack.c.l.b16 %v825
        %v2975 = vunpack.c.h.b16 %v825
        %v2976 = vunpack.c.l.b16 %v826
        %v2977 = vunpack.c.h.b16 %v826
        %v2978 = vunpack.c.l.b16 %v827
        %v2979 = vunpack.c.h.b16 %v827
        %v2980 = vunpack.c.l.b16 %v828
        %v2981 = vunpack.c.h.b16 %v828
        %v2982 = vunpack.c.l.b16 %v829
        %v2983 = vunpack.c.h.b16 %v829
        %v2984 = vunpack.c.l.b16 %v830
        %v2985 = vunpack.c.h.b16 %v830
        %v2986 = vunpack.c.l.b16 %v831
        %v2987 = vunpack.c.h.b16 %v831
        %v2988 = vunpack.c.l.b16 %v832
        %v2989 = vunpack.c.h.b16 %v832
        %v2990 = vunpack.c.l.b16 %v833
        %v2991 = vunpack.c.h.b16 %v833
        %v2992 = vunpack.c.l.b16 %v834
        %v2993 = vunpack.c.h.b16 %v834
        %v2994 = vunpack.c.l.b16 %v835
        %v2995 = vunpack.c.h.b16 %v835
        %v2996 = vunpack.c.l.b16 %v836
        %v2997 = vunpack.c.h.b16 %v836
        %v2998 = vunpack.c.l.b16 %v837
        %v2999 = vunpack.c.h.b16 %v837
        %v3000 = vunpack.c.l.b16 %v838
        %v3001 = vunpack.c.h.b16 %v838
        %v3002 = vunpack.c.l.b16 %v839
        %v3003 = vunpack.c.h.b16 %v839
        %v3004 = vunpack.c.l.b16 %v840
        %v3005 = vunpack.c.h.b16 %v840
        %v3006 = vunpack.c.l.b16 %v841
        %v3007 = vunpack.c.h.b16 %v841
        %v3008 = vunpack.c.l.b16 %v842
        %v3009 = vunpack.c.h.b16 %v842
        %v3010 = vunpack.c.l.b16 %v843
        %v3011 = vunpack.c.h.b16 %v843
        %v3012 = vunpack.c.l.b16 %v844
        %v3013 = vunpack.c.h.b16 %v844
        %v3014 = vunpack.c.l.b16 %v845
        %v3015 = vunpack.c.h.b16 %v845
        %v3016 = vunpack.c.l.b16 %v846
        %v3017 = vunpack.c.h.b16 %v846
        %v3018 = vunpack.c.l.b16 %v847
        %v3019 = vunpack.c.h.b16 %v847
        %v3020 = vunpack.c.l.b16 %v848
        %v3021 = vunpack.c.h.b16 %v848
        %v3022 = vunpack.c.l.b16 %v849
        %v3023 = vunpack.c.h.b16 %v849
        %v3024 = vunpack.c.l.b16 %v850
        %v3025 = vunpack.c.h.b16 %v850
        %v3026 = vunpack.c.l.b16 %v851
        %v3027 = vunpack.c.h.b16 %v851
        %v3028 = vunpack.c.l.b16 %v852
        %v3029 = vunpack.c.h.b16 %v852
        %v3030 = vunpack.c.l.b16 %v853
        %v3031 = vunpack.c.h.b16 %v853
        %v3032 = vunpack.c.l.b16 %v854
        %v3033 = vunpack.c.h.b16 %v854
        %v3034 = vunpack.c.l.b16 %v855
        %v3035 = vunpack.c.h.b16 %v855
        %v3036 = vunpack.c.l.b16 %v856
        %v3037 = vunpack.c.h.b16 %v856
        %v3038 = vunpack.c.l.b16 %v857
        %v3039 = vunpack.c.h.b16 %v857
        %v3040 = vunpack.c.l.b16 %v858
        %v3041 = vunpack.c.h.b16 %v858
        %v3042 = vunpack.c.l.b16 %v859
        %v3043 = vunpack.c.h.b16 %v859
        %v3044 = vunpack.c.l.b16 %v860
        %v3045 = vunpack.c.h.b16 %v860
        %v3046 = vunpack.c.l.b16 %v861
        %v3047 = vunpack.c.h.b16 %v861
        %v3048 = vunpack.c.l.b16 %v862
        %v3049 = vunpack.c.h.b16 %v862
        %v3050 = vunpack.c.l.b16 %v863
        %v3051 = vunpack.c.h.b16 %v863
        %v3052 = vunpack.c.l.b16 %v864
        %v3053 = vunpack.c.h.b16 %v864
        %v3054 = vunpack.c.l.b16 %v865
        %v3055 = vunpack.c.h.b16 %v865
        %v3056 = vunpack.c.l.b16 %v866
        %v3057 = vunpack.c.h.b16 %v866
        %v3058 = vunpack.c.l.b16 %v867
        %v3059 = vunpack.c.h.b16 %v867
        %v3060 = vunpack.c.l.b16 %v868
        %v3061 = vunpack.c.h.b16 %v868
        %v3062 = vunpack.c.l.b16 %v869
        %v3063 = vunpack.c.h.b16 %v869
        %v3064 = vunpack.c.l.b16 %v870
        %v3065 = vunpack.c.h.b16 %v870
        %v3066 = vunpack.c.l.b16 %v871
        %v3067 = vunpack.c.h.b16 %v871
        %v3068 = vunpack.c.l.b16 %v872
        %v3069 = vunpack.c.h.b16 %v872
        %v3070 = vunpack.c.l.b16 %v873
        %v3071 = vunpack.c.h.b16 %v873
        %v3072 = vunpack.c.l.b16 %v874
        %v3073 = vunpack.c.h.b16 %v874
        %v3074 = vunpack.c.l.b16 %v875
        %v3075 = vunpack.c.h.b16 %v875
        %v3076 = vunpack.c.l.b16 %v876
        %v3077 = vunpack.c.h.b16 %v876
        %v3078 = vunpack.c.l.b16 %v877
        %v3079 = vunpack.c.h.b16 %v877
        %v3080 = vunpack.c.l.b16 %v878
        %v3081 = vunpack.c.h.b16 %v878
        %v3082 = vunpack.c.l.b16 %v879
        %v3083 = vunpack.c.h.b16 %v879
        %v3084 = vunpack.c.l.b16 %v880
        %v3085 = vunpack.c.h.b16 %v880
        %v3086 = vunpack.c.l.b16 %v881
        %v3087 = vunpack.c.h.b16 %v881
        %v3088 = vunpack.c.l.b16 %v882
        %v3089 = vunpack.c.h.b16 %v882
        %v3090 = vunpack.c.l.b16 %v883
        %v3091 = vunpack.c.h.b16 %v883
        %v3092 = vunpack.c.l.b16 %v884
        %v3093 = vunpack.c.h.b16 %v884
        %v3094 = vunpack.c.l.b16 %v885
        %v3095 = vunpack.c.h.b16 %v885
        %v3096 = vunpack.c.l.b16 %v886
        %v3097 = vunpack.c.h.b16 %v886
        %v3098 = vunpack.c.l.b16 %v887
        %v3099 = vunpack.c.h.b16 %v887
        %v3100 = vunpack.c.l.b16 %v888
        %v3101 = vunpack.c.h.b16 %v888
        %v3102 = vunpack.c.l.b16 %v889
        %v3103 = vunpack.c.h.b16 %v889
        %v3104 = vunpack.c.l.b16 %v890
        %v3105 = vunpack.c.h.b16 %v890
        %v3106 = vunpack.c.l.b16 %v891
        %v3107 = vunpack.c.h.b16 %v891
        %v3108 = vunpack.c.l.b16 %v892
        %v3109 = vunpack.c.h.b16 %v892
        %v3110 = vunpack.c.l.b16 %v893
        %v3111 = vunpack.c.h.b16 %v893
        %v3112 = vunpack.c.l.b16 %v894
        %v3113 = vunpack.c.h.b16 %v894
        %v3114 = vunpack.c.l.b16 %v895
        %v3115 = vunpack.c.h.b16 %v895
        %v3116 = vunpack.c.l.b16 %v896
        %v3117 = vunpack.c.h.b16 %v896
        %v3118 = vunpack.c.l.b16 %v897
        %v3119 = vunpack.c.h.b16 %v897
        %v3120 = vunpack.c.l.b16 %v898
        %v3121 = vunpack.c.h.b16 %v898
        %v3122 = vunpack.c.l.b16 %v899
        %v3123 = vunpack.c.h.b16 %v899
        %v3124 = vunpack.c.l.b16 %v900
        %v3125 = vunpack.c.h.b16 %v900
        %v3126 = vunpack.c.l.b16 %v901
        %v3127 = vunpack.c.h.b16 %v901
        %v3128 = vunpack.c.l.b16 %v902
        %v3129 = vunpack.c.h.b16 %v902
        %v3130 = vunpack.c.l.b16 %v903
        %v3131 = vunpack.c.h.b16 %v903
        %v3132 = vunpack.c.l.b16 %v904
        %v3133 = vunpack.c.h.b16 %v904
        %v3134 = vunpack.c.l.b16 %v905
        %v3135 = vunpack.c.h.b16 %v905
        %v3136 = vunpack.c.l.b16 %v906
        %v3137 = vunpack.c.h.b16 %v906
        %v3138 = vunpack.c.l.b16 %v907
        %v3139 = vunpack.c.h.b16 %v907
        %v3140 = vunpack.c.l.b16 %v908
        %v3141 = vunpack.c.h.b16 %v908
        %v3142 = vunpack.c.l.b16 %v909
        %v3143 = vunpack.c.h.b16 %v909
        %v3144 = vunpack.c.l.b16 %v910
        %v3145 = vunpack.c.h.b16 %v910
        %v3146 = vunpack.c.l.b16 %v911
        %v3147 = vunpack.c.h.b16 %v911
        %v3148 = vunpack.c.l.b16 %v912
        %v3149 = vunpack.c.h.b16 %v912
        %v3150 = vunpack.c.l.b16 %v913
        %v3151 = vunpack.c.h.b16 %v913
        %v3152 = vunpack.c.l.b16 %v914
        %v3153 = vunpack.c.h.b16 %v914
        %v3154 = vunpack.c.l.b16 %v915
        %v3155 = vunpack.c.h.b16 %v915
        %v3156 = vunpack.c.l.b16 %v916
        %v3157 = vunpack.c.h.b16 %v916
        %v3158 = vunpack.c.l.b16 %v917
        %v3159 = vunpack.c.h.b16 %v917
        %v3160 = vunpack.c.l.b16 %v918
        %v3161 = vunpack.c.h.b16 %v918
        %v3162 = vunpack.c.l.b16 %v919
        %v3163 = vunpack.c.h.b16 %v919
        %v3164 = vunpack.c.l.b16 %v920
        %v3165 = vunpack.c.h.b16 %v920
        %v3166 = vunpack.c.l.b16 %v921
        %v3167 = vunpack.c.h.b16 %v921
        %v3168 = vunpack.c.l.b16 %v922
        %v3169 = vunpack.c.h.b16 %v922
        %v3170 = vunpack.c.l.b16 %v923
        %v3171 = vunpack.c.h.b16 %v923
        %v3172 = vunpack.c.l.b16 %v924
        %v3173 = vunpack.c.h.b16 %v924
        %v3174 = vunpack.c.l.b16 %v925
        %v3175 = vunpack.c.h.b16 %v925
        %v3176 = vunpack.c.l.b16 %v926
        %v3177 = vunpack.c.h.b16 %v926
        %v3178 = vunpack.c.l.b16 %v927
        %v3179 = vunpack.c.h.b16 %v927
        %v3180 = vunpack.c.l.b16 %v928
        %v3181 = vunpack.c.h.b16 %v928
        %v3182 = vunpack.c.l.b16 %v929
        %v3183 = vunpack.c.h.b16 %v929
        %v3184 = vunpack.c.l.b16 %v930
        %v3185 = vunpack.c.h.b16 %v930
        %v3186 = vunpack.c.l.b16 %v931
        %v3187 = vunpack.c.h.b16 %v931
        %v3188 = vunpack.c.l.b16 %v932
        %v3189 = vunpack.c.h.b16 %v932
        %v3190 = vunpack.c.l.b16 %v933
        %v3191 = vunpack.c.h.b16 %v933
        %v3192 = vunpack.c.l.b16 %v934
        %v3193 = vunpack.c.h.b16 %v934
        %v3194 = vunpack.c.l.b16 %v935
        %v3195 = vunpack.c.h.b16 %v935
        %v3196 = vunpack.c.l.b16 %v936
        %v3197 = vunpack.c.h.b16 %v936
        %v3198 = vunpack.c.l.b16 %v937
        %v3199 = vunpack.c.h.b16 %v937
        %v3200 = vunpack.c.l.b16 %v938
        %v3201 = vunpack.c.h.b16 %v938
        %v3202 = vunpack.c.l.b16 %v939
        %v3203 = vunpack.c.h.b16 %v939
        %v3204 = vunpack.c.l.b16 %v940
        %v3205 = vunpack.c.h.b16 %v940
        %v3206 = vunpack.c.l.b16 %v941
        %v3207 = vunpack.c.h.b16 %v941
        %v3208 = vunpack.c.l.b16 %v942
        %v3209 = vunpack.c.h.b16 %v942
        %v3210 = vunpack.c.l.b16 %v943
        %v3211 = vunpack.c.h.b16 %v943
        %v3212 = vunpack.c.l.b16 %v944
        %v3213 = vunpack.c.h.b16 %v944
        %v3214 = vunpack.c.l.b16 %v945
        %v3215 = vunpack.c.h.b16 %v945
        %v3216 = vunpack.c.l.b16 %v946
        %v3217 = vunpack.c.h.b16 %v946
        %v3218 = vunpack.c.l.b16 %v947
        %v3219 = vunpack.c.h.b16 %v947
        %v3220 = vunpack.c.l.b16 %v948
        %v3221 = vunpack.c.h.b16 %v948
        %v3222 = vunpack.c.l.b16 %v949
        %v3223 = vunpack.c.h.b16 %v949
        %v3224 = vunpack.c.l.b16 %v950
        %v3225 = vunpack.c.h.b16 %v950
        %v3226 = vunpack.c.l.b16 %v951
        %v3227 = vunpack.c.h.b16 %v951
        %v3228 = vunpack.c.l.b16 %v952
        %v3229 = vunpack.c.h.b16 %v952
        %v3230 = vunpack.c.l.b16 %v953
        %v3231 = vunpack.c.h.b16 %v953
        %v3232 = vunpack.c.l.b16 %v954
        %v3233 = vunpack.c.h.b16 %v954
        %v3234 = vunpack.c.l.b16 %v955
        %v3235 = vunpack.c.h.b16 %v955
        %v3236 = vunpack.c.l.b16 %v956
        %v3237 = vunpack.c.h.b16 %v956
        %v3238 = vunpack.c.l.b16 %v957
        %v3239 = vunpack.c.h.b16 %v957
        %v3240 = vunpack.c.l.b16 %v958
        %v3241 = vunpack.c.h.b16 %v958
        %v3242 = vunpack.c.l.b16 %v959
        %v3243 = vunpack.c.h.b16 %v959
        %v3244 = vunpack.c.l.b16 %v960
        %v3245 = vunpack.c.h.b16 %v960
        %v3246 = vunpack.c.l.b16 %v961
        %v3247 = vunpack.c.h.b16 %v961
        %v3248 = vunpack.c.l.b16 %v962
        %v3249 = vunpack.c.h.b16 %v962
        %v3250 = vunpack.c.l.b16 %v963
        %v3251 = vunpack.c.h.b16 %v963
        %v3252 = vunpack.c.l.b16 %v964
        %v3253 = vunpack.c.h.b16 %v964
        %v3254 = vunpack.c.l.b16 %v965
        %v3255 = vunpack.c.h.b16 %v965
        %v3256 = vunpack.c.l.b16 %v966
        %v3257 = vunpack.c.h.b16 %v966
        %v3258 = vunpack.c.l.b16 %v967
        %v3259 = vunpack.c.h.b16 %v967
        %v3260 = vunpack.c.l.b16 %v968
        %v3261 = vunpack.c.h.b16 %v968
        %v3262 = vunpack.c.l.b16 %v969
        %v3263 = vunpack.c.h.b16 %v969
        %v3264 = vunpack.c.l.b16 %v970
        %v3265 = vunpack.c.h.b16 %v970
        %v3266 = vunpack.c.l.b16 %v971
        %v3267 = vunpack.c.h.b16 %v971
        %v3268 = vunpack.c.l.b16 %v972
        %v3269 = vunpack.c.h.b16 %v972
        %v3270 = vunpack.c.l.b16 %v973
        %v3271 = vunpack.c.h.b16 %v973
        %v3272 = vunpack.c.l.b16 %v974
        %v3273 = vunpack.c.h.b16 %v974
        %v3274 = vunpack.c.l.b16 %v975
        %v3275 = vunpack.c.h.b16 %v975
        %v3276 = vunpack.c.l.b16 %v976
        %v3277 = vunpack.c.h.b16 %v976
        %v3278 = vunpack.c.l.b16 %v977
        %v3279 = vunpack.c.h.b16 %v977
        %v3280 = vunpack.c.l.b16 %v978
        %v3281 = vunpack.c.h.b16 %v978
        %v3282 = vunpack.c.l.b16 %v979
        %v3283 = vunpack.c.h.b16 %v979
        %v3284 = vunpack.c.l.b16 %v980
        %v3285 = vunpack.c.h.b16 %v980
        %v3286 = vunpack.c.l.b16 %v981
        %v3287 = vunpack.c.h.b16 %v981
        %v3288 = vunpack.c.l.b16 %v982
        %v3289 = vunpack.c.h.b16 %v982
        %v3290 = vunpack.c.l.b16 %v983
        %v3291 = vunpack.c.h.b16 %v983
        %v3292 = vunpack.c.l.b16 %v984
        %v3293 = vunpack.c.h.b16 %v984
        %v3294 = vunpack.c.l.b16 %v985
        %v3295 = vunpack.c.h.b16 %v985
        %v3296 = vunpack.c.l.b16 %v986
        %v3297 = vunpack.c.h.b16 %v986
        %v3298 = vunpack.c.l.b16 %v987
        %v3299 = vunpack.c.h.b16 %v987
        %v3300 = vunpack.c.l.b16 %v988
        %v3301 = vunpack.c.h.b16 %v988
        %v3302 = vunpack.c.l.b16 %v989
        %v3303 = vunpack.c.h.b16 %v989
        %v3304 = vunpack.c.l.b16 %v990
        %v3305 = vunpack.c.h.b16 %v990
        %v3306 = vunpack.c.l.b16 %v991
        %v3307 = vunpack.c.h.b16 %v991
        %v3308 = vunpack.c.l.b16 %v992
        %v3309 = vunpack.c.h.b16 %v992
        %v3310 = vunpack.c.l.b16 %v993
        %v3311 = vunpack.c.h.b16 %v993
        %v3312 = vunpack.c.l.b16 %v994
        %v3313 = vunpack.c.h.b16 %v994
        %v3314 = vunpack.c.l.b16 %v995
        %v3315 = vunpack.c.h.b16 %v995
        %v3316 = vunpack.c.l.b16 %v996
        %v3317 = vunpack.c.h.b16 %v996
        %v3318 = vunpack.c.l.b16 %v997
        %v3319 = vunpack.c.h.b16 %v997
        %v3320 = vunpack.c.l.b16 %v998
        %v3321 = vunpack.c.h.b16 %v998
        %v3322 = vunpack.c.l.b16 %v999
        %v3323 = vunpack.c.h.b16 %v999
        %v3324 = vunpack.c.l.b16 %v1000
        %v3325 = vunpack.c.h.b16 %v1000
        %v3326 = vunpack.c.l.b16 %v1001
        %v3327 = vunpack.c.h.b16 %v1001
        %v3328 = vunpack.c.l.b16 %v1002
        %v3329 = vunpack.c.h.b16 %v1002
        %v3330 = vunpack.c.l.b16 %v1003
        %v3331 = vunpack.c.h.b16 %v1003
        %v3332 = vunpack.c.l.b16 %v1004
        %v3333 = vunpack.c.h.b16 %v1004
        %v3334 = vunpack.c.l.b16 %v1005
        %v3335 = vunpack.c.h.b16 %v1005
        %v3336 = vunpack.c.l.b16 %v1006
        %v3337 = vunpack.c.h.b16 %v1006
        %v3338 = vunpack.c.l.b16 %v1007
        %v3339 = vunpack.c.h.b16 %v1007
        %v3340 = vunpack.c.l.b16 %v1008
        %v3341 = vunpack.c.h.b16 %v1008
        %v3342 = vunpack.c.l.b16 %v1009
        %v3343 = vunpack.c.h.b16 %v1009
        %v3344 = vunpack.c.l.b16 %v1010
        %v3345 = vunpack.c.h.b16 %v1010
        %v3346 = vunpack.c.l.b16 %v1011
        %v3347 = vunpack.c.h.b16 %v1011
        %v3348 = vunpack.c.l.b16 %v1012
        %v3349 = vunpack.c.h.b16 %v1012
        %v3350 = vunpack.c.l.b16 %v1013
        %v3351 = vunpack.c.h.b16 %v1013
        %v3352 = vunpack.c.l.b16 %v1014
        %v3353 = vunpack.c.h.b16 %v1014
        %v3354 = vunpack.c.l.b16 %v1015
        %v3355 = vunpack.c.h.b16 %v1015
        %v3356 = vunpack.c.l.b16 %v1016
        %v3357 = vunpack.c.h.b16 %v1016
        %v3358 = vunpack.c.l.b16 %v1017
        %v3359 = vunpack.c.h.b16 %v1017
        %v3360 = vunpack.c.l.b16 %v1018
        %v3361 = vunpack.c.h.b16 %v1018
        %v3362 = vunpack.c.l.b16 %v1019
        %v3363 = vunpack.c.h.b16 %v1019
        %v3364 = vunpack.c.l.b16 %v1020
        %v3365 = vunpack.c.h.b16 %v1020
        %v3366 = vunpack.c.l.b16 %v1021
        %v3367 = vunpack.c.h.b16 %v1021
        %v3368 = vunpack.c.l.b16 %v1022
        %v3369 = vunpack.c.h.b16 %v1022
        %v3370 = vunpack.c.l.b16 %v1023
        %v3371 = vunpack.c.h.b16 %v1023
        %v3372 = vunpack.c.l.b16 %v1024
        %v3373 = vunpack.c.h.b16 %v1024
        %v3374 = vunpack.c.l.b16 %v1025
        %v3375 = vunpack.c.h.b16 %v1025
        %v3376 = vunpack.c.l.b16 %v1026
        %v3377 = vunpack.c.h.b16 %v1026
        %v3378 = vunpack.c.l.b16 %v1027
        %v3379 = vunpack.c.h.b16 %v1027
        %v3380 = vunpack.c.l.b16 %v1028
        %v3381 = vunpack.c.h.b16 %v1028
        %v3382 = vunpack.c.l.b16 %v1029
        %v3383 = vunpack.c.h.b16 %v1029
        %v3384 = vunpack.c.l.b16 %v1030
        %v3385 = vunpack.c.h.b16 %v1030
        %v3386 = vunpack.c.l.b16 %v1031
        %v3387 = vunpack.c.h.b16 %v1031
        %v3388 = vunpack.c.l.b16 %v1032
        %v3389 = vunpack.c.h.b16 %v1032
        %v3390 = vunpack.c.l.b16 %v1033
        %v3391 = vunpack.c.h.b16 %v1033
        %v3392 = vunpack.c.l.b16 %v1034
        %v3393 = vunpack.c.h.b16 %v1034
        %v3394 = vunpack.c.l.b16 %v1035
        %v3395 = vunpack.c.h.b16 %v1035
        %v3396 = vunpack.c.l.b16 %v1036
        %v3397 = vunpack.c.h.b16 %v1036
        %v3398 = vunpack.c.l.b16 %v1037
        %v3399 = vunpack.c.h.b16 %v1037
        %v3400 = vunpack.c.l.b16 %v1038
        %v3401 = vunpack.c.h.b16 %v1038
        %v3402 = vunpack.c.l.b16 %v1039
        %v3403 = vunpack.c.h.b16 %v1039
        %v3404 = vunpack.c.l.b16 %v1040
        %v3405 = vunpack.c.h.b16 %v1040
        %v3406 = vunpack.c.l.b16 %v1041
        %v3407 = vunpack.c.h.b16 %v1041
        %v3408 = vunpack.c.l.b16 %v1042
        %v3409 = vunpack.c.h.b16 %v1042
        %v3410 = vunpack.c.l.b16 %v1043
        %v3411 = vunpack.c.h.b16 %v1043
        %v3412 = vunpack.c.l.b16 %v1044
        %v3413 = vunpack.c.h.b16 %v1044
        %v3414 = vunpack.c.l.b16 %v1045
        %v3415 = vunpack.c.h.b16 %v1045
        %v3416 = vunpack.c.l.b16 %v1046
        %v3417 = vunpack.c.h.b16 %v1046
        %v3418 = vunpack.c.l.b16 %v1047
        %v3419 = vunpack.c.h.b16 %v1047
        %v3420 = vunpack.c.l.b16 %v1048
        %v3421 = vunpack.c.h.b16 %v1048
        %v3422 = vunpack.c.l.b16 %v1049
        %v3423 = vunpack.c.h.b16 %v1049
        %v3424 = vunpack.c.l.b16 %v1050
        %v3425 = vunpack.c.h.b16 %v1050
        %v3426 = vunpack.c.l.b16 %v1051
        %v3427 = vunpack.c.h.b16 %v1051
        %v3428 = vunpack.c.l.b16 %v1052
        %v3429 = vunpack.c.h.b16 %v1052
        %v3430 = vunpack.c.l.b16 %v1053
        %v3431 = vunpack.c.h.b16 %v1053
        %v3432 = vunpack.c.l.b16 %v1054
        %v3433 = vunpack.c.h.b16 %v1054
        %v3434 = vunpack.c.l.b16 %v1055
        %v3435 = vunpack.c.h.b16 %v1055
        %v3436 = vunpack.c.l.b16 %v1056
        %v3437 = vunpack.c.h.b16 %v1056
        %v3438 = vunpack.c.l.b16 %v1057
        %v3439 = vunpack.c.h.b16 %v1057
        %v3440 = vunpack.c.l.b16 %v1058
        %v3441 = vunpack.c.h.b16 %v1058
        %v3442 = vunpack.c.l.b16 %v1059
        %v3443 = vunpack.c.h.b16 %v1059
        %v3444 = vunpack.c.l.b16 %v1060
        %v3445 = vunpack.c.h.b16 %v1060
        %v3446 = vunpack.c.l.b16 %v1061
        %v3447 = vunpack.c.h.b16 %v1061
        %v3448 = vunpack.c.l.b16 %v1062
        %v3449 = vunpack.c.h.b16 %v1062
        %v3450 = vunpack.c.l.b16 %v1063
        %v3451 = vunpack.c.h.b16 %v1063
        %v3452 = vunpack.c.l.b16 %v1064
        %v3453 = vunpack.c.h.b16 %v1064
        %v3454 = vunpack.c.l.b16 %v1065
        %v3455 = vunpack.c.h.b16 %v1065
        %v3456 = vunpack.c.l.b16 %v1066
        %v3457 = vunpack.c.h.b16 %v1066
        %v3458 = vunpack.c.l.b16 %v1067
        %v3459 = vunpack.c.h.b16 %v1067
        %v3460 = vunpack.c.l.b16 %v1068
        %v3461 = vunpack.c.h.b16 %v1068
        %v3462 = vunpack.c.l.b16 %v1069
        %v3463 = vunpack.c.h.b16 %v1069
        %v3464 = vunpack.c.l.b16 %v1070
        %v3465 = vunpack.c.h.b16 %v1070
        %v3466 = vunpack.c.l.b16 %v1071
        %v3467 = vunpack.c.h.b16 %v1071
        %v3468 = vunpack.c.l.b16 %v1072
        %v3469 = vunpack.c.h.b16 %v1072
        %v3470 = vunpack.c.l.b16 %v1073
        %v3471 = vunpack.c.h.b16 %v1073
        %v3472 = vunpack.c.l.b16 %v1074
        %v3473 = vunpack.c.h.b16 %v1074
        %v3474 = vunpack.c.l.b16 %v1075
        %v3475 = vunpack.c.h.b16 %v1075
        %v3476 = vunpack.c.l.b16 %v1076
        %v3477 = vunpack.c.h.b16 %v1076
        %v3478 = vunpack.c.l.b16 %v1077
        %v3479 = vunpack.c.h.b16 %v1077
        %v3480 = vunpack.c.l.b16 %v1078
        %v3481 = vunpack.c.h.b16 %v1078
        %v3482 = vunpack.c.l.b16 %v1079
        %v3483 = vunpack.c.h.b16 %v1079
        %v3484 = vunpack.c.l.b16 %v1080
        %v3485 = vunpack.c.h.b16 %v1080
        %v3486 = vunpack.c.l.b16 %v1081
        %v3487 = vunpack.c.h.b16 %v1081
        %v3488 = vunpack.c.l.b16 %v1082
        %v3489 = vunpack.c.h.b16 %v1082
        %v3490 = vunpack.c.l.b16 %v1083
        %v3491 = vunpack.c.h.b16 %v1083
        %v3492 = vunpack.c.l.b16 %v1084
        %v3493 = vunpack.c.h.b16 %v1084
        %v3494 = vunpack.c.l.b16 %v1085
        %v3495 = vunpack.c.h.b16 %v1085
        %v3496 = vunpack.c.l.b16 %v1086
        %v3497 = vunpack.c.h.b16 %v1086
        %v3498 = vunpack.c.l.b16 %v1087
        %v3499 = vunpack.c.h.b16 %v1087
        %v3500 = vunpack.c.l.b16 %v1088
        %v3501 = vunpack.c.h.b16 %v1088
        %v3502 = vunpack.c.l.b16 %v1089
        %v3503 = vunpack.c.h.b16 %v1089
        %v3504 = vunpack.c.l.b16 %v1090
        %v3505 = vunpack.c.h.b16 %v1090
        %v3506 = vunpack.c.l.b16 %v1091
        %v3507 = vunpack.c.h.b16 %v1091
        %v3508 = vunpack.c.l.b16 %v1092
        %v3509 = vunpack.c.h.b16 %v1092
        %v3510 = vunpack.c.l.b16 %v1093
        %v3511 = vunpack.c.h.b16 %v1093
        %v3512 = vunpack.c.l.b16 %v1094
        %v3513 = vunpack.c.h.b16 %v1094
        %v3514 = vunpack.c.l.b16 %v1095
        %v3515 = vunpack.c.h.b16 %v1095
        %v3516 = vunpack.c.l.b16 %v1096
        %v3517 = vunpack.c.h.b16 %v1096
        %v3518 = vunpack.c.l.b16 %v1097
        %v3519 = vunpack.c.h.b16 %v1097
        %v3520 = vunpack.c.l.b16 %v1098
        %v3521 = vunpack.c.h.b16 %v1098
        %v3522 = vunpack.c.l.b16 %v1099
        %v3523 = vunpack.c.h.b16 %v1099
        %v3524 = vunpack.c.l.b16 %v1100
        %v3525 = vunpack.c.h.b16 %v1100
        %v3526 = vunpack.c.l.b16 %v1101
        %v3527 = vunpack.c.h.b16 %v1101
        %v3528 = vunpack.c.l.b16 %v1102
        %v3529 = vunpack.c.h.b16 %v1102
        %v3530 = vunpack.c.l.b16 %v1103
        %v3531 = vunpack.c.h.b16 %v1103
        %v3532 = vunpack.c.l.b16 %v1104
        %v3533 = vunpack.c.h.b16 %v1104
        %v3534 = vunpack.c.l.b16 %v1105
        %v3535 = vunpack.c.h.b16 %v1105
        %v3536 = vunpack.c.l.b16 %v1106
        %v3537 = vunpack.c.h.b16 %v1106
        %v3538 = vunpack.c.l.b16 %v1107
        %v3539 = vunpack.c.h.b16 %v1107
        %v3540 = vunpack.c.l.b16 %v1108
        %v3541 = vunpack.c.h.b16 %v1108
        %v3542 = vunpack.c.l.b16 %v1109
        %v3543 = vunpack.c.h.b16 %v1109
        %v3544 = vunpack.c.l.b16 %v1110
        %v3545 = vunpack.c.h.b16 %v1110
        %v3546 = vunpack.c.l.b16 %v1111
        %v3547 = vunpack.c.h.b16 %v1111
        %v3548 = vunpack.c.l.b16 %v1112
        %v3549 = vunpack.c.h.b16 %v1112
        %v3550 = vunpack.c.l.b16 %v1113
        %v3551 = vunpack.c.h.b16 %v1113
        %v3552 = vunpack.c.l.b16 %v1114
        %v3553 = vunpack.c.h.b16 %v1114
        %v3554 = vunpack.c.l.b16 %v1115
        %v3555 = vunpack.c.h.b16 %v1115
        %v3556 = vunpack.c.l.b16 %v1116
        %v3557 = vunpack.c.h.b16 %v1116
        %v3558 = vunpack.c.l.b16 %v1117
        %v3559 = vunpack.c.h.b16 %v1117
        %v3560 = vunpack.c.l.b16 %v1118
        %v3561 = vunpack.c.h.b16 %v1118
        %v3562 = vunpack.c.l.b16 %v1119
        %v3563 = vunpack.c.h.b16 %v1119
        %v3564 = vunpack.c.l.b16 %v1120
        %v3565 = vunpack.c.h.b16 %v1120
        %v3566 = vunpack.c.l.b16 %v1121
        %v3567 = vunpack.c.h.b16 %v1121
        %v3568 = vunpack.c.l.b16 %v1122
        %v3569 = vunpack.c.h.b16 %v1122
        %v3570 = vunpack.c.l.b16 %v1123
        %v3571 = vunpack.c.h.b16 %v1123
        %v3572 = vunpack.c.l.b16 %v1124
        %v3573 = vunpack.c.h.b16 %v1124
        %v3574 = vunpack.c.l.b16 %v1125
        %v3575 = vunpack.c.h.b16 %v1125
        %v3576 = vunpack.c.l.b16 %v1126
        %v3577 = vunpack.c.h.b16 %v1126
        %v3578 = vunpack.c.l.b16 %v1127
        %v3579 = vunpack.c.h.b16 %v1127
        %v3580 = vunpack.c.l.b16 %v1128
        %v3581 = vunpack.c.h.b16 %v1128
        %v3582 = vunpack.c.l.b16 %v1129
        %v3583 = vunpack.c.h.b16 %v1129
        %v3584 = vunpack.c.l.b16 %v1130
        %v3585 = vunpack.c.h.b16 %v1130
        %v3586 = vunpack.c.l.b16 %v1131
        %v3587 = vunpack.c.h.b16 %v1131
        %v3588 = vunpack.c.l.b16 %v1132
        %v3589 = vunpack.c.h.b16 %v1132
        %v3590 = vunpack.c.l.b16 %v1133
        %v3591 = vunpack.c.h.b16 %v1133
        %v3592 = vunpack.c.l.b16 %v1134
        %v3593 = vunpack.c.h.b16 %v1134
        %v3594 = vunpack.c.l.b16 %v1135
        %v3595 = vunpack.c.h.b16 %v1135
        %v3596 = vunpack.c.l.b16 %v1136
        %v3597 = vunpack.c.h.b16 %v1136
        %v3598 = vunpack.c.l.b16 %v1137
        %v3599 = vunpack.c.h.b16 %v1137
        %v3600 = vunpack.c.l.b16 %v1138
        %v3601 = vunpack.c.h.b16 %v1138
        %v3602 = vunpack.c.l.b16 %v1139
        %v3603 = vunpack.c.h.b16 %v1139
        %v3604 = vunpack.c.l.b16 %v1140
        %v3605 = vunpack.c.h.b16 %v1140
        %v3606 = vunpack.c.l.b16 %v1141
        %v3607 = vunpack.c.h.b16 %v1141
        %v3608 = vunpack.c.l.b16 %v1142
        %v3609 = vunpack.c.h.b16 %v1142
        %v3610 = vunpack.c.l.b16 %v1143
        %v3611 = vunpack.c.h.b16 %v1143
        %v3612 = vunpack.c.l.b16 %v1144
        %v3613 = vunpack.c.h.b16 %v1144
        %v3614 = vunpack.c.l.b16 %v1145
        %v3615 = vunpack.c.h.b16 %v1145
        %v3616 = vunpack.c.l.b16 %v1146
        %v3617 = vunpack.c.h.b16 %v1146
        %v3618 = vunpack.c.l.b16 %v1147
        %v3619 = vunpack.c.h.b16 %v1147
        %v3620 = vunpack.c.l.b16 %v1148
        %v3621 = vunpack.c.h.b16 %v1148
        %v3622 = vunpack.c.l.b16 %v1149
        %v3623 = vunpack.c.h.b16 %v1149
        %v3624 = vunpack.c.l.b16 %v1150
        %v3625 = vunpack.c.h.b16 %v1150
        %v3626 = vunpack.c.l.b16 %v1151
        %v3627 = vunpack.c.h.b16 %v1151
        %v3628 = vunpack.c.l.b16 %v1152
        %v3629 = vunpack.c.h.b16 %v1152
        %v3630 = vunpack.c.l.b16 %v1153
        %v3631 = vunpack.c.h.b16 %v1153
        %v3632 = vunpack.c.l.b16 %v1154
        %v3633 = vunpack.c.h.b16 %v1154
        %v3634 = vunpack.c.l.b16 %v1155
        %v3635 = vunpack.c.h.b16 %v1155
        %v3636 = vunpack.c.l.b16 %v1156
        %v3637 = vunpack.c.h.b16 %v1156
        %v3638 = vunpack.c.l.b16 %v1157
        %v3639 = vunpack.c.h.b16 %v1157
        %v3640 = vunpack.c.l.b16 %v1158
        %v3641 = vunpack.c.h.b16 %v1158
        %v3642 = vunpack.c.l.b16 %v1159
        %v3643 = vunpack.c.h.b16 %v1159
        %v3644 = vunpack.c.l.b16 %v1160
        %v3645 = vunpack.c.h.b16 %v1160
        %v3646 = vunpack.c.l.b16 %v1161
        %v3647 = vunpack.c.h.b16 %v1161
        %v3648 = vunpack.c.l.b16 %v1162
        %v3649 = vunpack.c.h.b16 %v1162
        %v3650 = vunpack.c.l.b16 %v1163
        %v3651 = vunpack.c.h.b16 %v1163
        %v3652 = vunpack.c.l.b16 %v1164
        %v3653 = vunpack.c.h.b16 %v1164
        %v3654 = vunpack.c.l.b16 %v1165
        %v3655 = vunpack.c.h.b16 %v1165
        %v3656 = vunpack.c.l.b16 %v1166
        %v3657 = vunpack.c.h.b16 %v1166
        %v3658 = vunpack.c.l.b16 %v1167
        %v3659 = vunpack.c.h.b16 %v1167
        %v3660 = vunpack.c.l.b16 %v1168
        %v3661 = vunpack.c.h.b16 %v1168
        %v3662 = vunpack.c.l.b16 %v1169
        %v3663 = vunpack.c.h.b16 %v1169
        %v3664 = vunpack.c.l.b16 %v1170
        %v3665 = vunpack.c.h.b16 %v1170
        %v3666 = vunpack.c.l.b16 %v1171
        %v3667 = vunpack.c.h.b16 %v1171
        %v3668 = vunpack.c.l.b16 %v1172
        %v3669 = vunpack.c.h.b16 %v1172
        %v3670 = vunpack.c.l.b16 %v1173
        %v3671 = vunpack.c.h.b16 %v1173
        %v3672 = vunpack.c.l.b16 %v1174
        %v3673 = vunpack.c.h.b16 %v1174
        %v3674 = vunpack.c.l.b16 %v1175
        %v3675 = vunpack.c.h.b16 %v1175
        %v3676 = vunpack.c.l.b16 %v1176
        %v3677 = vunpack.c.h.b16 %v1176
        %v3678 = vunpack.c.l.b16 %v1177
        %v3679 = vunpack.c.h.b16 %v1177
        %v3680 = vunpack.c.l.b16 %v1178
        %v3681 = vunpack.c.h.b16 %v1178
        %v3682 = vunpack.c.l.b16 %v1179
        %v3683 = vunpack.c.h.b16 %v1179
        %v3684 = vunpack.c.l.b16 %v1180
        %v3685 = vunpack.c.h.b16 %v1180
        %v3686 = vunpack.c.l.b16 %v1181
        %v3687 = vunpack.c.h.b16 %v1181
        %v3688 = vunpack.c.l.b16 %v1182
        %v3689 = vunpack.c.h.b16 %v1182
        %v3690 = vunpack.c.l.b16 %v1183
        %v3691 = vunpack.c.h.b16 %v1183
        %v3692 = vunpack.c.l.b16 %v1184
        %v3693 = vunpack.c.h.b16 %v1184
        %v3694 = vunpack.c.l.b16 %v1185
        %v3695 = vunpack.c.h.b16 %v1185
        %v3696 = vunpack.c.l.b16 %v1186
        %v3697 = vunpack.c.h.b16 %v1186
        %v3698 = vunpack.c.l.b16 %v1187
        %v3699 = vunpack.c.h.b16 %v1187
        %v3700 = vunpack.c.l.b16 %v1188
        %v3701 = vunpack.c.h.b16 %v1188
        %v3702 = vunpack.c.l.b16 %v1189
        %v3703 = vunpack.c.h.b16 %v1189
        %v3704 = vunpack.c.l.b16 %v1190
        %v3705 = vunpack.c.h.b16 %v1190
        %v3706 = vunpack.c.l.b16 %v1191
        %v3707 = vunpack.c.h.b16 %v1191
        %v3708 = vunpack.c.l.b16 %v1192
        %v3709 = vunpack.c.h.b16 %v1192
        %v3710 = vunpack.c.l.b16 %v1193
        %v3711 = vunpack.c.h.b16 %v1193
        %v3712 = vunpack.c.l.b16 %v1194
        %v3713 = vunpack.c.h.b16 %v1194
        %v3714 = vunpack.c.l.b16 %v1195
        %v3715 = vunpack.c.h.b16 %v1195
        %v3716 = vunpack.c.l.b16 %v1196
        %v3717 = vunpack.c.h.b16 %v1196
        %v3718 = vunpack.c.l.b16 %v1197
        %v3719 = vunpack.c.h.b16 %v1197
        %v3720 = vunpack.c.l.b16 %v1198
        %v3721 = vunpack.c.h.b16 %v1198
        %v3722 = vunpack.c.l.b16 %v1199
        %v3723 = vunpack.c.h.b16 %v1199
        %v3724 = vunpack.c.l.b16 %v1200
        %v3725 = vunpack.c.h.b16 %v1200
        %v3726 = vunpack.c.l.b16 %v1201
        %v3727 = vunpack.c.h.b16 %v1201
        %v3728 = vunpack.c.l.b16 %v1202
        %v3729 = vunpack.c.h.b16 %v1202
        %v3730 = vunpack.c.l.b16 %v1203
        %v3731 = vunpack.c.h.b16 %v1203
        %v3732 = vunpack.c.l.b16 %v1204
        %v3733 = vunpack.c.h.b16 %v1204
        %v3734 = vunpack.c.l.b16 %v1205
        %v3735 = vunpack.c.h.b16 %v1205
        %v3736 = vunpack.c.l.b16 %v1206
        %v3737 = vunpack.c.h.b16 %v1206
        %v3738 = vunpack.c.l.b16 %v1207
        %v3739 = vunpack.c.h.b16 %v1207
        %v3740 = vunpack.c.l.b16 %v1208
        %v3741 = vunpack.c.h.b16 %v1208
        %v3742 = vunpack.c.l.b16 %v1209
        %v3743 = vunpack.c.h.b16 %v1209
        %v3744 = vunpack.c.l.b16 %v1210
        %v3745 = vunpack.c.h.b16 %v1210
        %v3746 = vunpack.c.l.b16 %v1211
        %v3747 = vunpack.c.h.b16 %v1211
        %v3748 = vunpack.c.l.b16 %v1212
        %v3749 = vunpack.c.h.b16 %v1212
        %v3750 = vunpack.c.l.b16 %v1213
        %v3751 = vunpack.c.h.b16 %v1213
        %v3752 = vunpack.c.l.b16 %v1214
        %v3753 = vunpack.c.h.b16 %v1214
        %v3754 = vunpack.c.l.b16 %v1215
        %v3755 = vunpack.c.h.b16 %v1215
        %v3756 = vunpack.c.l.b16 %v1216
        %v3757 = vunpack.c.h.b16 %v1216
        %v3758 = vunpack.c.l.b16 %v1217
        %v3759 = vunpack.c.h.b16 %v1217
        %v3760 = vunpack.c.l.b16 %v1218
        %v3761 = vunpack.c.h.b16 %v1218
        %v3762 = vunpack.c.l.b16 %v1219
        %v3763 = vunpack.c.h.b16 %v1219
        %v3764 = vunpack.c.l.b16 %v1220
        %v3765 = vunpack.c.h.b16 %v1220
        %v3766 = vunpack.c.l.b16 %v1221
        %v3767 = vunpack.c.h.b16 %v1221
        %v3768 = vunpack.c.l.b16 %v1222
        %v3769 = vunpack.c.h.b16 %v1222
        %v3770 = vunpack.c.l.b16 %v1223
        %v3771 = vunpack.c.h.b16 %v1223
        %v3772 = vunpack.c.l.b16 %v1224
        %v3773 = vunpack.c.h.b16 %v1224
        %v3774 = vunpack.c.l.b16 %v1225
        %v3775 = vunpack.c.h.b16 %v1225
        %v3776 = vunpack.c.l.b16 %v1226
        %v3777 = vunpack.c.h.b16 %v1226
        %v3778 = vunpack.c.l.b16 %v1227
        %v3779 = vunpack.c.h.b16 %v1227
        %v3780 = vunpack.c.l.b16 %v1228
        %v3781 = vunpack.c.h.b16 %v1228
        %v3782 = vunpack.c.l.b16 %v1229
        %v3783 = vunpack.c.h.b16 %v1229
        %v3784 = vunpack.c.l.b16 %v1230
        %v3785 = vunpack.c.h.b16 %v1230
        %v3786 = vunpack.c.l.b16 %v1231
        %v3787 = vunpack.c.h.b16 %v1231
        %v3788 = vunpack.c.l.b16 %v1232
        %v3789 = vunpack.c.h.b16 %v1232
        %v3790 = vunpack.c.l.b16 %v1233
        %v3791 = vunpack.c.h.b16 %v1233
        %v3792 = vunpack.c.l.b16 %v1234
        %v3793 = vunpack.c.h.b16 %v1234
        %v3794 = vunpack.c.l.b16 %v1235
        %v3795 = vunpack.c.h.b16 %v1235
        %v3796 = vunpack.c.l.b16 %v1236
        %v3797 = vunpack.c.h.b16 %v1236
        %v3798 = vunpack.c.l.b16 %v1237
        %v3799 = vunpack.c.h.b16 %v1237
        %v3800 = vunpack.c.l.b16 %v1238
        %v3801 = vunpack.c.h.b16 %v1238
        %v3802 = vunpack.c.l.b16 %v1239
        %v3803 = vunpack.c.h.b16 %v1239
        %v3804 = vunpack.c.l.b16 %v1240
        %v3805 = vunpack.c.h.b16 %v1240
        %v3806 = vunpack.c.l.b16 %v1241
        %v3807 = vunpack.c.h.b16 %v1241
        %v3808 = vunpack.c.l.b16 %v1242
        %v3809 = vunpack.c.h.b16 %v1242
        %v3810 = vunpack.c.l.b16 %v1243
        %v3811 = vunpack.c.h.b16 %v1243
        %v3812 = vunpack.c.l.b16 %v1244
        %v3813 = vunpack.c.h.b16 %v1244
        %v3814 = vunpack.c.l.b16 %v1245
        %v3815 = vunpack.c.h.b16 %v1245
        %v3816 = vunpack.c.l.b16 %v1246
        %v3817 = vunpack.c.h.b16 %v1246
        %v3818 = vunpack.c.l.b16 %v1247
        %v3819 = vunpack.c.h.b16 %v1247
        %v3820 = vunpack.c.l.b16 %v1248
        %v3821 = vunpack.c.h.b16 %v1248
        %v3822 = vunpack.c.l.b16 %v1249
        %v3823 = vunpack.c.h.b16 %v1249
        %v3824 = vunpack.c.l.b16 %v1250
        %v3825 = vunpack.c.h.b16 %v1250
        %v3826 = vunpack.c.l.b16 %v1251
        %v3827 = vunpack.c.h.b16 %v1251
        %v3828 = vunpack.c.l.b16 %v1252
        %v3829 = vunpack.c.h.b16 %v1252
        %v3830 = vunpack.c.l.b16 %v1253
        %v3831 = vunpack.c.h.b16 %v1253
        %v3832 = vunpack.c.l.b16 %v1254
        %v3833 = vunpack.c.h.b16 %v1254
        %v3834 = vunpack.c.l.b16 %v1255
        %v3835 = vunpack.c.h.b16 %v1255
        %v3836 = vunpack.c.l.b16 %v1256
        %v3837 = vunpack.c.h.b16 %v1256
        %v3838 = vunpack.c.l.b16 %v1257
        %v3839 = vunpack.c.h.b16 %v1257
        %v3840 = vunpack.c.l.b16 %v1258
        %v3841 = vunpack.c.h.b16 %v1258
        %v3842 = vunpack.c.l.b16 %v1259
        %v3843 = vunpack.c.h.b16 %v1259
        %v3844 = vunpack.c.l.b16 %v1260
        %v3845 = vunpack.c.h.b16 %v1260
        %v3846 = vunpack.c.l.b16 %v1261
        %v3847 = vunpack.c.h.b16 %v1261
        %v3848 = vunpack.c.l.b16 %v1262
        %v3849 = vunpack.c.h.b16 %v1262
        %v3850 = vunpack.c.l.b16 %v1263
        %v3851 = vunpack.c.h.b16 %v1263
        %v3852 = vunpack.c.l.b16 %v1264
        %v3853 = vunpack.c.h.b16 %v1264
        %v3854 = vunpack.c.l.b16 %v1265
        %v3855 = vunpack.c.h.b16 %v1265
        %v3856 = vunpack.c.l.b16 %v1266
        %v3857 = vunpack.c.h.b16 %v1266
        %v3858 = vunpack.c.l.b16 %v1267
        %v3859 = vunpack.c.h.b16 %v1267
        %v3860 = vunpack.c.l.b16 %v1268
        %v3861 = vunpack.c.h.b16 %v1268
        %v3862 = vunpack.c.l.b16 %v1269
        %v3863 = vunpack.c.h.b16 %v1269
        %v3864 = vunpack.c.l.b16 %v1270
        %v3865 = vunpack.c.h.b16 %v1270
        %v3866 = vunpack.c.l.b16 %v1271
        %v3867 = vunpack.c.h.b16 %v1271
        %v3868 = vunpack.c.l.b16 %v1272
        %v3869 = vunpack.c.h.b16 %v1272
        %v3870 = vunpack.c.l.b16 %v1273
        %v3871 = vunpack.c.h.b16 %v1273
        %v3872 = vunpack.c.l.b16 %v1274
        %v3873 = vunpack.c.h.b16 %v1274
        %v3874 = vunpack.c.l.b16 %v1275
        %v3875 = vunpack.c.h.b16 %v1275
        %v3876 = vunpack.c.l.b16 %v1276
        %v3877 = vunpack.c.h.b16 %v1276
        %v3878 = vunpack.c.l.b16 %v1277
        %v3879 = vunpack.c.h.b16 %v1277
        %v3880 = vunpack.c.l.b16 %v1278
        %v3881 = vunpack.c.h.b16 %v1278
        %v3882 = vunpack.c.l.b16 %v1279
        %v3883 = vunpack.c.h.b16 %v1279
        %v3884 = vunpack.c.l.b16 %v1280
        %v3885 = vunpack.c.h.b16 %v1280
        %v3886 = vunpack.c.l.b16 %v1281
        %v3887 = vunpack.c.h.b16 %v1281
        %v3888 = vunpack.c.l.b16 %v1282
        %v3889 = vunpack.c.h.b16 %v1282
        %v3890 = vunpack.c.l.b16 %v1283
        %v3891 = vunpack.c.h.b16 %v1283
        %v3892 = vunpack.c.l.b16 %v1284
        %v3893 = vunpack.c.h.b16 %v1284
        %v3894 = vunpack.c.l.b16 %v1285
        %v3895 = vunpack.c.h.b16 %v1285
        %v3896 = vunpack.c.l.b16 %v1286
        %v3897 = vunpack.c.h.b16 %v1286
        %v3898 = vunpack.c.l.b16 %v1287
        %v3899 = vunpack.c.h.b16 %v1287
        %v3900 = vunpack.c.l.b16 %v1288
        %v3901 = vunpack.c.h.b16 %v1288
        %v3902 = vunpack.c.l.b16 %v1289
        %v3903 = vunpack.c.h.b16 %v1289
        %v3904 = vunpack.c.l.b16 %v1290
        %v3905 = vunpack.c.h.b16 %v1290
        %v3906 = vunpack.c.l.b16 %v1291
        %v3907 = vunpack.c.h.b16 %v1291
        %v3908 = vunpack.c.l.b16 %v1292
        %v3909 = vunpack.c.h.b16 %v1292
        %v3910 = vunpack.c.l.b16 %v1293
        %v3911 = vunpack.c.h.b16 %v1293
        %v3912 = vunpack.c.l.b16 %v1294
        %v3913 = vunpack.c.h.b16 %v1294
        %v3914 = vunpack.c.l.b16 %v1295
        %v3915 = vunpack.c.h.b16 %v1295
        %v3916 = vunpack.c.l.b16 %v1296
        %v3917 = vunpack.c.h.b16 %v1296
        %v3918 = vunpack.c.l.b16 %v1297
        %v3919 = vunpack.c.h.b16 %v1297
        %v3920 = vunpack.c.l.b16 %v1298
        %v3921 = vunpack.c.h.b16 %v1298
        %v3922 = vunpack.c.l.b16 %v1299
        %v3923 = vunpack.c.h.b16 %v1299
        %v3924 = vunpack.c.l.b16 %v1300
        %v3925 = vunpack.c.h.b16 %v1300
        %v3926 = vunpack.c.l.b16 %v1301
        %v3927 = vunpack.c.h.b16 %v1301
        %v3928 = vunpack.c.l.b16 %v1302
        %v3929 = vunpack.c.h.b16 %v1302
        %v3930 = vunpack.c.l.b16 %v1303
        %v3931 = vunpack.c.h.b16 %v1303
        %v3932 = vunpack.c.l.b16 %v1304
        %v3933 = vunpack.c.h.b16 %v1304
        %v3934 = vunpack.c.l.b16 %v1305
        %v3935 = vunpack.c.h.b16 %v1305
        %v3936 = vunpack.c.l.b16 %v1306
        %v3937 = vunpack.c.h.b16 %v1306
        %v3938 = vunpack.c.l.b16 %v1307
        %v3939 = vunpack.c.h.b16 %v1307
        %v3940 = vunpack.c.l.b16 %v1308
        %v3941 = vunpack.c.h.b16 %v1308
        %v3942 = vunpack.c.l.b16 %v1309
        %v3943 = vunpack.c.h.b16 %v1309
        %v3944 = vunpack.c.l.b16 %v1310
        %v3945 = vunpack.c.h.b16 %v1310
        %v3946 = vunpack.c.l.b16 %v1311
        %v3947 = vunpack.c.h.b16 %v1311
        %v3948 = vunpack.c.l.b16 %v1312
        %v3949 = vunpack.c.h.b16 %v1312
        %v3950 = vunpack.c.l.b16 %v1313
        %v3951 = vunpack.c.h.b16 %v1313
        %v3952 = vunpack.c.l.b16 %v1314
        %v3953 = vunpack.c.h.b16 %v1314
        %v3954 = vunpack.c.l.b16 %v1315
        %v3955 = vunpack.c.h.b16 %v1315
        %v3956 = vunpack.c.l.b16 %v1316
        %v3957 = vunpack.c.h.b16 %v1316
        %v3958 = vunpack.c.l.b16 %v1317
        %v3959 = vunpack.c.h.b16 %v1317
        %v3960 = vunpack.c.l.b16 %v1318
        %v3961 = vunpack.c.h.b16 %v1318
        %v3962 = vunpack.c.l.b16 %v1319
        %v3963 = vunpack.c.h.b16 %v1319
        %v3964 = vunpack.c.l.b16 %v1320
        %v3965 = vunpack.c.h.b16 %v1320
        %v3966 = vunpack.c.l.b16 %v1321
        %v3967 = vunpack.c.h.b16 %v1321
        %v3968 = vunpack.c.l.b16 %v1322
        %v3969 = vunpack.c.h.b16 %v1322
        %v3970 = vunpack.c.l.b16 %v1323
        %v3971 = vunpack.c.h.b16 %v1323
        %v3972 = vunpack.c.l.b16 %v1324
        %v3973 = vunpack.c.h.b16 %v1324
        %v3974 = vunpack.c.l.b16 %v1325
        %v3975 = vunpack.c.h.b16 %v1325
        %v3976 = vunpack.c.l.b16 %v1326
        %v3977 = vunpack.c.h.b16 %v1326
        %v3978 = vunpack.c.l.b16 %v1327
        %v3979 = vunpack.c.h.b16 %v1327
        %v3980 = vunpack.c.l.b16 %v1328
        %v3981 = vunpack.c.h.b16 %v1328
        %v3982 = vunpack.c.l.b16 %v1329
        %v3983 = vunpack.c.h.b16 %v1329
        %v3984 = vunpack.c.l.b16 %v1330
        %v3985 = vunpack.c.h.b16 %v1330
        %v3986 = vunpack.c.l.b16 %v1331
        %v3987 = vunpack.c.h.b16 %v1331
        %v3988 = vunpack.c.l.b16 %v1332
        %v3989 = vunpack.c.h.b16 %v1332
        %v3990 = vunpack.c.l.b16 %v1333
        %v3991 = vunpack.c.h.b16 %v1333
        %v3992 = vunpack.c.l.b16 %v1334
        %v3993 = vunpack.c.h.b16 %v1334
        %v3994 = vunpack.c.l.b16 %v1335
        %v3995 = vunpack.c.h.b16 %v1335
        %v3996 = vunpack.c.l.b16 %v1336
        %v3997 = vunpack.c.h.b16 %v1336
        %v3998 = vunpack.c.l.b16 %v1337
        %v3999 = vunpack.c.h.b16 %v1337
        %v4000 = vunpack.c.l.b16 %v1338
        %v4001 = vunpack.c.h.b16 %v1338
        %v4002 = vunpack.c.l.b16 %v1339
        %v4003 = vunpack.c.h.b16 %v1339
        %v4004 = vunpack.c.l.b16 %v1340
        %v4005 = vunpack.c.h.b16 %v1340
        %v4006 = vunpack.c.l.b16 %v1341
        %v4007 = vunpack.c.h.b16 %v1341
        %v4008 = vunpack.c.l.b16 %v1342
        %v4009 = vunpack.c.h.b16 %v1342
        %v4010 = vunpack.c.l.b16 %v1343
        %v4011 = vunpack.c.h.b16 %v1343
        %v4012 = vunpack.c.l.b16 %v1344
        %v4013 = vunpack.c.h.b16 %v1344
        %v4014 = vunpack.c.l.b16 %v1345
        %v4015 = vunpack.c.h.b16 %v1345
        %v4016 = vunpack.c.l.b16 %v1346
        %v4017 = vunpack.c.h.b16 %v1346
        %v4018 = vunpack.c.l.b16 %v1347
        %v4019 = vunpack.c.h.b16 %v1347
        %v4020 = vunpack.c.l.b16 %v1348
        %v4021 = vunpack.c.h.b16 %v1348
        %v4022 = vunpack.c.l.b16 %v1349
        %v4023 = vunpack.c.h.b16 %v1349
        %v4024 = vunpack.c.l.b16 %v1350
        %v4025 = vunpack.c.h.b16 %v1350
        %v4026 = vunpack.c.l.b16 %v1351
        %v4027 = vunpack.c.h.b16 %v1351
        %v4028 = vunpack.c.l.b16 %v1352
        %v4029 = vunpack.c.h.b16 %v1352
        %v4030 = vunpack.c.l.b16 %v1353
        %v4031 = vunpack.c.h.b16 %v1353
        %v4032 = vunpack.c.l.b16 %v1354
        %v4033 = vunpack.c.h.b16 %v1354
        %v4034 = vunpack.c.l.b16 %v1355
        %v4035 = vunpack.c.h.b16 %v1355
        %v4036 = vunpack.c.l.b16 %v1356
        %v4037 = vunpack.c.h.b16 %v1356
        %v4038 = vunpack.c.l.b16 %v1357
        %v4039 = vunpack.c.h.b16 %v1357
        %v4040 = vunpack.c.l.b16 %v1358
        %v4041 = vunpack.c.h.b16 %v1358
        %v4042 = vunpack.c.l.b16 %v1359
        %v4043 = vunpack.c.h.b16 %v1359
        %v4044 = vunpack.c.l.b16 %v1360
        %v4045 = vunpack.c.h.b16 %v1360
        %v4046 = vunpack.c.l.b16 %v1361
        %v4047 = vunpack.c.h.b16 %v1361
        %v4048 = vunpack.c.l.b16 %v1362
        %v4049 = vunpack.c.h.b16 %v1362
        %v4050 = vunpack.c.l.b16 %v1363
        %v4051 = vunpack.c.h.b16 %v1363
        %v4052 = vpack.c.b16 %v2342, %v2324
        %v4053 = vpack.c.b16 %v2343, %v2325
        %v4054 = vpack.c.b16 %v2344, %v2326
        %v4055 = vpack.c.b16 %v2345, %v2327
        %v4056 = vpack.c.b16 %v2346, %v2328
        %v4057 = vpack.c.b16 %v2347, %v2329
        %v4058 = vpack.c.b16 %v2348, %v2330
        %v4059 = vpack.c.b16 %v2349, %v2331
        %v4060 = vpack.c.b16 %v2350, %v2332
        %v4061 = vpack.c.b16 %v2351, %v2333
        %v4062 = vpack.c.b16 %v2352, %v2334
        %v4063 = vpack.c.b16 %v2353, %v2335
        %v4064 = vpack.c.b16 %v2354, %v2336
        %v4065 = vpack.c.b16 %v2355, %v2337
        %v4066 = vpack.c.b16 %v2356, %v2338
        %v4067 = vpack.c.b16 %v2357, %v2339
        %v4068 = vpack.c.b16 %v2358, %v2340
        %v4069 = vpack.c.b16 %v2359, %v2341
        %v4070 = vpack.c.b16 %v2378, %v2360
        %v4071 = vpack.c.b16 %v2379, %v2361
        %v4072 = vpack.c.b16 %v2380, %v2362
        %v4073 = vpack.c.b16 %v2381, %v2363
        %v4074 = vpack.c.b16 %v2382, %v2364
        %v4075 = vpack.c.b16 %v2383, %v2365
        %v4076 = vpack.c.b16 %v2384, %v2366
        %v4077 = vpack.c.b16 %v2385, %v2367
        %v4078 = vpack.c.b16 %v2386, %v2368
        %v4079 = vpack.c.b16 %v2387, %v2369
        %v4080 = vpack.c.b16 %v2388, %v2370
        %v4081 = vpack.c.b16 %v2389, %v2371
        %v4082 = vpack.c.b16 %v2390, %v2372
        %v4083 = vpack.c.b16 %v2391, %v2373
        %v4084 = vpack.c.b16 %v2392, %v2374
        %v4085 = vpack.c.b16 %v2393, %v2375
        %v4086 = vpack.c.b16 %v2394, %v2376
        %v4087 = vpack.c.b16 %v2395, %v2377
        %v4088 = vpack.c.b16 %v2414, %v2396
        %v4089 = vpack.c.b16 %v2415, %v2397
        %v4090 = vpack.c.b16 %v2416, %v2398
        %v4091 = vpack.c.b16 %v2417, %v2399
        %v4092 = vpack.c.b16 %v2418, %v2400
        %v4093 = vpack.c.b16 %v2419, %v2401
        %v4094 = vpack.c.b16 %v2420, %v2402
        %v4095 = vpack.c.b16 %v2421, %v2403
        %v4096 = vpack.c.b16 %v2422, %v2404
        %v4097 = vpack.c.b16 %v2423, %v2405
        %v4098 = vpack.c.b16 %v2424, %v2406
        %v4099 = vpack.c.b16 %v2425, %v2407
        %v4100 = vpack.c.b16 %v2426, %v2408
        %v4101 = vpack.c.b16 %v2427, %v2409
        %v4102 = vpack.c.b16 %v2428, %v2410
        %v4103 = vpack.c.b16 %v2429, %v2411
        %v4104 = vpack.c.b16 %v2430, %v2412
        %v4105 = vpack.c.b16 %v2431, %v2413
        %v4106 = vpack.c.b16 %v2450, %v2432
        %v4107 = vpack.c.b16 %v2451, %v2433
        %v4108 = vpack.c.b16 %v2452, %v2434
        %v4109 = vpack.c.b16 %v2453, %v2435
        %v4110 = vpack.c.b16 %v2454, %v2436
        %v4111 = vpack.c.b16 %v2455, %v2437
        %v4112 = vpack.c.b16 %v2456, %v2438
        %v4113 = vpack.c.b16 %v2457, %v2439
        %v4114 = vpack.c.b16 %v2458, %v2440
        %v4115 = vpack.c.b16 %v2459, %v2441
        %v4116 = vpack.c.b16 %v2460, %v2442
        %v4117 = vpack.c.b16 %v2461, %v2443
        %v4118 = vpack.c.b16 %v2462, %v2444
        %v4119 = vpack.c.b16 %v2463, %v2445
        %v4120 = vpack.c.b16 %v2464, %v2446
        %v4121 = vpack.c.b16 %v2465, %v2447
        %v4122 = vpack.c.b16 %v2466, %v2448
        %v4123 = vpack.c.b16 %v2467, %v2449
        %v4124 = vpack.c.b16 %v2486, %v2468
        %v4125 = vpack.c.b16 %v2487, %v2469
        %v4126 = vpack.c.b16 %v2488, %v2470
        %v4127 = vpack.c.b16 %v2489, %v2471
        %v4128 = vpack.c.b16 %v2490, %v2472
        %v4129 = vpack.c.b16 %v2491, %v2473
        %v4130 = vpack.c.b16 %v2492, %v2474
        %v4131 = vpack.c.b16 %v2493, %v2475
        %v4132 = vpack.c.b16 %v2494, %v2476
        %v4133 = vpack.c.b16 %v2495, %v2477
        %v4134 = vpack.c.b16 %v2496, %v2478
        %v4135 = vpack.c.b16 %v2497, %v2479
        %v4136 = vpack.c.b16 %v2498, %v2480
        %v4137 = vpack.c.b16 %v2499, %v2481
        %v4138 = vpack.c.b16 %v2500, %v2482
        %v4139 = vpack.c.b16 %v2501, %v2483
        %v4140 = vpack.c.b16 %v2502, %v2484
        %v4141 = vpack.c.b16 %v2503, %v2485
        %v4142 = vpack.c.b16 %v2522, %v2504
        %v4143 = vpack.c.b16 %v2523, %v2505
        %v4144 = vpack.c.b16 %v2524, %v2506
        %v4145 = vpack.c.b16 %v2525, %v2507
        %v4146 = vpack.c.b16 %v2526, %v2508
        %v4147 = vpack.c.b16 %v2527, %v2509
        %v4148 = vpack.c.b16 %v2528, %v2510
        %v4149 = vpack.c.b16 %v2529, %v2511
        %v4150 = vpack.c.b16 %v2530, %v2512
        %v4151 = vpack.c.b16 %v2531, %v2513
        %v4152 = vpack.c.b16 %v2532, %v2514
        %v4153 = vpack.c.b16 %v2533, %v2515
        %v4154 = vpack.c.b16 %v2534, %v2516
        %v4155 = vpack.c.b16 %v2535, %v2517
        %v4156 = vpack.c.b16 %v2536, %v2518
        %v4157 = vpack.c.b16 %v2537, %v2519
        %v4158 = vpack.c.b16 %v2538, %v2520
        %v4159 = vpack.c.b16 %v2539, %v2521
        %v4160 = vpack.c.b16 %v2558, %v2540
        %v4161 = vpack.c.b16 %v2559, %v2541
        %v4162 = vpack.c.b16 %v2560, %v2542
        %v4163 = vpack.c.b16 %v2561, %v2543
        %v4164 = vpack.c.b16 %v2562, %v2544
        %v4165 = vpack.c.b16 %v2563, %v2545
        %v4166 = vpack.c.b16 %v2564, %v2546
        %v4167 = vpack.c.b16 %v2565, %v2547
        %v4168 = vpack.c.b16 %v2566, %v2548
        %v4169 = vpack.c.b16 %v2567, %v2549
        %v4170 = vpack.c.b16 %v2568, %v2550
        %v4171 = vpack.c.b16 %v2569, %v2551
        %v4172 = vpack.c.b16 %v2570, %v2552
        %v4173 = vpack.c.b16 %v2571, %v2553
        %v4174 = vpack.c.b16 %v2572, %v2554
        %v4175 = vpack.c.b16 %v2573, %v2555
        %v4176 = vpack.c.b16 %v2574, %v2556
        %v4177 = vpack.c.b16 %v2575, %v2557
        %v4178 = vpack.c.b16 %v2594, %v2576
        %v4179 = vpack.c.b16 %v2595, %v2577
        %v4180 = vpack.c.b16 %v2596, %v2578
        %v4181 = vpack.c.b16 %v2597, %v2579
        %v4182 = vpack.c.b16 %v2598, %v2580
        %v4183 = vpack.c.b16 %v2599, %v2581
        %v4184 = vpack.c.b16 %v2600, %v2582
        %v4185 = vpack.c.b16 %v2601, %v2583
        %v4186 = vpack.c.b16 %v2602, %v2584
        %v4187 = vpack.c.b16 %v2603, %v2585
        %v4188 = vpack.c.b16 %v2604, %v2586
        %v4189 = vpack.c.b16 %v2605, %v2587
        %v4190 = vpack.c.b16 %v2606, %v2588
        %v4191 = vpack.c.b16 %v2607, %v2589
        %v4192 = vpack.c.b16 %v2608, %v2590
        %v4193 = vpack.c.b16 %v2609, %v2591
        %v4194 = vpack.c.b16 %v2610, %v2592
        %v4195 = vpack.c.b16 %v2611, %v2593
        %v4196 = vpack.c.b16 %v2630, %v2612
        %v4197 = vpack.c.b16 %v2631, %v2613
        %v4198 = vpack.c.b16 %v2632, %v2614
        %v4199 = vpack.c.b16 %v2633, %v2615
        %v4200 = vpack.c.b16 %v2634, %v2616
        %v4201 = vpack.c.b16 %v2635, %v2617
        %v4202 = vpack.c.b16 %v2636, %v2618
        %v4203 = vpack.c.b16 %v2637, %v2619
        %v4204 = vpack.c.b16 %v2638, %v2620
        %v4205 = vpack.c.b16 %v2639, %v2621
        %v4206 = vpack.c.b16 %v2640, %v2622
        %v4207 = vpack.c.b16 %v2641, %v2623
        %v4208 = vpack.c.b16 %v2642, %v2624
        %v4209 = vpack.c.b16 %v2643, %v2625
        %v4210 = vpack.c.b16 %v2644, %v2626
        %v4211 = vpack.c.b16 %v2645, %v2627
        %v4212 = vpack.c.b16 %v2646, %v2628
        %v4213 = vpack.c.b16 %v2647, %v2629
        %v4214 = vpack.c.b16 %v2666, %v2648
        %v4215 = vpack.c.b16 %v2667, %v2649
        %v4216 = vpack.c.b16 %v2668, %v2650
        %v4217 = vpack.c.b16 %v2669, %v2651
        %v4218 = vpack.c.b16 %v2670, %v2652
        %v4219 = vpack.c.b16 %v2671, %v2653
        %v4220 = vpack.c.b16 %v2672, %v2654
        %v4221 = vpack.c.b16 %v2673, %v2655
        %v4222 = vpack.c.b16 %v2674, %v2656
        %v4223 = vpack.c.b16 %v2675, %v2657
        %v4224 = vpack.c.b16 %v2676, %v2658
        %v4225 = vpack.c.b16 %v2677, %v2659
        %v4226 = vpack.c.b16 %v2678, %v2660
        %v4227 = vpack.c.b16 %v2679, %v2661
        %v4228 = vpack.c.b16 %v2680, %v2662
        %v4229 = vpack.c.b16 %v2681, %v2663
        %v4230 = vpack.c.b16 %v2682, %v2664
        %v4231 = vpack.c.b16 %v2683, %v2665
        %v4232 = vpack.c.b16 %v2702, %v2684
        %v4233 = vpack.c.b16 %v2703, %v2685
        %v4234 = vpack.c.b16 %v2704, %v2686
        %v4235 = vpack.c.b16 %v2705, %v2687
        %v4236 = vpack.c.b16 %v2706, %v2688
        %v4237 = vpack.c.b16 %v2707, %v2689
        %v4238 = vpack.c.b16 %v2708, %v2690
        %v4239 = vpack.c.b16 %v2709, %v2691
        %v4240 = vpack.c.b16 %v2710, %v2692
        %v4241 = vpack.c.b16 %v2711, %v2693
        %v4242 = vpack.c.b16 %v2712, %v2694
        %v4243 = vpack.c.b16 %v2713, %v2695
        %v4244 = vpack.c.b16 %v2714, %v2696
        %v4245 = vpack.c.b16 %v2715, %v2697
        %v4246 = vpack.c.b16 %v2716, %v2698
        %v4247 = vpack.c.b16 %v2717, %v2699
        %v4248 = vpack.c.b16 %v2718, %v2700
        %v4249 = vpack.c.b16 %v2719, %v2701
        %v4250 = vpack.c.b16 %v2738, %v2720
        %v4251 = vpack.c.b16 %v2739, %v2721
        %v4252 = vpack.c.b16 %v2740, %v2722
        %v4253 = vpack.c.b16 %v2741, %v2723
        %v4254 = vpack.c.b16 %v2742, %v2724
        %v4255 = vpack.c.b16 %v2743, %v2725
        %v4256 = vpack.c.b16 %v2744, %v2726
        %v4257 = vpack.c.b16 %v2745, %v2727
        %v4258 = vpack.c.b16 %v2746, %v2728
        %v4259 = vpack.c.b16 %v2747, %v2729
        %v4260 = vpack.c.b16 %v2748, %v2730
        %v4261 = vpack.c.b16 %v2749, %v2731
        %v4262 = vpack.c.b16 %v2750, %v2732
        %v4263 = vpack.c.b16 %v2751, %v2733
        %v4264 = vpack.c.b16 %v2752, %v2734
        %v4265 = vpack.c.b16 %v2753, %v2735
        %v4266 = vpack.c.b16 %v2754, %v2736
        %v4267 = vpack.c.b16 %v2755, %v2737
        %v4268 = vpack.c.b16 %v2774, %v2756
        %v4269 = vpack.c.b16 %v2775, %v2757
        %v4270 = vpack.c.b16 %v2776, %v2758
        %v4271 = vpack.c.b16 %v2777, %v2759
        %v4272 = vpack.c.b16 %v2778, %v2760
        %v4273 = vpack.c.b16 %v2779, %v2761
        %v4274 = vpack.c.b16 %v2780, %v2762
        %v4275 = vpack.c.b16 %v2781, %v2763
        %v4276 = vpack.c.b16 %v2782, %v2764
        %v4277 = vpack.c.b16 %v2783, %v2765
        %v4278 = vpack.c.b16 %v2784, %v2766
        %v4279 = vpack.c.b16 %v2785, %v2767
        %v4280 = vpack.c.b16 %v2786, %v2768
        %v4281 = vpack.c.b16 %v2787, %v2769
        %v4282 = vpack.c.b16 %v2788, %v2770
        %v4283 = vpack.c.b16 %v2789, %v2771
        %v4284 = vpack.c.b16 %v2790, %v2772
        %v4285 = vpack.c.b16 %v2791, %v2773
        %v4286 = vpack.c.b16 %v2810, %v2792
        %v4287 = vpack.c.b16 %v2811, %v2793
        %v4288 = vpack.c.b16 %v2812, %v2794
        %v4289 = vpack.c.b16 %v2813, %v2795
        %v4290 = vpack.c.b16 %v2814, %v2796
        %v4291 = vpack.c.b16 %v2815, %v2797
        %v4292 = vpack.c.b16 %v2816, %v2798
        %v4293 = vpack.c.b16 %v2817, %v2799
        %v4294 = vpack.c.b16 %v2818, %v2800
        %v4295 = vpack.c.b16 %v2819, %v2801
        %v4296 = vpack.c.b16 %v2820, %v2802
        %v4297 = vpack.c.b16 %v2821, %v2803
        %v4298 = vpack.c.b16 %v2822, %v2804
        %v4299 = vpack.c.b16 %v2823, %v2805
        %v4300 = vpack.c.b16 %v2824, %v2806
        %v4301 = vpack.c.b16 %v2825, %v2807
        %v4302 = vpack.c.b16 %v2826, %v2808
        %v4303 = vpack.c.b16 %v2827, %v2809
        %v4304 = vpack.c.b16 %v2846, %v2828
        %v4305 = vpack.c.b16 %v2847, %v2829
        %v4306 = vpack.c.b16 %v2848, %v2830
        %v4307 = vpack.c.b16 %v2849, %v2831
        %v4308 = vpack.c.b16 %v2850, %v2832
        %v4309 = vpack.c.b16 %v2851, %v2833
        %v4310 = vpack.c.b16 %v2852, %v2834
        %v4311 = vpack.c.b16 %v2853, %v2835
        %v4312 = vpack.c.b16 %v2854, %v2836
        %v4313 = vpack.c.b16 %v2855, %v2837
        %v4314 = vpack.c.b16 %v2856, %v2838
        %v4315 = vpack.c.b16 %v2857, %v2839
        %v4316 = vpack.c.b16 %v2858, %v2840
        %v4317 = vpack.c.b16 %v2859, %v2841
        %v4318 = vpack.c.b16 %v2860, %v2842
        %v4319 = vpack.c.b16 %v2861, %v2843
        %v4320 = vpack.c.b16 %v2862, %v2844
        %v4321 = vpack.c.b16 %v2863, %v2845
        %v4322 = vpack.c.b16 %v2882, %v2864
        %v4323 = vpack.c.b16 %v2883, %v2865
        %v4324 = vpack.c.b16 %v2884, %v2866
        %v4325 = vpack.c.b16 %v2885, %v2867
        %v4326 = vpack.c.b16 %v2886, %v2868
        %v4327 = vpack.c.b16 %v2887, %v2869
        %v4328 = vpack.c.b16 %v2888, %v2870
        %v4329 = vpack.c.b16 %v2889, %v2871
        %v4330 = vpack.c.b16 %v2890, %v2872
        %v4331 = vpack.c.b16 %v2891, %v2873
        %v4332 = vpack.c.b16 %v2892, %v2874
        %v4333 = vpack.c.b16 %v2893, %v2875
        %v4334 = vpack.c.b16 %v2894, %v2876
        %v4335 = vpack.c.b16 %v2895, %v2877
        %v4336 = vpack.c.b16 %v2896, %v2878
        %v4337 = vpack.c.b16 %v2897, %v2879
        %v4338 = vpack.c.b16 %v2898, %v2880
        %v4339 = vpack.c.b16 %v2899, %v2881
        %v4340 = vpack.c.b16 %v2918, %v2900
        %v4341 = vpack.c.b16 %v2919, %v2901
        %v4342 = vpack.c.b16 %v2920, %v2902
        %v4343 = vpack.c.b16 %v2921, %v2903
        %v4344 = vpack.c.b16 %v2922, %v2904
        %v4345 = vpack.c.b16 %v2923, %v2905
        %v4346 = vpack.c.b16 %v2924, %v2906
        %v4347 = vpack.c.b16 %v2925, %v2907
        %v4348 = vpack.c.b16 %v2926, %v2908
        %v4349 = vpack.c.b16 %v2927, %v2909
        %v4350 = vpack.c.b16 %v2928, %v2910
        %v4351 = vpack.c.b16 %v2929, %v2911
        %v4352 = vpack.c.b16 %v2930, %v2912
        %v4353 = vpack.c.b16 %v2931, %v2913
        %v4354 = vpack.c.b16 %v2932, %v2914
        %v4355 = vpack.c.b16 %v2933, %v2915
        %v4356 = vpack.c.b16 %v2934, %v2916
        %v4357 = vpack.c.b16 %v2935, %v2917
        %v4358 = vpack.c.b16 %v2954, %v2936
        %v4359 = vpack.c.b16 %v2955, %v2937
        %v4360 = vpack.c.b16 %v2956, %v2938
        %v4361 = vpack.c.b16 %v2957, %v2939
        %v4362 = vpack.c.b16 %v2958, %v2940
        %v4363 = vpack.c.b16 %v2959, %v2941
        %v4364 = vpack.c.b16 %v2960, %v2942
        %v4365 = vpack.c.b16 %v2961, %v2943
        %v4366 = vpack.c.b16 %v2962, %v2944
        %v4367 = vpack.c.b16 %v2963, %v2945
        %v4368 = vpack.c.b16 %v2964, %v2946
        %v4369 = vpack.c.b16 %v2965, %v2947
        %v4370 = vpack.c.b16 %v2966, %v2948
        %v4371 = vpack.c.b16 %v2967, %v2949
        %v4372 = vpack.c.b16 %v2968, %v2950
        %v4373 = vpack.c.b16 %v2969, %v2951
        %v4374 = vpack.c.b16 %v2970, %v2952
        %v4375 = vpack.c.b16 %v2971, %v2953
        %v4376 = vpack.c.b16 %v2990, %v2972
        %v4377 = vpack.c.b16 %v2991, %v2973
        %v4378 = vpack.c.b16 %v2992, %v2974
        %v4379 = vpack.c.b16 %v2993, %v2975
        %v4380 = vpack.c.b16 %v2994, %v2976
        %v4381 = vpack.c.b16 %v2995, %v2977
        %v4382 = vpack.c.b16 %v2996, %v2978
        %v4383 = vpack.c.b16 %v2997, %v2979
        %v4384 = vpack.c.b16 %v2998, %v2980
        %v4385 = vpack.c.b16 %v2999, %v2981
        %v4386 = vpack.c.b16 %v3000, %v2982
        %v4387 = vpack.c.b16 %v3001, %v2983
        %v4388 = vpack.c.b16 %v3002, %v2984
        %v4389 = vpack.c.b16 %v3003, %v2985
        %v4390 = vpack.c.b16 %v3004, %v2986
        %v4391 = vpack.c.b16 %v3005, %v2987
        %v4392 = vpack.c.b16 %v3006, %v2988
        %v4393 = vpack.c.b16 %v3007, %v2989
        %v4394 = vpack.c.b16 %v3026, %v3008
        %v4395 = vpack.c.b16 %v3027, %v3009
        %v4396 = vpack.c.b16 %v3028, %v3010
        %v4397 = vpack.c.b16 %v3029, %v3011
        %v4398 = vpack.c.b16 %v3030, %v3012
        %v4399 = vpack.c.b16 %v3031, %v3013
        %v4400 = vpack.c.b16 %v3032, %v3014
        %v4401 = vpack.c.b16 %v3033, %v3015
        %v4402 = vpack.c.b16 %v3034, %v3016
        %v4403 = vpack.c.b16 %v3035, %v3017
        %v4404 = vpack.c.b16 %v3036, %v3018
        %v4405 = vpack.c.b16 %v3037, %v3019
        %v4406 = vpack.c.b16 %v3038, %v3020
        %v4407 = vpack.c.b16 %v3039, %v3021
        %v4408 = vpack.c.b16 %v3040, %v3022
        %v4409 = vpack.c.b16 %v3041, %v3023
        %v4410 = vpack.c.b16 %v3042, %v3024
        %v4411 = vpack.c.b16 %v3043, %v3025
        %v4412 = vpack.c.b16 %v3062, %v3044
        %v4413 = vpack.c.b16 %v3063, %v3045
        %v4414 = vpack.c.b16 %v3064, %v3046
        %v4415 = vpack.c.b16 %v3065, %v3047
        %v4416 = vpack.c.b16 %v3066, %v3048
        %v4417 = vpack.c.b16 %v3067, %v3049
        %v4418 = vpack.c.b16 %v3068, %v3050
        %v4419 = vpack.c.b16 %v3069, %v3051
        %v4420 = vpack.c.b16 %v3070, %v3052
        %v4421 = vpack.c.b16 %v3071, %v3053
        %v4422 = vpack.c.b16 %v3072, %v3054
        %v4423 = vpack.c.b16 %v3073, %v3055
        %v4424 = vpack.c.b16 %v3074, %v3056
        %v4425 = vpack.c.b16 %v3075, %v3057
        %v4426 = vpack.c.b16 %v3076, %v3058
        %v4427 = vpack.c.b16 %v3077, %v3059
        %v4428 = vpack.c.b16 %v3078, %v3060
        %v4429 = vpack.c.b16 %v3079, %v3061
        %v4430 = vpack.c.b16 %v3098, %v3080
        %v4431 = vpack.c.b16 %v3099, %v3081
        %v4432 = vpack.c.b16 %v3100, %v3082
        %v4433 = vpack.c.b16 %v3101, %v3083
        %v4434 = vpack.c.b16 %v3102, %v3084
        %v4435 = vpack.c.b16 %v3103, %v3085
        %v4436 = vpack.c.b16 %v3104, %v3086
        %v4437 = vpack.c.b16 %v3105, %v3087
        %v4438 = vpack.c.b16 %v3106, %v3088
        %v4439 = vpack.c.b16 %v3107, %v3089
        %v4440 = vpack.c.b16 %v3108, %v3090
        %v4441 = vpack.c.b16 %v3109, %v3091
        %v4442 = vpack.c.b16 %v3110, %v3092
        %v4443 = vpack.c.b16 %v3111, %v3093
        %v4444 = vpack.c.b16 %v3112, %v3094
        %v4445 = vpack.c.b16 %v3113, %v3095
        %v4446 = vpack.c.b16 %v3114, %v3096
        %v4447 = vpack.c.b16 %v3115, %v3097
        %v4448 = vpack.c.b16 %v3134, %v3116
        %v4449 = vpack.c.b16 %v3135, %v3117
        %v4450 = vpack.c.b16 %v3136, %v3118
        %v4451 = vpack.c.b16 %v3137, %v3119
        %v4452 = vpack.c.b16 %v3138, %v3120
        %v4453 = vpack.c.b16 %v3139, %v3121
        %v4454 = vpack.c.b16 %v3140, %v3122
        %v4455 = vpack.c.b16 %v3141, %v3123
        %v4456 = vpack.c.b16 %v3142, %v3124
        %v4457 = vpack.c.b16 %v3143, %v3125
        %v4458 = vpack.c.b16 %v3144, %v3126
        %v4459 = vpack.c.b16 %v3145, %v3127
        %v4460 = vpack.c.b16 %v3146, %v3128
        %v4461 = vpack.c.b16 %v3147, %v3129
        %v4462 = vpack.c.b16 %v3148, %v3130
        %v4463 = vpack.c.b16 %v3149, %v3131
        %v4464 = vpack.c.b16 %v3150, %v3132
        %v4465 = vpack.c.b16 %v3151, %v3133
        %v4466 = vpack.c.b16 %v3170, %v3152
        %v4467 = vpack.c.b16 %v3171, %v3153
        %v4468 = vpack.c.b16 %v3172, %v3154
        %v4469 = vpack.c.b16 %v3173, %v3155
        %v4470 = vpack.c.b16 %v3174, %v3156
        %v4471 = vpack.c.b16 %v3175, %v3157
        %v4472 = vpack.c.b16 %v3176, %v3158
        %v4473 = vpack.c.b16 %v3177, %v3159
        %v4474 = vpack.c.b16 %v3178, %v3160
        %v4475 = vpack.c.b16 %v3179, %v3161
        %v4476 = vpack.c.b16 %v3180, %v3162
        %v4477 = vpack.c.b16 %v3181, %v3163
        %v4478 = vpack.c.b16 %v3182, %v3164
        %v4479 = vpack.c.b16 %v3183, %v3165
        %v4480 = vpack.c.b16 %v3184, %v3166
        %v4481 = vpack.c.b16 %v3185, %v3167
        %v4482 = vpack.c.b16 %v3186, %v3168
        %v4483 = vpack.c.b16 %v3187, %v3169
        %v4484 = vpack.c.b16 %v3206, %v3188
        %v4485 = vpack.c.b16 %v3207, %v3189
        %v4486 = vpack.c.b16 %v3208, %v3190
        %v4487 = vpack.c.b16 %v3209, %v3191
        %v4488 = vpack.c.b16 %v3210, %v3192
        %v4489 = vpack.c.b16 %v3211, %v3193
        %v4490 = vpack.c.b16 %v3212, %v3194
        %v4491 = vpack.c.b16 %v3213, %v3195
        %v4492 = vpack.c.b16 %v3214, %v3196
        %v4493 = vpack.c.b16 %v3215, %v3197
        %v4494 = vpack.c.b16 %v3216, %v3198
        %v4495 = vpack.c.b16 %v3217, %v3199
        %v4496 = vpack.c.b16 %v3218, %v3200
        %v4497 = vpack.c.b16 %v3219, %v3201
        %v4498 = vpack.c.b16 %v3220, %v3202
        %v4499 = vpack.c.b16 %v3221, %v3203
        %v4500 = vpack.c.b16 %v3222, %v3204
        %v4501 = vpack.c.b16 %v3223, %v3205
        %v4502 = vpack.c.b16 %v3242, %v3224
        %v4503 = vpack.c.b16 %v3243, %v3225
        %v4504 = vpack.c.b16 %v3244, %v3226
        %v4505 = vpack.c.b16 %v3245, %v3227
        %v4506 = vpack.c.b16 %v3246, %v3228
        %v4507 = vpack.c.b16 %v3247, %v3229
        %v4508 = vpack.c.b16 %v3248, %v3230
        %v4509 = vpack.c.b16 %v3249, %v3231
        %v4510 = vpack.c.b16 %v3250, %v3232
        %v4511 = vpack.c.b16 %v3251, %v3233
        %v4512 = vpack.c.b16 %v3252, %v3234
        %v4513 = vpack.c.b16 %v3253, %v3235
        %v4514 = vpack.c.b16 %v3254, %v3236
        %v4515 = vpack.c.b16 %v3255, %v3237
        %v4516 = vpack.c.b16 %v3256, %v3238
        %v4517 = vpack.c.b16 %v3257, %v3239
        %v4518 = vpack.c.b16 %v3258, %v3240
        %v4519 = vpack.c.b16 %v3259, %v3241
        %v4520 = vpack.c.b16 %v3278, %v3260
        %v4521 = vpack.c.b16 %v3279, %v3261
        %v4522 = vpack.c.b16 %v3280, %v3262
        %v4523 = vpack.c.b16 %v3281, %v3263
        %v4524 = vpack.c.b16 %v3282, %v3264
        %v4525 = vpack.c.b16 %v3283, %v3265
        %v4526 = vpack.c.b16 %v3284, %v3266
        %v4527 = vpack.c.b16 %v3285, %v3267
        %v4528 = vpack.c.b16 %v3286, %v3268
        %v4529 = vpack.c.b16 %v3287, %v3269
        %v4530 = vpack.c.b16 %v3288, %v3270
        %v4531 = vpack.c.b16 %v3289, %v3271
        %v4532 = vpack.c.b16 %v3290, %v3272
        %v4533 = vpack.c.b16 %v3291, %v3273
        %v4534 = vpack.c.b16 %v3292, %v3274
        %v4535 = vpack.c.b16 %v3293, %v3275
        %v4536 = vpack.c.b16 %v3294, %v3276
        %v4537 = vpack.c.b16 %v3295, %v3277
        %v4538 = vpack.c.b16 %v3314, %v3296
        %v4539 = vpack.c.b16 %v3315, %v3297
        %v4540 = vpack.c.b16 %v3316, %v3298
        %v4541 = vpack.c.b16 %v3317, %v3299
        %v4542 = vpack.c.b16 %v3318, %v3300
        %v4543 = vpack.c.b16 %v3319, %v3301
        %v4544 = vpack.c.b16 %v3320, %v3302
        %v4545 = vpack.c.b16 %v3321, %v3303
        %v4546 = vpack.c.b16 %v3322, %v3304
        %v4547 = vpack.c.b16 %v3323, %v3305
        %v4548 = vpack.c.b16 %v3324, %v3306
        %v4549 = vpack.c.b16 %v3325, %v3307
        %v4550 = vpack.c.b16 %v3326, %v3308
        %v4551 = vpack.c.b16 %v3327, %v3309
        %v4552 = vpack.c.b16 %v3328, %v3310
        %v4553 = vpack.c.b16 %v3329, %v3311
        %v4554 = vpack.c.b16 %v3330, %v3312
        %v4555 = vpack.c.b16 %v3331, %v3313
        %v4556 = vpack.c.b16 %v3350, %v3332
        %v4557 = vpack.c.b16 %v3351, %v3333
        %v4558 = vpack.c.b16 %v3352, %v3334
        %v4559 = vpack.c.b16 %v3353, %v3335
        %v4560 = vpack.c.b16 %v3354, %v3336
        %v4561 = vpack.c.b16 %v3355, %v3337
        %v4562 = vpack.c.b16 %v3356, %v3338
        %v4563 = vpack.c.b16 %v3357, %v3339
        %v4564 = vpack.c.b16 %v3358, %v3340
        %v4565 = vpack.c.b16 %v3359, %v3341
        %v4566 = vpack.c.b16 %v3360, %v3342
        %v4567 = vpack.c.b16 %v3361, %v3343
        %v4568 = vpack.c.b16 %v3362, %v3344
        %v4569 = vpack.c.b16 %v3363, %v3345
        %v4570 = vpack.c.b16 %v3364, %v3346
        %v4571 = vpack.c.b16 %v3365, %v3347
        %v4572 = vpack.c.b16 %v3366, %v3348
        %v4573 = vpack.c.b16 %v3367, %v3349
        %v4574 = vpack.c.b16 %v3386, %v3368
        %v4575 = vpack.c.b16 %v3387, %v3369
        %v4576 = vpack.c.b16 %v3388, %v3370
        %v4577 = vpack.c.b16 %v3389, %v3371
        %v4578 = vpack.c.b16 %v3390, %v3372
        %v4579 = vpack.c.b16 %v3391, %v3373
        %v4580 = vpack.c.b16 %v3392, %v3374
        %v4581 = vpack.c.b16 %v3393, %v3375
        %v4582 = vpack.c.b16 %v3394, %v3376
        %v4583 = vpack.c.b16 %v3395, %v3377
        %v4584 = vpack.c.b16 %v3396, %v3378
        %v4585 = vpack.c.b16 %v3397, %v3379
        %v4586 = vpack.c.b16 %v3398, %v3380
        %v4587 = vpack.c.b16 %v3399, %v3381
        %v4588 = vpack.c.b16 %v3400, %v3382
        %v4589 = vpack.c.b16 %v3401, %v3383
        %v4590 = vpack.c.b16 %v3402, %v3384
        %v4591 = vpack.c.b16 %v3403, %v3385
        %v4592 = vpack.c.b16 %v3422, %v3404
        %v4593 = vpack.c.b16 %v3423, %v3405
        %v4594 = vpack.c.b16 %v3424, %v3406
        %v4595 = vpack.c.b16 %v3425, %v3407
        %v4596 = vpack.c.b16 %v3426, %v3408
        %v4597 = vpack.c.b16 %v3427, %v3409
        %v4598 = vpack.c.b16 %v3428, %v3410
        %v4599 = vpack.c.b16 %v3429, %v3411
        %v4600 = vpack.c.b16 %v3430, %v3412
        %v4601 = vpack.c.b16 %v3431, %v3413
        %v4602 = vpack.c.b16 %v3432, %v3414
        %v4603 = vpack.c.b16 %v3433, %v3415
        %v4604 = vpack.c.b16 %v3434, %v3416
        %v4605 = vpack.c.b16 %v3435, %v3417
        %v4606 = vpack.c.b16 %v3436, %v3418
        %v4607 = vpack.c.b16 %v3437, %v3419
        %v4608 = vpack.c.b16 %v3438, %v3420
        %v4609 = vpack.c.b16 %v3439, %v3421
        %v4610 = vpack.c.b16 %v3458, %v3440
        %v4611 = vpack.c.b16 %v3459, %v3441
        %v4612 = vpack.c.b16 %v3460, %v3442
        %v4613 = vpack.c.b16 %v3461, %v3443
        %v4614 = vpack.c.b16 %v3462, %v3444
        %v4615 = vpack.c.b16 %v3463, %v3445
        %v4616 = vpack.c.b16 %v3464, %v3446
        %v4617 = vpack.c.b16 %v3465, %v3447
        %v4618 = vpack.c.b16 %v3466, %v3448
        %v4619 = vpack.c.b16 %v3467, %v3449
        %v4620 = vpack.c.b16 %v3468, %v3450
        %v4621 = vpack.c.b16 %v3469, %v3451
        %v4622 = vpack.c.b16 %v3470, %v3452
        %v4623 = vpack.c.b16 %v3471, %v3453
        %v4624 = vpack.c.b16 %v3472, %v3454
        %v4625 = vpack.c.b16 %v3473, %v3455
        %v4626 = vpack.c.b16 %v3474, %v3456
        %v4627 = vpack.c.b16 %v3475, %v3457
        %v4628 = vpack.c.b16 %v3494, %v3476
        %v4629 = vpack.c.b16 %v3495, %v3477
        %v4630 = vpack.c.b16 %v3496, %v3478
        %v4631 = vpack.c.b16 %v3497, %v3479
        %v4632 = vpack.c.b16 %v3498, %v3480
        %v4633 = vpack.c.b16 %v3499, %v3481
        %v4634 = vpack.c.b16 %v3500, %v3482
        %v4635 = vpack.c.b16 %v3501, %v3483
        %v4636 = vpack.c.b16 %v3502, %v3484
        %v4637 = vpack.c.b16 %v3503, %v3485
        %v4638 = vpack.c.b16 %v3504, %v3486
        %v4639 = vpack.c.b16 %v3505, %v3487
        %v4640 = vpack.c.b16 %v3506, %v3488
        %v4641 = vpack.c.b16 %v3507, %v3489
        %v4642 = vpack.c.b16 %v3508, %v3490
        %v4643 = vpack.c.b16 %v3509, %v3491
        %v4644 = vpack.c.b16 %v3510, %v3492
        %v4645 = vpack.c.b16 %v3511, %v3493
        %v4646 = vpack.c.b16 %v3530, %v3512
        %v4647 = vpack.c.b16 %v3531, %v3513
        %v4648 = vpack.c.b16 %v3532, %v3514
        %v4649 = vpack.c.b16 %v3533, %v3515
        %v4650 = vpack.c.b16 %v3534, %v3516
        %v4651 = vpack.c.b16 %v3535, %v3517
        %v4652 = vpack.c.b16 %v3536, %v3518
        %v4653 = vpack.c.b16 %v3537, %v3519
        %v4654 = vpack.c.b16 %v3538, %v3520
        %v4655 = vpack.c.b16 %v3539, %v3521
        %v4656 = vpack.c.b16 %v3540, %v3522
        %v4657 = vpack.c.b16 %v3541, %v3523
        %v4658 = vpack.c.b16 %v3542, %v3524
        %v4659 = vpack.c.b16 %v3543, %v3525
        %v4660 = vpack.c.b16 %v3544, %v3526
        %v4661 = vpack.c.b16 %v3545, %v3527
        %v4662 = vpack.c.b16 %v3546, %v3528
        %v4663 = vpack.c.b16 %v3547, %v3529
        %v4664 = vpack.c.b16 %v3566, %v3548
        %v4665 = vpack.c.b16 %v3567, %v3549
        %v4666 = vpack.c.b16 %v3568, %v3550
        %v4667 = vpack.c.b16 %v3569, %v3551
        %v4668 = vpack.c.b16 %v3570, %v3552
        %v4669 = vpack.c.b16 %v3571, %v3553
        %v4670 = vpack.c.b16 %v3572, %v3554
        %v4671 = vpack.c.b16 %v3573, %v3555
        %v4672 = vpack.c.b16 %v3574, %v3556
        %v4673 = vpack.c.b16 %v3575, %v3557
        %v4674 = vpack.c.b16 %v3576, %v3558
        %v4675 = vpack.c.b16 %v3577, %v3559
        %v4676 = vpack.c.b16 %v3578, %v3560
        %v4677 = vpack.c.b16 %v3579, %v3561
        %v4678 = vpack.c.b16 %v3580, %v3562
        %v4679 = vpack.c.b16 %v3581, %v3563
        %v4680 = vpack.c.b16 %v3582, %v3564
        %v4681 = vpack.c.b16 %v3583, %v3565
        %v4682 = vpack.c.b16 %v3602, %v3584
        %v4683 = vpack.c.b16 %v3603, %v3585
        %v4684 = vpack.c.b16 %v3604, %v3586
        %v4685 = vpack.c.b16 %v3605, %v3587
        %v4686 = vpack.c.b16 %v3606, %v3588
        %v4687 = vpack.c.b16 %v3607, %v3589
        %v4688 = vpack.c.b16 %v3608, %v3590
        %v4689 = vpack.c.b16 %v3609, %v3591
        %v4690 = vpack.c.b16 %v3610, %v3592
        %v4691 = vpack.c.b16 %v3611, %v3593
        %v4692 = vpack.c.b16 %v3612, %v3594
        %v4693 = vpack.c.b16 %v3613, %v3595
        %v4694 = vpack.c.b16 %v3614, %v3596
        %v4695 = vpack.c.b16 %v3615, %v3597
        %v4696 = vpack.c.b16 %v3616, %v3598
        %v4697 = vpack.c.b16 %v3617, %v3599
        %v4698 = vpack.c.b16 %v3618, %v3600
        %v4699 = vpack.c.b16 %v3619, %v3601
        %v4700 = vpack.c.b16 %v3638, %v3620
        %v4701 = vpack.c.b16 %v3639, %v3621
        %v4702 = vpack.c.b16 %v3640, %v3622
        %v4703 = vpack.c.b16 %v3641, %v3623
        %v4704 = vpack.c.b16 %v3642, %v3624
        %v4705 = vpack.c.b16 %v3643, %v3625
        %v4706 = vpack.c.b16 %v3644, %v3626
        %v4707 = vpack.c.b16 %v3645, %v3627
        %v4708 = vpack.c.b16 %v3646, %v3628
        %v4709 = vpack.c.b16 %v3647, %v3629
        %v4710 = vpack.c.b16 %v3648, %v3630
        %v4711 = vpack.c.b16 %v3649, %v3631
        %v4712 = vpack.c.b16 %v3650, %v3632
        %v4713 = vpack.c.b16 %v3651, %v3633
        %v4714 = vpack.c.b16 %v3652, %v3634
        %v4715 = vpack.c.b16 %v3653, %v3635
        %v4716 = vpack.c.b16 %v3654, %v3636
        %v4717 = vpack.c.b16 %v3655, %v3637
        %v4718 = vpack.c.b16 %v3674, %v3656
        %v4719 = vpack.c.b16 %v3675, %v3657
        %v4720 = vpack.c.b16 %v3676, %v3658
        %v4721 = vpack.c.b16 %v3677, %v3659
        %v4722 = vpack.c.b16 %v3678, %v3660
        %v4723 = vpack.c.b16 %v3679, %v3661
        %v4724 = vpack.c.b16 %v3680, %v3662
        %v4725 = vpack.c.b16 %v3681, %v3663
        %v4726 = vpack.c.b16 %v3682, %v3664
        %v4727 = vpack.c.b16 %v3683, %v3665
        %v4728 = vpack.c.b16 %v3684, %v3666
        %v4729 = vpack.c.b16 %v3685, %v3667
        %v4730 = vpack.c.b16 %v3686, %v3668
        %v4731 = vpack.c.b16 %v3687, %v3669
        %v4732 = vpack.c.b16 %v3688, %v3670
        %v4733 = vpack.c.b16 %v3689, %v3671
        %v4734 = vpack.c.b16 %v3690, %v3672
        %v4735 = vpack.c.b16 %v3691, %v3673
        %v4736 = vpack.c.b16 %v3710, %v3692
        %v4737 = vpack.c.b16 %v3711, %v3693
        %v4738 = vpack.c.b16 %v3712, %v3694
        %v4739 = vpack.c.b16 %v3713, %v3695
        %v4740 = vpack.c.b16 %v3714, %v3696
        %v4741 = vpack.c.b16 %v3715, %v3697
        %v4742 = vpack.c.b16 %v3716, %v3698
        %v4743 = vpack.c.b16 %v3717, %v3699
        %v4744 = vpack.c.b16 %v3718, %v3700
        %v4745 = vpack.c.b16 %v3719, %v3701
        %v4746 = vpack.c.b16 %v3720, %v3702
        %v4747 = vpack.c.b16 %v3721, %v3703
        %v4748 = vpack.c.b16 %v3722, %v3704
        %v4749 = vpack.c.b16 %v3723, %v3705
        %v4750 = vpack.c.b16 %v3724, %v3706
        %v4751 = vpack.c.b16 %v3725, %v3707
        %v4752 = vpack.c.b16 %v3726, %v3708
        %v4753 = vpack.c.b16 %v3727, %v3709
        %v4754 = vpack.c.b16 %v3746, %v3728
        %v4755 = vpack.c.b16 %v3747, %v3729
        %v4756 = vpack.c.b16 %v3748, %v3730
        %v4757 = vpack.c.b16 %v3749, %v3731
        %v4758 = vpack.c.b16 %v3750, %v3732
        %v4759 = vpack.c.b16 %v3751, %v3733
        %v4760 = vpack.c.b16 %v3752, %v3734
        %v4761 = vpack.c.b16 %v3753, %v3735
        %v4762 = vpack.c.b16 %v3754, %v3736
        %v4763 = vpack.c.b16 %v3755, %v3737
        %v4764 = vpack.c.b16 %v3756, %v3738
        %v4765 = vpack.c.b16 %v3757, %v3739
        %v4766 = vpack.c.b16 %v3758, %v3740
        %v4767 = vpack.c.b16 %v3759, %v3741
        %v4768 = vpack.c.b16 %v3760, %v3742
        %v4769 = vpack.c.b16 %v3761, %v3743
        %v4770 = vpack.c.b16 %v3762, %v3744
        %v4771 = vpack.c.b16 %v3763, %v3745
        %v4772 = vpack.c.b16 %v3782, %v3764
        %v4773 = vpack.c.b16 %v3783, %v3765
        %v4774 = vpack.c.b16 %v3784, %v3766
        %v4775 = vpack.c.b16 %v3785, %v3767
        %v4776 = vpack.c.b16 %v3786, %v3768
        %v4777 = vpack.c.b16 %v3787, %v3769
        %v4778 = vpack.c.b16 %v3788, %v3770
        %v4779 = vpack.c.b16 %v3789, %v3771
        %v4780 = vpack.c.b16 %v3790, %v3772
        %v4781 = vpack.c.b16 %v3791, %v3773
        %v4782 = vpack.c.b16 %v3792, %v3774
        %v4783 = vpack.c.b16 %v3793, %v3775
        %v4784 = vpack.c.b16 %v3794, %v3776
        %v4785 = vpack.c.b16 %v3795, %v3777
        %v4786 = vpack.c.b16 %v3796, %v3778
        %v4787 = vpack.c.b16 %v3797, %v3779
        %v4788 = vpack.c.b16 %v3798, %v3780
        %v4789 = vpack.c.b16 %v3799, %v3781
        %v4790 = vpack.c.b16 %v3818, %v3800
        %v4791 = vpack.c.b16 %v3819, %v3801
        %v4792 = vpack.c.b16 %v3820, %v3802
        %v4793 = vpack.c.b16 %v3821, %v3803
        %v4794 = vpack.c.b16 %v3822, %v3804
        %v4795 = vpack.c.b16 %v3823, %v3805
        %v4796 = vpack.c.b16 %v3824, %v3806
        %v4797 = vpack.c.b16 %v3825, %v3807
        %v4798 = vpack.c.b16 %v3826, %v3808
        %v4799 = vpack.c.b16 %v3827, %v3809
        %v4800 = vpack.c.b16 %v3828, %v3810
        %v4801 = vpack.c.b16 %v3829, %v3811
        %v4802 = vpack.c.b16 %v3830, %v3812
        %v4803 = vpack.c.b16 %v3831, %v3813
        %v4804 = vpack.c.b16 %v3832, %v3814
        %v4805 = vpack.c.b16 %v3833, %v3815
        %v4806 = vpack.c.b16 %v3834, %v3816
        %v4807 = vpack.c.b16 %v3835, %v3817
        %v4808 = vpack.c.b16 %v3854, %v3836
        %v4809 = vpack.c.b16 %v3855, %v3837
        %v4810 = vpack.c.b16 %v3856, %v3838
        %v4811 = vpack.c.b16 %v3857, %v3839
        %v4812 = vpack.c.b16 %v3858, %v3840
        %v4813 = vpack.c.b16 %v3859, %v3841
        %v4814 = vpack.c.b16 %v3860, %v3842
        %v4815 = vpack.c.b16 %v3861, %v3843
        %v4816 = vpack.c.b16 %v3862, %v3844
        %v4817 = vpack.c.b16 %v3863, %v3845
        %v4818 = vpack.c.b16 %v3864, %v3846
        %v4819 = vpack.c.b16 %v3865, %v3847
        %v4820 = vpack.c.b16 %v3866, %v3848
        %v4821 = vpack.c.b16 %v3867, %v3849
        %v4822 = vpack.c.b16 %v3868, %v3850
        %v4823 = vpack.c.b16 %v3869, %v3851
        %v4824 = vpack.c.b16 %v3870, %v3852
        %v4825 = vpack.c.b16 %v3871, %v3853
        %v4826 = vpack.c.b16 %v3890, %v3872
        %v4827 = vpack.c.b16 %v3891, %v3873
        %v4828 = vpack.c.b16 %v3892, %v3874
        %v4829 = vpack.c.b16 %v3893, %v3875
        %v4830 = vpack.c.b16 %v3894, %v3876
        %v4831 = vpack.c.b16 %v3895, %v3877
        %v4832 = vpack.c.b16 %v3896, %v3878
        %v4833 = vpack.c.b16 %v3897, %v3879
        %v4834 = vpack.c.b16 %v3898, %v3880
        %v4835 = vpack.c.b16 %v3899, %v3881
        %v4836 = vpack.c.b16 %v3900, %v3882
        %v4837 = vpack.c.b16 %v3901, %v3883
        %v4838 = vpack.c.b16 %v3902, %v3884
        %v4839 = vpack.c.b16 %v3903, %v3885
        %v4840 = vpack.c.b16 %v3904, %v3886
        %v4841 = vpack.c.b16 %v3905, %v3887
        %v4842 = vpack.c.b16 %v3906, %v3888
        %v4843 = vpack.c.b16 %v3907, %v3889
        %v4844 = vpack.c.b16 %v3926, %v3908
        %v4845 = vpack.c.b16 %v3927, %v3909
        %v4846 = vpack.c.b16 %v3928, %v3910
        %v4847 = vpack.c.b16 %v3929, %v3911
        %v4848 = vpack.c.b16 %v3930, %v3912
        %v4849 = vpack.c.b16 %v3931, %v3913
        %v4850 = vpack.c.b16 %v3932, %v3914
        %v4851 = vpack.c.b16 %v3933, %v3915
        %v4852 = vpack.c.b16 %v3934, %v3916
        %v4853 = vpack.c.b16 %v3935, %v3917
        %v4854 = vpack.c.b16 %v3936, %v3918
        %v4855 = vpack.c.b16 %v3937, %v3919
        %v4856 = vpack.c.b16 %v3938, %v3920
        %v4857 = vpack.c.b16 %v3939, %v3921
        %v4858 = vpack.c.b16 %v3940, %v3922
        %v4859 = vpack.c.b16 %v3941, %v3923
        %v4860 = vpack.c.b16 %v3942, %v3924
        %v4861 = vpack.c.b16 %v3943, %v3925
        %v4862 = vpack.c.b16 %v3962, %v3944
        %v4863 = vpack.c.b16 %v3963, %v3945
        %v4864 = vpack.c.b16 %v3964, %v3946
        %v4865 = vpack.c.b16 %v3965, %v3947
        %v4866 = vpack.c.b16 %v3966, %v3948
        %v4867 = vpack.c.b16 %v3967, %v3949
        %v4868 = vpack.c.b16 %v3968, %v3950
        %v4869 = vpack.c.b16 %v3969, %v3951
        %v4870 = vpack.c.b16 %v3970, %v3952
        %v4871 = vpack.c.b16 %v3971, %v3953
        %v4872 = vpack.c.b16 %v3972, %v3954
        %v4873 = vpack.c.b16 %v3973, %v3955
        %v4874 = vpack.c.b16 %v3974, %v3956
        %v4875 = vpack.c.b16 %v3975, %v3957
        %v4876 = vpack.c.b16 %v3976, %v3958
        %v4877 = vpack.c.b16 %v3977, %v3959
        %v4878 = vpack.c.b16 %v3978, %v3960
        %v4879 = vpack.c.b16 %v3979, %v3961
        %v4880 = vpack.c.b16 %v3998, %v3980
        %v4881 = vpack.c.b16 %v3999, %v3981
        %v4882 = vpack.c.b16 %v4000, %v3982
        %v4883 = vpack.c.b16 %v4001, %v3983
        %v4884 = vpack.c.b16 %v4002, %v3984
        %v4885 = vpack.c.b16 %v4003, %v3985
        %v4886 = vpack.c.b16 %v4004, %v3986
        %v4887 = vpack.c.b16 %v4005, %v3987
        %v4888 = vpack.c.b16 %v4006, %v3988
        %v4889 = vpack.c.b16 %v4007, %v3989
        %v4890 = vpack.c.b16 %v4008, %v3990
        %v4891 = vpack.c.b16 %v4009, %v3991
        %v4892 = vpack.c.b16 %v4010, %v3992
        %v4893 = vpack.c.b16 %v4011, %v3993
        %v4894 = vpack.c.b16 %v4012, %v3994
        %v4895 = vpack.c.b16 %v4013, %v3995
        %v4896 = vpack.c.b16 %v4014, %v3996
        %v4897 = vpack.c.b16 %v4015, %v3997
        %v4898 = vpack.c.b16 %v4034, %v4016
        %v4899 = vpack.c.b16 %v4035, %v4017
        %v4900 = vpack.c.b16 %v4036, %v4018
        %v4901 = vpack.c.b16 %v4037, %v4019
        %v4902 = vpack.c.b16 %v4038, %v4020
        %v4903 = vpack.c.b16 %v4039, %v4021
        %v4904 = vpack.c.b16 %v4040, %v4022
        %v4905 = vpack.c.b16 %v4041, %v4023
        %v4906 = vpack.c.b16 %v4042, %v4024
        %v4907 = vpack.c.b16 %v4043, %v4025
        %v4908 = vpack.c.b16 %v4044, %v4026
        %v4909 = vpack.c.b16 %v4045, %v4027
        %v4910 = vpack.c.b16 %v4046, %v4028
        %v4911 = vpack.c.b16 %v4047, %v4029
        %v4912 = vpack.c.b16 %v4048, %v4030
        %v4913 = vpack.c.b16 %v4049, %v4031
        %v4914 = vpack.c.b16 %v4050, %v4032
        %v4915 = vpack.c.b16 %v4051, %v4033
        %5780 = vmatprep.subr.bf16.mxu0 %v4053
        %5781 = vmatpush1.bf16.msra.mxu0 %v4052
        %5782 = vmatprep.subr.bf16.mxu0 %v4071
        %5783 = vmatpush1.bf16.msra.mxu0 %v4070
        %5784 = vmatprep.subr.bf16.mxu0 %v4089
        %5785 = vmatpush1.bf16.msra.mxu0 %v4088
        %5786 = vmatprep.subr.bf16.mxu0 %v4107
        %5787 = vmatpush1.bf16.msra.mxu0 %v4106
        %5788 = vmatprep.subr.bf16.mxu0 %v4125
        %5789 = vmatpush1.bf16.msra.mxu0 %v4124
        %5790 = vmatprep.subr.bf16.mxu0 %v4143
        %5791 = vmatpush1.bf16.msra.mxu0 %v4142
        %5792 = vmatprep.subr.bf16.mxu0 %v4161
        %5793 = vmatpush1.bf16.msra.mxu0 %v4160
        %5794 = vmatprep.subr.bf16.mxu0 %v4179
        %5795 = vmatpush1.bf16.msra.mxu0 %v4178
        %5796 = vmatprep.subr.bf16.mxu0 %v4197
        %5797 = vmatpush1.bf16.msra.mxu0 %v4196
        %5798 = vmatprep.subr.bf16.mxu0 %v4215
        %5799 = vmatpush1.bf16.msra.mxu0 %v4214
        %5800 = vmatprep.subr.bf16.mxu0 %v4233
        %5801 = vmatpush1.bf16.msra.mxu0 %v4232
        %5802 = vmatprep.subr.bf16.mxu0 %v4251
        %5803 = vmatpush1.bf16.msra.mxu0 %v4250
        %5804 = vmatprep.subr.bf16.mxu0 %v4269
        %5805 = vmatpush1.bf16.msra.mxu0 %v4268
        %5806 = vmatprep.subr.bf16.mxu0 %v4287
        %5807 = vmatpush1.bf16.msra.mxu0 %v4286
        %5808 = vmatprep.subr.bf16.mxu0 %v4305
        %5809 = vmatpush1.bf16.msra.mxu0 %v4304
        %5810 = vmatprep.subr.bf16.mxu0 %v4323
        %5811 = vmatpush1.bf16.msra.mxu0 %v4322
        %5812 = vmatprep.mubr.bf16.mxu0 %v495
        %5813 = vmatmul.mubr.bf16.gmra.mrb[0].mxu0 %v494
        %v5814 = vpop.f32.mrb[0].mxu0
        %v5815 = vadd.f32 %v1373, %v5814
        %v5816 = vpop.f32.mrb[0].mxu0
        %v5817 = vadd.f32 %v1377, %v5816
        %v5818 = vpop.f32.mrb[0].mxu0
        %v5819 = vpop.f32.mrb[0].mxu0
        %5820 = vdwg.mxu0
        %5821 = vmatprep.subr.bf16.mxu0 %v4341
        %5822 = vmatpush1.bf16.msra.mxu0 %v4340
        %5823 = vmatprep.subr.bf16.mxu0 %v4359
        %5824 = vmatpush1.bf16.msra.mxu0 %v4358
        %5825 = vmatprep.subr.bf16.mxu0 %v4377
        %5826 = vmatpush1.bf16.msra.mxu0 %v4376
        %5827 = vmatprep.subr.bf16.mxu0 %v4395
        %5828 = vmatpush1.bf16.msra.mxu0 %v4394
        %5829 = vmatprep.subr.bf16.mxu0 %v4413
        %5830 = vmatpush1.bf16.msra.mxu0 %v4412
        %5831 = vmatprep.subr.bf16.mxu0 %v4431
        %5832 = vmatpush1.bf16.msra.mxu0 %v4430
        %5833 = vmatprep.subr.bf16.mxu0 %v4449
        %5834 = vmatpush1.bf16.msra.mxu0 %v4448
        %5835 = vmatprep.subr.bf16.mxu0 %v4467
        %5836 = vmatpush1.bf16.msra.mxu0 %v4466
        %5837 = vmatprep.subr.bf16.mxu0 %v4485
        %5838 = vmatpush1.bf16.msra.mxu0 %v4484
        %5839 = vmatprep.subr.bf16.mxu0 %v4503
        %5840 = vmatpush1.bf16.msra.mxu0 %v4502
        %5841 = vmatprep.subr.bf16.mxu0 %v4521
        %5842 = vmatpush1.bf16.msra.mxu0 %v4520
        %5843 = vmatprep.subr.bf16.mxu0 %v4539
        %5844 = vmatpush1.bf16.msra.mxu0 %v4538
        %5845 = vmatprep.subr.bf16.mxu0 %v4557
        %5846 = vmatpush1.bf16.msra.mxu0 %v4556
        %5847 = vmatprep.subr.bf16.mxu0 %v4575
        %5848 = vmatpush1.bf16.msra.mxu0 %v4574
        %5849 = vmatprep.subr.bf16.mxu0 %v4593
        %5850 = vmatpush1.bf16.msra.mxu0 %v4592
        %5851 = vmatprep.subr.bf16.mxu0 %v4611
        %5852 = vmatpush1.bf16.msra.mxu0 %v4610
        %5853 = vmatprep.mubr.bf16.mxu0 %v497
        %5854 = vmatmul.mubr.bf16.gmra.mrb[0].mxu0 %v496
        %v5855 = vpop.f32.mrb[0].mxu0
        %v5856 = vadd.f32 %v5815, %v5855
        %v5857 = vpop.f32.mrb[0].mxu0
        %v5858 = vadd.f32 %v5817, %v5857
        %v5859 = vpop.f32.mrb[0].mxu0
        %v5860 = vpop.f32.mrb[0].mxu0
        %5861 = vdwg.mxu0
        %5862 = vmatprep.subr.bf16.mxu0 %v4629
        %5863 = vmatpush1.bf16.msra.mxu0 %v4628
        %5864 = vmatprep.subr.bf16.mxu0 %v4647
        %5865 = vmatpush1.bf16.msra.mxu0 %v4646
        %5866 = vmatprep.subr.bf16.mxu0 %v4665
        %5867 = vmatpush1.bf16.msra.mxu0 %v4664
        %5868 = vmatprep.subr.bf16.mxu0 %v4683
        %5869 = vmatpush1.bf16.msra.mxu0 %v4682
        %5870 = vmatprep.subr.bf16.mxu0 %v4701
        %5871 = vmatpush1.bf16.msra.mxu0 %v4700
        %5872 = vmatprep.subr.bf16.mxu0 %v4719
        %5873 = vmatpush1.bf16.msra.mxu0 %v4718
        %5874 = vmatprep.subr.bf16.mxu0 %v4737
        %5875 = vmatpush1.bf16.msra.mxu0 %v4736
        %5876 = vmatprep.subr.bf16.mxu0 %v4755
        %5877 = vmatpush1.bf16.msra.mxu0 %v4754
        %5878 = vmatprep.subr.bf16.mxu0 %v4773
        %5879 = vmatpush1.bf16.msra.mxu0 %v4772
        %5880 = vmatprep.subr.bf16.mxu0 %v4791
        %5881 = vmatpush1.bf16.msra.mxu0 %v4790
        %5882 = vmatprep.subr.bf16.mxu0 %v4809
        %5883 = vmatpush1.bf16.msra.mxu0 %v4808
        %5884 = vmatprep.subr.bf16.mxu0 %v4827
        %5885 = vmatpush1.bf16.msra.mxu0 %v4826
        %5886 = vmatprep.subr.bf16.mxu0 %v4845
        %5887 = vmatpush1.bf16.msra.mxu0 %v4844
        %5888 = vmatprep.subr.bf16.mxu0 %v4863
        %5889 = vmatpush1.bf16.msra.mxu0 %v4862
        %5890 = vmatprep.subr.bf16.mxu0 %v4881
        %5891 = vmatpush1.bf16.msra.mxu0 %v4880
        %5892 = vmatprep.subr.bf16.mxu0 %v4899
        %5893 = vmatpush1.bf16.msra.mxu0 %v4898
        %5894 = vmatprep.mubr.bf16.mxu0 %v499
        %5895 = vmatmul.mubr.bf16.gmra.mrb[0].mxu0 %v498
        %v5896 = vpop.f32.mrb[0].mxu0
        %v5897 = vadd.f32 %v5856, %v5896
        %v5898 = vpop.f32.mrb[0].mxu0
        %v5899 = vadd.f32 %v5858, %v5898
        %v5900 = vpop.f32.mrb[0].mxu0
        %v5901 = vpop.f32.mrb[0].mxu0
        %5902 = vdwg.mxu0
        %5903 = vmatprep.subr.bf16.mxu0 %v4055
        %5904 = vmatpush1.bf16.msra.mxu0 %v4054
        %5905 = vmatprep.subr.bf16.mxu0 %v4073
        %5906 = vmatpush1.bf16.msra.mxu0 %v4072
        %5907 = vmatprep.subr.bf16.mxu0 %v4091
        %5908 = vmatpush1.bf16.msra.mxu0 %v4090
        %5909 = vmatprep.subr.bf16.mxu0 %v4109
        %5910 = vmatpush1.bf16.msra.mxu0 %v4108
        %5911 = vmatprep.subr.bf16.mxu0 %v4127
        %5912 = vmatpush1.bf16.msra.mxu0 %v4126
        %5913 = vmatprep.subr.bf16.mxu0 %v4145
        %5914 = vmatpush1.bf16.msra.mxu0 %v4144
        %5915 = vmatprep.subr.bf16.mxu0 %v4163
        %5916 = vmatpush1.bf16.msra.mxu0 %v4162
        %5917 = vmatprep.subr.bf16.mxu0 %v4181
        %5918 = vmatpush1.bf16.msra.mxu0 %v4180
        %5919 = vmatprep.subr.bf16.mxu0 %v4199
        %5920 = vmatpush1.bf16.msra.mxu0 %v4198
        %5921 = vmatprep.subr.bf16.mxu0 %v4217
        %5922 = vmatpush1.bf16.msra.mxu0 %v4216
        %5923 = vmatprep.subr.bf16.mxu0 %v4235
        %5924 = vmatpush1.bf16.msra.mxu0 %v4234
        %5925 = vmatprep.subr.bf16.mxu0 %v4253
        %5926 = vmatpush1.bf16.msra.mxu0 %v4252
        %5927 = vmatprep.subr.bf16.mxu0 %v4271
        %5928 = vmatpush1.bf16.msra.mxu0 %v4270
        %5929 = vmatprep.subr.bf16.mxu0 %v4289
        %5930 = vmatpush1.bf16.msra.mxu0 %v4288
        %5931 = vmatprep.subr.bf16.mxu0 %v4307
        %5932 = vmatpush1.bf16.msra.mxu0 %v4306
        %5933 = vmatprep.subr.bf16.mxu0 %v4325
        %5934 = vmatpush1.bf16.msra.mxu0 %v4324
        %5935 = vmatprep.mubr.bf16.mxu0 %v495
        %5936 = vmatmul.mubr.bf16.gmra.mrb[0].mxu0 %v494
        %v5937 = vpop.f32.mrb[0].mxu0
        %v5938 = vadd.f32 %v1381, %v5937
        %v5939 = vpop.f32.mrb[0].mxu0
        %v5940 = vadd.f32 %v1385, %v5939
        %v5941 = vpop.f32.mrb[0].mxu0
        %v5942 = vpop.f32.mrb[0].mxu0
        %5943 = vdwg.mxu0
        %5944 = vmatprep.subr.bf16.mxu0 %v4343
        %5945 = vmatpush1.bf16.msra.mxu0 %v4342
        %5946 = vmatprep.subr.bf16.mxu0 %v4361
        %5947 = vmatpush1.bf16.msra.mxu0 %v4360
        %5948 = vmatprep.subr.bf16.mxu0 %v4379
        %5949 = vmatpush1.bf16.msra.mxu0 %v4378
        %5950 = vmatprep.subr.bf16.mxu0 %v4397
        %5951 = vmatpush1.bf16.msra.mxu0 %v4396
        %5952 = vmatprep.subr.bf16.mxu0 %v4415
        %5953 = vmatpush1.bf16.msra.mxu0 %v4414
        %5954 = vmatprep.subr.bf16.mxu0 %v4433
        %5955 = vmatpush1.bf16.msra.mxu0 %v4432
        %5956 = vmatprep.subr.bf16.mxu0 %v4451
        %5957 = vmatpush1.bf16.msra.mxu0 %v4450
        %5958 = vmatprep.subr.bf16.mxu0 %v4469
        %5959 = vmatpush1.bf16.msra.mxu0 %v4468
        %5960 = vmatprep.subr.bf16.mxu0 %v4487
        %5961 = vmatpush1.bf16.msra.mxu0 %v4486
        %5962 = vmatprep.subr.bf16.mxu0 %v4505
        %5963 = vmatpush1.bf16.msra.mxu0 %v4504
        %5964 = vmatprep.subr.bf16.mxu0 %v4523
        %5965 = vmatpush1.bf16.msra.mxu0 %v4522
        %5966 = vmatprep.subr.bf16.mxu0 %v4541
        %5967 = vmatpush1.bf16.msra.mxu0 %v4540
        %5968 = vmatprep.subr.bf16.mxu0 %v4559
        %5969 = vmatpush1.bf16.msra.mxu0 %v4558
        %5970 = vmatprep.subr.bf16.mxu0 %v4577
        %5971 = vmatpush1.bf16.msra.mxu0 %v4576
        %5972 = vmatprep.subr.bf16.mxu0 %v4595
        %5973 = vmatpush1.bf16.msra.mxu0 %v4594
        %5974 = vmatprep.subr.bf16.mxu0 %v4613
        %5975 = vmatpush1.bf16.msra.mxu0 %v4612
        %5976 = vmatprep.mubr.bf16.mxu0 %v497
        %5977 = vmatmul.mubr.bf16.gmra.mrb[0].mxu0 %v496
        %v5978 = vpop.f32.mrb[0].mxu0
        %v5979 = vadd.f32 %v5938, %v5978
        %v5980 = vpop.f32.mrb[0].mxu0
        %v5981 = vadd.f32 %v5940, %v5980
        %v5982 = vpop.f32.mrb[0].mxu0
        %v5983 = vpop.f32.mrb[0].mxu0
        %5984 = vdwg.mxu0
        %5985 = vmatprep.subr.bf16.mxu0 %v4631
        %5986 = vmatpush1.bf16.msra.mxu0 %v4630
        %5987 = vmatprep.subr.bf16.mxu0 %v4649
        %5988 = vmatpush1.bf16.msra.mxu0 %v4648
        %5989 = vmatprep.subr.bf16.mxu0 %v4667
        %5990 = vmatpush1.bf16.msra.mxu0 %v4666
        %5991 = vmatprep.subr.bf16.mxu0 %v4685
        %5992 = vmatpush1.bf16.msra.mxu0 %v4684
        %5993 = vmatprep.subr.bf16.mxu0 %v4703
        %5994 = vmatpush1.bf16.msra.mxu0 %v4702
        %5995 = vmatprep.subr.bf16.mxu0 %v4721
        %5996 = vmatpush1.bf16.msra.mxu0 %v4720
        %5997 = vmatprep.subr.bf16.mxu0 %v4739
        %5998 = vmatpush1.bf16.msra.mxu0 %v4738
        %5999 = vmatprep.subr.bf16.mxu0 %v4757
        %6000 = vmatpush1.bf16.msra.mxu0 %v4756
        %6001 = vmatprep.subr.bf16.mxu0 %v4775
        %6002 = vmatpush1.bf16.msra.mxu0 %v4774
        %6003 = vmatprep.subr.bf16.mxu0 %v4793
        %6004 = vmatpush1.bf16.msra.mxu0 %v4792
        %6005 = vmatprep.subr.bf16.mxu0 %v4811
        %6006 = vmatpush1.bf16.msra.mxu0 %v4810
        %6007 = vmatprep.subr.bf16.mxu0 %v4829
        %6008 = vmatpush1.bf16.msra.mxu0 %v4828
        %6009 = vmatprep.subr.bf16.mxu0 %v4847
        %6010 = vmatpush1.bf16.msra.mxu0 %v4846
        %6011 = vmatprep.subr.bf16.mxu0 %v4865
        %6012 = vmatpush1.bf16.msra.mxu0 %v4864
        %6013 = vmatprep.subr.bf16.mxu0 %v4883
        %6014 = vmatpush1.bf16.msra.mxu0 %v4882
        %6015 = vmatprep.subr.bf16.mxu0 %v4901
        %6016 = vmatpush1.bf16.msra.mxu0 %v4900
        %6017 = vmatprep.mubr.bf16.mxu0 %v499
        %6018 = vmatmul.mubr.bf16.gmra.mrb[0].mxu0 %v498
        %v6019 = vpop.f32.mrb[0].mxu0
        %v6020 = vadd.f32 %v5979, %v6019
        %v6021 = vpop.f32.mrb[0].mxu0
        %v6022 = vadd.f32 %v5981, %v6021
        %v6023 = vpop.f32.mrb[0].mxu0
        %v6024 = vpop.f32.mrb[0].mxu0
        %6025 = vdwg.mxu0
        %6026 = vmatprep.subr.bf16.mxu0 %v4057
        %6027 = vmatpush1.bf16.msra.mxu0 %v4056
        %6028 = vmatprep.subr.bf16.mxu0 %v4075
        %6029 = vmatpush1.bf16.msra.mxu0 %v4074
        %6030 = vmatprep.subr.bf16.mxu0 %v4093
        %6031 = vmatpush1.bf16.msra.mxu0 %v4092
        %6032 = vmatprep.subr.bf16.mxu0 %v4111
        %6033 = vmatpush1.bf16.msra.mxu0 %v4110
        %6034 = vmatprep.subr.bf16.mxu0 %v4129
        %6035 = vmatpush1.bf16.msra.mxu0 %v4128
        %6036 = vmatprep.subr.bf16.mxu0 %v4147
        %6037 = vmatpush1.bf16.msra.mxu0 %v4146
        %6038 = vmatprep.subr.bf16.mxu0 %v4165
        %6039 = vmatpush1.bf16.msra.mxu0 %v4164
        %6040 = vmatprep.subr.bf16.mxu0 %v4183
        %6041 = vmatpush1.bf16.msra.mxu0 %v4182
        %6042 = vmatprep.subr.bf16.mxu0 %v4201
        %6043 = vmatpush1.bf16.msra.mxu0 %v4200
        %6044 = vmatprep.subr.bf16.mxu0 %v4219
        %6045 = vmatpush1.bf16.msra.mxu0 %v4218
        %6046 = vmatprep.subr.bf16.mxu0 %v4237
        %6047 = vmatpush1.bf16.msra.mxu0 %v4236
        %6048 = vmatprep.subr.bf16.mxu0 %v4255
        %6049 = vmatpush1.bf16.msra.mxu0 %v4254
        %6050 = vmatprep.subr.bf16.mxu0 %v4273
        %6051 = vmatpush1.bf16.msra.mxu0 %v4272
        %6052 = vmatprep.subr.bf16.mxu0 %v4291
        %6053 = vmatpush1.bf16.msra.mxu0 %v4290
        %6054 = vmatprep.subr.bf16.mxu0 %v4309
        %6055 = vmatpush1.bf16.msra.mxu0 %v4308
        %6056 = vmatprep.subr.bf16.mxu0 %v4327
        %6057 = vmatpush1.bf16.msra.mxu0 %v4326
        %6058 = vmatprep.mubr.bf16.mxu0 %v495
        %6059 = vmatmul.mubr.bf16.gmra.mrb[0].mxu0 %v494
        %v6060 = vpop.f32.mrb[0].mxu0
        %v6061 = vadd.f32 %v1389, %v6060
        %v6062 = vpop.f32.mrb[0].mxu0
        %v6063 = vadd.f32 %v1393, %v6062
        %v6064 = vpop.f32.mrb[0].mxu0
        %v6065 = vpop.f32.mrb[0].mxu0
        %6066 = vdwg.mxu0
        %6067 = vmatprep.subr.bf16.mxu0 %v4345
        %6068 = vmatpush1.bf16.msra.mxu0 %v4344
        %6069 = vmatprep.subr.bf16.mxu0 %v4363
        %6070 = vmatpush1.bf16.msra.mxu0 %v4362
        %6071 = vmatprep.subr.bf16.mxu0 %v4381
        %6072 = vmatpush1.bf16.msra.mxu0 %v4380
        %6073 = vmatprep.subr.bf16.mxu0 %v4399
        %6074 = vmatpush1.bf16.msra.mxu0 %v4398
        %6075 = vmatprep.subr.bf16.mxu0 %v4417
        %6076 = vmatpush1.bf16.msra.mxu0 %v4416
        %6077 = vmatprep.subr.bf16.mxu0 %v4435
        %6078 = vmatpush1.bf16.msra.mxu0 %v4434
        %6079 = vmatprep.subr.bf16.mxu0 %v4453
        %6080 = vmatpush1.bf16.msra.mxu0 %v4452
        %6081 = vmatprep.subr.bf16.mxu0 %v4471
        %6082 = vmatpush1.bf16.msra.mxu0 %v4470
        %6083 = vmatprep.subr.bf16.mxu0 %v4489
        %6084 = vmatpush1.bf16.msra.mxu0 %v4488
        %6085 = vmatprep.subr.bf16.mxu0 %v4507
        %6086 = vmatpush1.bf16.msra.mxu0 %v4506
        %6087 = vmatprep.subr.bf16.mxu0 %v4525
        %6088 = vmatpush1.bf16.msra.mxu0 %v4524
        %6089 = vmatprep.subr.bf16.mxu0 %v4543
        %6090 = vmatpush1.bf16.msra.mxu0 %v4542
        %6091 = vmatprep.subr.bf16.mxu0 %v4561
        %6092 = vmatpush1.bf16.msra.mxu0 %v4560
        %6093 = vmatprep.subr.bf16.mxu0 %v4579
        %6094 = vmatpush1.bf16.msra.mxu0 %v4578
        %6095 = vmatprep.subr.bf16.mxu0 %v4597
        %6096 = vmatpush1.bf16.msra.mxu0 %v4596
        %6097 = vmatprep.subr.bf16.mxu0 %v4615
        %6098 = vmatpush1.bf16.msra.mxu0 %v4614
        %6099 = vmatprep.mubr.bf16.mxu0 %v497
        %6100 = vmatmul.mubr.bf16.gmra.mrb[0].mxu0 %v496
        %v6101 = vpop.f32.mrb[0].mxu0
        %v6102 = vadd.f32 %v6061, %v6101
        %v6103 = vpop.f32.mrb[0].mxu0
        %v6104 = vadd.f32 %v6063, %v6103
        %v6105 = vpop.f32.mrb[0].mxu0
        %v6106 = vpop.f32.mrb[0].mxu0
        %6107 = vdwg.mxu0
        %6108 = vmatprep.subr.bf16.mxu0 %v4633
        %6109 = vmatpush1.bf16.msra.mxu0 %v4632
        %6110 = vmatprep.subr.bf16.mxu0 %v4651
        %6111 = vmatpush1.bf16.msra.mxu0 %v4650
        %6112 = vmatprep.subr.bf16.mxu0 %v4669
        %6113 = vmatpush1.bf16.msra.mxu0 %v4668
        %6114 = vmatprep.subr.bf16.mxu0 %v4687
        %6115 = vmatpush1.bf16.msra.mxu0 %v4686
        %6116 = vmatprep.subr.bf16.mxu0 %v4705
        %6117 = vmatpush1.bf16.msra.mxu0 %v4704
        %6118 = vmatprep.subr.bf16.mxu0 %v4723
        %6119 = vmatpush1.bf16.msra.mxu0 %v4722
        %6120 = vmatprep.subr.bf16.mxu0 %v4741
        %6121 = vmatpush1.bf16.msra.mxu0 %v4740
        %6122 = vmatprep.subr.bf16.mxu0 %v4759
        %6123 = vmatpush1.bf16.msra.mxu0 %v4758
        %6124 = vmatprep.subr.bf16.mxu0 %v4777
        %6125 = vmatpush1.bf16.msra.mxu0 %v4776
        %6126 = vmatprep.subr.bf16.mxu0 %v4795
        %6127 = vmatpush1.bf16.msra.mxu0 %v4794
        %6128 = vmatprep.subr.bf16.mxu0 %v4813
        %6129 = vmatpush1.bf16.msra.mxu0 %v4812
        %6130 = vmatprep.subr.bf16.mxu0 %v4831
        %6131 = vmatpush1.bf16.msra.mxu0 %v4830
        %6132 = vmatprep.subr.bf16.mxu0 %v4849
        %6133 = vmatpush1.bf16.msra.mxu0 %v4848
        %6134 = vmatprep.subr.bf16.mxu0 %v4867
        %6135 = vmatpush1.bf16.msra.mxu0 %v4866
        %6136 = vmatprep.subr.bf16.mxu0 %v4885
        %6137 = vmatpush1.bf16.msra.mxu0 %v4884
        %6138 = vmatprep.subr.bf16.mxu0 %v4903
        %6139 = vmatpush1.bf16.msra.mxu0 %v4902
        %6140 = vmatprep.mubr.bf16.mxu0 %v499
        %6141 = vmatmul.mubr.bf16.gmra.mrb[0].mxu0 %v498
        %v6142 = vpop.f32.mrb[0].mxu0
        %v6143 = vadd.f32 %v6102, %v6142
        %v6144 = vpop.f32.mrb[0].mxu0
        %v6145 = vadd.f32 %v6104, %v6144
        %v6146 = vpop.f32.mrb[0].mxu0
        %v6147 = vpop.f32.mrb[0].mxu0
        %6148 = vdwg.mxu0
        %6149 = vmatprep.subr.bf16.mxu0 %v4059
        %6150 = vmatpush1.bf16.msra.mxu0 %v4058
        %6151 = vmatprep.subr.bf16.mxu0 %v4077
        %6152 = vmatpush1.bf16.msra.mxu0 %v4076
        %6153 = vmatprep.subr.bf16.mxu0 %v4095
        %6154 = vmatpush1.bf16.msra.mxu0 %v4094
        %6155 = vmatprep.subr.bf16.mxu0 %v4113
        %6156 = vmatpush1.bf16.msra.mxu0 %v4112
        %6157 = vmatprep.subr.bf16.mxu0 %v4131
        %6158 = vmatpush1.bf16.msra.mxu0 %v4130
        %6159 = vmatprep.subr.bf16.mxu0 %v4149
        %6160 = vmatpush1.bf16.msra.mxu0 %v4148
        %6161 = vmatprep.subr.bf16.mxu0 %v4167
        %6162 = vmatpush1.bf16.msra.mxu0 %v4166
        %6163 = vmatprep.subr.bf16.mxu0 %v4185
        %6164 = vmatpush1.bf16.msra.mxu0 %v4184
        %6165 = vmatprep.subr.bf16.mxu0 %v4203
        %6166 = vmatpush1.bf16.msra.mxu0 %v4202
        %6167 = vmatprep.subr.bf16.mxu0 %v4221
        %6168 = vmatpush1.bf16.msra.mxu0 %v4220
        %6169 = vmatprep.subr.bf16.mxu0 %v4239
        %6170 = vmatpush1.bf16.msra.mxu0 %v4238
        %6171 = vmatprep.subr.bf16.mxu0 %v4257
        %6172 = vmatpush1.bf16.msra.mxu0 %v4256
        %6173 = vmatprep.subr.bf16.mxu0 %v4275
        %6174 = vmatpush1.bf16.msra.mxu0 %v4274
        %6175 = vmatprep.subr.bf16.mxu0 %v4293
        %6176 = vmatpush1.bf16.msra.mxu0 %v4292
        %6177 = vmatprep.subr.bf16.mxu0 %v4311
        %6178 = vmatpush1.bf16.msra.mxu0 %v4310
        %6179 = vmatprep.subr.bf16.mxu0 %v4329
        %6180 = vmatpush1.bf16.msra.mxu0 %v4328
        %6181 = vmatprep.mubr.bf16.mxu0 %v495
        %6182 = vmatmul.mubr.bf16.gmra.mrb[0].mxu0 %v494
        %v6183 = vpop.f32.mrb[0].mxu0
        %v6184 = vadd.f32 %v1397, %v6183
        %v6185 = vpop.f32.mrb[0].mxu0
        %v6186 = vadd.f32 %v1401, %v6185
        %v6187 = vpop.f32.mrb[0].mxu0
        %v6188 = vpop.f32.mrb[0].mxu0
        %6189 = vdwg.mxu0
        %6190 = vmatprep.subr.bf16.mxu0 %v4347
        %6191 = vmatpush1.bf16.msra.mxu0 %v4346
        %6192 = vmatprep.subr.bf16.mxu0 %v4365
        %6193 = vmatpush1.bf16.msra.mxu0 %v4364
        %6194 = vmatprep.subr.bf16.mxu0 %v4383
        %6195 = vmatpush1.bf16.msra.mxu0 %v4382
        %6196 = vmatprep.subr.bf16.mxu0 %v4401
        %6197 = vmatpush1.bf16.msra.mxu0 %v4400
        %6198 = vmatprep.subr.bf16.mxu0 %v4419
        %6199 = vmatpush1.bf16.msra.mxu0 %v4418
        %6200 = vmatprep.subr.bf16.mxu0 %v4437
        %6201 = vmatpush1.bf16.msra.mxu0 %v4436
        %6202 = vmatprep.subr.bf16.mxu0 %v4455
        %6203 = vmatpush1.bf16.msra.mxu0 %v4454
        %6204 = vmatprep.subr.bf16.mxu0 %v4473
        %6205 = vmatpush1.bf16.msra.mxu0 %v4472
        %6206 = vmatprep.subr.bf16.mxu0 %v4491
        %6207 = vmatpush1.bf16.msra.mxu0 %v4490
        %6208 = vmatprep.subr.bf16.mxu0 %v4509
        %6209 = vmatpush1.bf16.msra.mxu0 %v4508
        %6210 = vmatprep.subr.bf16.mxu0 %v4527
        %6211 = vmatpush1.bf16.msra.mxu0 %v4526
        %6212 = vmatprep.subr.bf16.mxu0 %v4545
        %6213 = vmatpush1.bf16.msra.mxu0 %v4544
        %6214 = vmatprep.subr.bf16.mxu0 %v4563
        %6215 = vmatpush1.bf16.msra.mxu0 %v4562
        %6216 = vmatprep.subr.bf16.mxu0 %v4581
        %6217 = vmatpush1.bf16.msra.mxu0 %v4580
        %6218 = vmatprep.subr.bf16.mxu0 %v4599
        %6219 = vmatpush1.bf16.msra.mxu0 %v4598
        %6220 = vmatprep.subr.bf16.mxu0 %v4617
        %6221 = vmatpush1.bf16.msra.mxu0 %v4616
        %6222 = vmatprep.mubr.bf16.mxu0 %v497
        %6223 = vmatmul.mubr.bf16.gmra.mrb[0].mxu0 %v496
        %v6224 = vpop.f32.mrb[0].mxu0
        %v6225 = vadd.f32 %v6184, %v6224
        %v6226 = vpop.f32.mrb[0].mxu0
        %v6227 = vadd.f32 %v6186, %v6226
        %v6228 = vpop.f32.mrb[0].mxu0
        %v6229 = vpop.f32.mrb[0].mxu0
        %6230 = vdwg.mxu0
        %6231 = vmatprep.subr.bf16.mxu0 %v4635
        %6232 = vmatpush1.bf16.msra.mxu0 %v4634
        %6233 = vmatprep.subr.bf16.mxu0 %v4653
        %6234 = vmatpush1.bf16.msra.mxu0 %v4652
        %6235 = vmatprep.subr.bf16.mxu0 %v4671
        %6236 = vmatpush1.bf16.msra.mxu0 %v4670
        %6237 = vmatprep.subr.bf16.mxu0 %v4689
        %6238 = vmatpush1.bf16.msra.mxu0 %v4688
        %6239 = vmatprep.subr.bf16.mxu0 %v4707
        %6240 = vmatpush1.bf16.msra.mxu0 %v4706
        %6241 = vmatprep.subr.bf16.mxu0 %v4725
        %6242 = vmatpush1.bf16.msra.mxu0 %v4724
        %6243 = vmatprep.subr.bf16.mxu0 %v4743
        %6244 = vmatpush1.bf16.msra.mxu0 %v4742
        %6245 = vmatprep.subr.bf16.mxu0 %v4761
        %6246 = vmatpush1.bf16.msra.mxu0 %v4760
        %6247 = vmatprep.subr.bf16.mxu0 %v4779
        %6248 = vmatpush1.bf16.msra.mxu0 %v4778
        %6249 = vmatprep.subr.bf16.mxu0 %v4797
        %6250 = vmatpush1.bf16.msra.mxu0 %v4796
        %6251 = vmatprep.subr.bf16.mxu0 %v4815
        %6252 = vmatpush1.bf16.msra.mxu0 %v4814
        %6253 = vmatprep.subr.bf16.mxu0 %v4833
        %6254 = vmatpush1.bf16.msra.mxu0 %v4832
        %6255 = vmatprep.subr.bf16.mxu0 %v4851
        %6256 = vmatpush1.bf16.msra.mxu0 %v4850
        %6257 = vmatprep.subr.bf16.mxu0 %v4869
        %6258 = vmatpush1.bf16.msra.mxu0 %v4868
        %6259 = vmatprep.subr.bf16.mxu0 %v4887
        %6260 = vmatpush1.bf16.msra.mxu0 %v4886
        %6261 = vmatprep.subr.bf16.mxu0 %v4905
        %6262 = vmatpush1.bf16.msra.mxu0 %v4904
        %6263 = vmatprep.mubr.bf16.mxu0 %v499
        %6264 = vmatmul.mubr.bf16.gmra.mrb[0].mxu0 %v498
        %v6265 = vpop.f32.mrb[0].mxu0
        %v6266 = vadd.f32 %v6225, %v6265
        %v6267 = vpop.f32.mrb[0].mxu0
        %v6268 = vadd.f32 %v6227, %v6267
        %v6269 = vpop.f32.mrb[0].mxu0
        %v6270 = vpop.f32.mrb[0].mxu0
        %6271 = vdwg.mxu0
        %6272 = vmatprep.subr.bf16.mxu0 %v4061
        %6273 = vmatpush1.bf16.msra.mxu0 %v4060
        %6274 = vmatprep.subr.bf16.mxu0 %v4079
        %6275 = vmatpush1.bf16.msra.mxu0 %v4078
        %6276 = vmatprep.subr.bf16.mxu0 %v4097
        %6277 = vmatpush1.bf16.msra.mxu0 %v4096
        %6278 = vmatprep.subr.bf16.mxu0 %v4115
        %6279 = vmatpush1.bf16.msra.mxu0 %v4114
        %6280 = vmatprep.subr.bf16.mxu0 %v4133
        %6281 = vmatpush1.bf16.msra.mxu0 %v4132
        %6282 = vmatprep.subr.bf16.mxu0 %v4151
        %6283 = vmatpush1.bf16.msra.mxu0 %v4150
        %6284 = vmatprep.subr.bf16.mxu0 %v4169
        %6285 = vmatpush1.bf16.msra.mxu0 %v4168
        %6286 = vmatprep.subr.bf16.mxu0 %v4187
        %6287 = vmatpush1.bf16.msra.mxu0 %v4186
        %6288 = vmatprep.subr.bf16.mxu0 %v4205
        %6289 = vmatpush1.bf16.msra.mxu0 %v4204
        %6290 = vmatprep.subr.bf16.mxu0 %v4223
        %6291 = vmatpush1.bf16.msra.mxu0 %v4222
        %6292 = vmatprep.subr.bf16.mxu0 %v4241
        %6293 = vmatpush1.bf16.msra.mxu0 %v4240
        %6294 = vmatprep.subr.bf16.mxu0 %v4259
        %6295 = vmatpush1.bf16.msra.mxu0 %v4258
        %6296 = vmatprep.subr.bf16.mxu0 %v4277
        %6297 = vmatpush1.bf16.msra.mxu0 %v4276
        %6298 = vmatprep.subr.bf16.mxu0 %v4295
        %6299 = vmatpush1.bf16.msra.mxu0 %v4294
        %6300 = vmatprep.subr.bf16.mxu0 %v4313
        %6301 = vmatpush1.bf16.msra.mxu0 %v4312
        %6302 = vmatprep.subr.bf16.mxu0 %v4331
        %6303 = vmatpush1.bf16.msra.mxu0 %v4330
        %6304 = vmatprep.mubr.bf16.mxu0 %v495
        %6305 = vmatmul.mubr.bf16.gmra.mrb[0].mxu0 %v494
        %v6306 = vpop.f32.mrb[0].mxu0
        %v6307 = vadd.f32 %v1405, %v6306
        %v6308 = vpop.f32.mrb[0].mxu0
        %v6309 = vadd.f32 %v1409, %v6308
        %v6310 = vpop.f32.mrb[0].mxu0
        %v6311 = vpop.f32.mrb[0].mxu0
        %6312 = vdwg.mxu0
        %6313 = vmatprep.subr.bf16.mxu0 %v4349
        %6314 = vmatpush1.bf16.msra.mxu0 %v4348
        %6315 = vmatprep.subr.bf16.mxu0 %v4367
        %6316 = vmatpush1.bf16.msra.mxu0 %v4366
        %6317 = vmatprep.subr.bf16.mxu0 %v4385
        %6318 = vmatpush1.bf16.msra.mxu0 %v4384
        %6319 = vmatprep.subr.bf16.mxu0 %v4403
        %6320 = vmatpush1.bf16.msra.mxu0 %v4402
        %6321 = vmatprep.subr.bf16.mxu0 %v4421
        %6322 = vmatpush1.bf16.msra.mxu0 %v4420
        %6323 = vmatprep.subr.bf16.mxu0 %v4439
        %6324 = vmatpush1.bf16.msra.mxu0 %v4438
        %6325 = vmatprep.subr.bf16.mxu0 %v4457
        %6326 = vmatpush1.bf16.msra.mxu0 %v4456
        %6327 = vmatprep.subr.bf16.mxu0 %v4475
        %6328 = vmatpush1.bf16.msra.mxu0 %v4474
        %6329 = vmatprep.subr.bf16.mxu0 %v4493
        %6330 = vmatpush1.bf16.msra.mxu0 %v4492
        %6331 = vmatprep.subr.bf16.mxu0 %v4511
        %6332 = vmatpush1.bf16.msra.mxu0 %v4510
        %6333 = vmatprep.subr.bf16.mxu0 %v4529
        %6334 = vmatpush1.bf16.msra.mxu0 %v4528
        %6335 = vmatprep.subr.bf16.mxu0 %v4547
        %6336 = vmatpush1.bf16.msra.mxu0 %v4546
        %6337 = vmatprep.subr.bf16.mxu0 %v4565
        %6338 = vmatpush1.bf16.msra.mxu0 %v4564
        %6339 = vmatprep.subr.bf16.mxu0 %v4583
        %6340 = vmatpush1.bf16.msra.mxu0 %v4582
        %6341 = vmatprep.subr.bf16.mxu0 %v4601
        %6342 = vmatpush1.bf16.msra.mxu0 %v4600
        %6343 = vmatprep.subr.bf16.mxu0 %v4619
        %6344 = vmatpush1.bf16.msra.mxu0 %v4618
        %6345 = vmatprep.mubr.bf16.mxu0 %v497
        %6346 = vmatmul.mubr.bf16.gmra.mrb[0].mxu0 %v496
        %v6347 = vpop.f32.mrb[0].mxu0
        %v6348 = vadd.f32 %v6307, %v6347
        %v6349 = vpop.f32.mrb[0].mxu0
        %v6350 = vadd.f32 %v6309, %v6349
        %v6351 = vpop.f32.mrb[0].mxu0
        %v6352 = vpop.f32.mrb[0].mxu0
        %6353 = vdwg.mxu0
        %6354 = vmatprep.subr.bf16.mxu0 %v4637
        %6355 = vmatpush1.bf16.msra.mxu0 %v4636
        %6356 = vmatprep.subr.bf16.mxu0 %v4655
        %6357 = vmatpush1.bf16.msra.mxu0 %v4654
        %6358 = vmatprep.subr.bf16.mxu0 %v4673
        %6359 = vmatpush1.bf16.msra.mxu0 %v4672
        %6360 = vmatprep.subr.bf16.mxu0 %v4691
        %6361 = vmatpush1.bf16.msra.mxu0 %v4690
        %6362 = vmatprep.subr.bf16.mxu0 %v4709
        %6363 = vmatpush1.bf16.msra.mxu0 %v4708
        %6364 = vmatprep.subr.bf16.mxu0 %v4727
        %6365 = vmatpush1.bf16.msra.mxu0 %v4726
        %6366 = vmatprep.subr.bf16.mxu0 %v4745
        %6367 = vmatpush1.bf16.msra.mxu0 %v4744
        %6368 = vmatprep.subr.bf16.mxu0 %v4763
        %6369 = vmatpush1.bf16.msra.mxu0 %v4762
        %6370 = vmatprep.subr.bf16.mxu0 %v4781
        %6371 = vmatpush1.bf16.msra.mxu0 %v4780
        %6372 = vmatprep.subr.bf16.mxu0 %v4799
        %6373 = vmatpush1.bf16.msra.mxu0 %v4798
        %6374 = vmatprep.subr.bf16.mxu0 %v4817
        %6375 = vmatpush1.bf16.msra.mxu0 %v4816
        %6376 = vmatprep.subr.bf16.mxu0 %v4835
        %6377 = vmatpush1.bf16.msra.mxu0 %v4834
        %6378 = vmatprep.subr.bf16.mxu0 %v4853
        %6379 = vmatpush1.bf16.msra.mxu0 %v4852
        %6380 = vmatprep.subr.bf16.mxu0 %v4871
        %6381 = vmatpush1.bf16.msra.mxu0 %v4870
        %6382 = vmatprep.subr.bf16.mxu0 %v4889
        %6383 = vmatpush1.bf16.msra.mxu0 %v4888
        %6384 = vmatprep.subr.bf16.mxu0 %v4907
        %6385 = vmatpush1.bf16.msra.mxu0 %v4906
        %6386 = vmatprep.mubr.bf16.mxu0 %v499
        %6387 = vmatmul.mubr.bf16.gmra.mrb[0].mxu0 %v498
        %v6388 = vpop.f32.mrb[0].mxu0
        %v6389 = vadd.f32 %v6348, %v6388
        %v6390 = vpop.f32.mrb[0].mxu0
        %v6391 = vadd.f32 %v6350, %v6390
        %v6392 = vpop.f32.mrb[0].mxu0
        %v6393 = vpop.f32.mrb[0].mxu0
        %6394 = vdwg.mxu0
        %6395 = vmatprep.subr.bf16.mxu0 %v4063
        %6396 = vmatpush1.bf16.msra.mxu0 %v4062
        %6397 = vmatprep.subr.bf16.mxu0 %v4081
        %6398 = vmatpush1.bf16.msra.mxu0 %v4080
        %6399 = vmatprep.subr.bf16.mxu0 %v4099
        %6400 = vmatpush1.bf16.msra.mxu0 %v4098
        %6401 = vmatprep.subr.bf16.mxu0 %v4117
        %6402 = vmatpush1.bf16.msra.mxu0 %v4116
        %6403 = vmatprep.subr.bf16.mxu0 %v4135
        %6404 = vmatpush1.bf16.msra.mxu0 %v4134
        %6405 = vmatprep.subr.bf16.mxu0 %v4153
        %6406 = vmatpush1.bf16.msra.mxu0 %v4152
        %6407 = vmatprep.subr.bf16.mxu0 %v4171
        %6408 = vmatpush1.bf16.msra.mxu0 %v4170
        %6409 = vmatprep.subr.bf16.mxu0 %v4189
        %6410 = vmatpush1.bf16.msra.mxu0 %v4188
        %6411 = vmatprep.subr.bf16.mxu0 %v4207
        %6412 = vmatpush1.bf16.msra.mxu0 %v4206
        %6413 = vmatprep.subr.bf16.mxu0 %v4225
        %6414 = vmatpush1.bf16.msra.mxu0 %v4224
        %6415 = vmatprep.subr.bf16.mxu0 %v4243
        %6416 = vmatpush1.bf16.msra.mxu0 %v4242
        %6417 = vmatprep.subr.bf16.mxu0 %v4261
        %6418 = vmatpush1.bf16.msra.mxu0 %v4260
        %6419 = vmatprep.subr.bf16.mxu0 %v4279
        %6420 = vmatpush1.bf16.msra.mxu0 %v4278
        %6421 = vmatprep.subr.bf16.mxu0 %v4297
        %6422 = vmatpush1.bf16.msra.mxu0 %v4296
        %6423 = vmatprep.subr.bf16.mxu0 %v4315
        %6424 = vmatpush1.bf16.msra.mxu0 %v4314
        %6425 = vmatprep.subr.bf16.mxu0 %v4333
        %6426 = vmatpush1.bf16.msra.mxu0 %v4332
        %6427 = vmatprep.mubr.bf16.mxu0 %v495
        %6428 = vmatmul.mubr.bf16.gmra.mrb[0].mxu0 %v494
        %v6429 = vpop.f32.mrb[0].mxu0
        %v6430 = vadd.f32 %v1413, %v6429
        %v6431 = vpop.f32.mrb[0].mxu0
        %v6432 = vadd.f32 %v1417, %v6431
        %v6433 = vpop.f32.mrb[0].mxu0
        %v6434 = vpop.f32.mrb[0].mxu0
        %6435 = vdwg.mxu0
        %6436 = vmatprep.subr.bf16.mxu0 %v4351
        %6437 = vmatpush1.bf16.msra.mxu0 %v4350
        %6438 = vmatprep.subr.bf16.mxu0 %v4369
        %6439 = vmatpush1.bf16.msra.mxu0 %v4368
        %6440 = vmatprep.subr.bf16.mxu0 %v4387
        %6441 = vmatpush1.bf16.msra.mxu0 %v4386
        %6442 = vmatprep.subr.bf16.mxu0 %v4405
        %6443 = vmatpush1.bf16.msra.mxu0 %v4404
        %6444 = vmatprep.subr.bf16.mxu0 %v4423
        %6445 = vmatpush1.bf16.msra.mxu0 %v4422
        %6446 = vmatprep.subr.bf16.mxu0 %v4441
        %6447 = vmatpush1.bf16.msra.mxu0 %v4440
        %6448 = vmatprep.subr.bf16.mxu0 %v4459
        %6449 = vmatpush1.bf16.msra.mxu0 %v4458
        %6450 = vmatprep.subr.bf16.mxu0 %v4477
        %6451 = vmatpush1.bf16.msra.mxu0 %v4476
        %6452 = vmatprep.subr.bf16.mxu0 %v4495
        %6453 = vmatpush1.bf16.msra.mxu0 %v4494
        %6454 = vmatprep.subr.bf16.mxu0 %v4513
        %6455 = vmatpush1.bf16.msra.mxu0 %v4512
        %6456 = vmatprep.subr.bf16.mxu0 %v4531
        %6457 = vmatpush1.bf16.msra.mxu0 %v4530
        %6458 = vmatprep.subr.bf16.mxu0 %v4549
        %6459 = vmatpush1.bf16.msra.mxu0 %v4548
        %6460 = vmatprep.subr.bf16.mxu0 %v4567
        %6461 = vmatpush1.bf16.msra.mxu0 %v4566
        %6462 = vmatprep.subr.bf16.mxu0 %v4585
        %6463 = vmatpush1.bf16.msra.mxu0 %v4584
        %6464 = vmatprep.subr.bf16.mxu0 %v4603
        %6465 = vmatpush1.bf16.msra.mxu0 %v4602
        %6466 = vmatprep.subr.bf16.mxu0 %v4621
        %6467 = vmatpush1.bf16.msra.mxu0 %v4620
        %6468 = vmatprep.mubr.bf16.mxu0 %v497
        %6469 = vmatmul.mubr.bf16.gmra.mrb[0].mxu0 %v496
        %v6470 = vpop.f32.mrb[0].mxu0
        %v6471 = vadd.f32 %v6430, %v6470
        %v6472 = vpop.f32.mrb[0].mxu0
        %v6473 = vadd.f32 %v6432, %v6472
        %v6474 = vpop.f32.mrb[0].mxu0
        %v6475 = vpop.f32.mrb[0].mxu0
        %6476 = vdwg.mxu0
        %6477 = vmatprep.subr.bf16.mxu0 %v4639
        %6478 = vmatpush1.bf16.msra.mxu0 %v4638
        %6479 = vmatprep.subr.bf16.mxu0 %v4657
        %6480 = vmatpush1.bf16.msra.mxu0 %v4656
        %6481 = vmatprep.subr.bf16.mxu0 %v4675
        %6482 = vmatpush1.bf16.msra.mxu0 %v4674
        %6483 = vmatprep.subr.bf16.mxu0 %v4693
        %6484 = vmatpush1.bf16.msra.mxu0 %v4692
        %6485 = vmatprep.subr.bf16.mxu0 %v4711
        %6486 = vmatpush1.bf16.msra.mxu0 %v4710
        %6487 = vmatprep.subr.bf16.mxu0 %v4729
        %6488 = vmatpush1.bf16.msra.mxu0 %v4728
        %6489 = vmatprep.subr.bf16.mxu0 %v4747
        %6490 = vmatpush1.bf16.msra.mxu0 %v4746
        %6491 = vmatprep.subr.bf16.mxu0 %v4765
        %6492 = vmatpush1.bf16.msra.mxu0 %v4764
        %6493 = vmatprep.subr.bf16.mxu0 %v4783
        %6494 = vmatpush1.bf16.msra.mxu0 %v4782
        %6495 = vmatprep.subr.bf16.mxu0 %v4801
        %6496 = vmatpush1.bf16.msra.mxu0 %v4800
        %6497 = vmatprep.subr.bf16.mxu0 %v4819
        %6498 = vmatpush1.bf16.msra.mxu0 %v4818
        %6499 = vmatprep.subr.bf16.mxu0 %v4837
        %6500 = vmatpush1.bf16.msra.mxu0 %v4836
        %6501 = vmatprep.subr.bf16.mxu0 %v4855
        %6502 = vmatpush1.bf16.msra.mxu0 %v4854
        %6503 = vmatprep.subr.bf16.mxu0 %v4873
        %6504 = vmatpush1.bf16.msra.mxu0 %v4872
        %6505 = vmatprep.subr.bf16.mxu0 %v4891
        %6506 = vmatpush1.bf16.msra.mxu0 %v4890
        %6507 = vmatprep.subr.bf16.mxu0 %v4909
        %6508 = vmatpush1.bf16.msra.mxu0 %v4908
        %6509 = vmatprep.mubr.bf16.mxu0 %v499
        %6510 = vmatmul.mubr.bf16.gmra.mrb[0].mxu0 %v498
        %v6511 = vpop.f32.mrb[0].mxu0
        %v6512 = vadd.f32 %v6471, %v6511
        %v6513 = vpop.f32.mrb[0].mxu0
        %v6514 = vadd.f32 %v6473, %v6513
        %v6515 = vpop.f32.mrb[0].mxu0
        %v6516 = vpop.f32.mrb[0].mxu0
        %6517 = vdwg.mxu0
        %6518 = vmatprep.subr.bf16.mxu0 %v4065
        %6519 = vmatpush1.bf16.msra.mxu0 %v4064
        %6520 = vmatprep.subr.bf16.mxu0 %v4083
        %6521 = vmatpush1.bf16.msra.mxu0 %v4082
        %6522 = vmatprep.subr.bf16.mxu0 %v4101
        %6523 = vmatpush1.bf16.msra.mxu0 %v4100
        %6524 = vmatprep.subr.bf16.mxu0 %v4119
        %6525 = vmatpush1.bf16.msra.mxu0 %v4118
        %6526 = vmatprep.subr.bf16.mxu0 %v4137
        %6527 = vmatpush1.bf16.msra.mxu0 %v4136
        %6528 = vmatprep.subr.bf16.mxu0 %v4155
        %6529 = vmatpush1.bf16.msra.mxu0 %v4154
        %6530 = vmatprep.subr.bf16.mxu0 %v4173
        %6531 = vmatpush1.bf16.msra.mxu0 %v4172
        %6532 = vmatprep.subr.bf16.mxu0 %v4191
        %6533 = vmatpush1.bf16.msra.mxu0 %v4190
        %6534 = vmatprep.subr.bf16.mxu0 %v4209
        %6535 = vmatpush1.bf16.msra.mxu0 %v4208
        %6536 = vmatprep.subr.bf16.mxu0 %v4227
        %6537 = vmatpush1.bf16.msra.mxu0 %v4226
        %6538 = vmatprep.subr.bf16.mxu0 %v4245
        %6539 = vmatpush1.bf16.msra.mxu0 %v4244
        %6540 = vmatprep.subr.bf16.mxu0 %v4263
        %6541 = vmatpush1.bf16.msra.mxu0 %v4262
        %6542 = vmatprep.subr.bf16.mxu0 %v4281
        %6543 = vmatpush1.bf16.msra.mxu0 %v4280
        %6544 = vmatprep.subr.bf16.mxu0 %v4299
        %6545 = vmatpush1.bf16.msra.mxu0 %v4298
        %6546 = vmatprep.subr.bf16.mxu0 %v4317
        %6547 = vmatpush1.bf16.msra.mxu0 %v4316
        %6548 = vmatprep.subr.bf16.mxu0 %v4335
        %6549 = vmatpush1.bf16.msra.mxu0 %v4334
        %6550 = vmatprep.mubr.bf16.mxu0 %v495
        %6551 = vmatmul.mubr.bf16.gmra.mrb[0].mxu0 %v494
        %v6552 = vpop.f32.mrb[0].mxu0
        %v6553 = vadd.f32 %v1421, %v6552
        %v6554 = vpop.f32.mrb[0].mxu0
        %v6555 = vadd.f32 %v1425, %v6554
        %v6556 = vpop.f32.mrb[0].mxu0
        %v6557 = vpop.f32.mrb[0].mxu0
        %6558 = vdwg.mxu0
        %6559 = vmatprep.subr.bf16.mxu0 %v4353
        %6560 = vmatpush1.bf16.msra.mxu0 %v4352
        %6561 = vmatprep.subr.bf16.mxu0 %v4371
        %6562 = vmatpush1.bf16.msra.mxu0 %v4370
        %6563 = vmatprep.subr.bf16.mxu0 %v4389
        %6564 = vmatpush1.bf16.msra.mxu0 %v4388
        %6565 = vmatprep.subr.bf16.mxu0 %v4407
        %6566 = vmatpush1.bf16.msra.mxu0 %v4406
        %6567 = vmatprep.subr.bf16.mxu0 %v4425
        %6568 = vmatpush1.bf16.msra.mxu0 %v4424
        %6569 = vmatprep.subr.bf16.mxu0 %v4443
        %6570 = vmatpush1.bf16.msra.mxu0 %v4442
        %6571 = vmatprep.subr.bf16.mxu0 %v4461
        %6572 = vmatpush1.bf16.msra.mxu0 %v4460
        %6573 = vmatprep.subr.bf16.mxu0 %v4479
        %6574 = vmatpush1.bf16.msra.mxu0 %v4478
        %6575 = vmatprep.subr.bf16.mxu0 %v4497
        %6576 = vmatpush1.bf16.msra.mxu0 %v4496
        %6577 = vmatprep.subr.bf16.mxu0 %v4515
        %6578 = vmatpush1.bf16.msra.mxu0 %v4514
        %6579 = vmatprep.subr.bf16.mxu0 %v4533
        %6580 = vmatpush1.bf16.msra.mxu0 %v4532
        %6581 = vmatprep.subr.bf16.mxu0 %v4551
        %6582 = vmatpush1.bf16.msra.mxu0 %v4550
        %6583 = vmatprep.subr.bf16.mxu0 %v4569
        %6584 = vmatpush1.bf16.msra.mxu0 %v4568
        %6585 = vmatprep.subr.bf16.mxu0 %v4587
        %6586 = vmatpush1.bf16.msra.mxu0 %v4586
        %6587 = vmatprep.subr.bf16.mxu0 %v4605
        %6588 = vmatpush1.bf16.msra.mxu0 %v4604
        %6589 = vmatprep.subr.bf16.mxu0 %v4623
        %6590 = vmatpush1.bf16.msra.mxu0 %v4622
        %6591 = vmatprep.mubr.bf16.mxu0 %v497
        %6592 = vmatmul.mubr.bf16.gmra.mrb[0].mxu0 %v496
        %v6593 = vpop.f32.mrb[0].mxu0
        %v6594 = vadd.f32 %v6553, %v6593
        %v6595 = vpop.f32.mrb[0].mxu0
        %v6596 = vadd.f32 %v6555, %v6595
        %v6597 = vpop.f32.mrb[0].mxu0
        %v6598 = vpop.f32.mrb[0].mxu0
        %6599 = vdwg.mxu0
        %6600 = vmatprep.subr.bf16.mxu0 %v4641
        %6601 = vmatpush1.bf16.msra.mxu0 %v4640
        %6602 = vmatprep.subr.bf16.mxu0 %v4659
        %6603 = vmatpush1.bf16.msra.mxu0 %v4658
        %6604 = vmatprep.subr.bf16.mxu0 %v4677
        %6605 = vmatpush1.bf16.msra.mxu0 %v4676
        %6606 = vmatprep.subr.bf16.mxu0 %v4695
        %6607 = vmatpush1.bf16.msra.mxu0 %v4694
        %6608 = vmatprep.subr.bf16.mxu0 %v4713
        %6609 = vmatpush1.bf16.msra.mxu0 %v4712
        %6610 = vmatprep.subr.bf16.mxu0 %v4731
        %6611 = vmatpush1.bf16.msra.mxu0 %v4730
        %6612 = vmatprep.subr.bf16.mxu0 %v4749
        %6613 = vmatpush1.bf16.msra.mxu0 %v4748
        %6614 = vmatprep.subr.bf16.mxu0 %v4767
        %6615 = vmatpush1.bf16.msra.mxu0 %v4766
        %6616 = vmatprep.subr.bf16.mxu0 %v4785
        %6617 = vmatpush1.bf16.msra.mxu0 %v4784
        %6618 = vmatprep.subr.bf16.mxu0 %v4803
        %6619 = vmatpush1.bf16.msra.mxu0 %v4802
        %6620 = vmatprep.subr.bf16.mxu0 %v4821
        %6621 = vmatpush1.bf16.msra.mxu0 %v4820
        %6622 = vmatprep.subr.bf16.mxu0 %v4839
        %6623 = vmatpush1.bf16.msra.mxu0 %v4838
        %6624 = vmatprep.subr.bf16.mxu0 %v4857
        %6625 = vmatpush1.bf16.msra.mxu0 %v4856
        %6626 = vmatprep.subr.bf16.mxu0 %v4875
        %6627 = vmatpush1.bf16.msra.mxu0 %v4874
        %6628 = vmatprep.subr.bf16.mxu0 %v4893
        %6629 = vmatpush1.bf16.msra.mxu0 %v4892
        %6630 = vmatprep.subr.bf16.mxu0 %v4911
        %6631 = vmatpush1.bf16.msra.mxu0 %v4910
        %6632 = vmatprep.mubr.bf16.mxu0 %v499
        %6633 = vmatmul.mubr.bf16.gmra.mrb[0].mxu0 %v498
        %v6634 = vpop.f32.mrb[0].mxu0
        %v6635 = vadd.f32 %v6594, %v6634
        %v6636 = vpop.f32.mrb[0].mxu0
        %v6637 = vadd.f32 %v6596, %v6636
        %v6638 = vpop.f32.mrb[0].mxu0
        %v6639 = vpop.f32.mrb[0].mxu0
        %6640 = vdwg.mxu0
        %6641 = vmatprep.subr.bf16.mxu0 %v4067
        %6642 = vmatpush1.bf16.msra.mxu0 %v4066
        %6643 = vmatprep.subr.bf16.mxu0 %v4085
        %6644 = vmatpush1.bf16.msra.mxu0 %v4084
        %6645 = vmatprep.subr.bf16.mxu0 %v4103
        %6646 = vmatpush1.bf16.msra.mxu0 %v4102
        %6647 = vmatprep.subr.bf16.mxu0 %v4121
        %6648 = vmatpush1.bf16.msra.mxu0 %v4120
        %6649 = vmatprep.subr.bf16.mxu0 %v4139
        %6650 = vmatpush1.bf16.msra.mxu0 %v4138
        %6651 = vmatprep.subr.bf16.mxu0 %v4157
        %6652 = vmatpush1.bf16.msra.mxu0 %v4156
        %6653 = vmatprep.subr.bf16.mxu0 %v4175
        %6654 = vmatpush1.bf16.msra.mxu0 %v4174
        %6655 = vmatprep.subr.bf16.mxu0 %v4193
        %6656 = vmatpush1.bf16.msra.mxu0 %v4192
        %6657 = vmatprep.subr.bf16.mxu0 %v4211
        %6658 = vmatpush1.bf16.msra.mxu0 %v4210
        %6659 = vmatprep.subr.bf16.mxu0 %v4229
        %6660 = vmatpush1.bf16.msra.mxu0 %v4228
        %6661 = vmatprep.subr.bf16.mxu0 %v4247
        %6662 = vmatpush1.bf16.msra.mxu0 %v4246
        %6663 = vmatprep.subr.bf16.mxu0 %v4265
        %6664 = vmatpush1.bf16.msra.mxu0 %v4264
        %6665 = vmatprep.subr.bf16.mxu0 %v4283
        %6666 = vmatpush1.bf16.msra.mxu0 %v4282
        %6667 = vmatprep.subr.bf16.mxu0 %v4301
        %6668 = vmatpush1.bf16.msra.mxu0 %v4300
        %6669 = vmatprep.subr.bf16.mxu0 %v4319
        %6670 = vmatpush1.bf16.msra.mxu0 %v4318
        %6671 = vmatprep.subr.bf16.mxu0 %v4337
        %6672 = vmatpush1.bf16.msra.mxu0 %v4336
        %6673 = vmatprep.mubr.bf16.mxu0 %v495
        %6674 = vmatmul.mubr.bf16.gmra.mrb[0].mxu0 %v494
        %v6675 = vpop.f32.mrb[0].mxu0
        %v6676 = vadd.f32 %v1429, %v6675
        %v6677 = vpop.f32.mrb[0].mxu0
        %v6678 = vadd.f32 %v1433, %v6677
        %v6679 = vpop.f32.mrb[0].mxu0
        %v6680 = vpop.f32.mrb[0].mxu0
        %6681 = vdwg.mxu0
        %6682 = vmatprep.subr.bf16.mxu0 %v4355
        %6683 = vmatpush1.bf16.msra.mxu0 %v4354
        %6684 = vmatprep.subr.bf16.mxu0 %v4373
        %6685 = vmatpush1.bf16.msra.mxu0 %v4372
        %6686 = vmatprep.subr.bf16.mxu0 %v4391
        %6687 = vmatpush1.bf16.msra.mxu0 %v4390
        %6688 = vmatprep.subr.bf16.mxu0 %v4409
        %6689 = vmatpush1.bf16.msra.mxu0 %v4408
        %6690 = vmatprep.subr.bf16.mxu0 %v4427
        %6691 = vmatpush1.bf16.msra.mxu0 %v4426
        %6692 = vmatprep.subr.bf16.mxu0 %v4445
        %6693 = vmatpush1.bf16.msra.mxu0 %v4444
        %6694 = vmatprep.subr.bf16.mxu0 %v4463
        %6695 = vmatpush1.bf16.msra.mxu0 %v4462
        %6696 = vmatprep.subr.bf16.mxu0 %v4481
        %6697 = vmatpush1.bf16.msra.mxu0 %v4480
        %6698 = vmatprep.subr.bf16.mxu0 %v4499
        %6699 = vmatpush1.bf16.msra.mxu0 %v4498
        %6700 = vmatprep.subr.bf16.mxu0 %v4517
        %6701 = vmatpush1.bf16.msra.mxu0 %v4516
        %6702 = vmatprep.subr.bf16.mxu0 %v4535
        %6703 = vmatpush1.bf16.msra.mxu0 %v4534
        %6704 = vmatprep.subr.bf16.mxu0 %v4553
        %6705 = vmatpush1.bf16.msra.mxu0 %v4552
        %6706 = vmatprep.subr.bf16.mxu0 %v4571
        %6707 = vmatpush1.bf16.msra.mxu0 %v4570
        %6708 = vmatprep.subr.bf16.mxu0 %v4589
        %6709 = vmatpush1.bf16.msra.mxu0 %v4588
        %6710 = vmatprep.subr.bf16.mxu0 %v4607
        %6711 = vmatpush1.bf16.msra.mxu0 %v4606
        %6712 = vmatprep.subr.bf16.mxu0 %v4625
        %6713 = vmatpush1.bf16.msra.mxu0 %v4624
        %6714 = vmatprep.mubr.bf16.mxu0 %v497
        %6715 = vmatmul.mubr.bf16.gmra.mrb[0].mxu0 %v496
        %v6716 = vpop.f32.mrb[0].mxu0
        %v6717 = vadd.f32 %v6676, %v6716
        %v6718 = vpop.f32.mrb[0].mxu0
        %v6719 = vadd.f32 %v6678, %v6718
        %v6720 = vpop.f32.mrb[0].mxu0
        %v6721 = vpop.f32.mrb[0].mxu0
        %6722 = vdwg.mxu0
        %6723 = vmatprep.subr.bf16.mxu0 %v4643
        %6724 = vmatpush1.bf16.msra.mxu0 %v4642
        %6725 = vmatprep.subr.bf16.mxu0 %v4661
        %6726 = vmatpush1.bf16.msra.mxu0 %v4660
        %6727 = vmatprep.subr.bf16.mxu0 %v4679
        %6728 = vmatpush1.bf16.msra.mxu0 %v4678
        %6729 = vmatprep.subr.bf16.mxu0 %v4697
        %6730 = vmatpush1.bf16.msra.mxu0 %v4696
        %6731 = vmatprep.subr.bf16.mxu0 %v4715
        %6732 = vmatpush1.bf16.msra.mxu0 %v4714
        %6733 = vmatprep.subr.bf16.mxu0 %v4733
        %6734 = vmatpush1.bf16.msra.mxu0 %v4732
        %6735 = vmatprep.subr.bf16.mxu0 %v4751
        %6736 = vmatpush1.bf16.msra.mxu0 %v4750
        %6737 = vmatprep.subr.bf16.mxu0 %v4769
        %6738 = vmatpush1.bf16.msra.mxu0 %v4768
        %6739 = vmatprep.subr.bf16.mxu0 %v4787
        %6740 = vmatpush1.bf16.msra.mxu0 %v4786
        %6741 = vmatprep.subr.bf16.mxu0 %v4805
        %6742 = vmatpush1.bf16.msra.mxu0 %v4804
        %6743 = vmatprep.subr.bf16.mxu0 %v4823
        %6744 = vmatpush1.bf16.msra.mxu0 %v4822
        %6745 = vmatprep.subr.bf16.mxu0 %v4841
        %6746 = vmatpush1.bf16.msra.mxu0 %v4840
        %6747 = vmatprep.subr.bf16.mxu0 %v4859
        %6748 = vmatpush1.bf16.msra.mxu0 %v4858
        %6749 = vmatprep.subr.bf16.mxu0 %v4877
        %6750 = vmatpush1.bf16.msra.mxu0 %v4876
        %6751 = vmatprep.subr.bf16.mxu0 %v4895
        %6752 = vmatpush1.bf16.msra.mxu0 %v4894
        %6753 = vmatprep.subr.bf16.mxu0 %v4913
        %6754 = vmatpush1.bf16.msra.mxu0 %v4912
        %6755 = vmatprep.mubr.bf16.mxu0 %v499
        %6756 = vmatmul.mubr.bf16.gmra.mrb[0].mxu0 %v498
        %v6757 = vpop.f32.mrb[0].mxu0
        %v6758 = vadd.f32 %v6717, %v6757
        %v6759 = vpop.f32.mrb[0].mxu0
        %v6760 = vadd.f32 %v6719, %v6759
        %v6761 = vpop.f32.mrb[0].mxu0
        %v6762 = vpop.f32.mrb[0].mxu0
        %6763 = vdwg.mxu0
        %6764 = vmatprep.subr.bf16.mxu0 %v4069
        %6765 = vmatpush1.bf16.msra.mxu0 %v4068
        %6766 = vmatprep.subr.bf16.mxu0 %v4087
        %6767 = vmatpush1.bf16.msra.mxu0 %v4086
        %6768 = vmatprep.subr.bf16.mxu0 %v4105
        %6769 = vmatpush1.bf16.msra.mxu0 %v4104
        %6770 = vmatprep.subr.bf16.mxu0 %v4123
        %6771 = vmatpush1.bf16.msra.mxu0 %v4122
        %6772 = vmatprep.subr.bf16.mxu0 %v4141
        %6773 = vmatpush1.bf16.msra.mxu0 %v4140
        %6774 = vmatprep.subr.bf16.mxu0 %v4159
        %6775 = vmatpush1.bf16.msra.mxu0 %v4158
        %6776 = vmatprep.subr.bf16.mxu0 %v4177
        %6777 = vmatpush1.bf16.msra.mxu0 %v4176
        %6778 = vmatprep.subr.bf16.mxu0 %v4195
        %6779 = vmatpush1.bf16.msra.mxu0 %v4194
        %6780 = vmatprep.subr.bf16.mxu0 %v4213
        %6781 = vmatpush1.bf16.msra.mxu0 %v4212
        %6782 = vmatprep.subr.bf16.mxu0 %v4231
        %6783 = vmatpush1.bf16.msra.mxu0 %v4230
        %6784 = vmatprep.subr.bf16.mxu0 %v4249
        %6785 = vmatpush1.bf16.msra.mxu0 %v4248
        %6786 = vmatprep.subr.bf16.mxu0 %v4267
        %6787 = vmatpush1.bf16.msra.mxu0 %v4266
        %6788 = vmatprep.subr.bf16.mxu0 %v4285
        %6789 = vmatpush1.bf16.msra.mxu0 %v4284
        %6790 = vmatprep.subr.bf16.mxu0 %v4303
        %6791 = vmatpush1.bf16.msra.mxu0 %v4302
        %6792 = vmatprep.subr.bf16.mxu0 %v4321
        %6793 = vmatpush1.bf16.msra.mxu0 %v4320
        %6794 = vmatprep.subr.bf16.mxu0 %v4339
        %6795 = vmatpush1.bf16.msra.mxu0 %v4338
        %6796 = vmatprep.mubr.bf16.mxu0 %v495
        %6797 = vmatmul.mubr.bf16.gmra.mrb[0].mxu0 %v494
        %v6798 = vpop.f32.mrb[0].mxu0
        %v6799 = vadd.f32 %v1437, %v6798
        %v6800 = vpop.f32.mrb[0].mxu0
        %v6801 = vadd.f32 %v1441, %v6800
        %v6802 = vpop.f32.mrb[0].mxu0
        %v6803 = vpop.f32.mrb[0].mxu0
        %6804 = vdwg.mxu0
        %6805 = vmatprep.subr.bf16.mxu0 %v4357
        %6806 = vmatpush1.bf16.msra.mxu0 %v4356
        %6807 = vmatprep.subr.bf16.mxu0 %v4375
        %6808 = vmatpush1.bf16.msra.mxu0 %v4374
        %6809 = vmatprep.subr.bf16.mxu0 %v4393
        %6810 = vmatpush1.bf16.msra.mxu0 %v4392
        %6811 = vmatprep.subr.bf16.mxu0 %v4411
        %6812 = vmatpush1.bf16.msra.mxu0 %v4410
        %6813 = vmatprep.subr.bf16.mxu0 %v4429
        %6814 = vmatpush1.bf16.msra.mxu0 %v4428
        %6815 = vmatprep.subr.bf16.mxu0 %v4447
        %6816 = vmatpush1.bf16.msra.mxu0 %v4446
        %6817 = vmatprep.subr.bf16.mxu0 %v4465
        %6818 = vmatpush1.bf16.msra.mxu0 %v4464
        %6819 = vmatprep.subr.bf16.mxu0 %v4483
        %6820 = vmatpush1.bf16.msra.mxu0 %v4482
        %6821 = vmatprep.subr.bf16.mxu0 %v4501
        %6822 = vmatpush1.bf16.msra.mxu0 %v4500
        %6823 = vmatprep.subr.bf16.mxu0 %v4519
        %6824 = vmatpush1.bf16.msra.mxu0 %v4518
        %6825 = vmatprep.subr.bf16.mxu0 %v4537
        %6826 = vmatpush1.bf16.msra.mxu0 %v4536
        %6827 = vmatprep.subr.bf16.mxu0 %v4555
        %6828 = vmatpush1.bf16.msra.mxu0 %v4554
        %6829 = vmatprep.subr.bf16.mxu0 %v4573
        %6830 = vmatpush1.bf16.msra.mxu0 %v4572
        %6831 = vmatprep.subr.bf16.mxu0 %v4591
        %6832 = vmatpush1.bf16.msra.mxu0 %v4590
        %6833 = vmatprep.subr.bf16.mxu0 %v4609
        %6834 = vmatpush1.bf16.msra.mxu0 %v4608
        %6835 = vmatprep.subr.bf16.mxu0 %v4627
        %6836 = vmatpush1.bf16.msra.mxu0 %v4626
        %6837 = vmatprep.mubr.bf16.mxu0 %v497
        %6838 = vmatmul.mubr.bf16.gmra.mrb[0].mxu0 %v496
        %v6839 = vpop.f32.mrb[0].mxu0
        %v6840 = vadd.f32 %v6799, %v6839
        %v6841 = vpop.f32.mrb[0].mxu0
        %v6842 = vadd.f32 %v6801, %v6841
        %v6843 = vpop.f32.mrb[0].mxu0
        %v6844 = vpop.f32.mrb[0].mxu0
        %6845 = vdwg.mxu0
        %6846 = vmatprep.subr.bf16.mxu0 %v4645
        %6847 = vmatpush1.bf16.msra.mxu0 %v4644
        %6848 = vmatprep.subr.bf16.mxu0 %v4663
        %6849 = vmatpush1.bf16.msra.mxu0 %v4662
        %6850 = vmatprep.subr.bf16.mxu0 %v4681
        %6851 = vmatpush1.bf16.msra.mxu0 %v4680
        %6852 = vmatprep.subr.bf16.mxu0 %v4699
        %6853 = vmatpush1.bf16.msra.mxu0 %v4698
        %6854 = vmatprep.subr.bf16.mxu0 %v4717
        %6855 = vmatpush1.bf16.msra.mxu0 %v4716
        %6856 = vmatprep.subr.bf16.mxu0 %v4735
        %6857 = vmatpush1.bf16.msra.mxu0 %v4734
        %6858 = vmatprep.subr.bf16.mxu0 %v4753
        %6859 = vmatpush1.bf16.msra.mxu0 %v4752
        %6860 = vmatprep.subr.bf16.mxu0 %v4771
        %6861 = vmatpush1.bf16.msra.mxu0 %v4770
        %6862 = vmatprep.subr.bf16.mxu0 %v4789
        %6863 = vmatpush1.bf16.msra.mxu0 %v4788
        %6864 = vmatprep.subr.bf16.mxu0 %v4807
        %6865 = vmatpush1.bf16.msra.mxu0 %v4806
        %6866 = vmatprep.subr.bf16.mxu0 %v4825
        %6867 = vmatpush1.bf16.msra.mxu0 %v4824
        %6868 = vmatprep.subr.bf16.mxu0 %v4843
        %6869 = vmatpush1.bf16.msra.mxu0 %v4842
        %6870 = vmatprep.subr.bf16.mxu0 %v4861
        %6871 = vmatpush1.bf16.msra.mxu0 %v4860
        %6872 = vmatprep.subr.bf16.mxu0 %v4879
        %6873 = vmatpush1.bf16.msra.mxu0 %v4878
        %6874 = vmatprep.subr.bf16.mxu0 %v4897
        %6875 = vmatpush1.bf16.msra.mxu0 %v4896
        %6876 = vmatprep.subr.bf16.mxu0 %v4915
        %6877 = vmatpush1.bf16.msra.mxu0 %v4914
        %6878 = vmatprep.mubr.bf16.mxu0 %v499
        %6879 = vmatmul.mubr.bf16.gmra.mrb[0].mxu0 %v498
        %v6880 = vpop.f32.mrb[0].mxu0
        %v6881 = vadd.f32 %v6840, %v6880
        %v6882 = vpop.f32.mrb[0].mxu0
        %v6883 = vadd.f32 %v6842, %v6882
        %v6884 = vpop.f32.mrb[0].mxu0
        %v6885 = vpop.f32.mrb[0].mxu0
        %6886 = vdwg.mxu0
        %v6887 = vmul.f32 %v5897, 0.125
        %v6888 = vmul.f32 %v5899, 0.125
        %v6889 = vmul.f32 %v6020, 0.125
        %v6890 = vmul.f32 %v6022, 0.125
        %v6891 = vmul.f32 %v6143, 0.125
        %v6892 = vmul.f32 %v6145, 0.125
        %6894 = vrot.lane.b32.xlu0 %v6887, 64
        %v6895 = vpop.permute.xlu0 %6894
        %6898 = vrot.lane.b32.xlu0 %v6888, 64
        %v6899 = vpop.permute.xlu0 %6898
        %6902 = vrot.lane.b32.xlu0 %v6889, 64
        %v6903 = vpop.permute.xlu0 %6902
        %6906 = vrot.lane.b32.xlu0 %v6890, 64
        %v6907 = vpop.permute.xlu0 %6906
        %6910 = vrot.lane.b32.xlu0 %v6891, 64
        %v6911 = vpop.permute.xlu0 %6910
        %6914 = vrot.lane.b32.xlu0 %v6892, 64
        %v6915 = vpop.permute.xlu0 %6914
        %v6917 = vcombine.low %v6887, %v6888
        %v6918 = vcombine.high %v6887, %v6888
        %v6920 = vunpack.c.l.s4 1983009808
        %v6921 = vunpack.c.0.s8 %v6920
        %v6922 = vlaneseq
        %v6923 = vshrl.u32 %v6922, 7
        %v6924 = vsub.s32 %v6921, %v6923
        %v6925 = vrot.slane %v6917, %v6924
        %v6927 = vunpack.c.l.s4 1983009808
        %v6928 = vunpack.c.0.s8 %v6927
        %v6929 = vlaneseq
        %v6930 = vshrl.u32 %v6929, 7
        %v6931 = vsub.s32 %v6928, %v6930
        %v6932 = vrot.slane %v6918, %v6931
        %v6933 = vcombine.low %v6895, %v6899
        %v6934 = vcombine.high %v6895, %v6899
        %v6936 = vunpack.c.l.s4 1983009808
        %v6937 = vunpack.c.0.s8 %v6936
        %v6938 = vlaneseq
        %v6939 = vshrl.u32 %v6938, 7
        %v6940 = vsub.s32 %v6937, %v6939
        %v6941 = vrot.slane %v6933, %v6940
        %v6943 = vunpack.c.l.s4 1983009808
        %v6944 = vunpack.c.0.s8 %v6943
        %v6945 = vlaneseq
        %v6946 = vshrl.u32 %v6945, 7
        %v6947 = vsub.s32 %v6944, %v6946
        %v6948 = vrot.slane %v6934, %v6947
        %v6949 = vcombine.low %v6889, %v6890
        %v6950 = vcombine.high %v6889, %v6890
        %v6952 = vunpack.c.l.s4 1983009808
        %v6953 = vunpack.c.0.s8 %v6952
        %v6954 = vlaneseq
        %v6955 = vshrl.u32 %v6954, 7
        %v6956 = vsub.s32 %v6953, %v6955
        %v6957 = vrot.slane %v6949, %v6956
        %v6959 = vunpack.c.l.s4 1983009808
        %v6960 = vunpack.c.0.s8 %v6959
        %v6961 = vlaneseq
        %v6962 = vshrl.u32 %v6961, 7
        %v6963 = vsub.s32 %v6960, %v6962
        %v6964 = vrot.slane %v6950, %v6963
        %v6965 = vcombine.low %v6903, %v6907
        %v6966 = vcombine.high %v6903, %v6907
        %v6968 = vunpack.c.l.s4 1983009808
        %v6969 = vunpack.c.0.s8 %v6968
        %v6970 = vlaneseq
        %v6971 = vshrl.u32 %v6970, 7
        %v6972 = vsub.s32 %v6969, %v6971
        %v6973 = vrot.slane %v6965, %v6972
        %v6975 = vunpack.c.l.s4 1983009808
        %v6976 = vunpack.c.0.s8 %v6975
        %v6977 = vlaneseq
        %v6978 = vshrl.u32 %v6977, 7
        %v6979 = vsub.s32 %v6976, %v6978
        %v6980 = vrot.slane %v6966, %v6979
        %v6981 = vcombine.low %v6925, %v6941
        %v6982 = vcombine.high %v6925, %v6941
        %v6984 = vunpack.c.l.s4 1934713408
        %v6985 = vunpack.c.0.s8 %v6984
        %v6986 = vlaneseq
        %v6987 = vshrl.u32 %v6986, 7
        %v6988 = vsub.s32 %v6985, %v6987
        %v6989 = vrot.slane %v6981, %v6988
        %v6991 = vunpack.c.l.s4 1934713408
        %v6992 = vunpack.c.0.s8 %v6991
        %v6993 = vlaneseq
        %v6994 = vshrl.u32 %v6993, 7
        %v6995 = vsub.s32 %v6992, %v6994
        %v6996 = vrot.slane %v6982, %v6995
        %v6997 = vcombine.low %v6932, %v6948
        %v6998 = vcombine.high %v6932, %v6948
        %v7000 = vunpack.c.l.s4 1934713408
        %v7001 = vunpack.c.0.s8 %v7000
        %v7002 = vlaneseq
        %v7003 = vshrl.u32 %v7002, 7
        %v7004 = vsub.s32 %v7001, %v7003
        %v7005 = vrot.slane %v6997, %v7004
        %v7007 = vunpack.c.l.s4 1934713408
        %v7008 = vunpack.c.0.s8 %v7007
        %v7009 = vlaneseq
        %v7010 = vshrl.u32 %v7009, 7
        %v7011 = vsub.s32 %v7008, %v7010
        %v7012 = vrot.slane %v6998, %v7011
        %v7013 = vcombine.low %v6957, %v6973
        %v7014 = vcombine.high %v6957, %v6973
        %v7016 = vunpack.c.l.s4 1934713408
        %v7017 = vunpack.c.0.s8 %v7016
        %v7018 = vlaneseq
        %v7019 = vshrl.u32 %v7018, 7
        %v7020 = vsub.s32 %v7017, %v7019
        %v7021 = vrot.slane %v7013, %v7020
        %v7023 = vunpack.c.l.s4 1934713408
        %v7024 = vunpack.c.0.s8 %v7023
        %v7025 = vlaneseq
        %v7026 = vshrl.u32 %v7025, 7
        %v7027 = vsub.s32 %v7024, %v7026
        %v7028 = vrot.slane %v7014, %v7027
        %v7029 = vcombine.low %v6964, %v6980
        %v7030 = vcombine.high %v6964, %v6980
        %v7032 = vunpack.c.l.s4 1934713408
        %v7033 = vunpack.c.0.s8 %v7032
        %v7034 = vlaneseq
        %v7035 = vshrl.u32 %v7034, 7
        %v7036 = vsub.s32 %v7033, %v7035
        %v7037 = vrot.slane %v7029, %v7036
        %v7039 = vunpack.c.l.s4 1934713408
        %v7040 = vunpack.c.0.s8 %v7039
        %v7041 = vlaneseq
        %v7042 = vshrl.u32 %v7041, 7
        %v7043 = vsub.s32 %v7040, %v7042
        %v7044 = vrot.slane %v7030, %v7043
        %v7045 = vcombine.low %v6989, %v7021
        %v7046 = vcombine.high %v6989, %v7021
        %v7047 = vcombine.low %v6996, %v7028
        %v7048 = vcombine.high %v6996, %v7028
        %v7049 = vcombine.low %v7005, %v7037
        %v7050 = vcombine.high %v7005, %v7037
        %v7051 = vcombine.low %v7012, %v7044
        %v7052 = vcombine.high %v7012, %v7044
        %v7053 = vcombine.low %v6891, %v6892
        %v7054 = vcombine.high %v6891, %v6892
        %v7056 = vunpack.c.l.s4 1983009808
        %v7057 = vunpack.c.0.s8 %v7056
        %v7058 = vlaneseq
        %v7059 = vshrl.u32 %v7058, 7
        %v7060 = vsub.s32 %v7057, %v7059
        %v7061 = vrot.slane %v7053, %v7060
        %v7063 = vunpack.c.l.s4 1983009808
        %v7064 = vunpack.c.0.s8 %v7063
        %v7065 = vlaneseq
        %v7066 = vshrl.u32 %v7065, 7
        %v7067 = vsub.s32 %v7064, %v7066
        %v7068 = vrot.slane %v7054, %v7067
        %v7069 = vcombine.low %v6911, %v6915
        %v7070 = vcombine.high %v6911, %v6915
        %v7072 = vunpack.c.l.s4 1983009808
        %v7073 = vunpack.c.0.s8 %v7072
        %v7074 = vlaneseq
        %v7075 = vshrl.u32 %v7074, 7
        %v7076 = vsub.s32 %v7073, %v7075
        %v7077 = vrot.slane %v7069, %v7076
        %v7079 = vunpack.c.l.s4 1983009808
        %v7080 = vunpack.c.0.s8 %v7079
        %v7081 = vlaneseq
        %v7082 = vshrl.u32 %v7081, 7
        %v7083 = vsub.s32 %v7080, %v7082
        %v7084 = vrot.slane %v7070, %v7083
        %v7085 = vcombine.low %v7061, %v7077
        %v7086 = vcombine.high %v7061, %v7077
        %v7088 = vunpack.c.l.s4 1934713408
        %v7089 = vunpack.c.0.s8 %v7088
        %v7090 = vlaneseq
        %v7091 = vshrl.u32 %v7090, 7
        %v7092 = vsub.s32 %v7089, %v7091
        %v7093 = vrot.slane %v7085, %v7092
        %v7095 = vunpack.c.l.s4 1934713408
        %v7096 = vunpack.c.0.s8 %v7095
        %v7097 = vlaneseq
        %v7098 = vshrl.u32 %v7097, 7
        %v7099 = vsub.s32 %v7096, %v7098
        %v7100 = vrot.slane %v7086, %v7099
        %v7101 = vcombine.low %v7068, %v7084
        %v7102 = vcombine.high %v7068, %v7084
        %v7104 = vunpack.c.l.s4 1934713408
        %v7105 = vunpack.c.0.s8 %v7104
        %v7106 = vlaneseq
        %v7107 = vshrl.u32 %v7106, 7
        %v7108 = vsub.s32 %v7105, %v7107
        %v7109 = vrot.slane %v7101, %v7108
        %v7111 = vunpack.c.l.s4 1934713408
        %v7112 = vunpack.c.0.s8 %v7111
        %v7113 = vlaneseq
        %v7114 = vshrl.u32 %v7113, 7
        %v7115 = vsub.s32 %v7112, %v7114
        %v7116 = vrot.slane %v7102, %v7115
        %v7117 = vcombine.high %v7093, 0.0
        %v7118 = vcombine.high %v7100, 0.0
        %v7119 = vcombine.high %v7109, 0.0
        %v7120 = vcombine.high %v7116, 0.0
        %v7121 = vcombine.low %v7045, %v7047
        %v7122 = vcombine.high %v7045, %v7047
        %v7124 = vunpack.c.l.s4 1983009808
        %v7125 = vunpack.c.0.s8 %v7124
        %v7126 = vlaneseq
        %v7127 = vshrl.u32 %v7126, 7
        %v7128 = vsub.s32 %v7125, %v7127
        %v7129 = vrot.slane %v7121, %v7128
        %v7131 = vunpack.c.l.s4 1983009808
        %v7132 = vunpack.c.0.s8 %v7131
        %v7133 = vlaneseq
        %v7134 = vshrl.u32 %v7133, 7
        %v7135 = vsub.s32 %v7132, %v7134
        %v7136 = vrot.slane %v7122, %v7135
        %v7137 = vcombine.low %v7046, %v7048
        %v7138 = vcombine.high %v7046, %v7048
        %v7140 = vunpack.c.l.s4 1983009808
        %v7141 = vunpack.c.0.s8 %v7140
        %v7142 = vlaneseq
        %v7143 = vshrl.u32 %v7142, 7
        %v7144 = vsub.s32 %v7141, %v7143
        %v7145 = vrot.slane %v7137, %v7144
        %v7147 = vunpack.c.l.s4 1983009808
        %v7148 = vunpack.c.0.s8 %v7147
        %v7149 = vlaneseq
        %v7150 = vshrl.u32 %v7149, 7
        %v7151 = vsub.s32 %v7148, %v7150
        %v7152 = vrot.slane %v7138, %v7151
        %v7153 = vcombine.low %v7049, %v7051
        %v7154 = vcombine.high %v7049, %v7051
        %v7156 = vunpack.c.l.s4 1983009808
        %v7157 = vunpack.c.0.s8 %v7156
        %v7158 = vlaneseq
        %v7159 = vshrl.u32 %v7158, 7
        %v7160 = vsub.s32 %v7157, %v7159
        %v7161 = vrot.slane %v7153, %v7160
        %v7163 = vunpack.c.l.s4 1983009808
        %v7164 = vunpack.c.0.s8 %v7163
        %v7165 = vlaneseq
        %v7166 = vshrl.u32 %v7165, 7
        %v7167 = vsub.s32 %v7164, %v7166
        %v7168 = vrot.slane %v7154, %v7167
        %v7169 = vcombine.low %v7050, %v7052
        %v7170 = vcombine.high %v7050, %v7052
        %v7172 = vunpack.c.l.s4 1983009808
        %v7173 = vunpack.c.0.s8 %v7172
        %v7174 = vlaneseq
        %v7175 = vshrl.u32 %v7174, 7
        %v7176 = vsub.s32 %v7173, %v7175
        %v7177 = vrot.slane %v7169, %v7176
        %v7179 = vunpack.c.l.s4 1983009808
        %v7180 = vunpack.c.0.s8 %v7179
        %v7181 = vlaneseq
        %v7182 = vshrl.u32 %v7181, 7
        %v7183 = vsub.s32 %v7180, %v7182
        %v7184 = vrot.slane %v7170, %v7183
        %v7185 = vcombine.low %v7129, %v7145
        %v7186 = vcombine.high %v7129, %v7145
        %v7188 = vunpack.c.l.s4 1934713408
        %v7189 = vunpack.c.0.s8 %v7188
        %v7190 = vlaneseq
        %v7191 = vshrl.u32 %v7190, 7
        %v7192 = vsub.s32 %v7189, %v7191
        %v7193 = vrot.slane %v7185, %v7192
        %v7195 = vunpack.c.l.s4 1934713408
        %v7196 = vunpack.c.0.s8 %v7195
        %v7197 = vlaneseq
        %v7198 = vshrl.u32 %v7197, 7
        %v7199 = vsub.s32 %v7196, %v7198
        %v7200 = vrot.slane %v7186, %v7199
        %v7201 = vcombine.low %v7136, %v7152
        %v7202 = vcombine.high %v7136, %v7152
        %v7204 = vunpack.c.l.s4 1934713408
        %v7205 = vunpack.c.0.s8 %v7204
        %v7206 = vlaneseq
        %v7207 = vshrl.u32 %v7206, 7
        %v7208 = vsub.s32 %v7205, %v7207
        %v7209 = vrot.slane %v7201, %v7208
        %v7211 = vunpack.c.l.s4 1934713408
        %v7212 = vunpack.c.0.s8 %v7211
        %v7213 = vlaneseq
        %v7214 = vshrl.u32 %v7213, 7
        %v7215 = vsub.s32 %v7212, %v7214
        %v7216 = vrot.slane %v7202, %v7215
        %v7217 = vcombine.low %v7161, %v7177
        %v7218 = vcombine.high %v7161, %v7177
        %v7220 = vunpack.c.l.s4 1934713408
        %v7221 = vunpack.c.0.s8 %v7220
        %v7222 = vlaneseq
        %v7223 = vshrl.u32 %v7222, 7
        %v7224 = vsub.s32 %v7221, %v7223
        %v7225 = vrot.slane %v7217, %v7224
        %v7227 = vunpack.c.l.s4 1934713408
        %v7228 = vunpack.c.0.s8 %v7227
        %v7229 = vlaneseq
        %v7230 = vshrl.u32 %v7229, 7
        %v7231 = vsub.s32 %v7228, %v7230
        %v7232 = vrot.slane %v7218, %v7231
        %v7233 = vcombine.low %v7168, %v7184
        %v7234 = vcombine.high %v7168, %v7184
        %v7236 = vunpack.c.l.s4 1934713408
        %v7237 = vunpack.c.0.s8 %v7236
        %v7238 = vlaneseq
        %v7239 = vshrl.u32 %v7238, 7
        %v7240 = vsub.s32 %v7237, %v7239
        %v7241 = vrot.slane %v7233, %v7240
        %v7243 = vunpack.c.l.s4 1934713408
        %v7244 = vunpack.c.0.s8 %v7243
        %v7245 = vlaneseq
        %v7246 = vshrl.u32 %v7245, 7
        %v7247 = vsub.s32 %v7244, %v7246
        %v7248 = vrot.slane %v7234, %v7247
        %v7249 = vcombine.low %v7193, %v7225
        %v7250 = vcombine.high %v7193, %v7225
        %v7251 = vcombine.low %v7200, %v7232
        %v7252 = vcombine.high %v7200, %v7232
        %v7253 = vcombine.low %v7209, %v7241
        %v7254 = vcombine.high %v7209, %v7241
        %v7255 = vcombine.low %v7216, %v7248
        %v7256 = vcombine.high %v7216, %v7248
        %v7257 = vcombine.low %v7093, %v7100
        %v7259 = vunpack.c.l.s4 1983009808
        %v7260 = vunpack.c.0.s8 %v7259
        %v7261 = vlaneseq
        %v7262 = vshrl.u32 %v7261, 7
        %v7263 = vsub.s32 %v7260, %v7262
        %v7264 = vrot.slane %v7257, %v7263
        %v7265 = vcombine.low %v7117, %v7118
        %v7267 = vunpack.c.l.s4 1983009808
        %v7268 = vunpack.c.0.s8 %v7267
        %v7269 = vlaneseq
        %v7270 = vshrl.u32 %v7269, 7
        %v7271 = vsub.s32 %v7268, %v7270
        %v7272 = vrot.slane %v7265, %v7271
        %v7273 = vcombine.low %v7109, %v7116
        %v7275 = vunpack.c.l.s4 1983009808
        %v7276 = vunpack.c.0.s8 %v7275
        %v7277 = vlaneseq
        %v7278 = vshrl.u32 %v7277, 7
        %v7279 = vsub.s32 %v7276, %v7278
        %v7280 = vrot.slane %v7273, %v7279
        %v7281 = vcombine.low %v7119, %v7120
        %v7283 = vunpack.c.l.s4 1983009808
        %v7284 = vunpack.c.0.s8 %v7283
        %v7285 = vlaneseq
        %v7286 = vshrl.u32 %v7285, 7
        %v7287 = vsub.s32 %v7284, %v7286
        %v7288 = vrot.slane %v7281, %v7287
        %v7289 = vcombine.low %v7264, %v7272
        %v7290 = vcombine.high %v7264, %v7272
        %v7292 = vunpack.c.l.s4 1934713408
        %v7293 = vunpack.c.0.s8 %v7292
        %v7294 = vlaneseq
        %v7295 = vshrl.u32 %v7294, 7
        %v7296 = vsub.s32 %v7293, %v7295
        %v7297 = vrot.slane %v7289, %v7296
        %v7299 = vunpack.c.l.s4 1934713408
        %v7300 = vunpack.c.0.s8 %v7299
        %v7301 = vlaneseq
        %v7302 = vshrl.u32 %v7301, 7
        %v7303 = vsub.s32 %v7300, %v7302
        %v7304 = vrot.slane %v7290, %v7303
        %v7305 = vcombine.low %v7280, %v7288
        %v7306 = vcombine.high %v7280, %v7288
        %v7308 = vunpack.c.l.s4 1934713408
        %v7309 = vunpack.c.0.s8 %v7308
        %v7310 = vlaneseq
        %v7311 = vshrl.u32 %v7310, 7
        %v7312 = vsub.s32 %v7309, %v7311
        %v7313 = vrot.slane %v7305, %v7312
        %v7315 = vunpack.c.l.s4 1934713408
        %v7316 = vunpack.c.0.s8 %v7315
        %v7317 = vlaneseq
        %v7318 = vshrl.u32 %v7317, 7
        %v7319 = vsub.s32 %v7316, %v7318
        %v7320 = vrot.slane %v7306, %v7319
        %v7321 = vcombine.low %v7297, %v7313
        %v7322 = vcombine.high %v7297, %v7313
        %v7323 = vcombine.low %v7304, %v7320
        %v7324 = vcombine.high %v7304, %v7320
        %v7325 = vpack.c.bf16 %v7249, %v7249
        %v7326 = vpack.c.bf16 %v7250, %v7250
        %v7327 = vpack.c.bf16 %v7251, %v7251
        %v7328 = vpack.c.bf16 %v7252, %v7252
        %v7329 = vpack.c.bf16 %v7253, %v7253
        %v7330 = vpack.c.bf16 %v7254, %v7254
        %v7331 = vpack.c.bf16 %v7255, %v7255
        %v7332 = vpack.c.bf16 %v7256, %v7256
        %v7333 = vpack.c.bf16 %v7321, %v7321
        %v7334 = vpack.c.bf16 %v7322, %v7322
        %v7335 = vpack.c.bf16 %v7323, %v7323
        %v7336 = vpack.c.bf16 %v7324, %v7324
        %7338 = vrot.lane.b32.xlu0 %v6266, 64
        %v7339 = vpop.permute.xlu0 %7338
        %7342 = vrot.lane.b32.xlu0 %v6268, 64
        %v7343 = vpop.permute.xlu0 %7342
        %7346 = vrot.lane.b32.xlu0 %v6389, 64
        %v7347 = vpop.permute.xlu0 %7346
        %7350 = vrot.lane.b32.xlu0 %v6391, 64
        %v7351 = vpop.permute.xlu0 %7350
        %7354 = vrot.lane.b32.xlu0 %v6512, 64
        %v7355 = vpop.permute.xlu0 %7354
        %7358 = vrot.lane.b32.xlu0 %v6514, 64
        %v7359 = vpop.permute.xlu0 %7358
        %v7361 = vcombine.low %v6266, %v6268
        %v7362 = vcombine.high %v6266, %v6268
        %v7364 = vunpack.c.l.s4 1983009808
        %v7365 = vunpack.c.0.s8 %v7364
        %v7366 = vlaneseq
        %v7367 = vshrl.u32 %v7366, 7
        %v7368 = vsub.s32 %v7365, %v7367
        %v7369 = vrot.slane %v7361, %v7368
        %v7371 = vunpack.c.l.s4 1983009808
        %v7372 = vunpack.c.0.s8 %v7371
        %v7373 = vlaneseq
        %v7374 = vshrl.u32 %v7373, 7
        %v7375 = vsub.s32 %v7372, %v7374
        %v7376 = vrot.slane %v7362, %v7375
        %v7377 = vcombine.low %v7339, %v7343
        %v7378 = vcombine.high %v7339, %v7343
        %v7380 = vunpack.c.l.s4 1983009808
        %v7381 = vunpack.c.0.s8 %v7380
        %v7382 = vlaneseq
        %v7383 = vshrl.u32 %v7382, 7
        %v7384 = vsub.s32 %v7381, %v7383
        %v7385 = vrot.slane %v7377, %v7384
        %v7387 = vunpack.c.l.s4 1983009808
        %v7388 = vunpack.c.0.s8 %v7387
        %v7389 = vlaneseq
        %v7390 = vshrl.u32 %v7389, 7
        %v7391 = vsub.s32 %v7388, %v7390
        %v7392 = vrot.slane %v7378, %v7391
        %v7393 = vcombine.low %v6389, %v6391
        %v7394 = vcombine.high %v6389, %v6391
        %v7396 = vunpack.c.l.s4 1983009808
        %v7397 = vunpack.c.0.s8 %v7396
        %v7398 = vlaneseq
        %v7399 = vshrl.u32 %v7398, 7
        %v7400 = vsub.s32 %v7397, %v7399
        %v7401 = vrot.slane %v7393, %v7400
        %v7403 = vunpack.c.l.s4 1983009808
        %v7404 = vunpack.c.0.s8 %v7403
        %v7405 = vlaneseq
        %v7406 = vshrl.u32 %v7405, 7
        %v7407 = vsub.s32 %v7404, %v7406
        %v7408 = vrot.slane %v7394, %v7407
        %v7409 = vcombine.low %v7347, %v7351
        %v7410 = vcombine.high %v7347, %v7351
        %v7412 = vunpack.c.l.s4 1983009808
        %v7413 = vunpack.c.0.s8 %v7412
        %v7414 = vlaneseq
        %v7415 = vshrl.u32 %v7414, 7
        %v7416 = vsub.s32 %v7413, %v7415
        %v7417 = vrot.slane %v7409, %v7416
        %v7419 = vunpack.c.l.s4 1983009808
        %v7420 = vunpack.c.0.s8 %v7419
        %v7421 = vlaneseq
        %v7422 = vshrl.u32 %v7421, 7
        %v7423 = vsub.s32 %v7420, %v7422
        %v7424 = vrot.slane %v7410, %v7423
        %v7425 = vcombine.low %v7369, %v7385
        %v7426 = vcombine.high %v7369, %v7385
        %v7428 = vunpack.c.l.s4 1934713408
        %v7429 = vunpack.c.0.s8 %v7428
        %v7430 = vlaneseq
        %v7431 = vshrl.u32 %v7430, 7
        %v7432 = vsub.s32 %v7429, %v7431
        %v7433 = vrot.slane %v7425, %v7432
        %v7435 = vunpack.c.l.s4 1934713408
        %v7436 = vunpack.c.0.s8 %v7435
        %v7437 = vlaneseq
        %v7438 = vshrl.u32 %v7437, 7
        %v7439 = vsub.s32 %v7436, %v7438
        %v7440 = vrot.slane %v7426, %v7439
        %v7441 = vcombine.low %v7376, %v7392
        %v7442 = vcombine.high %v7376, %v7392
        %v7444 = vunpack.c.l.s4 1934713408
        %v7445 = vunpack.c.0.s8 %v7444
        %v7446 = vlaneseq
        %v7447 = vshrl.u32 %v7446, 7
        %v7448 = vsub.s32 %v7445, %v7447
        %v7449 = vrot.slane %v7441, %v7448
        %v7451 = vunpack.c.l.s4 1934713408
        %v7452 = vunpack.c.0.s8 %v7451
        %v7453 = vlaneseq
        %v7454 = vshrl.u32 %v7453, 7
        %v7455 = vsub.s32 %v7452, %v7454
        %v7456 = vrot.slane %v7442, %v7455
        %v7457 = vcombine.low %v7401, %v7417
        %v7458 = vcombine.high %v7401, %v7417
        %v7460 = vunpack.c.l.s4 1934713408
        %v7461 = vunpack.c.0.s8 %v7460
        %v7462 = vlaneseq
        %v7463 = vshrl.u32 %v7462, 7
        %v7464 = vsub.s32 %v7461, %v7463
        %v7465 = vrot.slane %v7457, %v7464
        %v7467 = vunpack.c.l.s4 1934713408
        %v7468 = vunpack.c.0.s8 %v7467
        %v7469 = vlaneseq
        %v7470 = vshrl.u32 %v7469, 7
        %v7471 = vsub.s32 %v7468, %v7470
        %v7472 = vrot.slane %v7458, %v7471
        %v7473 = vcombine.low %v7408, %v7424
        %v7474 = vcombine.high %v7408, %v7424
        %v7476 = vunpack.c.l.s4 1934713408
        %v7477 = vunpack.c.0.s8 %v7476
        %v7478 = vlaneseq
        %v7479 = vshrl.u32 %v7478, 7
        %v7480 = vsub.s32 %v7477, %v7479
        %v7481 = vrot.slane %v7473, %v7480
        %v7483 = vunpack.c.l.s4 1934713408
        %v7484 = vunpack.c.0.s8 %v7483
        %v7485 = vlaneseq
        %v7486 = vshrl.u32 %v7485, 7
        %v7487 = vsub.s32 %v7484, %v7486
        %v7488 = vrot.slane %v7474, %v7487
        %v7489 = vcombine.low %v7433, %v7465
        %v7490 = vcombine.high %v7433, %v7465
        %v7491 = vcombine.low %v7440, %v7472
        %v7492 = vcombine.high %v7440, %v7472
        %v7493 = vcombine.low %v7449, %v7481
        %v7494 = vcombine.high %v7449, %v7481
        %v7495 = vcombine.low %v7456, %v7488
        %v7496 = vcombine.high %v7456, %v7488
        %v7497 = vcombine.low %v6512, %v6514
        %v7498 = vcombine.high %v6512, %v6514
        %v7500 = vunpack.c.l.s4 1983009808
        %v7501 = vunpack.c.0.s8 %v7500
        %v7502 = vlaneseq
        %v7503 = vshrl.u32 %v7502, 7
        %v7504 = vsub.s32 %v7501, %v7503
        %v7505 = vrot.slane %v7497, %v7504
        %v7507 = vunpack.c.l.s4 1983009808
        %v7508 = vunpack.c.0.s8 %v7507
        %v7509 = vlaneseq
        %v7510 = vshrl.u32 %v7509, 7
        %v7511 = vsub.s32 %v7508, %v7510
        %v7512 = vrot.slane %v7498, %v7511
        %v7513 = vcombine.low %v7355, %v7359
        %v7514 = vcombine.high %v7355, %v7359
        %v7516 = vunpack.c.l.s4 1983009808
        %v7517 = vunpack.c.0.s8 %v7516
        %v7518 = vlaneseq
        %v7519 = vshrl.u32 %v7518, 7
        %v7520 = vsub.s32 %v7517, %v7519
        %v7521 = vrot.slane %v7513, %v7520
        %v7523 = vunpack.c.l.s4 1983009808
        %v7524 = vunpack.c.0.s8 %v7523
        %v7525 = vlaneseq
        %v7526 = vshrl.u32 %v7525, 7
        %v7527 = vsub.s32 %v7524, %v7526
        %v7528 = vrot.slane %v7514, %v7527
        %v7529 = vcombine.low %v7505, %v7521
        %v7530 = vcombine.high %v7505, %v7521
        %v7532 = vunpack.c.l.s4 1934713408
        %v7533 = vunpack.c.0.s8 %v7532
        %v7534 = vlaneseq
        %v7535 = vshrl.u32 %v7534, 7
        %v7536 = vsub.s32 %v7533, %v7535
        %v7537 = vrot.slane %v7529, %v7536
        %v7539 = vunpack.c.l.s4 1934713408
        %v7540 = vunpack.c.0.s8 %v7539
        %v7541 = vlaneseq
        %v7542 = vshrl.u32 %v7541, 7
        %v7543 = vsub.s32 %v7540, %v7542
        %v7544 = vrot.slane %v7530, %v7543
        %v7545 = vcombine.low %v7512, %v7528
        %v7546 = vcombine.high %v7512, %v7528
        %v7548 = vunpack.c.l.s4 1934713408
        %v7549 = vunpack.c.0.s8 %v7548
        %v7550 = vlaneseq
        %v7551 = vshrl.u32 %v7550, 7
        %v7552 = vsub.s32 %v7549, %v7551
        %v7553 = vrot.slane %v7545, %v7552
        %v7555 = vunpack.c.l.s4 1934713408
        %v7556 = vunpack.c.0.s8 %v7555
        %v7557 = vlaneseq
        %v7558 = vshrl.u32 %v7557, 7
        %v7559 = vsub.s32 %v7556, %v7558
        %v7560 = vrot.slane %v7546, %v7559
        %v7561 = vcombine.high %v7537, 0.0
        %v7562 = vcombine.high %v7544, 0.0
        %v7563 = vcombine.high %v7553, 0.0
        %v7564 = vcombine.high %v7560, 0.0
        %v7565 = vcombine.low %v7489, %v7491
        %v7566 = vcombine.high %v7489, %v7491
        %v7568 = vunpack.c.l.s4 1983009808
        %v7569 = vunpack.c.0.s8 %v7568
        %v7570 = vlaneseq
        %v7571 = vshrl.u32 %v7570, 7
        %v7572 = vsub.s32 %v7569, %v7571
        %v7573 = vrot.slane %v7565, %v7572
        %v7575 = vunpack.c.l.s4 1983009808
        %v7576 = vunpack.c.0.s8 %v7575
        %v7577 = vlaneseq
        %v7578 = vshrl.u32 %v7577, 7
        %v7579 = vsub.s32 %v7576, %v7578
        %v7580 = vrot.slane %v7566, %v7579
        %v7581 = vcombine.low %v7490, %v7492
        %v7582 = vcombine.high %v7490, %v7492
        %v7584 = vunpack.c.l.s4 1983009808
        %v7585 = vunpack.c.0.s8 %v7584
        %v7586 = vlaneseq
        %v7587 = vshrl.u32 %v7586, 7
        %v7588 = vsub.s32 %v7585, %v7587
        %v7589 = vrot.slane %v7581, %v7588
        %v7591 = vunpack.c.l.s4 1983009808
        %v7592 = vunpack.c.0.s8 %v7591
        %v7593 = vlaneseq
        %v7594 = vshrl.u32 %v7593, 7
        %v7595 = vsub.s32 %v7592, %v7594
        %v7596 = vrot.slane %v7582, %v7595
        %v7597 = vcombine.low %v7493, %v7495
        %v7598 = vcombine.high %v7493, %v7495
        %v7600 = vunpack.c.l.s4 1983009808
        %v7601 = vunpack.c.0.s8 %v7600
        %v7602 = vlaneseq
        %v7603 = vshrl.u32 %v7602, 7
        %v7604 = vsub.s32 %v7601, %v7603
        %v7605 = vrot.slane %v7597, %v7604
        %v7607 = vunpack.c.l.s4 1983009808
        %v7608 = vunpack.c.0.s8 %v7607
        %v7609 = vlaneseq
        %v7610 = vshrl.u32 %v7609, 7
        %v7611 = vsub.s32 %v7608, %v7610
        %v7612 = vrot.slane %v7598, %v7611
        %v7613 = vcombine.low %v7494, %v7496
        %v7614 = vcombine.high %v7494, %v7496
        %v7616 = vunpack.c.l.s4 1983009808
        %v7617 = vunpack.c.0.s8 %v7616
        %v7618 = vlaneseq
        %v7619 = vshrl.u32 %v7618, 7
        %v7620 = vsub.s32 %v7617, %v7619
        %v7621 = vrot.slane %v7613, %v7620
        %v7623 = vunpack.c.l.s4 1983009808
        %v7624 = vunpack.c.0.s8 %v7623
        %v7625 = vlaneseq
        %v7626 = vshrl.u32 %v7625, 7
        %v7627 = vsub.s32 %v7624, %v7626
        %v7628 = vrot.slane %v7614, %v7627
        %v7629 = vcombine.low %v7573, %v7589
        %v7630 = vcombine.high %v7573, %v7589
        %v7632 = vunpack.c.l.s4 1934713408
        %v7633 = vunpack.c.0.s8 %v7632
        %v7634 = vlaneseq
        %v7635 = vshrl.u32 %v7634, 7
        %v7636 = vsub.s32 %v7633, %v7635
        %v7637 = vrot.slane %v7629, %v7636
        %v7639 = vunpack.c.l.s4 1934713408
        %v7640 = vunpack.c.0.s8 %v7639
        %v7641 = vlaneseq
        %v7642 = vshrl.u32 %v7641, 7
        %v7643 = vsub.s32 %v7640, %v7642
        %v7644 = vrot.slane %v7630, %v7643
        %v7645 = vcombine.low %v7580, %v7596
        %v7646 = vcombine.high %v7580, %v7596
        %v7648 = vunpack.c.l.s4 1934713408
        %v7649 = vunpack.c.0.s8 %v7648
        %v7650 = vlaneseq
        %v7651 = vshrl.u32 %v7650, 7
        %v7652 = vsub.s32 %v7649, %v7651
        %v7653 = vrot.slane %v7645, %v7652
        %v7655 = vunpack.c.l.s4 1934713408
        %v7656 = vunpack.c.0.s8 %v7655
        %v7657 = vlaneseq
        %v7658 = vshrl.u32 %v7657, 7
        %v7659 = vsub.s32 %v7656, %v7658
        %v7660 = vrot.slane %v7646, %v7659
        %v7661 = vcombine.low %v7605, %v7621
        %v7662 = vcombine.high %v7605, %v7621
        %v7664 = vunpack.c.l.s4 1934713408
        %v7665 = vunpack.c.0.s8 %v7664
        %v7666 = vlaneseq
        %v7667 = vshrl.u32 %v7666, 7
        %v7668 = vsub.s32 %v7665, %v7667
        %v7669 = vrot.slane %v7661, %v7668
        %v7671 = vunpack.c.l.s4 1934713408
        %v7672 = vunpack.c.0.s8 %v7671
        %v7673 = vlaneseq
        %v7674 = vshrl.u32 %v7673, 7
        %v7675 = vsub.s32 %v7672, %v7674
        %v7676 = vrot.slane %v7662, %v7675
        %v7677 = vcombine.low %v7612, %v7628
        %v7678 = vcombine.high %v7612, %v7628
        %v7680 = vunpack.c.l.s4 1934713408
        %v7681 = vunpack.c.0.s8 %v7680
        %v7682 = vlaneseq
        %v7683 = vshrl.u32 %v7682, 7
        %v7684 = vsub.s32 %v7681, %v7683
        %v7685 = vrot.slane %v7677, %v7684
        %v7687 = vunpack.c.l.s4 1934713408
        %v7688 = vunpack.c.0.s8 %v7687
        %v7689 = vlaneseq
        %v7690 = vshrl.u32 %v7689, 7
        %v7691 = vsub.s32 %v7688, %v7690
        %v7692 = vrot.slane %v7678, %v7691
        %v7693 = vcombine.low %v7637, %v7669
        %v7694 = vcombine.high %v7637, %v7669
        %v7695 = vcombine.low %v7644, %v7676
        %v7696 = vcombine.high %v7644, %v7676
        %v7697 = vcombine.low %v7653, %v7685
        %v7698 = vcombine.high %v7653, %v7685
        %v7699 = vcombine.low %v7660, %v7692
        %v7700 = vcombine.high %v7660, %v7692
        %v7701 = vcombine.low %v7537, %v7544
        %v7703 = vunpack.c.l.s4 1983009808
        %v7704 = vunpack.c.0.s8 %v7703
        %v7705 = vlaneseq
        %v7706 = vshrl.u32 %v7705, 7
        %v7707 = vsub.s32 %v7704, %v7706
        %v7708 = vrot.slane %v7701, %v7707
        %v7709 = vcombine.low %v7561, %v7562
        %v7711 = vunpack.c.l.s4 1983009808
        %v7712 = vunpack.c.0.s8 %v7711
        %v7713 = vlaneseq
        %v7714 = vshrl.u32 %v7713, 7
        %v7715 = vsub.s32 %v7712, %v7714
        %v7716 = vrot.slane %v7709, %v7715
        %v7717 = vcombine.low %v7553, %v7560
        %v7719 = vunpack.c.l.s4 1983009808
        %v7720 = vunpack.c.0.s8 %v7719
        %v7721 = vlaneseq
        %v7722 = vshrl.u32 %v7721, 7
        %v7723 = vsub.s32 %v7720, %v7722
        %v7724 = vrot.slane %v7717, %v7723
        %v7725 = vcombine.low %v7563, %v7564
        %v7727 = vunpack.c.l.s4 1983009808
        %v7728 = vunpack.c.0.s8 %v7727
        %v7729 = vlaneseq
        %v7730 = vshrl.u32 %v7729, 7
        %v7731 = vsub.s32 %v7728, %v7730
        %v7732 = vrot.slane %v7725, %v7731
        %v7733 = vcombine.low %v7708, %v7716
        %v7734 = vcombine.high %v7708, %v7716
        %v7736 = vunpack.c.l.s4 1934713408
        %v7737 = vunpack.c.0.s8 %v7736
        %v7738 = vlaneseq
        %v7739 = vshrl.u32 %v7738, 7
        %v7740 = vsub.s32 %v7737, %v7739
        %v7741 = vrot.slane %v7733, %v7740
        %v7743 = vunpack.c.l.s4 1934713408
        %v7744 = vunpack.c.0.s8 %v7743
        %v7745 = vlaneseq
        %v7746 = vshrl.u32 %v7745, 7
        %v7747 = vsub.s32 %v7744, %v7746
        %v7748 = vrot.slane %v7734, %v7747
        %v7749 = vcombine.low %v7724, %v7732
        %v7750 = vcombine.high %v7724, %v7732
        %v7752 = vunpack.c.l.s4 1934713408
        %v7753 = vunpack.c.0.s8 %v7752
        %v7754 = vlaneseq
        %v7755 = vshrl.u32 %v7754, 7
        %v7756 = vsub.s32 %v7753, %v7755
        %v7757 = vrot.slane %v7749, %v7756
        %v7759 = vunpack.c.l.s4 1934713408
        %v7760 = vunpack.c.0.s8 %v7759
        %v7761 = vlaneseq
        %v7762 = vshrl.u32 %v7761, 7
        %v7763 = vsub.s32 %v7760, %v7762
        %v7764 = vrot.slane %v7750, %v7763
        %v7765 = vcombine.low %v7741, %v7757
        %v7766 = vcombine.high %v7741, %v7757
        %v7767 = vcombine.low %v7748, %v7764
        %v7768 = vcombine.high %v7748, %v7764
        %v7769 = vpack.c.bf16 %v7693, %v7693
        %v7770 = vpack.c.bf16 %v7694, %v7694
        %v7771 = vpack.c.bf16 %v7695, %v7695
        %v7772 = vpack.c.bf16 %v7696, %v7696
        %v7773 = vpack.c.bf16 %v7697, %v7697
        %v7774 = vpack.c.bf16 %v7698, %v7698
        %v7775 = vpack.c.bf16 %v7699, %v7699
        %v7776 = vpack.c.bf16 %v7700, %v7700
        %v7777 = vpack.c.bf16 %v7765, %v7765
        %v7778 = vpack.c.bf16 %v7766, %v7766
        %v7779 = vpack.c.bf16 %v7767, %v7767
        %v7780 = vpack.c.bf16 %v7768, %v7768
        %7782 = vrot.lane.b32.xlu0 %v6635, 64
        %v7783 = vpop.permute.xlu0 %7782
        %7786 = vrot.lane.b32.xlu0 %v6637, 64
        %v7787 = vpop.permute.xlu0 %7786
        %7790 = vrot.lane.b32.xlu0 %v6758, 64
        %v7791 = vpop.permute.xlu0 %7790
        %7794 = vrot.lane.b32.xlu0 %v6760, 64
        %v7795 = vpop.permute.xlu0 %7794
        %7798 = vrot.lane.b32.xlu0 %v6881, 64
        %v7799 = vpop.permute.xlu0 %7798
        %7802 = vrot.lane.b32.xlu0 %v6883, 64
        %v7803 = vpop.permute.xlu0 %7802
        %v7805 = vcombine.low %v6635, %v6637
        %v7806 = vcombine.high %v6635, %v6637
        %v7808 = vunpack.c.l.s4 1983009808
        %v7809 = vunpack.c.0.s8 %v7808
        %v7810 = vlaneseq
        %v7811 = vshrl.u32 %v7810, 7
        %v7812 = vsub.s32 %v7809, %v7811
        %v7813 = vrot.slane %v7805, %v7812
        %v7815 = vunpack.c.l.s4 1983009808
        %v7816 = vunpack.c.0.s8 %v7815
        %v7817 = vlaneseq
        %v7818 = vshrl.u32 %v7817, 7
        %v7819 = vsub.s32 %v7816, %v7818
        %v7820 = vrot.slane %v7806, %v7819
        %v7821 = vcombine.low %v7783, %v7787
        %v7822 = vcombine.high %v7783, %v7787
        %v7824 = vunpack.c.l.s4 1983009808
        %v7825 = vunpack.c.0.s8 %v7824
        %v7826 = vlaneseq
        %v7827 = vshrl.u32 %v7826, 7
        %v7828 = vsub.s32 %v7825, %v7827
        %v7829 = vrot.slane %v7821, %v7828
        %v7831 = vunpack.c.l.s4 1983009808
        %v7832 = vunpack.c.0.s8 %v7831
        %v7833 = vlaneseq
        %v7834 = vshrl.u32 %v7833, 7
        %v7835 = vsub.s32 %v7832, %v7834
        %v7836 = vrot.slane %v7822, %v7835
        %v7837 = vcombine.low %v6758, %v6760
        %v7838 = vcombine.high %v6758, %v6760
        %v7840 = vunpack.c.l.s4 1983009808
        %v7841 = vunpack.c.0.s8 %v7840
        %v7842 = vlaneseq
        %v7843 = vshrl.u32 %v7842, 7
        %v7844 = vsub.s32 %v7841, %v7843
        %v7845 = vrot.slane %v7837, %v7844
        %v7847 = vunpack.c.l.s4 1983009808
        %v7848 = vunpack.c.0.s8 %v7847
        %v7849 = vlaneseq
        %v7850 = vshrl.u32 %v7849, 7
        %v7851 = vsub.s32 %v7848, %v7850
        %v7852 = vrot.slane %v7838, %v7851
        %v7853 = vcombine.low %v7791, %v7795
        %v7854 = vcombine.high %v7791, %v7795
        %v7856 = vunpack.c.l.s4 1983009808
        %v7857 = vunpack.c.0.s8 %v7856
        %v7858 = vlaneseq
        %v7859 = vshrl.u32 %v7858, 7
        %v7860 = vsub.s32 %v7857, %v7859
        %v7861 = vrot.slane %v7853, %v7860
        %v7863 = vunpack.c.l.s4 1983009808
        %v7864 = vunpack.c.0.s8 %v7863
        %v7865 = vlaneseq
        %v7866 = vshrl.u32 %v7865, 7
        %v7867 = vsub.s32 %v7864, %v7866
        %v7868 = vrot.slane %v7854, %v7867
        %v7869 = vcombine.low %v7813, %v7829
        %v7870 = vcombine.high %v7813, %v7829
        %v7872 = vunpack.c.l.s4 1934713408
        %v7873 = vunpack.c.0.s8 %v7872
        %v7874 = vlaneseq
        %v7875 = vshrl.u32 %v7874, 7
        %v7876 = vsub.s32 %v7873, %v7875
        %v7877 = vrot.slane %v7869, %v7876
        %v7879 = vunpack.c.l.s4 1934713408
        %v7880 = vunpack.c.0.s8 %v7879
        %v7881 = vlaneseq
        %v7882 = vshrl.u32 %v7881, 7
        %v7883 = vsub.s32 %v7880, %v7882
        %v7884 = vrot.slane %v7870, %v7883
        %v7885 = vcombine.low %v7820, %v7836
        %v7886 = vcombine.high %v7820, %v7836
        %v7888 = vunpack.c.l.s4 1934713408
        %v7889 = vunpack.c.0.s8 %v7888
        %v7890 = vlaneseq
        %v7891 = vshrl.u32 %v7890, 7
        %v7892 = vsub.s32 %v7889, %v7891
        %v7893 = vrot.slane %v7885, %v7892
        %v7895 = vunpack.c.l.s4 1934713408
        %v7896 = vunpack.c.0.s8 %v7895
        %v7897 = vlaneseq
        %v7898 = vshrl.u32 %v7897, 7
        %v7899 = vsub.s32 %v7896, %v7898
        %v7900 = vrot.slane %v7886, %v7899
        %v7901 = vcombine.low %v7845, %v7861
        %v7902 = vcombine.high %v7845, %v7861
        %v7904 = vunpack.c.l.s4 1934713408
        %v7905 = vunpack.c.0.s8 %v7904
        %v7906 = vlaneseq
        %v7907 = vshrl.u32 %v7906, 7
        %v7908 = vsub.s32 %v7905, %v7907
        %v7909 = vrot.slane %v7901, %v7908
        %v7911 = vunpack.c.l.s4 1934713408
        %v7912 = vunpack.c.0.s8 %v7911
        %v7913 = vlaneseq
        %v7914 = vshrl.u32 %v7913, 7
        %v7915 = vsub.s32 %v7912, %v7914
        %v7916 = vrot.slane %v7902, %v7915
        %v7917 = vcombine.low %v7852, %v7868
        %v7918 = vcombine.high %v7852, %v7868
        %v7920 = vunpack.c.l.s4 1934713408
        %v7921 = vunpack.c.0.s8 %v7920
        %v7922 = vlaneseq
        %v7923 = vshrl.u32 %v7922, 7
        %v7924 = vsub.s32 %v7921, %v7923
        %v7925 = vrot.slane %v7917, %v7924
        %v7927 = vunpack.c.l.s4 1934713408
        %v7928 = vunpack.c.0.s8 %v7927
        %v7929 = vlaneseq
        %v7930 = vshrl.u32 %v7929, 7
        %v7931 = vsub.s32 %v7928, %v7930
        %v7932 = vrot.slane %v7918, %v7931
        %v7933 = vcombine.low %v7877, %v7909
        %v7934 = vcombine.high %v7877, %v7909
        %v7935 = vcombine.low %v7884, %v7916
        %v7936 = vcombine.high %v7884, %v7916
        %v7937 = vcombine.low %v7893, %v7925
        %v7938 = vcombine.high %v7893, %v7925
        %v7939 = vcombine.low %v7900, %v7932
        %v7940 = vcombine.high %v7900, %v7932
        %v7941 = vcombine.low %v6881, %v6883
        %v7942 = vcombine.high %v6881, %v6883
        %v7944 = vunpack.c.l.s4 1983009808
        %v7945 = vunpack.c.0.s8 %v7944
        %v7946 = vlaneseq
        %v7947 = vshrl.u32 %v7946, 7
        %v7948 = vsub.s32 %v7945, %v7947
        %v7949 = vrot.slane %v7941, %v7948
        %v7951 = vunpack.c.l.s4 1983009808
        %v7952 = vunpack.c.0.s8 %v7951
        %v7953 = vlaneseq
        %v7954 = vshrl.u32 %v7953, 7
        %v7955 = vsub.s32 %v7952, %v7954
        %v7956 = vrot.slane %v7942, %v7955
        %v7957 = vcombine.low %v7799, %v7803
        %v7958 = vcombine.high %v7799, %v7803
        %v7960 = vunpack.c.l.s4 1983009808
        %v7961 = vunpack.c.0.s8 %v7960
        %v7962 = vlaneseq
        %v7963 = vshrl.u32 %v7962, 7
        %v7964 = vsub.s32 %v7961, %v7963
        %v7965 = vrot.slane %v7957, %v7964
        %v7967 = vunpack.c.l.s4 1983009808
        %v7968 = vunpack.c.0.s8 %v7967
        %v7969 = vlaneseq
        %v7970 = vshrl.u32 %v7969, 7
        %v7971 = vsub.s32 %v7968, %v7970
        %v7972 = vrot.slane %v7958, %v7971
        %v7973 = vcombine.low %v7949, %v7965
        %v7974 = vcombine.high %v7949, %v7965
        %v7976 = vunpack.c.l.s4 1934713408
        %v7977 = vunpack.c.0.s8 %v7976
        %v7978 = vlaneseq
        %v7979 = vshrl.u32 %v7978, 7
        %v7980 = vsub.s32 %v7977, %v7979
        %v7981 = vrot.slane %v7973, %v7980
        %v7983 = vunpack.c.l.s4 1934713408
        %v7984 = vunpack.c.0.s8 %v7983
        %v7985 = vlaneseq
        %v7986 = vshrl.u32 %v7985, 7
        %v7987 = vsub.s32 %v7984, %v7986
        %v7988 = vrot.slane %v7974, %v7987
        %v7989 = vcombine.low %v7956, %v7972
        %v7990 = vcombine.high %v7956, %v7972
        %v7992 = vunpack.c.l.s4 1934713408
        %v7993 = vunpack.c.0.s8 %v7992
        %v7994 = vlaneseq
        %v7995 = vshrl.u32 %v7994, 7
        %v7996 = vsub.s32 %v7993, %v7995
        %v7997 = vrot.slane %v7989, %v7996
        %v7999 = vunpack.c.l.s4 1934713408
        %v8000 = vunpack.c.0.s8 %v7999
        %v8001 = vlaneseq
        %v8002 = vshrl.u32 %v8001, 7
        %v8003 = vsub.s32 %v8000, %v8002
        %v8004 = vrot.slane %v7990, %v8003
        %v8005 = vcombine.high %v7981, 0.0
        %v8006 = vcombine.high %v7988, 0.0
        %v8007 = vcombine.high %v7997, 0.0
        %v8008 = vcombine.high %v8004, 0.0
        %v8009 = vcombine.low %v7933, %v7935
        %v8010 = vcombine.high %v7933, %v7935
        %v8012 = vunpack.c.l.s4 1983009808
        %v8013 = vunpack.c.0.s8 %v8012
        %v8014 = vlaneseq
        %v8015 = vshrl.u32 %v8014, 7
        %v8016 = vsub.s32 %v8013, %v8015
        %v8017 = vrot.slane %v8009, %v8016
        %v8019 = vunpack.c.l.s4 1983009808
        %v8020 = vunpack.c.0.s8 %v8019
        %v8021 = vlaneseq
        %v8022 = vshrl.u32 %v8021, 7
        %v8023 = vsub.s32 %v8020, %v8022
        %v8024 = vrot.slane %v8010, %v8023
        %v8025 = vcombine.low %v7934, %v7936
        %v8026 = vcombine.high %v7934, %v7936
        %v8028 = vunpack.c.l.s4 1983009808
        %v8029 = vunpack.c.0.s8 %v8028
        %v8030 = vlaneseq
        %v8031 = vshrl.u32 %v8030, 7
        %v8032 = vsub.s32 %v8029, %v8031
        %v8033 = vrot.slane %v8025, %v8032
        %v8035 = vunpack.c.l.s4 1983009808
        %v8036 = vunpack.c.0.s8 %v8035
        %v8037 = vlaneseq
        %v8038 = vshrl.u32 %v8037, 7
        %v8039 = vsub.s32 %v8036, %v8038
        %v8040 = vrot.slane %v8026, %v8039
        %v8041 = vcombine.low %v7937, %v7939
        %v8042 = vcombine.high %v7937, %v7939
        %v8044 = vunpack.c.l.s4 1983009808
        %v8045 = vunpack.c.0.s8 %v8044
        %v8046 = vlaneseq
        %v8047 = vshrl.u32 %v8046, 7
        %v8048 = vsub.s32 %v8045, %v8047
        %v8049 = vrot.slane %v8041, %v8048
        %v8051 = vunpack.c.l.s4 1983009808
        %v8052 = vunpack.c.0.s8 %v8051
        %v8053 = vlaneseq
        %v8054 = vshrl.u32 %v8053, 7
        %v8055 = vsub.s32 %v8052, %v8054
        %v8056 = vrot.slane %v8042, %v8055
        %v8057 = vcombine.low %v7938, %v7940
        %v8058 = vcombine.high %v7938, %v7940
        %v8060 = vunpack.c.l.s4 1983009808
        %v8061 = vunpack.c.0.s8 %v8060
        %v8062 = vlaneseq
        %v8063 = vshrl.u32 %v8062, 7
        %v8064 = vsub.s32 %v8061, %v8063
        %v8065 = vrot.slane %v8057, %v8064
        %v8067 = vunpack.c.l.s4 1983009808
        %v8068 = vunpack.c.0.s8 %v8067
        %v8069 = vlaneseq
        %v8070 = vshrl.u32 %v8069, 7
        %v8071 = vsub.s32 %v8068, %v8070
        %v8072 = vrot.slane %v8058, %v8071
        %v8073 = vcombine.low %v8017, %v8033
        %v8074 = vcombine.high %v8017, %v8033
        %v8076 = vunpack.c.l.s4 1934713408
        %v8077 = vunpack.c.0.s8 %v8076
        %v8078 = vlaneseq
        %v8079 = vshrl.u32 %v8078, 7
        %v8080 = vsub.s32 %v8077, %v8079
        %v8081 = vrot.slane %v8073, %v8080
        %v8083 = vunpack.c.l.s4 1934713408
        %v8084 = vunpack.c.0.s8 %v8083
        %v8085 = vlaneseq
        %v8086 = vshrl.u32 %v8085, 7
        %v8087 = vsub.s32 %v8084, %v8086
        %v8088 = vrot.slane %v8074, %v8087
        %v8089 = vcombine.low %v8024, %v8040
        %v8090 = vcombine.high %v8024, %v8040
        %v8092 = vunpack.c.l.s4 1934713408
        %v8093 = vunpack.c.0.s8 %v8092
        %v8094 = vlaneseq
        %v8095 = vshrl.u32 %v8094, 7
        %v8096 = vsub.s32 %v8093, %v8095
        %v8097 = vrot.slane %v8089, %v8096
        %v8099 = vunpack.c.l.s4 1934713408
        %v8100 = vunpack.c.0.s8 %v8099
        %v8101 = vlaneseq
        %v8102 = vshrl.u32 %v8101, 7
        %v8103 = vsub.s32 %v8100, %v8102
        %v8104 = vrot.slane %v8090, %v8103
        %v8105 = vcombine.low %v8049, %v8065
        %v8106 = vcombine.high %v8049, %v8065
        %v8108 = vunpack.c.l.s4 1934713408
        %v8109 = vunpack.c.0.s8 %v8108
        %v8110 = vlaneseq
        %v8111 = vshrl.u32 %v8110, 7
        %v8112 = vsub.s32 %v8109, %v8111
        %v8113 = vrot.slane %v8105, %v8112
        %v8115 = vunpack.c.l.s4 1934713408
        %v8116 = vunpack.c.0.s8 %v8115
        %v8117 = vlaneseq
        %v8118 = vshrl.u32 %v8117, 7
        %v8119 = vsub.s32 %v8116, %v8118
        %v8120 = vrot.slane %v8106, %v8119
        %v8121 = vcombine.low %v8056, %v8072
        %v8122 = vcombine.high %v8056, %v8072
        %v8124 = vunpack.c.l.s4 1934713408
        %v8125 = vunpack.c.0.s8 %v8124
        %v8126 = vlaneseq
        %v8127 = vshrl.u32 %v8126, 7
        %v8128 = vsub.s32 %v8125, %v8127
        %v8129 = vrot.slane %v8121, %v8128
        %v8131 = vunpack.c.l.s4 1934713408
        %v8132 = vunpack.c.0.s8 %v8131
        %v8133 = vlaneseq
        %v8134 = vshrl.u32 %v8133, 7
        %v8135 = vsub.s32 %v8132, %v8134
        %v8136 = vrot.slane %v8122, %v8135
        %v8137 = vcombine.low %v8081, %v8113
        %v8138 = vcombine.high %v8081, %v8113
        %v8139 = vcombine.low %v8088, %v8120
        %v8140 = vcombine.high %v8088, %v8120
        %v8141 = vcombine.low %v8097, %v8129
        %v8142 = vcombine.high %v8097, %v8129
        %v8143 = vcombine.low %v8104, %v8136
        %v8144 = vcombine.high %v8104, %v8136
        %v8145 = vcombine.low %v7981, %v7988
        %v8147 = vunpack.c.l.s4 1983009808
        %v8148 = vunpack.c.0.s8 %v8147
        %v8149 = vlaneseq
        %v8150 = vshrl.u32 %v8149, 7
        %v8151 = vsub.s32 %v8148, %v8150
        %v8152 = vrot.slane %v8145, %v8151
        %v8153 = vcombine.low %v8005, %v8006
        %v8155 = vunpack.c.l.s4 1983009808
        %v8156 = vunpack.c.0.s8 %v8155
        %v8157 = vlaneseq
        %v8158 = vshrl.u32 %v8157, 7
        %v8159 = vsub.s32 %v8156, %v8158
        %v8160 = vrot.slane %v8153, %v8159
        %v8161 = vcombine.low %v7997, %v8004
        %v8163 = vunpack.c.l.s4 1983009808
        %v8164 = vunpack.c.0.s8 %v8163
        %v8165 = vlaneseq
        %v8166 = vshrl.u32 %v8165, 7
        %v8167 = vsub.s32 %v8164, %v8166
        %v8168 = vrot.slane %v8161, %v8167
        %v8169 = vcombine.low %v8007, %v8008
        %v8171 = vunpack.c.l.s4 1983009808
        %v8172 = vunpack.c.0.s8 %v8171
        %v8173 = vlaneseq
        %v8174 = vshrl.u32 %v8173, 7
        %v8175 = vsub.s32 %v8172, %v8174
        %v8176 = vrot.slane %v8169, %v8175
        %v8177 = vcombine.low %v8152, %v8160
        %v8178 = vcombine.high %v8152, %v8160
        %v8180 = vunpack.c.l.s4 1934713408
        %v8181 = vunpack.c.0.s8 %v8180
        %v8182 = vlaneseq
        %v8183 = vshrl.u32 %v8182, 7
        %v8184 = vsub.s32 %v8181, %v8183
        %v8185 = vrot.slane %v8177, %v8184
        %v8187 = vunpack.c.l.s4 1934713408
        %v8188 = vunpack.c.0.s8 %v8187
        %v8189 = vlaneseq
        %v8190 = vshrl.u32 %v8189, 7
        %v8191 = vsub.s32 %v8188, %v8190
        %v8192 = vrot.slane %v8178, %v8191
        %v8193 = vcombine.low %v8168, %v8176
        %v8194 = vcombine.high %v8168, %v8176
        %v8196 = vunpack.c.l.s4 1934713408
        %v8197 = vunpack.c.0.s8 %v8196
        %v8198 = vlaneseq
        %v8199 = vshrl.u32 %v8198, 7
        %v8200 = vsub.s32 %v8197, %v8199
        %v8201 = vrot.slane %v8193, %v8200
        %v8203 = vunpack.c.l.s4 1934713408
        %v8204 = vunpack.c.0.s8 %v8203
        %v8205 = vlaneseq
        %v8206 = vshrl.u32 %v8205, 7
        %v8207 = vsub.s32 %v8204, %v8206
        %v8208 = vrot.slane %v8194, %v8207
        %v8209 = vcombine.low %v8185, %v8201
        %v8210 = vcombine.high %v8185, %v8201
        %v8211 = vcombine.low %v8192, %v8208
        %v8212 = vcombine.high %v8192, %v8208
        %v8213 = vpack.c.bf16 %v8137, %v8137
        %v8214 = vpack.c.bf16 %v8138, %v8138
        %v8215 = vpack.c.bf16 %v8139, %v8139
        %v8216 = vpack.c.bf16 %v8140, %v8140
        %v8217 = vpack.c.bf16 %v8141, %v8141
        %v8218 = vpack.c.bf16 %v8142, %v8142
        %v8219 = vpack.c.bf16 %v8143, %v8143
        %v8220 = vpack.c.bf16 %v8144, %v8144
        %v8221 = vpack.c.bf16 %v8209, %v8209
        %v8222 = vpack.c.bf16 %v8210, %v8210
        %v8223 = vpack.c.bf16 %v8211, %v8211
        %v8224 = vpack.c.bf16 %v8212, %v8212
        %vm8225 = vcmask 523264
        %v8227 = vsel %vm8225, %v7325, 0
        %v8230 = vsel %vm8225, %v7769, 0
        %8232 = vmatprep.subr.bf16.mxu0 0
        %8233 = vmatpush1.bf16.xpose.msra.mxu0 %v8230
        %8234 = vmatprep.subr.bf16.mxu0 0
        %8235 = vmatpush1.bf16.xpose.msra.mxu0 0
        %8236 = vmatprep.subr.bf16.mxu0 0
        %8237 = vmatpush1.bf16.xpose.msra.mxu0 0
        %8238 = vmatprep.subr.bf16.mxu0 0
        %8239 = vmatpush1.bf16.xpose.msra.mxu0 0
        %8240 = vmatprep.subr.bf16.mxu0 0
        %8241 = vmatpush1.bf16.xpose.msra.mxu0 0
        %8242 = vmatprep.subr.bf16.mxu0 0
        %8243 = vmatpush1.bf16.xpose.msra.mxu0 0
        %8244 = vmatprep.subr.bf16.mxu0 0
        %8245 = vmatpush1.bf16.xpose.msra.mxu0 0
        %8246 = vmatprep.subr.bf16.mxu0 0
        %8247 = vmatpush1.bf16.xpose.msra.mxu0 0
        %8248 = vmatprep.subr.bf16.mxu0 0
        %8249 = vmatpush1.bf16.xpose.msra.mxu0 0
        %8250 = vmatprep.subr.bf16.mxu0 0
        %8251 = vmatpush1.bf16.xpose.msra.mxu0 0
        %8252 = vmatprep.subr.bf16.mxu0 0
        %8253 = vmatpush1.bf16.xpose.msra.mxu0 0
        %8254 = vmatprep.subr.bf16.mxu0 0
        %8255 = vmatpush1.bf16.xpose.msra.mxu0 0
        %8256 = vmatprep.subr.bf16.mxu0 0
        %8257 = vmatpush1.bf16.xpose.msra.mxu0 0
        %8258 = vmatprep.subr.bf16.mxu0 0
        %8259 = vmatpush1.bf16.xpose.msra.mxu0 0
        %8260 = vmatprep.subr.bf16.mxu0 0
        %8261 = vmatpush1.bf16.xpose.msra.mxu0 0
        %8262 = vmatprep.subr.bf16.mxu0 0
        %8263 = vmatpush1.bf16.xpose.msra.mxu0 0
        %8264 = vmatprep.mubr.bf16.mxu0 0
        %8265 = vmatmul.mubr.bf16.gmra.mrb[0].mxu0 %v8227
        %v8266 = vpop.f32.mrb[0].mxu0
        %v8267 = vadd.f32 0.0, %v8266
        %v8268 = vpop.f32.mrb[0].mxu0
        %v8269 = vpop.f32.mrb[0].mxu0
        %v8270 = vpop.f32.mrb[0].mxu0
        %8271 = vdwg.mxu0
        %v8273 = vsel %vm8225, %v7326, 0
        %v8276 = vsel %vm8225, %v7770, 0
        %8278 = vmatprep.subr.bf16.mxu0 0
        %8279 = vmatpush1.bf16.xpose.msra.mxu0 %v8276
        %8280 = vmatprep.subr.bf16.mxu0 0
        %8281 = vmatpush1.bf16.xpose.msra.mxu0 0
        %8282 = vmatprep.subr.bf16.mxu0 0
        %8283 = vmatpush1.bf16.xpose.msra.mxu0 0
        %8284 = vmatprep.subr.bf16.mxu0 0
        %8285 = vmatpush1.bf16.xpose.msra.mxu0 0
        %8286 = vmatprep.subr.bf16.mxu0 0
        %8287 = vmatpush1.bf16.xpose.msra.mxu0 0
        %8288 = vmatprep.subr.bf16.mxu0 0
        %8289 = vmatpush1.bf16.xpose.msra.mxu0 0
        %8290 = vmatprep.subr.bf16.mxu0 0
        %8291 = vmatpush1.bf16.xpose.msra.mxu0 0
        %8292 = vmatprep.subr.bf16.mxu0 0
        %8293 = vmatpush1.bf16.xpose.msra.mxu0 0
        %8294 = vmatprep.subr.bf16.mxu0 0
        %8295 = vmatpush1.bf16.xpose.msra.mxu0 0
        %8296 = vmatprep.subr.bf16.mxu0 0
        %8297 = vmatpush1.bf16.xpose.msra.mxu0 0
        %8298 = vmatprep.subr.bf16.mxu0 0
        %8299 = vmatpush1.bf16.xpose.msra.mxu0 0
        %8300 = vmatprep.subr.bf16.mxu0 0
        %8301 = vmatpush1.bf16.xpose.msra.mxu0 0
        %8302 = vmatprep.subr.bf16.mxu0 0
        %8303 = vmatpush1.bf16.xpose.msra.mxu0 0
        %8304 = vmatprep.subr.bf16.mxu0 0
        %8305 = vmatpush1.bf16.xpose.msra.mxu0 0
        %8306 = vmatprep.subr.bf16.mxu0 0
        %8307 = vmatpush1.bf16.xpose.msra.mxu0 0
        %8308 = vmatprep.subr.bf16.mxu0 0
        %8309 = vmatpush1.bf16.xpose.msra.mxu0 0
        %8310 = vmatprep.mubr.bf16.mxu0 0
        %8311 = vmatmul.mubr.bf16.gmra.mrb[0].mxu0 %v8273
        %v8312 = vpop.f32.mrb[0].mxu0
        %v8313 = vadd.f32 0.0, %v8312
        %v8314 = vpop.f32.mrb[0].mxu0
        %v8315 = vpop.f32.mrb[0].mxu0
        %v8316 = vpop.f32.mrb[0].mxu0
        %8317 = vdwg.mxu0
        %v8319 = vsel %vm8225, %v7327, 0
        %v8322 = vsel %vm8225, %v7771, 0
        %8324 = vmatprep.subr.bf16.mxu0 0
        %8325 = vmatpush1.bf16.xpose.msra.mxu0 %v8322
        %8326 = vmatprep.subr.bf16.mxu0 0
        %8327 = vmatpush1.bf16.xpose.msra.mxu0 0
        %8328 = vmatprep.subr.bf16.mxu0 0
        %8329 = vmatpush1.bf16.xpose.msra.mxu0 0
        %8330 = vmatprep.subr.bf16.mxu0 0
        %8331 = vmatpush1.bf16.xpose.msra.mxu0 0
        %8332 = vmatprep.subr.bf16.mxu0 0
        %8333 = vmatpush1.bf16.xpose.msra.mxu0 0
        %8334 = vmatprep.subr.bf16.mxu0 0
        %8335 = vmatpush1.bf16.xpose.msra.mxu0 0
        %8336 = vmatprep.subr.bf16.mxu0 0
        %8337 = vmatpush1.bf16.xpose.msra.mxu0 0
        %8338 = vmatprep.subr.bf16.mxu0 0
        %8339 = vmatpush1.bf16.xpose.msra.mxu0 0
        %8340 = vmatprep.subr.bf16.mxu0 0
        %8341 = vmatpush1.bf16.xpose.msra.mxu0 0
        %8342 = vmatprep.subr.bf16.mxu0 0
        %8343 = vmatpush1.bf16.xpose.msra.mxu0 0
        %8344 = vmatprep.subr.bf16.mxu0 0
        %8345 = vmatpush1.bf16.xpose.msra.mxu0 0
        %8346 = vmatprep.subr.bf16.mxu0 0
        %8347 = vmatpush1.bf16.xpose.msra.mxu0 0
        %8348 = vmatprep.subr.bf16.mxu0 0
        %8349 = vmatpush1.bf16.xpose.msra.mxu0 0
        %8350 = vmatprep.subr.bf16.mxu0 0
        %8351 = vmatpush1.bf16.xpose.msra.mxu0 0
        %8352 = vmatprep.subr.bf16.mxu0 0
        %8353 = vmatpush1.bf16.xpose.msra.mxu0 0
        %8354 = vmatprep.subr.bf16.mxu0 0
        %8355 = vmatpush1.bf16.xpose.msra.mxu0 0
        %8356 = vmatprep.mubr.bf16.mxu0 0
        %8357 = vmatmul.mubr.bf16.gmra.mrb[0].mxu0 %v8319
        %v8358 = vpop.f32.mrb[0].mxu0
        %v8359 = vadd.f32 0.0, %v8358
        %v8360 = vpop.f32.mrb[0].mxu0
        %v8361 = vpop.f32.mrb[0].mxu0
        %v8362 = vpop.f32.mrb[0].mxu0
        %8363 = vdwg.mxu0
        %v8365 = vsel %vm8225, %v7328, 0
        %v8368 = vsel %vm8225, %v7772, 0
        %8370 = vmatprep.subr.bf16.mxu0 0
        %8371 = vmatpush1.bf16.xpose.msra.mxu0 %v8368
        %8372 = vmatprep.subr.bf16.mxu0 0
        %8373 = vmatpush1.bf16.xpose.msra.mxu0 0
        %8374 = vmatprep.subr.bf16.mxu0 0
        %8375 = vmatpush1.bf16.xpose.msra.mxu0 0
        %8376 = vmatprep.subr.bf16.mxu0 0
        %8377 = vmatpush1.bf16.xpose.msra.mxu0 0
        %8378 = vmatprep.subr.bf16.mxu0 0
        %8379 = vmatpush1.bf16.xpose.msra.mxu0 0
        %8380 = vmatprep.subr.bf16.mxu0 0
        %8381 = vmatpush1.bf16.xpose.msra.mxu0 0
        %8382 = vmatprep.subr.bf16.mxu0 0
        %8383 = vmatpush1.bf16.xpose.msra.mxu0 0
        %8384 = vmatprep.subr.bf16.mxu0 0
        %8385 = vmatpush1.bf16.xpose.msra.mxu0 0
        %8386 = vmatprep.subr.bf16.mxu0 0
        %8387 = vmatpush1.bf16.xpose.msra.mxu0 0
        %8388 = vmatprep.subr.bf16.mxu0 0
        %8389 = vmatpush1.bf16.xpose.msra.mxu0 0
        %8390 = vmatprep.subr.bf16.mxu0 0
        %8391 = vmatpush1.bf16.xpose.msra.mxu0 0
        %8392 = vmatprep.subr.bf16.mxu0 0
        %8393 = vmatpush1.bf16.xpose.msra.mxu0 0
        %8394 = vmatprep.subr.bf16.mxu0 0
        %8395 = vmatpush1.bf16.xpose.msra.mxu0 0
        %8396 = vmatprep.subr.bf16.mxu0 0
        %8397 = vmatpush1.bf16.xpose.msra.mxu0 0
        %8398 = vmatprep.subr.bf16.mxu0 0
        %8399 = vmatpush1.bf16.xpose.msra.mxu0 0
        %8400 = vmatprep.subr.bf16.mxu0 0
        %8401 = vmatpush1.bf16.xpose.msra.mxu0 0
        %8402 = vmatprep.mubr.bf16.mxu0 0
        %8403 = vmatmul.mubr.bf16.gmra.mrb[0].mxu0 %v8365
        %v8404 = vpop.f32.mrb[0].mxu0
        %v8405 = vadd.f32 0.0, %v8404
        %v8406 = vpop.f32.mrb[0].mxu0
        %v8407 = vpop.f32.mrb[0].mxu0
        %v8408 = vpop.f32.mrb[0].mxu0
        %8409 = vdwg.mxu0
        %v8411 = vsel %vm8225, %v7329, 0
        %v8414 = vsel %vm8225, %v7773, 0
        %8416 = vmatprep.subr.bf16.mxu0 0
        %8417 = vmatpush1.bf16.xpose.msra.mxu0 %v8414
        %8418 = vmatprep.subr.bf16.mxu0 0
        %8419 = vmatpush1.bf16.xpose.msra.mxu0 0
        %8420 = vmatprep.subr.bf16.mxu0 0
        %8421 = vmatpush1.bf16.xpose.msra.mxu0 0
        %8422 = vmatprep.subr.bf16.mxu0 0
        %8423 = vmatpush1.bf16.xpose.msra.mxu0 0
        %8424 = vmatprep.subr.bf16.mxu0 0
        %8425 = vmatpush1.bf16.xpose.msra.mxu0 0
        %8426 = vmatprep.subr.bf16.mxu0 0
        %8427 = vmatpush1.bf16.xpose.msra.mxu0 0
        %8428 = vmatprep.subr.bf16.mxu0 0
        %8429 = vmatpush1.bf16.xpose.msra.mxu0 0
        %8430 = vmatprep.subr.bf16.mxu0 0
        %8431 = vmatpush1.bf16.xpose.msra.mxu0 0
        %8432 = vmatprep.subr.bf16.mxu0 0
        %8433 = vmatpush1.bf16.xpose.msra.mxu0 0
        %8434 = vmatprep.subr.bf16.mxu0 0
        %8435 = vmatpush1.bf16.xpose.msra.mxu0 0
        %8436 = vmatprep.subr.bf16.mxu0 0
        %8437 = vmatpush1.bf16.xpose.msra.mxu0 0
        %8438 = vmatprep.subr.bf16.mxu0 0
        %8439 = vmatpush1.bf16.xpose.msra.mxu0 0
        %8440 = vmatprep.subr.bf16.mxu0 0
        %8441 = vmatpush1.bf16.xpose.msra.mxu0 0
        %8442 = vmatprep.subr.bf16.mxu0 0
        %8443 = vmatpush1.bf16.xpose.msra.mxu0 0
        %8444 = vmatprep.subr.bf16.mxu0 0
        %8445 = vmatpush1.bf16.xpose.msra.mxu0 0
        %8446 = vmatprep.subr.bf16.mxu0 0
        %8447 = vmatpush1.bf16.xpose.msra.mxu0 0
        %8448 = vmatprep.mubr.bf16.mxu0 0
        %8449 = vmatmul.mubr.bf16.gmra.mrb[0].mxu0 %v8411
        %v8450 = vpop.f32.mrb[0].mxu0
        %v8451 = vadd.f32 0.0, %v8450
        %v8452 = vpop.f32.mrb[0].mxu0
        %v8453 = vpop.f32.mrb[0].mxu0
        %v8454 = vpop.f32.mrb[0].mxu0
        %8455 = vdwg.mxu0
        %v8457 = vsel %vm8225, %v7330, 0
        %v8460 = vsel %vm8225, %v7774, 0
        %8462 = vmatprep.subr.bf16.mxu0 0
        %8463 = vmatpush1.bf16.xpose.msra.mxu0 %v8460
        %8464 = vmatprep.subr.bf16.mxu0 0
        %8465 = vmatpush1.bf16.xpose.msra.mxu0 0
        %8466 = vmatprep.subr.bf16.mxu0 0
        %8467 = vmatpush1.bf16.xpose.msra.mxu0 0
        %8468 = vmatprep.subr.bf16.mxu0 0
        %8469 = vmatpush1.bf16.xpose.msra.mxu0 0
        %8470 = vmatprep.subr.bf16.mxu0 0
        %8471 = vmatpush1.bf16.xpose.msra.mxu0 0
        %8472 = vmatprep.subr.bf16.mxu0 0
        %8473 = vmatpush1.bf16.xpose.msra.mxu0 0
        %8474 = vmatprep.subr.bf16.mxu0 0
        %8475 = vmatpush1.bf16.xpose.msra.mxu0 0
        %8476 = vmatprep.subr.bf16.mxu0 0
        %8477 = vmatpush1.bf16.xpose.msra.mxu0 0
        %8478 = vmatprep.subr.bf16.mxu0 0
        %8479 = vmatpush1.bf16.xpose.msra.mxu0 0
        %8480 = vmatprep.subr.bf16.mxu0 0
        %8481 = vmatpush1.bf16.xpose.msra.mxu0 0
        %8482 = vmatprep.subr.bf16.mxu0 0
        %8483 = vmatpush1.bf16.xpose.msra.mxu0 0
        %8484 = vmatprep.subr.bf16.mxu0 0
        %8485 = vmatpush1.bf16.xpose.msra.mxu0 0
        %8486 = vmatprep.subr.bf16.mxu0 0
        %8487 = vmatpush1.bf16.xpose.msra.mxu0 0
        %8488 = vmatprep.subr.bf16.mxu0 0
        %8489 = vmatpush1.bf16.xpose.msra.mxu0 0
        %8490 = vmatprep.subr.bf16.mxu0 0
        %8491 = vmatpush1.bf16.xpose.msra.mxu0 0
        %8492 = vmatprep.subr.bf16.mxu0 0
        %8493 = vmatpush1.bf16.xpose.msra.mxu0 0
        %8494 = vmatprep.mubr.bf16.mxu0 0
        %8495 = vmatmul.mubr.bf16.gmra.mrb[0].mxu0 %v8457
        %v8496 = vpop.f32.mrb[0].mxu0
        %v8497 = vadd.f32 0.0, %v8496
        %v8498 = vpop.f32.mrb[0].mxu0
        %v8499 = vpop.f32.mrb[0].mxu0
        %v8500 = vpop.f32.mrb[0].mxu0
        %8501 = vdwg.mxu0
        %v8503 = vsel %vm8225, %v7331, 0
        %v8506 = vsel %vm8225, %v7775, 0
        %8508 = vmatprep.subr.bf16.mxu0 0
        %8509 = vmatpush1.bf16.xpose.msra.mxu0 %v8506
        %8510 = vmatprep.subr.bf16.mxu0 0
        %8511 = vmatpush1.bf16.xpose.msra.mxu0 0
        %8512 = vmatprep.subr.bf16.mxu0 0
        %8513 = vmatpush1.bf16.xpose.msra.mxu0 0
        %8514 = vmatprep.subr.bf16.mxu0 0
        %8515 = vmatpush1.bf16.xpose.msra.mxu0 0
        %8516 = vmatprep.subr.bf16.mxu0 0
        %8517 = vmatpush1.bf16.xpose.msra.mxu0 0
        %8518 = vmatprep.subr.bf16.mxu0 0
        %8519 = vmatpush1.bf16.xpose.msra.mxu0 0
        %8520 = vmatprep.subr.bf16.mxu0 0
        %8521 = vmatpush1.bf16.xpose.msra.mxu0 0
        %8522 = vmatprep.subr.bf16.mxu0 0
        %8523 = vmatpush1.bf16.xpose.msra.mxu0 0
        %8524 = vmatprep.subr.bf16.mxu0 0
        %8525 = vmatpush1.bf16.xpose.msra.mxu0 0
        %8526 = vmatprep.subr.bf16.mxu0 0
        %8527 = vmatpush1.bf16.xpose.msra.mxu0 0
        %8528 = vmatprep.subr.bf16.mxu0 0
        %8529 = vmatpush1.bf16.xpose.msra.mxu0 0
        %8530 = vmatprep.subr.bf16.mxu0 0
        %8531 = vmatpush1.bf16.xpose.msra.mxu0 0
        %8532 = vmatprep.subr.bf16.mxu0 0
        %8533 = vmatpush1.bf16.xpose.msra.mxu0 0
        %8534 = vmatprep.subr.bf16.mxu0 0
        %8535 = vmatpush1.bf16.xpose.msra.mxu0 0
        %8536 = vmatprep.subr.bf16.mxu0 0
        %8537 = vmatpush1.bf16.xpose.msra.mxu0 0
        %8538 = vmatprep.subr.bf16.mxu0 0
        %8539 = vmatpush1.bf16.xpose.msra.mxu0 0
        %8540 = vmatprep.mubr.bf16.mxu0 0
        %8541 = vmatmul.mubr.bf16.gmra.mrb[0].mxu0 %v8503
        %v8542 = vpop.f32.mrb[0].mxu0
        %v8543 = vadd.f32 0.0, %v8542
        %v8544 = vpop.f32.mrb[0].mxu0
        %v8545 = vpop.f32.mrb[0].mxu0
        %v8546 = vpop.f32.mrb[0].mxu0
        %8547 = vdwg.mxu0
        %v8549 = vsel %vm8225, %v7332, 0
        %v8552 = vsel %vm8225, %v7776, 0
        %8554 = vmatprep.subr.bf16.mxu0 0
        %8555 = vmatpush1.bf16.xpose.msra.mxu0 %v8552
        %8556 = vmatprep.subr.bf16.mxu0 0
        %8557 = vmatpush1.bf16.xpose.msra.mxu0 0
        %8558 = vmatprep.subr.bf16.mxu0 0
        %8559 = vmatpush1.bf16.xpose.msra.mxu0 0
        %8560 = vmatprep.subr.bf16.mxu0 0
        %8561 = vmatpush1.bf16.xpose.msra.mxu0 0
        %8562 = vmatprep.subr.bf16.mxu0 0
        %8563 = vmatpush1.bf16.xpose.msra.mxu0 0
        %8564 = vmatprep.subr.bf16.mxu0 0
        %8565 = vmatpush1.bf16.xpose.msra.mxu0 0
        %8566 = vmatprep.subr.bf16.mxu0 0
        %8567 = vmatpush1.bf16.xpose.msra.mxu0 0
        %8568 = vmatprep.subr.bf16.mxu0 0
        %8569 = vmatpush1.bf16.xpose.msra.mxu0 0
        %8570 = vmatprep.subr.bf16.mxu0 0
        %8571 = vmatpush1.bf16.xpose.msra.mxu0 0
        %8572 = vmatprep.subr.bf16.mxu0 0
        %8573 = vmatpush1.bf16.xpose.msra.mxu0 0
        %8574 = vmatprep.subr.bf16.mxu0 0
        %8575 = vmatpush1.bf16.xpose.msra.mxu0 0
        %8576 = vmatprep.subr.bf16.mxu0 0
        %8577 = vmatpush1.bf16.xpose.msra.mxu0 0
        %8578 = vmatprep.subr.bf16.mxu0 0
        %8579 = vmatpush1.bf16.xpose.msra.mxu0 0
        %8580 = vmatprep.subr.bf16.mxu0 0
        %8581 = vmatpush1.bf16.xpose.msra.mxu0 0
        %8582 = vmatprep.subr.bf16.mxu0 0
        %8583 = vmatpush1.bf16.xpose.msra.mxu0 0
        %8584 = vmatprep.subr.bf16.mxu0 0
        %8585 = vmatpush1.bf16.xpose.msra.mxu0 0
        %8586 = vmatprep.mubr.bf16.mxu0 0
        %8587 = vmatmul.mubr.bf16.gmra.mrb[0].mxu0 %v8549
        %v8588 = vpop.f32.mrb[0].mxu0
        %v8589 = vadd.f32 0.0, %v8588
        %v8590 = vpop.f32.mrb[0].mxu0
        %v8591 = vpop.f32.mrb[0].mxu0
        %v8592 = vpop.f32.mrb[0].mxu0
        %8593 = vdwg.mxu0
        %v8595 = vsel %vm8225, %v7333, 0
        %v8598 = vsel %vm8225, %v7777, 0
        %8600 = vmatprep.subr.bf16.mxu0 0
        %8601 = vmatpush1.bf16.xpose.msra.mxu0 %v8598
        %8602 = vmatprep.subr.bf16.mxu0 0
        %8603 = vmatpush1.bf16.xpose.msra.mxu0 0
        %8604 = vmatprep.subr.bf16.mxu0 0
        %8605 = vmatpush1.bf16.xpose.msra.mxu0 0
        %8606 = vmatprep.subr.bf16.mxu0 0
        %8607 = vmatpush1.bf16.xpose.msra.mxu0 0
        %8608 = vmatprep.subr.bf16.mxu0 0
        %8609 = vmatpush1.bf16.xpose.msra.mxu0 0
        %8610 = vmatprep.subr.bf16.mxu0 0
        %8611 = vmatpush1.bf16.xpose.msra.mxu0 0
        %8612 = vmatprep.subr.bf16.mxu0 0
        %8613 = vmatpush1.bf16.xpose.msra.mxu0 0
        %8614 = vmatprep.subr.bf16.mxu0 0
        %8615 = vmatpush1.bf16.xpose.msra.mxu0 0
        %8616 = vmatprep.subr.bf16.mxu0 0
        %8617 = vmatpush1.bf16.xpose.msra.mxu0 0
        %8618 = vmatprep.subr.bf16.mxu0 0
        %8619 = vmatpush1.bf16.xpose.msra.mxu0 0
        %8620 = vmatprep.subr.bf16.mxu0 0
        %8621 = vmatpush1.bf16.xpose.msra.mxu0 0
        %8622 = vmatprep.subr.bf16.mxu0 0
        %8623 = vmatpush1.bf16.xpose.msra.mxu0 0
        %8624 = vmatprep.subr.bf16.mxu0 0
        %8625 = vmatpush1.bf16.xpose.msra.mxu0 0
        %8626 = vmatprep.subr.bf16.mxu0 0
        %8627 = vmatpush1.bf16.xpose.msra.mxu0 0
        %8628 = vmatprep.subr.bf16.mxu0 0
        %8629 = vmatpush1.bf16.xpose.msra.mxu0 0
        %8630 = vmatprep.subr.bf16.mxu0 0
        %8631 = vmatpush1.bf16.xpose.msra.mxu0 0
        %8632 = vmatprep.mubr.bf16.mxu0 0
        %8633 = vmatmul.mubr.bf16.gmra.mrb[0].mxu0 %v8595
        %v8634 = vpop.f32.mrb[0].mxu0
        %v8635 = vadd.f32 0.0, %v8634
        %v8636 = vpop.f32.mrb[0].mxu0
        %v8637 = vpop.f32.mrb[0].mxu0
        %v8638 = vpop.f32.mrb[0].mxu0
        %8639 = vdwg.mxu0
        %v8641 = vsel %vm8225, %v7334, 0
        %v8644 = vsel %vm8225, %v7778, 0
        %8646 = vmatprep.subr.bf16.mxu0 0
        %8647 = vmatpush1.bf16.xpose.msra.mxu0 %v8644
        %8648 = vmatprep.subr.bf16.mxu0 0
        %8649 = vmatpush1.bf16.xpose.msra.mxu0 0
        %8650 = vmatprep.subr.bf16.mxu0 0
        %8651 = vmatpush1.bf16.xpose.msra.mxu0 0
        %8652 = vmatprep.subr.bf16.mxu0 0
        %8653 = vmatpush1.bf16.xpose.msra.mxu0 0
        %8654 = vmatprep.subr.bf16.mxu0 0
        %8655 = vmatpush1.bf16.xpose.msra.mxu0 0
        %8656 = vmatprep.subr.bf16.mxu0 0
        %8657 = vmatpush1.bf16.xpose.msra.mxu0 0
        %8658 = vmatprep.subr.bf16.mxu0 0
        %8659 = vmatpush1.bf16.xpose.msra.mxu0 0
        %8660 = vmatprep.subr.bf16.mxu0 0
        %8661 = vmatpush1.bf16.xpose.msra.mxu0 0
        %8662 = vmatprep.subr.bf16.mxu0 0
        %8663 = vmatpush1.bf16.xpose.msra.mxu0 0
        %8664 = vmatprep.subr.bf16.mxu0 0
        %8665 = vmatpush1.bf16.xpose.msra.mxu0 0
        %8666 = vmatprep.subr.bf16.mxu0 0
        %8667 = vmatpush1.bf16.xpose.msra.mxu0 0
        %8668 = vmatprep.subr.bf16.mxu0 0
        %8669 = vmatpush1.bf16.xpose.msra.mxu0 0
        %8670 = vmatprep.subr.bf16.mxu0 0
        %8671 = vmatpush1.bf16.xpose.msra.mxu0 0
        %8672 = vmatprep.subr.bf16.mxu0 0
        %8673 = vmatpush1.bf16.xpose.msra.mxu0 0
        %8674 = vmatprep.subr.bf16.mxu0 0
        %8675 = vmatpush1.bf16.xpose.msra.mxu0 0
        %8676 = vmatprep.subr.bf16.mxu0 0
        %8677 = vmatpush1.bf16.xpose.msra.mxu0 0
        %8678 = vmatprep.mubr.bf16.mxu0 0
        %8679 = vmatmul.mubr.bf16.gmra.mrb[0].mxu0 %v8641
        %v8680 = vpop.f32.mrb[0].mxu0
        %v8681 = vadd.f32 0.0, %v8680
        %v8682 = vpop.f32.mrb[0].mxu0
        %v8683 = vpop.f32.mrb[0].mxu0
        %v8684 = vpop.f32.mrb[0].mxu0
        %8685 = vdwg.mxu0
        %v8687 = vsel %vm8225, %v7335, 0
        %v8690 = vsel %vm8225, %v7779, 0
        %8692 = vmatprep.subr.bf16.mxu0 0
        %8693 = vmatpush1.bf16.xpose.msra.mxu0 %v8690
        %8694 = vmatprep.subr.bf16.mxu0 0
        %8695 = vmatpush1.bf16.xpose.msra.mxu0 0
        %8696 = vmatprep.subr.bf16.mxu0 0
        %8697 = vmatpush1.bf16.xpose.msra.mxu0 0
        %8698 = vmatprep.subr.bf16.mxu0 0
        %8699 = vmatpush1.bf16.xpose.msra.mxu0 0
        %8700 = vmatprep.subr.bf16.mxu0 0
        %8701 = vmatpush1.bf16.xpose.msra.mxu0 0
        %8702 = vmatprep.subr.bf16.mxu0 0
        %8703 = vmatpush1.bf16.xpose.msra.mxu0 0
        %8704 = vmatprep.subr.bf16.mxu0 0
        %8705 = vmatpush1.bf16.xpose.msra.mxu0 0
        %8706 = vmatprep.subr.bf16.mxu0 0
        %8707 = vmatpush1.bf16.xpose.msra.mxu0 0
        %8708 = vmatprep.subr.bf16.mxu0 0
        %8709 = vmatpush1.bf16.xpose.msra.mxu0 0
        %8710 = vmatprep.subr.bf16.mxu0 0
        %8711 = vmatpush1.bf16.xpose.msra.mxu0 0
        %8712 = vmatprep.subr.bf16.mxu0 0
        %8713 = vmatpush1.bf16.xpose.msra.mxu0 0
        %8714 = vmatprep.subr.bf16.mxu0 0
        %8715 = vmatpush1.bf16.xpose.msra.mxu0 0
        %8716 = vmatprep.subr.bf16.mxu0 0
        %8717 = vmatpush1.bf16.xpose.msra.mxu0 0
        %8718 = vmatprep.subr.bf16.mxu0 0
        %8719 = vmatpush1.bf16.xpose.msra.mxu0 0
        %8720 = vmatprep.subr.bf16.mxu0 0
        %8721 = vmatpush1.bf16.xpose.msra.mxu0 0
        %8722 = vmatprep.subr.bf16.mxu0 0
        %8723 = vmatpush1.bf16.xpose.msra.mxu0 0
        %8724 = vmatprep.mubr.bf16.mxu0 0
        %8725 = vmatmul.mubr.bf16.gmra.mrb[0].mxu0 %v8687
        %v8726 = vpop.f32.mrb[0].mxu0
        %v8727 = vadd.f32 0.0, %v8726
        %v8728 = vpop.f32.mrb[0].mxu0
        %v8729 = vpop.f32.mrb[0].mxu0
        %v8730 = vpop.f32.mrb[0].mxu0
        %8731 = vdwg.mxu0
        %v8733 = vsel %vm8225, %v7336, 0
        %v8736 = vsel %vm8225, %v7780, 0
        %8738 = vmatprep.subr.bf16.mxu0 0
        %8739 = vmatpush1.bf16.xpose.msra.mxu0 %v8736
        %8740 = vmatprep.subr.bf16.mxu0 0
        %8741 = vmatpush1.bf16.xpose.msra.mxu0 0
        %8742 = vmatprep.subr.bf16.mxu0 0
        %8743 = vmatpush1.bf16.xpose.msra.mxu0 0
        %8744 = vmatprep.subr.bf16.mxu0 0
        %8745 = vmatpush1.bf16.xpose.msra.mxu0 0
        %8746 = vmatprep.subr.bf16.mxu0 0
        %8747 = vmatpush1.bf16.xpose.msra.mxu0 0
        %8748 = vmatprep.subr.bf16.mxu0 0
        %8749 = vmatpush1.bf16.xpose.msra.mxu0 0
        %8750 = vmatprep.subr.bf16.mxu0 0
        %8751 = vmatpush1.bf16.xpose.msra.mxu0 0
        %8752 = vmatprep.subr.bf16.mxu0 0
        %8753 = vmatpush1.bf16.xpose.msra.mxu0 0
        %8754 = vmatprep.subr.bf16.mxu0 0
        %8755 = vmatpush1.bf16.xpose.msra.mxu0 0
        %8756 = vmatprep.subr.bf16.mxu0 0
        %8757 = vmatpush1.bf16.xpose.msra.mxu0 0
        %8758 = vmatprep.subr.bf16.mxu0 0
        %8759 = vmatpush1.bf16.xpose.msra.mxu0 0
        %8760 = vmatprep.subr.bf16.mxu0 0
        %8761 = vmatpush1.bf16.xpose.msra.mxu0 0
        %8762 = vmatprep.subr.bf16.mxu0 0
        %8763 = vmatpush1.bf16.xpose.msra.mxu0 0
        %8764 = vmatprep.subr.bf16.mxu0 0
        %8765 = vmatpush1.bf16.xpose.msra.mxu0 0
        %8766 = vmatprep.subr.bf16.mxu0 0
        %8767 = vmatpush1.bf16.xpose.msra.mxu0 0
        %8768 = vmatprep.subr.bf16.mxu0 0
        %8769 = vmatpush1.bf16.xpose.msra.mxu0 0
        %8770 = vmatprep.mubr.bf16.mxu0 0
        %8771 = vmatmul.mubr.bf16.gmra.mrb[0].mxu0 %v8733
        %v8772 = vpop.f32.mrb[0].mxu0
        %v8773 = vadd.f32 0.0, %v8772
        %v8774 = vpop.f32.mrb[0].mxu0
        %v8775 = vpop.f32.mrb[0].mxu0
        %v8776 = vpop.f32.mrb[0].mxu0
        %8777 = vdwg.mxu0
        %vm8778 = vcmask 64512
        %v8779 = vsel %vm8778, %v8267, -inf
        %8780 = vmax.xlane.f32.xlu0 %v8779
        %v8781 = vpop.xlane.xlu0 %8780
        %v8782 = vsel %vm8778, %v8313, -inf
        %8783 = vmax.xlane.f32.xlu0 %v8782
        %v8784 = vpop.xlane.xlu0 %8783
        %v8785 = vsel %vm8778, %v8359, -inf
        %8786 = vmax.xlane.f32.xlu0 %v8785
        %v8787 = vpop.xlane.xlu0 %8786
        %v8788 = vsel %vm8778, %v8405, -inf
        %8789 = vmax.xlane.f32.xlu0 %v8788
        %v8790 = vpop.xlane.xlu0 %8789
        %v8791 = vsel %vm8778, %v8451, -inf
        %8792 = vmax.xlane.f32.xlu0 %v8791
        %v8793 = vpop.xlane.xlu0 %8792
        %v8794 = vsel %vm8778, %v8497, -inf
        %8795 = vmax.xlane.f32.xlu0 %v8794
        %v8796 = vpop.xlane.xlu0 %8795
        %v8797 = vsel %vm8778, %v8543, -inf
        %8798 = vmax.xlane.f32.xlu0 %v8797
        %v8799 = vpop.xlane.xlu0 %8798
        %v8800 = vsel %vm8778, %v8589, -inf
        %8801 = vmax.xlane.f32.xlu0 %v8800
        %v8802 = vpop.xlane.xlu0 %8801
        %v8803 = vsel %vm8778, %v8635, -inf
        %8804 = vmax.xlane.f32.xlu0 %v8803
        %v8805 = vpop.xlane.xlu0 %8804
        %v8806 = vsel %vm8778, %v8681, -inf
        %8807 = vmax.xlane.f32.xlu0 %v8806
        %v8808 = vpop.xlane.xlu0 %8807
        %v8809 = vsel %vm8778, %v8727, -inf
        %8810 = vmax.xlane.f32.xlu0 %v8809
        %v8811 = vpop.xlane.xlu0 %8810
        %v8812 = vsel %vm8778, %v8773, -inf
        %8813 = vmax.xlane.f32.xlu0 %v8812
        %v8814 = vpop.xlane.xlu0 %8813
        %v8815 = vsub.f32 %v8267, %v8781
        %v8816 = vsub.f32 %v8313, %v8784
        %v8817 = vsub.f32 %v8359, %v8787
        %v8818 = vsub.f32 %v8405, %v8790
        %v8819 = vsub.f32 %v8451, %v8793
        %v8820 = vsub.f32 %v8497, %v8796
        %v8821 = vsub.f32 %v8543, %v8799
        %v8822 = vsub.f32 %v8589, %v8802
        %v8823 = vsub.f32 %v8635, %v8805
        %v8824 = vsub.f32 %v8681, %v8808
        %v8825 = vsub.f32 %v8727, %v8811
        %v8826 = vsub.f32 %v8773, %v8814
        %v8827 = vmul.f32 %v8815, 1.442695
        %v8828 = vpow.pop %v8827
        %v8829 = vmul.f32 %v8816, 1.442695
        %v8830 = vpow.pop %v8829
        %v8831 = vmul.f32 %v8817, 1.442695
        %v8832 = vpow.pop %v8831
        %v8833 = vmul.f32 %v8818, 1.442695
        %v8834 = vpow.pop %v8833
        %v8835 = vmul.f32 %v8819, 1.442695
        %v8836 = vpow.pop %v8835
        %v8837 = vmul.f32 %v8820, 1.442695
        %v8838 = vpow.pop %v8837
        %v8839 = vmul.f32 %v8821, 1.442695
        %v8840 = vpow.pop %v8839
        %v8841 = vmul.f32 %v8822, 1.442695
        %v8842 = vpow.pop %v8841
        %v8843 = vmul.f32 %v8823, 1.442695
        %v8844 = vpow.pop %v8843
        %v8845 = vmul.f32 %v8824, 1.442695
        %v8846 = vpow.pop %v8845
        %v8847 = vmul.f32 %v8825, 1.442695
        %v8848 = vpow.pop %v8847
        %v8849 = vmul.f32 %v8826, 1.442695
        %v8850 = vpow.pop %v8849
        %v8851 = vsel %vm8778, %v8828, 0.0
        %8852 = vadd.xlane.f32.xlu0 %v8851
        %v8853 = vpop.xlane.xlu0 %8852
        %v8854 = vsel %vm8778, %v8830, 0.0
        %8855 = vadd.xlane.f32.xlu0 %v8854
        %v8856 = vpop.xlane.xlu0 %8855
        %v8857 = vsel %vm8778, %v8832, 0.0
        %8858 = vadd.xlane.f32.xlu0 %v8857
        %v8859 = vpop.xlane.xlu0 %8858
        %v8860 = vsel %vm8778, %v8834, 0.0
        %8861 = vadd.xlane.f32.xlu0 %v8860
        %v8862 = vpop.xlane.xlu0 %8861
        %v8863 = vsel %vm8778, %v8836, 0.0
        %8864 = vadd.xlane.f32.xlu0 %v8863
        %v8865 = vpop.xlane.xlu0 %8864
        %v8866 = vsel %vm8778, %v8838, 0.0
        %8867 = vadd.xlane.f32.xlu0 %v8866
        %v8868 = vpop.xlane.xlu0 %8867
        %v8869 = vsel %vm8778, %v8840, 0.0
        %8870 = vadd.xlane.f32.xlu0 %v8869
        %v8871 = vpop.xlane.xlu0 %8870
        %v8872 = vsel %vm8778, %v8842, 0.0
        %8873 = vadd.xlane.f32.xlu0 %v8872
        %v8874 = vpop.xlane.xlu0 %8873
        %v8875 = vsel %vm8778, %v8844, 0.0
        %8876 = vadd.xlane.f32.xlu0 %v8875
        %v8877 = vpop.xlane.xlu0 %8876
        %v8878 = vsel %vm8778, %v8846, 0.0
        %8879 = vadd.xlane.f32.xlu0 %v8878
        %v8880 = vpop.xlane.xlu0 %8879
        %v8881 = vsel %vm8778, %v8848, 0.0
        %8882 = vadd.xlane.f32.xlu0 %v8881
        %v8883 = vpop.xlane.xlu0 %8882
        %v8884 = vsel %vm8778, %v8850, 0.0
        %8885 = vadd.xlane.f32.xlu0 %v8884
        %v8886 = vpop.xlane.xlu0 %8885
        %v8887 = vrcp.pop %v8853
        %v8888 = vmul.f32 %v8828, %v8887
        %v8889 = vrcp.pop %v8856
        %v8890 = vmul.f32 %v8830, %v8889
        %v8891 = vrcp.pop %v8859
        %v8892 = vmul.f32 %v8832, %v8891
        %v8893 = vrcp.pop %v8862
        %v8894 = vmul.f32 %v8834, %v8893
        %v8895 = vrcp.pop %v8865
        %v8896 = vmul.f32 %v8836, %v8895
        %v8897 = vrcp.pop %v8868
        %v8898 = vmul.f32 %v8838, %v8897
        %v8899 = vrcp.pop %v8871
        %v8900 = vmul.f32 %v8840, %v8899
        %v8901 = vrcp.pop %v8874
        %v8902 = vmul.f32 %v8842, %v8901
        %v8903 = vrcp.pop %v8877
        %v8904 = vmul.f32 %v8844, %v8903
        %v8905 = vrcp.pop %v8880
        %v8906 = vmul.f32 %v8846, %v8905
        %v8907 = vrcp.pop %v8883
        %v8908 = vmul.f32 %v8848, %v8907
        %v8909 = vrcp.pop %v8886
        %v8910 = vmul.f32 %v8850, %v8909
        %v8911 = vpack.c.bf16 %v8888, %v8888
        %v8912 = vpack.c.bf16 %v8890, %v8890
        %v8913 = vpack.c.bf16 %v8892, %v8892
        %v8914 = vpack.c.bf16 %v8894, %v8894
        %v8915 = vpack.c.bf16 %v8896, %v8896
        %v8916 = vpack.c.bf16 %v8898, %v8898
        %v8917 = vpack.c.bf16 %v8900, %v8900
        %v8918 = vpack.c.bf16 %v8902, %v8902
        %v8919 = vpack.c.bf16 %v8904, %v8904
        %v8920 = vpack.c.bf16 %v8906, %v8906
        %v8921 = vpack.c.bf16 %v8908, %v8908
        %v8922 = vpack.c.bf16 %v8910, %v8910
        %v8924 = vsel %vm8778, %v8911, 0
        %vm8926 = vcmask 1043456
        %v8928 = vsel %vm8926, %v8213, 0
        %8930 = vmatprep.subr.bf16.mxu0 0
        %8931 = vmatpush1.bf16.msra.mxu0 %v8928
        %8932 = vmatprep.subr.bf16.mxu0 0
        %8933 = vmatpush1.bf16.msra.mxu0 0
        %8934 = vmatprep.subr.bf16.mxu0 0
        %8935 = vmatpush1.bf16.msra.mxu0 0
        %8936 = vmatprep.subr.bf16.mxu0 0
        %8937 = vmatpush1.bf16.msra.mxu0 0
        %8938 = vmatprep.subr.bf16.mxu0 0
        %8939 = vmatpush1.bf16.msra.mxu0 0
        %8940 = vmatprep.subr.bf16.mxu0 0
        %8941 = vmatpush1.bf16.msra.mxu0 0
        %8942 = vmatprep.subr.bf16.mxu0 0
        %8943 = vmatpush1.bf16.msra.mxu0 0
        %8944 = vmatprep.subr.bf16.mxu0 0
        %8945 = vmatpush1.bf16.msra.mxu0 0
        %8946 = vmatprep.subr.bf16.mxu0 0
        %8947 = vmatpush1.bf16.msra.mxu0 0
        %8948 = vmatprep.subr.bf16.mxu0 0
        %8949 = vmatpush1.bf16.msra.mxu0 0
        %8950 = vmatprep.subr.bf16.mxu0 0
        %8951 = vmatpush1.bf16.msra.mxu0 0
        %8952 = vmatprep.subr.bf16.mxu0 0
        %8953 = vmatpush1.bf16.msra.mxu0 0
        %8954 = vmatprep.subr.bf16.mxu0 0
        %8955 = vmatpush1.bf16.msra.mxu0 0
        %8956 = vmatprep.subr.bf16.mxu0 0
        %8957 = vmatpush1.bf16.msra.mxu0 0
        %8958 = vmatprep.subr.bf16.mxu0 0
        %8959 = vmatpush1.bf16.msra.mxu0 0
        %8960 = vmatprep.subr.bf16.mxu0 0
        %8961 = vmatpush1.bf16.msra.mxu0 0
        %8962 = vmatprep.mubr.bf16.mxu0 0
        %8963 = vmatmul.mubr.bf16.gmra.mrb[0].mxu0 %v8924
        %v8964 = vpop.f32.mrb[0].mxu0
        %v8965 = vadd.f32 0.0, %v8964
        %v8966 = vpop.f32.mrb[0].mxu0
        %v8967 = vpop.f32.mrb[0].mxu0
        %v8968 = vpop.f32.mrb[0].mxu0
        %8969 = vdwg.mxu0
        %v8971 = vsel %vm8778, %v8912, 0
        %v8974 = vsel %vm8926, %v8214, 0
        %8976 = vmatprep.subr.bf16.mxu0 0
        %8977 = vmatpush1.bf16.msra.mxu0 %v8974
        %8978 = vmatprep.subr.bf16.mxu0 0
        %8979 = vmatpush1.bf16.msra.mxu0 0
        %8980 = vmatprep.subr.bf16.mxu0 0
        %8981 = vmatpush1.bf16.msra.mxu0 0
        %8982 = vmatprep.subr.bf16.mxu0 0
        %8983 = vmatpush1.bf16.msra.mxu0 0
        %8984 = vmatprep.subr.bf16.mxu0 0
        %8985 = vmatpush1.bf16.msra.mxu0 0
        %8986 = vmatprep.subr.bf16.mxu0 0
        %8987 = vmatpush1.bf16.msra.mxu0 0
        %8988 = vmatprep.subr.bf16.mxu0 0
        %8989 = vmatpush1.bf16.msra.mxu0 0
        %8990 = vmatprep.subr.bf16.mxu0 0
        %8991 = vmatpush1.bf16.msra.mxu0 0
        %8992 = vmatprep.subr.bf16.mxu0 0
        %8993 = vmatpush1.bf16.msra.mxu0 0
        %8994 = vmatprep.subr.bf16.mxu0 0
        %8995 = vmatpush1.bf16.msra.mxu0 0
        %8996 = vmatprep.subr.bf16.mxu0 0
        %8997 = vmatpush1.bf16.msra.mxu0 0
        %8998 = vmatprep.subr.bf16.mxu0 0
        %8999 = vmatpush1.bf16.msra.mxu0 0
        %9000 = vmatprep.subr.bf16.mxu0 0
        %9001 = vmatpush1.bf16.msra.mxu0 0
        %9002 = vmatprep.subr.bf16.mxu0 0
        %9003 = vmatpush1.bf16.msra.mxu0 0
        %9004 = vmatprep.subr.bf16.mxu0 0
        %9005 = vmatpush1.bf16.msra.mxu0 0
        %9006 = vmatprep.subr.bf16.mxu0 0
        %9007 = vmatpush1.bf16.msra.mxu0 0
        %9008 = vmatprep.mubr.bf16.mxu0 0
        %9009 = vmatmul.mubr.bf16.gmra.mrb[0].mxu0 %v8971
        %v9010 = vpop.f32.mrb[0].mxu0
        %v9011 = vadd.f32 0.0, %v9010
        %v9012 = vpop.f32.mrb[0].mxu0
        %v9013 = vpop.f32.mrb[0].mxu0
        %v9014 = vpop.f32.mrb[0].mxu0
        %9015 = vdwg.mxu0
        %v9017 = vsel %vm8778, %v8913, 0
        %v9020 = vsel %vm8926, %v8215, 0
        %9022 = vmatprep.subr.bf16.mxu0 0
        %9023 = vmatpush1.bf16.msra.mxu0 %v9020
        %9024 = vmatprep.subr.bf16.mxu0 0
        %9025 = vmatpush1.bf16.msra.mxu0 0
        %9026 = vmatprep.subr.bf16.mxu0 0
        %9027 = vmatpush1.bf16.msra.mxu0 0
        %9028 = vmatprep.subr.bf16.mxu0 0
        %9029 = vmatpush1.bf16.msra.mxu0 0
        %9030 = vmatprep.subr.bf16.mxu0 0
        %9031 = vmatpush1.bf16.msra.mxu0 0
        %9032 = vmatprep.subr.bf16.mxu0 0
        %9033 = vmatpush1.bf16.msra.mxu0 0
        %9034 = vmatprep.subr.bf16.mxu0 0
        %9035 = vmatpush1.bf16.msra.mxu0 0
        %9036 = vmatprep.subr.bf16.mxu0 0
        %9037 = vmatpush1.bf16.msra.mxu0 0
        %9038 = vmatprep.subr.bf16.mxu0 0
        %9039 = vmatpush1.bf16.msra.mxu0 0
        %9040 = vmatprep.subr.bf16.mxu0 0
        %9041 = vmatpush1.bf16.msra.mxu0 0
        %9042 = vmatprep.subr.bf16.mxu0 0
        %9043 = vmatpush1.bf16.msra.mxu0 0
        %9044 = vmatprep.subr.bf16.mxu0 0
        %9045 = vmatpush1.bf16.msra.mxu0 0
        %9046 = vmatprep.subr.bf16.mxu0 0
        %9047 = vmatpush1.bf16.msra.mxu0 0
        %9048 = vmatprep.subr.bf16.mxu0 0
        %9049 = vmatpush1.bf16.msra.mxu0 0
        %9050 = vmatprep.subr.bf16.mxu0 0
        %9051 = vmatpush1.bf16.msra.mxu0 0
        %9052 = vmatprep.subr.bf16.mxu0 0
        %9053 = vmatpush1.bf16.msra.mxu0 0
        %9054 = vmatprep.mubr.bf16.mxu0 0
        %9055 = vmatmul.mubr.bf16.gmra.mrb[0].mxu0 %v9017
        %v9056 = vpop.f32.mrb[0].mxu0
        %v9057 = vadd.f32 0.0, %v9056
        %v9058 = vpop.f32.mrb[0].mxu0
        %v9059 = vpop.f32.mrb[0].mxu0
        %v9060 = vpop.f32.mrb[0].mxu0
        %9061 = vdwg.mxu0
        %v9063 = vsel %vm8778, %v8914, 0
        %v9066 = vsel %vm8926, %v8216, 0
        %9068 = vmatprep.subr.bf16.mxu0 0
        %9069 = vmatpush1.bf16.msra.mxu0 %v9066
        %9070 = vmatprep.subr.bf16.mxu0 0
        %9071 = vmatpush1.bf16.msra.mxu0 0
        %9072 = vmatprep.subr.bf16.mxu0 0
        %9073 = vmatpush1.bf16.msra.mxu0 0
        %9074 = vmatprep.subr.bf16.mxu0 0
        %9075 = vmatpush1.bf16.msra.mxu0 0
        %9076 = vmatprep.subr.bf16.mxu0 0
        %9077 = vmatpush1.bf16.msra.mxu0 0
        %9078 = vmatprep.subr.bf16.mxu0 0
        %9079 = vmatpush1.bf16.msra.mxu0 0
        %9080 = vmatprep.subr.bf16.mxu0 0
        %9081 = vmatpush1.bf16.msra.mxu0 0
        %9082 = vmatprep.subr.bf16.mxu0 0
        %9083 = vmatpush1.bf16.msra.mxu0 0
        %9084 = vmatprep.subr.bf16.mxu0 0
        %9085 = vmatpush1.bf16.msra.mxu0 0
        %9086 = vmatprep.subr.bf16.mxu0 0
        %9087 = vmatpush1.bf16.msra.mxu0 0
        %9088 = vmatprep.subr.bf16.mxu0 0
        %9089 = vmatpush1.bf16.msra.mxu0 0
        %9090 = vmatprep.subr.bf16.mxu0 0
        %9091 = vmatpush1.bf16.msra.mxu0 0
        %9092 = vmatprep.subr.bf16.mxu0 0
        %9093 = vmatpush1.bf16.msra.mxu0 0
        %9094 = vmatprep.subr.bf16.mxu0 0
        %9095 = vmatpush1.bf16.msra.mxu0 0
        %9096 = vmatprep.subr.bf16.mxu0 0
        %9097 = vmatpush1.bf16.msra.mxu0 0
        %9098 = vmatprep.subr.bf16.mxu0 0
        %9099 = vmatpush1.bf16.msra.mxu0 0
        %9100 = vmatprep.mubr.bf16.mxu0 0
        %9101 = vmatmul.mubr.bf16.gmra.mrb[0].mxu0 %v9063
        %v9102 = vpop.f32.mrb[0].mxu0
        %v9103 = vadd.f32 0.0, %v9102
        %v9104 = vpop.f32.mrb[0].mxu0
        %v9105 = vpop.f32.mrb[0].mxu0
        %v9106 = vpop.f32.mrb[0].mxu0
        %9107 = vdwg.mxu0
        %v9109 = vsel %vm8778, %v8915, 0
        %v9112 = vsel %vm8926, %v8217, 0
        %9114 = vmatprep.subr.bf16.mxu0 0
        %9115 = vmatpush1.bf16.msra.mxu0 %v9112
        %9116 = vmatprep.subr.bf16.mxu0 0
        %9117 = vmatpush1.bf16.msra.mxu0 0
        %9118 = vmatprep.subr.bf16.mxu0 0
        %9119 = vmatpush1.bf16.msra.mxu0 0
        %9120 = vmatprep.subr.bf16.mxu0 0
        %9121 = vmatpush1.bf16.msra.mxu0 0
        %9122 = vmatprep.subr.bf16.mxu0 0
        %9123 = vmatpush1.bf16.msra.mxu0 0
        %9124 = vmatprep.subr.bf16.mxu0 0
        %9125 = vmatpush1.bf16.msra.mxu0 0
        %9126 = vmatprep.subr.bf16.mxu0 0
        %9127 = vmatpush1.bf16.msra.mxu0 0
        %9128 = vmatprep.subr.bf16.mxu0 0
        %9129 = vmatpush1.bf16.msra.mxu0 0
        %9130 = vmatprep.subr.bf16.mxu0 0
        %9131 = vmatpush1.bf16.msra.mxu0 0
        %9132 = vmatprep.subr.bf16.mxu0 0
        %9133 = vmatpush1.bf16.msra.mxu0 0
        %9134 = vmatprep.subr.bf16.mxu0 0
        %9135 = vmatpush1.bf16.msra.mxu0 0
        %9136 = vmatprep.subr.bf16.mxu0 0
        %9137 = vmatpush1.bf16.msra.mxu0 0
        %9138 = vmatprep.subr.bf16.mxu0 0
        %9139 = vmatpush1.bf16.msra.mxu0 0
        %9140 = vmatprep.subr.bf16.mxu0 0
        %9141 = vmatpush1.bf16.msra.mxu0 0
        %9142 = vmatprep.subr.bf16.mxu0 0
        %9143 = vmatpush1.bf16.msra.mxu0 0
        %9144 = vmatprep.subr.bf16.mxu0 0
        %9145 = vmatpush1.bf16.msra.mxu0 0
        %9146 = vmatprep.mubr.bf16.mxu0 0
        %9147 = vmatmul.mubr.bf16.gmra.mrb[0].mxu0 %v9109
        %v9148 = vpop.f32.mrb[0].mxu0
        %v9149 = vadd.f32 0.0, %v9148
        %v9150 = vpop.f32.mrb[0].mxu0
        %v9151 = vpop.f32.mrb[0].mxu0
        %v9152 = vpop.f32.mrb[0].mxu0
        %9153 = vdwg.mxu0
        %v9155 = vsel %vm8778, %v8916, 0
        %v9158 = vsel %vm8926, %v8218, 0
        %9160 = vmatprep.subr.bf16.mxu0 0
        %9161 = vmatpush1.bf16.msra.mxu0 %v9158
        %9162 = vmatprep.subr.bf16.mxu0 0
        %9163 = vmatpush1.bf16.msra.mxu0 0
        %9164 = vmatprep.subr.bf16.mxu0 0
        %9165 = vmatpush1.bf16.msra.mxu0 0
        %9166 = vmatprep.subr.bf16.mxu0 0
        %9167 = vmatpush1.bf16.msra.mxu0 0
        %9168 = vmatprep.subr.bf16.mxu0 0
        %9169 = vmatpush1.bf16.msra.mxu0 0
        %9170 = vmatprep.subr.bf16.mxu0 0
        %9171 = vmatpush1.bf16.msra.mxu0 0
        %9172 = vmatprep.subr.bf16.mxu0 0
        %9173 = vmatpush1.bf16.msra.mxu0 0
        %9174 = vmatprep.subr.bf16.mxu0 0
        %9175 = vmatpush1.bf16.msra.mxu0 0
        %9176 = vmatprep.subr.bf16.mxu0 0
        %9177 = vmatpush1.bf16.msra.mxu0 0
        %9178 = vmatprep.subr.bf16.mxu0 0
        %9179 = vmatpush1.bf16.msra.mxu0 0
        %9180 = vmatprep.subr.bf16.mxu0 0
        %9181 = vmatpush1.bf16.msra.mxu0 0
        %9182 = vmatprep.subr.bf16.mxu0 0
        %9183 = vmatpush1.bf16.msra.mxu0 0
        %9184 = vmatprep.subr.bf16.mxu0 0
        %9185 = vmatpush1.bf16.msra.mxu0 0
        %9186 = vmatprep.subr.bf16.mxu0 0
        %9187 = vmatpush1.bf16.msra.mxu0 0
        %9188 = vmatprep.subr.bf16.mxu0 0
        %9189 = vmatpush1.bf16.msra.mxu0 0
        %9190 = vmatprep.subr.bf16.mxu0 0
        %9191 = vmatpush1.bf16.msra.mxu0 0
        %9192 = vmatprep.mubr.bf16.mxu0 0
        %9193 = vmatmul.mubr.bf16.gmra.mrb[0].mxu0 %v9155
        %v9194 = vpop.f32.mrb[0].mxu0
        %v9195 = vadd.f32 0.0, %v9194
        %v9196 = vpop.f32.mrb[0].mxu0
        %v9197 = vpop.f32.mrb[0].mxu0
        %v9198 = vpop.f32.mrb[0].mxu0
        %9199 = vdwg.mxu0
        %v9201 = vsel %vm8778, %v8917, 0
        %v9204 = vsel %vm8926, %v8219, 0
        %9206 = vmatprep.subr.bf16.mxu0 0
        %9207 = vmatpush1.bf16.msra.mxu0 %v9204
        %9208 = vmatprep.subr.bf16.mxu0 0
        %9209 = vmatpush1.bf16.msra.mxu0 0
        %9210 = vmatprep.subr.bf16.mxu0 0
        %9211 = vmatpush1.bf16.msra.mxu0 0
        %9212 = vmatprep.subr.bf16.mxu0 0
        %9213 = vmatpush1.bf16.msra.mxu0 0
        %9214 = vmatprep.subr.bf16.mxu0 0
        %9215 = vmatpush1.bf16.msra.mxu0 0
        %9216 = vmatprep.subr.bf16.mxu0 0
        %9217 = vmatpush1.bf16.msra.mxu0 0
        %9218 = vmatprep.subr.bf16.mxu0 0
        %9219 = vmatpush1.bf16.msra.mxu0 0
        %9220 = vmatprep.subr.bf16.mxu0 0
        %9221 = vmatpush1.bf16.msra.mxu0 0
        %9222 = vmatprep.subr.bf16.mxu0 0
        %9223 = vmatpush1.bf16.msra.mxu0 0
        %9224 = vmatprep.subr.bf16.mxu0 0
        %9225 = vmatpush1.bf16.msra.mxu0 0
        %9226 = vmatprep.subr.bf16.mxu0 0
        %9227 = vmatpush1.bf16.msra.mxu0 0
        %9228 = vmatprep.subr.bf16.mxu0 0
        %9229 = vmatpush1.bf16.msra.mxu0 0
        %9230 = vmatprep.subr.bf16.mxu0 0
        %9231 = vmatpush1.bf16.msra.mxu0 0
        %9232 = vmatprep.subr.bf16.mxu0 0
        %9233 = vmatpush1.bf16.msra.mxu0 0
        %9234 = vmatprep.subr.bf16.mxu0 0
        %9235 = vmatpush1.bf16.msra.mxu0 0
        %9236 = vmatprep.subr.bf16.mxu0 0
        %9237 = vmatpush1.bf16.msra.mxu0 0
        %9238 = vmatprep.mubr.bf16.mxu0 0
        %9239 = vmatmul.mubr.bf16.gmra.mrb[0].mxu0 %v9201
        %v9240 = vpop.f32.mrb[0].mxu0
        %v9241 = vadd.f32 0.0, %v9240
        %v9242 = vpop.f32.mrb[0].mxu0
        %v9243 = vpop.f32.mrb[0].mxu0
        %v9244 = vpop.f32.mrb[0].mxu0
        %9245 = vdwg.mxu0
        %v9247 = vsel %vm8778, %v8918, 0
        %v9250 = vsel %vm8926, %v8220, 0
        %9252 = vmatprep.subr.bf16.mxu0 0
        %9253 = vmatpush1.bf16.msra.mxu0 %v9250
        %9254 = vmatprep.subr.bf16.mxu0 0
        %9255 = vmatpush1.bf16.msra.mxu0 0
        %9256 = vmatprep.subr.bf16.mxu0 0
        %9257 = vmatpush1.bf16.msra.mxu0 0
        %9258 = vmatprep.subr.bf16.mxu0 0
        %9259 = vmatpush1.bf16.msra.mxu0 0
        %9260 = vmatprep.subr.bf16.mxu0 0
        %9261 = vmatpush1.bf16.msra.mxu0 0
        %9262 = vmatprep.subr.bf16.mxu0 0
        %9263 = vmatpush1.bf16.msra.mxu0 0
        %9264 = vmatprep.subr.bf16.mxu0 0
        %9265 = vmatpush1.bf16.msra.mxu0 0
        %9266 = vmatprep.subr.bf16.mxu0 0
        %9267 = vmatpush1.bf16.msra.mxu0 0
        %9268 = vmatprep.subr.bf16.mxu0 0
        %9269 = vmatpush1.bf16.msra.mxu0 0
        %9270 = vmatprep.subr.bf16.mxu0 0
        %9271 = vmatpush1.bf16.msra.mxu0 0
        %9272 = vmatprep.subr.bf16.mxu0 0
        %9273 = vmatpush1.bf16.msra.mxu0 0
        %9274 = vmatprep.subr.bf16.mxu0 0
        %9275 = vmatpush1.bf16.msra.mxu0 0
        %9276 = vmatprep.subr.bf16.mxu0 0
        %9277 = vmatpush1.bf16.msra.mxu0 0
        %9278 = vmatprep.subr.bf16.mxu0 0
        %9279 = vmatpush1.bf16.msra.mxu0 0
        %9280 = vmatprep.subr.bf16.mxu0 0
        %9281 = vmatpush1.bf16.msra.mxu0 0
        %9282 = vmatprep.subr.bf16.mxu0 0
        %9283 = vmatpush1.bf16.msra.mxu0 0
        %9284 = vmatprep.mubr.bf16.mxu0 0
        %9285 = vmatmul.mubr.bf16.gmra.mrb[0].mxu0 %v9247
        %v9286 = vpop.f32.mrb[0].mxu0
        %v9287 = vadd.f32 0.0, %v9286
        %v9288 = vpop.f32.mrb[0].mxu0
        %v9289 = vpop.f32.mrb[0].mxu0
        %v9290 = vpop.f32.mrb[0].mxu0
        %9291 = vdwg.mxu0
        %v9293 = vsel %vm8778, %v8919, 0
        %v9296 = vsel %vm8926, %v8221, 0
        %9298 = vmatprep.subr.bf16.mxu0 0
        %9299 = vmatpush1.bf16.msra.mxu0 %v9296
        %9300 = vmatprep.subr.bf16.mxu0 0
        %9301 = vmatpush1.bf16.msra.mxu0 0
        %9302 = vmatprep.subr.bf16.mxu0 0
        %9303 = vmatpush1.bf16.msra.mxu0 0
        %9304 = vmatprep.subr.bf16.mxu0 0
        %9305 = vmatpush1.bf16.msra.mxu0 0
        %9306 = vmatprep.subr.bf16.mxu0 0
        %9307 = vmatpush1.bf16.msra.mxu0 0
        %9308 = vmatprep.subr.bf16.mxu0 0
        %9309 = vmatpush1.bf16.msra.mxu0 0
        %9310 = vmatprep.subr.bf16.mxu0 0
        %9311 = vmatpush1.bf16.msra.mxu0 0
        %9312 = vmatprep.subr.bf16.mxu0 0
        %9313 = vmatpush1.bf16.msra.mxu0 0
        %9314 = vmatprep.subr.bf16.mxu0 0
        %9315 = vmatpush1.bf16.msra.mxu0 0
        %9316 = vmatprep.subr.bf16.mxu0 0
        %9317 = vmatpush1.bf16.msra.mxu0 0
        %9318 = vmatprep.subr.bf16.mxu0 0
        %9319 = vmatpush1.bf16.msra.mxu0 0
        %9320 = vmatprep.subr.bf16.mxu0 0
        %9321 = vmatpush1.bf16.msra.mxu0 0
        %9322 = vmatprep.subr.bf16.mxu0 0
        %9323 = vmatpush1.bf16.msra.mxu0 0
        %9324 = vmatprep.subr.bf16.mxu0 0
        %9325 = vmatpush1.bf16.msra.mxu0 0
        %9326 = vmatprep.subr.bf16.mxu0 0
        %9327 = vmatpush1.bf16.msra.mxu0 0
        %9328 = vmatprep.subr.bf16.mxu0 0
        %9329 = vmatpush1.bf16.msra.mxu0 0
        %9330 = vmatprep.mubr.bf16.mxu0 0
        %9331 = vmatmul.mubr.bf16.gmra.mrb[0].mxu0 %v9293
        %v9332 = vpop.f32.mrb[0].mxu0
        %v9333 = vadd.f32 0.0, %v9332
        %v9334 = vpop.f32.mrb[0].mxu0
        %v9335 = vpop.f32.mrb[0].mxu0
        %v9336 = vpop.f32.mrb[0].mxu0
        %9337 = vdwg.mxu0
        %v9339 = vsel %vm8778, %v8920, 0
        %v9342 = vsel %vm8926, %v8222, 0
        %9344 = vmatprep.subr.bf16.mxu0 0
        %9345 = vmatpush1.bf16.msra.mxu0 %v9342
        %9346 = vmatprep.subr.bf16.mxu0 0
        %9347 = vmatpush1.bf16.msra.mxu0 0
        %9348 = vmatprep.subr.bf16.mxu0 0
        %9349 = vmatpush1.bf16.msra.mxu0 0
        %9350 = vmatprep.subr.bf16.mxu0 0
        %9351 = vmatpush1.bf16.msra.mxu0 0
        %9352 = vmatprep.subr.bf16.mxu0 0
        %9353 = vmatpush1.bf16.msra.mxu0 0
        %9354 = vmatprep.subr.bf16.mxu0 0
        %9355 = vmatpush1.bf16.msra.mxu0 0
        %9356 = vmatprep.subr.bf16.mxu0 0
        %9357 = vmatpush1.bf16.msra.mxu0 0
        %9358 = vmatprep.subr.bf16.mxu0 0
        %9359 = vmatpush1.bf16.msra.mxu0 0
        %9360 = vmatprep.subr.bf16.mxu0 0
        %9361 = vmatpush1.bf16.msra.mxu0 0
        %9362 = vmatprep.subr.bf16.mxu0 0
        %9363 = vmatpush1.bf16.msra.mxu0 0
        %9364 = vmatprep.subr.bf16.mxu0 0
        %9365 = vmatpush1.bf16.msra.mxu0 0
        %9366 = vmatprep.subr.bf16.mxu0 0
        %9367 = vmatpush1.bf16.msra.mxu0 0
        %9368 = vmatprep.subr.bf16.mxu0 0
        %9369 = vmatpush1.bf16.msra.mxu0 0
        %9370 = vmatprep.subr.bf16.mxu0 0
        %9371 = vmatpush1.bf16.msra.mxu0 0
        %9372 = vmatprep.subr.bf16.mxu0 0
        %9373 = vmatpush1.bf16.msra.mxu0 0
        %9374 = vmatprep.subr.bf16.mxu0 0
        %9375 = vmatpush1.bf16.msra.mxu0 0
        %9376 = vmatprep.mubr.bf16.mxu0 0
        %9377 = vmatmul.mubr.bf16.gmra.mrb[0].mxu0 %v9339
        %v9378 = vpop.f32.mrb[0].mxu0
        %v9379 = vadd.f32 0.0, %v9378
        %v9380 = vpop.f32.mrb[0].mxu0
        %v9381 = vpop.f32.mrb[0].mxu0
        %v9382 = vpop.f32.mrb[0].mxu0
        %9383 = vdwg.mxu0
        %v9385 = vsel %vm8778, %v8921, 0
        %v9388 = vsel %vm8926, %v8223, 0
        %9390 = vmatprep.subr.bf16.mxu0 0
        %9391 = vmatpush1.bf16.msra.mxu0 %v9388
        %9392 = vmatprep.subr.bf16.mxu0 0
        %9393 = vmatpush1.bf16.msra.mxu0 0
        %9394 = vmatprep.subr.bf16.mxu0 0
        %9395 = vmatpush1.bf16.msra.mxu0 0
        %9396 = vmatprep.subr.bf16.mxu0 0
        %9397 = vmatpush1.bf16.msra.mxu0 0
        %9398 = vmatprep.subr.bf16.mxu0 0
        %9399 = vmatpush1.bf16.msra.mxu0 0
        %9400 = vmatprep.subr.bf16.mxu0 0
        %9401 = vmatpush1.bf16.msra.mxu0 0
        %9402 = vmatprep.subr.bf16.mxu0 0
        %9403 = vmatpush1.bf16.msra.mxu0 0
        %9404 = vmatprep.subr.bf16.mxu0 0
        %9405 = vmatpush1.bf16.msra.mxu0 0
        %9406 = vmatprep.subr.bf16.mxu0 0
        %9407 = vmatpush1.bf16.msra.mxu0 0
        %9408 = vmatprep.subr.bf16.mxu0 0
        %9409 = vmatpush1.bf16.msra.mxu0 0
        %9410 = vmatprep.subr.bf16.mxu0 0
        %9411 = vmatpush1.bf16.msra.mxu0 0
        %9412 = vmatprep.subr.bf16.mxu0 0
        %9413 = vmatpush1.bf16.msra.mxu0 0
        %9414 = vmatprep.subr.bf16.mxu0 0
        %9415 = vmatpush1.bf16.msra.mxu0 0
        %9416 = vmatprep.subr.bf16.mxu0 0
        %9417 = vmatpush1.bf16.msra.mxu0 0
        %9418 = vmatprep.subr.bf16.mxu0 0
        %9419 = vmatpush1.bf16.msra.mxu0 0
        %9420 = vmatprep.subr.bf16.mxu0 0
        %9421 = vmatpush1.bf16.msra.mxu0 0
        %9422 = vmatprep.mubr.bf16.mxu0 0
        %9423 = vmatmul.mubr.bf16.gmra.mrb[0].mxu0 %v9385
        %v9424 = vpop.f32.mrb[0].mxu0
        %v9425 = vadd.f32 0.0, %v9424
        %v9426 = vpop.f32.mrb[0].mxu0
        %v9427 = vpop.f32.mrb[0].mxu0
        %v9428 = vpop.f32.mrb[0].mxu0
        %9429 = vdwg.mxu0
        %v9431 = vsel %vm8778, %v8922, 0
        %v9434 = vsel %vm8926, %v8224, 0
        %9436 = vmatprep.subr.bf16.mxu0 0
        %9437 = vmatpush1.bf16.msra.mxu0 %v9434
        %9438 = vmatprep.subr.bf16.mxu0 0
        %9439 = vmatpush1.bf16.msra.mxu0 0
        %9440 = vmatprep.subr.bf16.mxu0 0
        %9441 = vmatpush1.bf16.msra.mxu0 0
        %9442 = vmatprep.subr.bf16.mxu0 0
        %9443 = vmatpush1.bf16.msra.mxu0 0
        %9444 = vmatprep.subr.bf16.mxu0 0
        %9445 = vmatpush1.bf16.msra.mxu0 0
        %9446 = vmatprep.subr.bf16.mxu0 0
        %9447 = vmatpush1.bf16.msra.mxu0 0
        %9448 = vmatprep.subr.bf16.mxu0 0
        %9449 = vmatpush1.bf16.msra.mxu0 0
        %9450 = vmatprep.subr.bf16.mxu0 0
        %9451 = vmatpush1.bf16.msra.mxu0 0
        %9452 = vmatprep.subr.bf16.mxu0 0
        %9453 = vmatpush1.bf16.msra.mxu0 0
        %9454 = vmatprep.subr.bf16.mxu0 0
        %9455 = vmatpush1.bf16.msra.mxu0 0
        %9456 = vmatprep.subr.bf16.mxu0 0
        %9457 = vmatpush1.bf16.msra.mxu0 0
        %9458 = vmatprep.subr.bf16.mxu0 0
        %9459 = vmatpush1.bf16.msra.mxu0 0
        %9460 = vmatprep.subr.bf16.mxu0 0
        %9461 = vmatpush1.bf16.msra.mxu0 0
        %9462 = vmatprep.subr.bf16.mxu0 0
        %9463 = vmatpush1.bf16.msra.mxu0 0
        %9464 = vmatprep.subr.bf16.mxu0 0
        %9465 = vmatpush1.bf16.msra.mxu0 0
        %9466 = vmatprep.subr.bf16.mxu0 0
        %9467 = vmatpush1.bf16.msra.mxu0 0
        %9468 = vmatprep.mubr.bf16.mxu0 0
        %9469 = vmatmul.mubr.bf16.gmra.mrb[0].mxu0 %v9431
        %v9470 = vpop.f32.mrb[0].mxu0
        %v9471 = vadd.f32 0.0, %v9470
        %v9472 = vpop.f32.mrb[0].mxu0
        %v9473 = vpop.f32.mrb[0].mxu0
        %v9474 = vpop.f32.mrb[0].mxu0
        %9475 = vdwg.mxu0
        %v9476 = vcombine.low %v8965, %v9057
        %v9477 = vcombine.high %v8965, %v9057
        %v9479 = vunpack.c.l.s4 1983009808
        %v9480 = vunpack.c.0.s8 %v9479
        %v9481 = vlaneseq
        %v9482 = vshrl.u32 %v9481, 7
        %v9483 = vsub.s32 %v9480, %v9482
        %v9484 = vrot.slane %v9476, %v9483
        %v9486 = vunpack.c.l.s4 1983009808
        %v9487 = vunpack.c.0.s8 %v9486
        %v9488 = vlaneseq
        %v9489 = vshrl.u32 %v9488, 7
        %v9490 = vsub.s32 %v9487, %v9489
        %v9491 = vrot.slane %v9477, %v9490
        %v9492 = vcombine.low %v9011, %v9103
        %v9493 = vcombine.high %v9011, %v9103
        %v9495 = vunpack.c.l.s4 1983009808
        %v9496 = vunpack.c.0.s8 %v9495
        %v9497 = vlaneseq
        %v9498 = vshrl.u32 %v9497, 7
        %v9499 = vsub.s32 %v9496, %v9498
        %v9500 = vrot.slane %v9492, %v9499
        %v9502 = vunpack.c.l.s4 1983009808
        %v9503 = vunpack.c.0.s8 %v9502
        %v9504 = vlaneseq
        %v9505 = vshrl.u32 %v9504, 7
        %v9506 = vsub.s32 %v9503, %v9505
        %v9507 = vrot.slane %v9493, %v9506
        %v9508 = vcombine.low %v9149, %v9241
        %v9509 = vcombine.high %v9149, %v9241
        %v9511 = vunpack.c.l.s4 1983009808
        %v9512 = vunpack.c.0.s8 %v9511
        %v9513 = vlaneseq
        %v9514 = vshrl.u32 %v9513, 7
        %v9515 = vsub.s32 %v9512, %v9514
        %v9516 = vrot.slane %v9508, %v9515
        %v9518 = vunpack.c.l.s4 1983009808
        %v9519 = vunpack.c.0.s8 %v9518
        %v9520 = vlaneseq
        %v9521 = vshrl.u32 %v9520, 7
        %v9522 = vsub.s32 %v9519, %v9521
        %v9523 = vrot.slane %v9509, %v9522
        %v9524 = vcombine.low %v9195, %v9287
        %v9525 = vcombine.high %v9195, %v9287
        %v9527 = vunpack.c.l.s4 1983009808
        %v9528 = vunpack.c.0.s8 %v9527
        %v9529 = vlaneseq
        %v9530 = vshrl.u32 %v9529, 7
        %v9531 = vsub.s32 %v9528, %v9530
        %v9532 = vrot.slane %v9524, %v9531
        %v9534 = vunpack.c.l.s4 1983009808
        %v9535 = vunpack.c.0.s8 %v9534
        %v9536 = vlaneseq
        %v9537 = vshrl.u32 %v9536, 7
        %v9538 = vsub.s32 %v9535, %v9537
        %v9539 = vrot.slane %v9525, %v9538
        %v9540 = vcombine.low %v9484, %v9500
        %v9541 = vcombine.high %v9484, %v9500
        %v9543 = vunpack.c.l.s4 1934713408
        %v9544 = vunpack.c.0.s8 %v9543
        %v9545 = vlaneseq
        %v9546 = vshrl.u32 %v9545, 7
        %v9547 = vsub.s32 %v9544, %v9546
        %v9548 = vrot.slane %v9540, %v9547
        %v9550 = vunpack.c.l.s4 1934713408
        %v9551 = vunpack.c.0.s8 %v9550
        %v9552 = vlaneseq
        %v9553 = vshrl.u32 %v9552, 7
        %v9554 = vsub.s32 %v9551, %v9553
        %v9555 = vrot.slane %v9541, %v9554
        %v9556 = vcombine.low %v9491, %v9507
        %v9557 = vcombine.high %v9491, %v9507
        %v9559 = vunpack.c.l.s4 1934713408
        %v9560 = vunpack.c.0.s8 %v9559
        %v9561 = vlaneseq
        %v9562 = vshrl.u32 %v9561, 7
        %v9563 = vsub.s32 %v9560, %v9562
        %v9564 = vrot.slane %v9556, %v9563
        %v9566 = vunpack.c.l.s4 1934713408
        %v9567 = vunpack.c.0.s8 %v9566
        %v9568 = vlaneseq
        %v9569 = vshrl.u32 %v9568, 7
        %v9570 = vsub.s32 %v9567, %v9569
        %v9571 = vrot.slane %v9557, %v9570
        %v9572 = vcombine.low %v9516, %v9532
        %v9573 = vcombine.high %v9516, %v9532
        %v9575 = vunpack.c.l.s4 1934713408
        %v9576 = vunpack.c.0.s8 %v9575
        %v9577 = vlaneseq
        %v9578 = vshrl.u32 %v9577, 7
        %v9579 = vsub.s32 %v9576, %v9578
        %v9580 = vrot.slane %v9572, %v9579
        %v9582 = vunpack.c.l.s4 1934713408
        %v9583 = vunpack.c.0.s8 %v9582
        %v9584 = vlaneseq
        %v9585 = vshrl.u32 %v9584, 7
        %v9586 = vsub.s32 %v9583, %v9585
        %v9587 = vrot.slane %v9573, %v9586
        %v9588 = vcombine.low %v9523, %v9539
        %v9589 = vcombine.high %v9523, %v9539
        %v9591 = vunpack.c.l.s4 1934713408
        %v9592 = vunpack.c.0.s8 %v9591
        %v9593 = vlaneseq
        %v9594 = vshrl.u32 %v9593, 7
        %v9595 = vsub.s32 %v9592, %v9594
        %v9596 = vrot.slane %v9588, %v9595
        %v9598 = vunpack.c.l.s4 1934713408
        %v9599 = vunpack.c.0.s8 %v9598
        %v9600 = vlaneseq
        %v9601 = vshrl.u32 %v9600, 7
        %v9602 = vsub.s32 %v9599, %v9601
        %v9603 = vrot.slane %v9589, %v9602
        %v9604 = vcombine.low %v9548, %v9580
        %v9605 = vcombine.high %v9548, %v9580
        %v9606 = vcombine.low %v9555, %v9587
        %v9607 = vcombine.high %v9555, %v9587
        %v9608 = vcombine.low %v9564, %v9596
        %v9609 = vcombine.high %v9564, %v9596
        %v9610 = vcombine.low %v9571, %v9603
        %v9611 = vcombine.high %v9571, %v9603
        %v9612 = vcombine.low %v9333, %v9425
        %v9613 = vcombine.high %v9333, %v9425
        %v9615 = vunpack.c.l.s4 1983009808
        %v9616 = vunpack.c.0.s8 %v9615
        %v9617 = vlaneseq
        %v9618 = vshrl.u32 %v9617, 7
        %v9619 = vsub.s32 %v9616, %v9618
        %v9620 = vrot.slane %v9612, %v9619
        %v9622 = vunpack.c.l.s4 1983009808
        %v9623 = vunpack.c.0.s8 %v9622
        %v9624 = vlaneseq
        %v9625 = vshrl.u32 %v9624, 7
        %v9626 = vsub.s32 %v9623, %v9625
        %v9627 = vrot.slane %v9613, %v9626
        %v9628 = vcombine.low %v9379, %v9471
        %v9629 = vcombine.high %v9379, %v9471
        %v9631 = vunpack.c.l.s4 1983009808
        %v9632 = vunpack.c.0.s8 %v9631
        %v9633 = vlaneseq
        %v9634 = vshrl.u32 %v9633, 7
        %v9635 = vsub.s32 %v9632, %v9634
        %v9636 = vrot.slane %v9628, %v9635
        %v9638 = vunpack.c.l.s4 1983009808
        %v9639 = vunpack.c.0.s8 %v9638
        %v9640 = vlaneseq
        %v9641 = vshrl.u32 %v9640, 7
        %v9642 = vsub.s32 %v9639, %v9641
        %v9643 = vrot.slane %v9629, %v9642
        %v9644 = vcombine.low %v9620, %v9636
        %v9645 = vcombine.high %v9620, %v9636
        %v9647 = vunpack.c.l.s4 1934713408
        %v9648 = vunpack.c.0.s8 %v9647
        %v9649 = vlaneseq
        %v9650 = vshrl.u32 %v9649, 7
        %v9651 = vsub.s32 %v9648, %v9650
        %v9652 = vrot.slane %v9644, %v9651
        %v9654 = vunpack.c.l.s4 1934713408
        %v9655 = vunpack.c.0.s8 %v9654
        %v9656 = vlaneseq
        %v9657 = vshrl.u32 %v9656, 7
        %v9658 = vsub.s32 %v9655, %v9657
        %v9659 = vrot.slane %v9645, %v9658
        %v9660 = vcombine.low %v9627, %v9643
        %v9661 = vcombine.high %v9627, %v9643
        %v9663 = vunpack.c.l.s4 1934713408
        %v9664 = vunpack.c.0.s8 %v9663
        %v9665 = vlaneseq
        %v9666 = vshrl.u32 %v9665, 7
        %v9667 = vsub.s32 %v9664, %v9666
        %v9668 = vrot.slane %v9660, %v9667
        %v9670 = vunpack.c.l.s4 1934713408
        %v9671 = vunpack.c.0.s8 %v9670
        %v9672 = vlaneseq
        %v9673 = vshrl.u32 %v9672, 7
        %v9674 = vsub.s32 %v9671, %v9673
        %v9675 = vrot.slane %v9661, %v9674
        %v9676 = vcombine.high %v9652, 0.0
        %v9677 = vcombine.high %v9659, 0.0
        %v9678 = vcombine.high %v9668, 0.0
        %v9679 = vcombine.high %v9675, 0.0
        %v9680 = vcombine.low %v9604, %v9606
        %v9681 = vcombine.high %v9604, %v9606
        %v9683 = vunpack.c.l.s4 1983009808
        %v9684 = vunpack.c.0.s8 %v9683
        %v9685 = vlaneseq
        %v9686 = vshrl.u32 %v9685, 7
        %v9687 = vsub.s32 %v9684, %v9686
        %v9688 = vrot.slane %v9680, %v9687
        %v9690 = vunpack.c.l.s4 1983009808
        %v9691 = vunpack.c.0.s8 %v9690
        %v9692 = vlaneseq
        %v9693 = vshrl.u32 %v9692, 7
        %v9694 = vsub.s32 %v9691, %v9693
        %v9695 = vrot.slane %v9681, %v9694
        %v9696 = vcombine.low %v9605, %v9607
        %v9697 = vcombine.high %v9605, %v9607
        %v9699 = vunpack.c.l.s4 1983009808
        %v9700 = vunpack.c.0.s8 %v9699
        %v9701 = vlaneseq
        %v9702 = vshrl.u32 %v9701, 7
        %v9703 = vsub.s32 %v9700, %v9702
        %v9704 = vrot.slane %v9696, %v9703
        %v9706 = vunpack.c.l.s4 1983009808
        %v9707 = vunpack.c.0.s8 %v9706
        %v9708 = vlaneseq
        %v9709 = vshrl.u32 %v9708, 7
        %v9710 = vsub.s32 %v9707, %v9709
        %v9711 = vrot.slane %v9697, %v9710
        %v9712 = vcombine.low %v9608, %v9610
        %v9713 = vcombine.high %v9608, %v9610
        %v9715 = vunpack.c.l.s4 1983009808
        %v9716 = vunpack.c.0.s8 %v9715
        %v9717 = vlaneseq
        %v9718 = vshrl.u32 %v9717, 7
        %v9719 = vsub.s32 %v9716, %v9718
        %v9720 = vrot.slane %v9712, %v9719
        %v9722 = vunpack.c.l.s4 1983009808
        %v9723 = vunpack.c.0.s8 %v9722
        %v9724 = vlaneseq
        %v9725 = vshrl.u32 %v9724, 7
        %v9726 = vsub.s32 %v9723, %v9725
        %v9727 = vrot.slane %v9713, %v9726
        %v9728 = vcombine.low %v9609, %v9611
        %v9729 = vcombine.high %v9609, %v9611
        %v9731 = vunpack.c.l.s4 1983009808
        %v9732 = vunpack.c.0.s8 %v9731
        %v9733 = vlaneseq
        %v9734 = vshrl.u32 %v9733, 7
        %v9735 = vsub.s32 %v9732, %v9734
        %v9736 = vrot.slane %v9728, %v9735
        %v9738 = vunpack.c.l.s4 1983009808
        %v9739 = vunpack.c.0.s8 %v9738
        %v9740 = vlaneseq
        %v9741 = vshrl.u32 %v9740, 7
        %v9742 = vsub.s32 %v9739, %v9741
        %v9743 = vrot.slane %v9729, %v9742
        %v9744 = vcombine.low %v9688, %v9704
        %v9745 = vcombine.high %v9688, %v9704
        %v9747 = vunpack.c.l.s4 1934713408
        %v9748 = vunpack.c.0.s8 %v9747
        %v9749 = vlaneseq
        %v9750 = vshrl.u32 %v9749, 7
        %v9751 = vsub.s32 %v9748, %v9750
        %v9752 = vrot.slane %v9744, %v9751
        %v9754 = vunpack.c.l.s4 1934713408
        %v9755 = vunpack.c.0.s8 %v9754
        %v9756 = vlaneseq
        %v9757 = vshrl.u32 %v9756, 7
        %v9758 = vsub.s32 %v9755, %v9757
        %v9759 = vrot.slane %v9745, %v9758
        %v9760 = vcombine.low %v9695, %v9711
        %v9761 = vcombine.high %v9695, %v9711
        %v9763 = vunpack.c.l.s4 1934713408
        %v9764 = vunpack.c.0.s8 %v9763
        %v9765 = vlaneseq
        %v9766 = vshrl.u32 %v9765, 7
        %v9767 = vsub.s32 %v9764, %v9766
        %v9768 = vrot.slane %v9760, %v9767
        %v9770 = vunpack.c.l.s4 1934713408
        %v9771 = vunpack.c.0.s8 %v9770
        %v9772 = vlaneseq
        %v9773 = vshrl.u32 %v9772, 7
        %v9774 = vsub.s32 %v9771, %v9773
        %v9775 = vrot.slane %v9761, %v9774
        %v9776 = vcombine.low %v9720, %v9736
        %v9777 = vcombine.high %v9720, %v9736
        %v9779 = vunpack.c.l.s4 1934713408
        %v9780 = vunpack.c.0.s8 %v9779
        %v9781 = vlaneseq
        %v9782 = vshrl.u32 %v9781, 7
        %v9783 = vsub.s32 %v9780, %v9782
        %v9784 = vrot.slane %v9776, %v9783
        %v9786 = vunpack.c.l.s4 1934713408
        %v9787 = vunpack.c.0.s8 %v9786
        %v9788 = vlaneseq
        %v9789 = vshrl.u32 %v9788, 7
        %v9790 = vsub.s32 %v9787, %v9789
        %v9791 = vrot.slane %v9777, %v9790
        %v9792 = vcombine.low %v9727, %v9743
        %v9793 = vcombine.high %v9727, %v9743
        %v9795 = vunpack.c.l.s4 1934713408
        %v9796 = vunpack.c.0.s8 %v9795
        %v9797 = vlaneseq
        %v9798 = vshrl.u32 %v9797, 7
        %v9799 = vsub.s32 %v9796, %v9798
        %v9800 = vrot.slane %v9792, %v9799
        %v9802 = vunpack.c.l.s4 1934713408
        %v9803 = vunpack.c.0.s8 %v9802
        %v9804 = vlaneseq
        %v9805 = vshrl.u32 %v9804, 7
        %v9806 = vsub.s32 %v9803, %v9805
        %v9807 = vrot.slane %v9793, %v9806
        %v9808 = vcombine.low %v9752, %v9784
        %v9809 = vcombine.high %v9752, %v9784
        %v9810 = vcombine.low %v9759, %v9791
        %v9811 = vcombine.high %v9759, %v9791
        %v9812 = vcombine.low %v9768, %v9800
        %v9813 = vcombine.high %v9768, %v9800
        %v9814 = vcombine.low %v9775, %v9807
        %v9815 = vcombine.high %v9775, %v9807
        %v9816 = vcombine.low %v9652, %v9659
        %v9818 = vunpack.c.l.s4 1983009808
        %v9819 = vunpack.c.0.s8 %v9818
        %v9820 = vlaneseq
        %v9821 = vshrl.u32 %v9820, 7
        %v9822 = vsub.s32 %v9819, %v9821
        %v9823 = vrot.slane %v9816, %v9822
        %v9824 = vcombine.low %v9676, %v9677
        %v9826 = vunpack.c.l.s4 1983009808
        %v9827 = vunpack.c.0.s8 %v9826
        %v9828 = vlaneseq
        %v9829 = vshrl.u32 %v9828, 7
        %v9830 = vsub.s32 %v9827, %v9829
        %v9831 = vrot.slane %v9824, %v9830
        %v9832 = vcombine.low %v9668, %v9675
        %v9834 = vunpack.c.l.s4 1983009808
        %v9835 = vunpack.c.0.s8 %v9834
        %v9836 = vlaneseq
        %v9837 = vshrl.u32 %v9836, 7
        %v9838 = vsub.s32 %v9835, %v9837
        %v9839 = vrot.slane %v9832, %v9838
        %v9840 = vcombine.low %v9678, %v9679
        %v9842 = vunpack.c.l.s4 1983009808
        %v9843 = vunpack.c.0.s8 %v9842
        %v9844 = vlaneseq
        %v9845 = vshrl.u32 %v9844, 7
        %v9846 = vsub.s32 %v9843, %v9845
        %v9847 = vrot.slane %v9840, %v9846
        %v9848 = vcombine.low %v9823, %v9831
        %v9849 = vcombine.high %v9823, %v9831
        %v9851 = vunpack.c.l.s4 1934713408
        %v9852 = vunpack.c.0.s8 %v9851
        %v9853 = vlaneseq
        %v9854 = vshrl.u32 %v9853, 7
        %v9855 = vsub.s32 %v9852, %v9854
        %v9856 = vrot.slane %v9848, %v9855
        %v9858 = vunpack.c.l.s4 1934713408
        %v9859 = vunpack.c.0.s8 %v9858
        %v9860 = vlaneseq
        %v9861 = vshrl.u32 %v9860, 7
        %v9862 = vsub.s32 %v9859, %v9861
        %v9863 = vrot.slane %v9849, %v9862
        %v9864 = vcombine.low %v9839, %v9847
        %v9865 = vcombine.high %v9839, %v9847
        %v9867 = vunpack.c.l.s4 1934713408
        %v9868 = vunpack.c.0.s8 %v9867
        %v9869 = vlaneseq
        %v9870 = vshrl.u32 %v9869, 7
        %v9871 = vsub.s32 %v9868, %v9870
        %v9872 = vrot.slane %v9864, %v9871
        %v9874 = vunpack.c.l.s4 1934713408
        %v9875 = vunpack.c.0.s8 %v9874
        %v9876 = vlaneseq
        %v9877 = vshrl.u32 %v9876, 7
        %v9878 = vsub.s32 %v9875, %v9877
        %v9879 = vrot.slane %v9865, %v9878
        %v9880 = vcombine.low %v9856, %v9872
        %v9881 = vcombine.high %v9856, %v9872
        %v9882 = vcombine.low %v9863, %v9879
        %v9883 = vcombine.high %v9863, %v9879
        %9885 = vrot.lane.b32.xlu0 %v9809, 64
        %v9886 = vpop.permute.xlu0 %9885
        %9889 = vrot.lane.b32.xlu0 %v9811, 64
        %v9890 = vpop.permute.xlu0 %9889
        %9893 = vrot.lane.b32.xlu0 %v9813, 64
        %v9894 = vpop.permute.xlu0 %9893
        %9897 = vrot.lane.b32.xlu0 %v9815, 64
        %v9898 = vpop.permute.xlu0 %9897
        %9901 = vrot.lane.b32.xlu0 %v9881, 64
        %v9902 = vpop.permute.xlu0 %9901
        %9905 = vrot.lane.b32.xlu0 %v9883, 64
        %v9906 = vpop.permute.xlu0 %9905
        %v9908 = vsel %vm8225, %v9808, %v9886
        %v9909 = vsel %vm8225, %v9810, %v9890
        %v9910 = vsel %vm8225, %v9812, %v9894
        %v9911 = vsel %vm8225, %v9814, %v9898
        %v9912 = vsel %vm8225, %v9880, %v9902
        %v9913 = vsel %vm8225, %v9882, %v9906
        %v9914 = vpack.c.bf16 %v9908, %v9908
        %v9915 = vpack.c.bf16 %v9909, %v9909
        %v9916 = vpack.c.bf16 %v9910, %v9910
        %v9917 = vpack.c.bf16 %v9911, %v9911
        %v9918 = vpack.c.bf16 %v9912, %v9912
        %v9919 = vpack.c.bf16 %v9913, %v9913
        %v9920 = vld [vmem:[#allocation11] sm:$0xff]
        %v9921 = vld [vmem:[#allocation11 + $0x8] sm:$0xff]
        %v9922 = vld [vmem:[#allocation11 + $0x10] sm:$0xff]
        %v9923 = vld [vmem:[#allocation11 + $0x18] sm:$0xff]
        %v9924 = vld [vmem:[#allocation11 + $0x20] sm:$0xff]
        %v9925 = vld [vmem:[#allocation11 + $0x28] sm:$0xff]
        %v9926 = vld [vmem:[#allocation11 + $0x30] sm:$0xff]
        %v9927 = vld [vmem:[#allocation11 + $0x38] sm:$0xff]
        %v9928 = vld [vmem:[#allocation11 + $0x40] sm:$0xff]
        %v9929 = vld [vmem:[#allocation11 + $0x48] sm:$0xff]
        %v9930 = vld [vmem:[#allocation11 + $0x50] sm:$0xff]
        %v9931 = vld [vmem:[#allocation11 + $0x58] sm:$0xff]
        %v9932 = vld [vmem:[#allocation11 + $0x60] sm:$0xff]
        %v9933 = vld [vmem:[#allocation11 + $0x68] sm:$0xff]
        %v9934 = vld [vmem:[#allocation11 + $0x70] sm:$0xff]
        %v9935 = vld [vmem:[#allocation11 + $0x78] sm:$0xff]
        %v9936 = vld [vmem:[#allocation11 + $0x80] sm:$0xff]
        %v9937 = vld [vmem:[#allocation11 + $0x88] sm:$0xff]
        %v9938 = vld [vmem:[#allocation11 + $0x90] sm:$0xff]
        %v9939 = vld [vmem:[#allocation11 + $0x98] sm:$0xff]
        %v9940 = vld [vmem:[#allocation11 + $0xa0] sm:$0xff]
        %v9941 = vld [vmem:[#allocation11 + $0xa8] sm:$0xff]
        %v9942 = vld [vmem:[#allocation11 + $0xb0] sm:$0xff]
        %v9943 = vld [vmem:[#allocation11 + $0xb8] sm:$0xff]
        %v9944 = vld [vmem:[#allocation11 + $0xc0] sm:$0xff]
        %v9945 = vld [vmem:[#allocation11 + $0xc8] sm:$0xff]
        %v9946 = vld [vmem:[#allocation11 + $0xd0] sm:$0xff]
        %v9947 = vld [vmem:[#allocation11 + $0xd8] sm:$0xff]
        %v9948 = vld [vmem:[#allocation11 + $0xe0] sm:$0xff]
        %v9949 = vld [vmem:[#allocation11 + $0xe8] sm:$0xff]
        %v9950 = vld [vmem:[#allocation11 + $0xf0] sm:$0xff]
        %v9951 = vld [vmem:[#allocation11 + $0xf8] sm:$0xff]
        %v9952 = vld [vmem:[#allocation11 + $0x100] sm:$0xff]
        %v9953 = vld [vmem:[#allocation11 + $0x108] sm:$0xff]
        %v9954 = vld [vmem:[#allocation11 + $0x110] sm:$0xff]
        %v9955 = vld [vmem:[#allocation11 + $0x118] sm:$0xff]
        %v9956 = vld [vmem:[#allocation11 + $0x120] sm:$0xff]
        %v9957 = vld [vmem:[#allocation11 + $0x128] sm:$0xff]
        %v9958 = vld [vmem:[#allocation11 + $0x130] sm:$0xff]
        %v9959 = vld [vmem:[#allocation11 + $0x138] sm:$0xff]
        %v9960 = vld [vmem:[#allocation11 + $0x140] sm:$0xff]
        %v9961 = vld [vmem:[#allocation11 + $0x148] sm:$0xff]
        %v9962 = vld [vmem:[#allocation11 + $0x150] sm:$0xff]
        %v9963 = vld [vmem:[#allocation11 + $0x158] sm:$0xff]
        %v9964 = vld [vmem:[#allocation11 + $0x160] sm:$0xff]
        %v9965 = vld [vmem:[#allocation11 + $0x168] sm:$0xff]
        %v9966 = vld [vmem:[#allocation11 + $0x170] sm:$0xff]
        %v9967 = vld [vmem:[#allocation11 + $0x178] sm:$0xff]
        %v9968 = vld [vmem:[#allocation11 + $0x180] sm:$0xff]
        %v9969 = vld [vmem:[#allocation11 + $0x188] sm:$0xff]
        %v9970 = vld [vmem:[#allocation11 + $0x190] sm:$0xff]
        %v9971 = vld [vmem:[#allocation11 + $0x198] sm:$0xff]
        %v9972 = vld [vmem:[#allocation11 + $0x1a0] sm:$0xff]
        %v9973 = vld [vmem:[#allocation11 + $0x1a8] sm:$0xff]
        %v9974 = vld [vmem:[#allocation11 + $0x1b0] sm:$0xff]
        %v9975 = vld [vmem:[#allocation11 + $0x1b8] sm:$0xff]
        %v9976 = vld [vmem:[#allocation11 + $0x1c0] sm:$0xff]
        %v9977 = vld [vmem:[#allocation11 + $0x1c8] sm:$0xff]
        %v9978 = vld [vmem:[#allocation11 + $0x1d0] sm:$0xff]
        %v9979 = vld [vmem:[#allocation11 + $0x1d8] sm:$0xff]
        %v9980 = vld [vmem:[#allocation11 + $0x1e0] sm:$0xff]
        %v9981 = vld [vmem:[#allocation11 + $0x1e8] sm:$0xff]
        %v9982 = vld [vmem:[#allocation11 + $0x1f0] sm:$0xff]
        %v9983 = vld [vmem:[#allocation11 + $0x1f8] sm:$0xff]
        %v9984 = vld [vmem:[#allocation11 + $0x200] sm:$0xff]
        %v9985 = vld [vmem:[#allocation11 + $0x208] sm:$0xff]
        %v9986 = vld [vmem:[#allocation11 + $0x210] sm:$0xff]
        %v9987 = vld [vmem:[#allocation11 + $0x218] sm:$0xff]
        %v9988 = vld [vmem:[#allocation11 + $0x220] sm:$0xff]
        %v9989 = vld [vmem:[#allocation11 + $0x228] sm:$0xff]
        %v9990 = vld [vmem:[#allocation11 + $0x230] sm:$0xff]
        %v9991 = vld [vmem:[#allocation11 + $0x238] sm:$0xff]
        %v9992 = vld [vmem:[#allocation11 + $0x240] sm:$0xff]
        %v9993 = vld [vmem:[#allocation11 + $0x248] sm:$0xff]
        %v9994 = vld [vmem:[#allocation11 + $0x250] sm:$0xff]
        %v9995 = vld [vmem:[#allocation11 + $0x258] sm:$0xff]
        %v9996 = vld [vmem:[#allocation11 + $0x260] sm:$0xff]
        %v9997 = vld [vmem:[#allocation11 + $0x268] sm:$0xff]
        %v9998 = vld [vmem:[#allocation11 + $0x270] sm:$0xff]
        %v9999 = vld [vmem:[#allocation11 + $0x278] sm:$0xff]
        %v10000 = vld [vmem:[#allocation11 + $0x280] sm:$0xff]
        %v10001 = vld [vmem:[#allocation11 + $0x288] sm:$0xff]
        %v10002 = vld [vmem:[#allocation11 + $0x290] sm:$0xff]
        %v10003 = vld [vmem:[#allocation11 + $0x298] sm:$0xff]
        %v10004 = vld [vmem:[#allocation11 + $0x2a0] sm:$0xff]
        %v10005 = vld [vmem:[#allocation11 + $0x2a8] sm:$0xff]
        %v10006 = vld [vmem:[#allocation11 + $0x2b0] sm:$0xff]
        %v10007 = vld [vmem:[#allocation11 + $0x2b8] sm:$0xff]
        %v10008 = vld [vmem:[#allocation11 + $0x2c0] sm:$0xff]
        %v10009 = vld [vmem:[#allocation11 + $0x2c8] sm:$0xff]
        %v10010 = vld [vmem:[#allocation11 + $0x2d0] sm:$0xff]
        %v10011 = vld [vmem:[#allocation11 + $0x2d8] sm:$0xff]
        %v10012 = vld [vmem:[#allocation11 + $0x2e0] sm:$0xff]
        %v10013 = vld [vmem:[#allocation11 + $0x2e8] sm:$0xff]
        %v10014 = vld [vmem:[#allocation11 + $0x2f0] sm:$0xff]
        %v10015 = vld [vmem:[#allocation11 + $0x2f8] sm:$0xff]
        %v10016 = vld [vmem:[#allocation11 + $0x300] sm:$0xff]
        %v10017 = vld [vmem:[#allocation11 + $0x308] sm:$0xff]
        %v10018 = vld [vmem:[#allocation11 + $0x310] sm:$0xff]
        %v10019 = vld [vmem:[#allocation11 + $0x318] sm:$0xff]
        %v10020 = vld [vmem:[#allocation11 + $0x320] sm:$0xff]
        %v10021 = vld [vmem:[#allocation11 + $0x328] sm:$0xff]
        %v10022 = vld [vmem:[#allocation11 + $0x330] sm:$0xff]
        %v10023 = vld [vmem:[#allocation11 + $0x338] sm:$0xff]
        %v10024 = vld [vmem:[#allocation11 + $0x340] sm:$0xff]
        %v10025 = vld [vmem:[#allocation11 + $0x348] sm:$0xff]
        %v10026 = vld [vmem:[#allocation11 + $0x350] sm:$0xff]
        %v10027 = vld [vmem:[#allocation11 + $0x358] sm:$0xff]
        %v10028 = vld [vmem:[#allocation11 + $0x360] sm:$0xff]
        %v10029 = vld [vmem:[#allocation11 + $0x368] sm:$0xff]
        %v10030 = vld [vmem:[#allocation11 + $0x370] sm:$0xff]
        %v10031 = vld [vmem:[#allocation11 + $0x378] sm:$0xff]
        %v10032 = vld [vmem:[#allocation11 + $0x380] sm:$0xff]
        %v10033 = vld [vmem:[#allocation11 + $0x388] sm:$0xff]
        %v10034 = vld [vmem:[#allocation11 + $0x390] sm:$0xff]
        %v10035 = vld [vmem:[#allocation11 + $0x398] sm:$0xff]
        %v10036 = vld [vmem:[#allocation11 + $0x3a0] sm:$0xff]
        %v10037 = vld [vmem:[#allocation11 + $0x3a8] sm:$0xff]
        %v10038 = vld [vmem:[#allocation11 + $0x3b0] sm:$0xff]
        %v10039 = vld [vmem:[#allocation11 + $0x3b8] sm:$0xff]
        %v10040 = vld [vmem:[#allocation11 + $0x3c0] sm:$0xff]
        %v10041 = vld [vmem:[#allocation11 + $0x3c8] sm:$0xff]
        %v10042 = vld [vmem:[#allocation11 + $0x3d0] sm:$0xff]
        %v10043 = vld [vmem:[#allocation11 + $0x3d8] sm:$0xff]
        %v10044 = vld [vmem:[#allocation11 + $0x3e0] sm:$0xff]
        %v10045 = vld [vmem:[#allocation11 + $0x3e8] sm:$0xff]
        %v10046 = vld [vmem:[#allocation11 + $0x3f0] sm:$0xff]
        %v10047 = vld [vmem:[#allocation11 + $0x3f8] sm:$0xff]
        %v10048 = vld [vmem:[#allocation11 + $0x400] sm:$0xff]
        %v10049 = vld [vmem:[#allocation11 + $0x408] sm:$0xff]
        %v10050 = vld [vmem:[#allocation11 + $0x410] sm:$0xff]
        %v10051 = vld [vmem:[#allocation11 + $0x418] sm:$0xff]
        %v10052 = vld [vmem:[#allocation11 + $0x420] sm:$0xff]
        %v10053 = vld [vmem:[#allocation11 + $0x428] sm:$0xff]
        %v10054 = vld [vmem:[#allocation11 + $0x430] sm:$0xff]
        %v10055 = vld [vmem:[#allocation11 + $0x438] sm:$0xff]
        %v10056 = vld [vmem:[#allocation11 + $0x440] sm:$0xff]
        %v10057 = vld [vmem:[#allocation11 + $0x448] sm:$0xff]
        %v10058 = vld [vmem:[#allocation11 + $0x450] sm:$0xff]
        %v10059 = vld [vmem:[#allocation11 + $0x458] sm:$0xff]
        %v10060 = vld [vmem:[#allocation11 + $0x460] sm:$0xff]
        %v10061 = vld [vmem:[#allocation11 + $0x468] sm:$0xff]
        %v10062 = vld [vmem:[#allocation11 + $0x470] sm:$0xff]
        %v10063 = vld [vmem:[#allocation11 + $0x478] sm:$0xff]
        %v10064 = vld [vmem:[#allocation11 + $0x480] sm:$0xff]
        %v10065 = vld [vmem:[#allocation11 + $0x488] sm:$0xff]
        %v10066 = vld [vmem:[#allocation11 + $0x490] sm:$0xff]
        %v10067 = vld [vmem:[#allocation11 + $0x498] sm:$0xff]
        %v10068 = vld [vmem:[#allocation11 + $0x4a0] sm:$0xff]
        %v10069 = vld [vmem:[#allocation11 + $0x4a8] sm:$0xff]
        %v10070 = vld [vmem:[#allocation11 + $0x4b0] sm:$0xff]
        %v10071 = vld [vmem:[#allocation11 + $0x4b8] sm:$0xff]
        %v10072 = vld [vmem:[#allocation11 + $0x4c0] sm:$0xff]
        %v10073 = vld [vmem:[#allocation11 + $0x4c8] sm:$0xff]
        %v10074 = vld [vmem:[#allocation11 + $0x4d0] sm:$0xff]
        %v10075 = vld [vmem:[#allocation11 + $0x4d8] sm:$0xff]
        %v10076 = vld [vmem:[#allocation11 + $0x4e0] sm:$0xff]
        %v10077 = vld [vmem:[#allocation11 + $0x4e8] sm:$0xff]
        %v10078 = vld [vmem:[#allocation11 + $0x4f0] sm:$0xff]
        %v10079 = vld [vmem:[#allocation11 + $0x4f8] sm:$0xff]
        %v10080 = vld [vmem:[#allocation11 + $0x500] sm:$0xff]
        %v10081 = vld [vmem:[#allocation11 + $0x508] sm:$0xff]
        %v10082 = vld [vmem:[#allocation11 + $0x510] sm:$0xff]
        %v10083 = vld [vmem:[#allocation11 + $0x518] sm:$0xff]
        %v10084 = vld [vmem:[#allocation11 + $0x520] sm:$0xff]
        %v10085 = vld [vmem:[#allocation11 + $0x528] sm:$0xff]
        %v10086 = vld [vmem:[#allocation11 + $0x530] sm:$0xff]
        %v10087 = vld [vmem:[#allocation11 + $0x538] sm:$0xff]
        %v10088 = vld [vmem:[#allocation11 + $0x540] sm:$0xff]
        %v10089 = vld [vmem:[#allocation11 + $0x548] sm:$0xff]
        %v10090 = vld [vmem:[#allocation11 + $0x550] sm:$0xff]
        %v10091 = vld [vmem:[#allocation11 + $0x558] sm:$0xff]
        %v10092 = vld [vmem:[#allocation11 + $0x560] sm:$0xff]
        %v10093 = vld [vmem:[#allocation11 + $0x568] sm:$0xff]
        %v10094 = vld [vmem:[#allocation11 + $0x570] sm:$0xff]
        %v10095 = vld [vmem:[#allocation11 + $0x578] sm:$0xff]
        %v10096 = vld [vmem:[#allocation11 + $0x580] sm:$0xff]
        %v10097 = vld [vmem:[#allocation11 + $0x588] sm:$0xff]
        %v10098 = vld [vmem:[#allocation11 + $0x590] sm:$0xff]
        %v10099 = vld [vmem:[#allocation11 + $0x598] sm:$0xff]
        %v10100 = vld [vmem:[#allocation11 + $0x5a0] sm:$0xff]
        %v10101 = vld [vmem:[#allocation11 + $0x5a8] sm:$0xff]
        %v10102 = vld [vmem:[#allocation11 + $0x5b0] sm:$0xff]
        %v10103 = vld [vmem:[#allocation11 + $0x5b8] sm:$0xff]
        %v10104 = vld [vmem:[#allocation11 + $0x5c0] sm:$0xff]
        %v10105 = vld [vmem:[#allocation11 + $0x5c8] sm:$0xff]
        %v10106 = vld [vmem:[#allocation11 + $0x5d0] sm:$0xff]
        %v10107 = vld [vmem:[#allocation11 + $0x5d8] sm:$0xff]
        %v10108 = vld [vmem:[#allocation11 + $0x5e0] sm:$0xff]
        %v10109 = vld [vmem:[#allocation11 + $0x5e8] sm:$0xff]
        %v10110 = vld [vmem:[#allocation11 + $0x5f0] sm:$0xff]
        %v10111 = vld [vmem:[#allocation11 + $0x5f8] sm:$0xff]
        %v10112 = vld [vmem:[#allocation11 + $0x600] sm:$0xff]
        %v10113 = vld [vmem:[#allocation11 + $0x608] sm:$0xff]
        %v10114 = vld [vmem:[#allocation11 + $0x610] sm:$0xff]
        %v10115 = vld [vmem:[#allocation11 + $0x618] sm:$0xff]
        %v10116 = vld [vmem:[#allocation11 + $0x620] sm:$0xff]
        %v10117 = vld [vmem:[#allocation11 + $0x628] sm:$0xff]
        %v10118 = vld [vmem:[#allocation11 + $0x630] sm:$0xff]
        %v10119 = vld [vmem:[#allocation11 + $0x638] sm:$0xff]
        %v10120 = vld [vmem:[#allocation11 + $0x640] sm:$0xff]
        %v10121 = vld [vmem:[#allocation11 + $0x648] sm:$0xff]
        %v10122 = vld [vmem:[#allocation11 + $0x650] sm:$0xff]
        %v10123 = vld [vmem:[#allocation11 + $0x658] sm:$0xff]
        %v10124 = vld [vmem:[#allocation11 + $0x660] sm:$0xff]
        %v10125 = vld [vmem:[#allocation11 + $0x668] sm:$0xff]
        %v10126 = vld [vmem:[#allocation11 + $0x670] sm:$0xff]
        %v10127 = vld [vmem:[#allocation11 + $0x678] sm:$0xff]
        %v10128 = vld [vmem:[#allocation11 + $0x680] sm:$0xff]
        %v10129 = vld [vmem:[#allocation11 + $0x688] sm:$0xff]
        %v10130 = vld [vmem:[#allocation11 + $0x690] sm:$0xff]
        %v10131 = vld [vmem:[#allocation11 + $0x698] sm:$0xff]
        %v10132 = vld [vmem:[#allocation11 + $0x6a0] sm:$0xff]
        %v10133 = vld [vmem:[#allocation11 + $0x6a8] sm:$0xff]
        %v10134 = vld [vmem:[#allocation11 + $0x6b0] sm:$0xff]
        %v10135 = vld [vmem:[#allocation11 + $0x6b8] sm:$0xff]
        %v10136 = vld [vmem:[#allocation11 + $0x6c0] sm:$0xff]
        %v10137 = vld [vmem:[#allocation11 + $0x6c8] sm:$0xff]
        %v10138 = vld [vmem:[#allocation11 + $0x6d0] sm:$0xff]
        %v10139 = vld [vmem:[#allocation11 + $0x6d8] sm:$0xff]
        %v10140 = vld [vmem:[#allocation11 + $0x6e0] sm:$0xff]
        %v10141 = vld [vmem:[#allocation11 + $0x6e8] sm:$0xff]
        %v10142 = vld [vmem:[#allocation11 + $0x6f0] sm:$0xff]
        %v10143 = vld [vmem:[#allocation11 + $0x6f8] sm:$0xff]
        %v10144 = vld [vmem:[#allocation11 + $0x700] sm:$0xff]
        %v10145 = vld [vmem:[#allocation11 + $0x708] sm:$0xff]
        %v10146 = vld [vmem:[#allocation11 + $0x710] sm:$0xff]
        %v10147 = vld [vmem:[#allocation11 + $0x718] sm:$0xff]
        %v10148 = vld [vmem:[#allocation11 + $0x720] sm:$0xff]
        %v10149 = vld [vmem:[#allocation11 + $0x728] sm:$0xff]
        %v10150 = vld [vmem:[#allocation11 + $0x730] sm:$0xff]
        %v10151 = vld [vmem:[#allocation11 + $0x738] sm:$0xff]
        %v10152 = vld [vmem:[#allocation11 + $0x740] sm:$0xff]
        %v10153 = vld [vmem:[#allocation11 + $0x748] sm:$0xff]
        %v10154 = vld [vmem:[#allocation11 + $0x750] sm:$0xff]
        %v10155 = vld [vmem:[#allocation11 + $0x758] sm:$0xff]
        %v10156 = vld [vmem:[#allocation11 + $0x760] sm:$0xff]
        %v10157 = vld [vmem:[#allocation11 + $0x768] sm:$0xff]
        %v10158 = vld [vmem:[#allocation11 + $0x770] sm:$0xff]
        %v10159 = vld [vmem:[#allocation11 + $0x778] sm:$0xff]
        %v10160 = vld [vmem:[#allocation11 + $0x780] sm:$0xff]
        %v10161 = vld [vmem:[#allocation11 + $0x788] sm:$0xff]
        %v10162 = vld [vmem:[#allocation11 + $0x790] sm:$0xff]
        %v10163 = vld [vmem:[#allocation11 + $0x798] sm:$0xff]
        %v10164 = vld [vmem:[#allocation11 + $0x7a0] sm:$0xff]
        %v10165 = vld [vmem:[#allocation11 + $0x7a8] sm:$0xff]
        %v10166 = vld [vmem:[#allocation11 + $0x7b0] sm:$0xff]
        %v10167 = vld [vmem:[#allocation11 + $0x7b8] sm:$0xff]
        %v10168 = vld [vmem:[#allocation11 + $0x7c0] sm:$0xff]
        %v10169 = vld [vmem:[#allocation11 + $0x7c8] sm:$0xff]
        %v10170 = vld [vmem:[#allocation11 + $0x7d0] sm:$0xff]
        %v10171 = vld [vmem:[#allocation11 + $0x7d8] sm:$0xff]
        %v10172 = vld [vmem:[#allocation11 + $0x7e0] sm:$0xff]
        %v10173 = vld [vmem:[#allocation11 + $0x7e8] sm:$0xff]
        %v10174 = vld [vmem:[#allocation11 + $0x7f0] sm:$0xff]
        %v10175 = vld [vmem:[#allocation11 + $0x7f8] sm:$0xff]
        %v10176 = vld [vmem:[#allocation11 + $0x800] sm:$0xff]
        %v10177 = vld [vmem:[#allocation11 + $0x808] sm:$0xff]
        %v10178 = vld [vmem:[#allocation11 + $0x810] sm:$0xff]
        %v10179 = vld [vmem:[#allocation11 + $0x818] sm:$0xff]
        %v10180 = vld [vmem:[#allocation11 + $0x820] sm:$0xff]
        %v10181 = vld [vmem:[#allocation11 + $0x828] sm:$0xff]
        %v10182 = vld [vmem:[#allocation11 + $0x830] sm:$0xff]
        %v10183 = vld [vmem:[#allocation11 + $0x838] sm:$0xff]
        %v10184 = vld [vmem:[#allocation11 + $0x840] sm:$0xff]
        %v10185 = vld [vmem:[#allocation11 + $0x848] sm:$0xff]
        %v10186 = vld [vmem:[#allocation11 + $0x850] sm:$0xff]
        %v10187 = vld [vmem:[#allocation11 + $0x858] sm:$0xff]
        %v10188 = vld [vmem:[#allocation11 + $0x860] sm:$0xff]
        %v10189 = vld [vmem:[#allocation11 + $0x868] sm:$0xff]
        %v10190 = vld [vmem:[#allocation11 + $0x870] sm:$0xff]
        %v10191 = vld [vmem:[#allocation11 + $0x878] sm:$0xff]
        %v10192 = vld [vmem:[#allocation11 + $0x880] sm:$0xff]
        %v10193 = vld [vmem:[#allocation11 + $0x888] sm:$0xff]
        %v10194 = vld [vmem:[#allocation11 + $0x890] sm:$0xff]
        %v10195 = vld [vmem:[#allocation11 + $0x898] sm:$0xff]
        %v10196 = vld [vmem:[#allocation11 + $0x8a0] sm:$0xff]
        %v10197 = vld [vmem:[#allocation11 + $0x8a8] sm:$0xff]
        %v10198 = vld [vmem:[#allocation11 + $0x8b0] sm:$0xff]
        %v10199 = vld [vmem:[#allocation11 + $0x8b8] sm:$0xff]
        %v10200 = vld [vmem:[#allocation11 + $0x8c0] sm:$0xff]
        %v10201 = vld [vmem:[#allocation11 + $0x8c8] sm:$0xff]
        %v10202 = vld [vmem:[#allocation11 + $0x8d0] sm:$0xff]
        %v10203 = vld [vmem:[#allocation11 + $0x8d8] sm:$0xff]
        %v10204 = vld [vmem:[#allocation11 + $0x8e0] sm:$0xff]
        %v10205 = vld [vmem:[#allocation11 + $0x8e8] sm:$0xff]
        %v10206 = vld [vmem:[#allocation11 + $0x8f0] sm:$0xff]
        %v10207 = vld [vmem:[#allocation11 + $0x8f8] sm:$0xff]
        %v10208 = vld [vmem:[#allocation13] sm:$0x3f]
        %v10210 = vlaneseq
        %v10211 = vshrl.u32 %v10210, 7
        %v10212 = vsub.s32 0, %v10211
        %v10213 = vrot.slane %v10208, %v10212
        %v10214 = vlaneseq
        %v10215 = vshrl.u32 %v10214, 7
        %v10216 = vsub.s32 1, %v10215
        %v10217 = vrot.slane %v10208, %v10216
        %v10218 = vlaneseq
        %v10219 = vshrl.u32 %v10218, 7
        %v10220 = vsub.s32 2, %v10219
        %v10221 = vrot.slane %v10208, %v10220
        %v10222 = vlaneseq
        %v10223 = vshrl.u32 %v10222, 7
        %v10224 = vsub.s32 3, %v10223
        %v10225 = vrot.slane %v10208, %v10224
        %v10226 = vlaneseq
        %v10227 = vshrl.u32 %v10226, 7
        %v10228 = vsub.s32 4, %v10227
        %v10229 = vrot.slane %v10208, %v10228
        %v10230 = vlaneseq
        %v10231 = vshrl.u32 %v10230, 7
        %v10232 = vsub.s32 5, %v10231
        %v10233 = vrot.slane %v10208, %v10232
        %v10528 = vunpack.c.l.b16 %v9920
        %v10529 = vunpack.c.h.b16 %v9920
        %v10530 = vunpack.c.l.b16 %v9921
        %v10531 = vunpack.c.h.b16 %v9921
        %v10532 = vunpack.c.l.b16 %v9922
        %v10533 = vunpack.c.h.b16 %v9922
        %v10534 = vunpack.c.l.b16 %v9923
        %v10535 = vunpack.c.h.b16 %v9923
        %v10536 = vunpack.c.l.b16 %v9924
        %v10537 = vunpack.c.h.b16 %v9924
        %v10538 = vunpack.c.l.b16 %v9925
        %v10539 = vunpack.c.h.b16 %v9925
        %v10540 = vunpack.c.l.b16 %v9926
        %v10541 = vunpack.c.h.b16 %v9926
        %v10542 = vunpack.c.l.b16 %v9927
        %v10543 = vunpack.c.h.b16 %v9927
        %v10544 = vunpack.c.l.b16 %v9928
        %v10545 = vunpack.c.h.b16 %v9928
        %v10546 = vunpack.c.l.b16 %v9929
        %v10547 = vunpack.c.h.b16 %v9929
        %v10548 = vunpack.c.l.b16 %v9930
        %v10549 = vunpack.c.h.b16 %v9930
        %v10550 = vunpack.c.l.b16 %v9931
        %v10551 = vunpack.c.h.b16 %v9931
        %v10552 = vunpack.c.l.b16 %v9932
        %v10553 = vunpack.c.h.b16 %v9932
        %v10554 = vunpack.c.l.b16 %v9933
        %v10555 = vunpack.c.h.b16 %v9933
        %v10556 = vunpack.c.l.b16 %v9934
        %v10557 = vunpack.c.h.b16 %v9934
        %v10558 = vunpack.c.l.b16 %v9935
        %v10559 = vunpack.c.h.b16 %v9935
        %v10560 = vunpack.c.l.b16 %v9936
        %v10561 = vunpack.c.h.b16 %v9936
        %v10562 = vunpack.c.l.b16 %v9937
        %v10563 = vunpack.c.h.b16 %v9937
        %v10564 = vunpack.c.l.b16 %v9938
        %v10565 = vunpack.c.h.b16 %v9938
        %v10566 = vunpack.c.l.b16 %v9939
        %v10567 = vunpack.c.h.b16 %v9939
        %v10568 = vunpack.c.l.b16 %v9940
        %v10569 = vunpack.c.h.b16 %v9940
        %v10570 = vunpack.c.l.b16 %v9941
        %v10571 = vunpack.c.h.b16 %v9941
        %v10572 = vunpack.c.l.b16 %v9942
        %v10573 = vunpack.c.h.b16 %v9942
        %v10574 = vunpack.c.l.b16 %v9943
        %v10575 = vunpack.c.h.b16 %v9943
        %v10576 = vunpack.c.l.b16 %v9944
        %v10577 = vunpack.c.h.b16 %v9944
        %v10578 = vunpack.c.l.b16 %v9945
        %v10579 = vunpack.c.h.b16 %v9945
        %v10580 = vunpack.c.l.b16 %v9946
        %v10581 = vunpack.c.h.b16 %v9946
        %v10582 = vunpack.c.l.b16 %v9947
        %v10583 = vunpack.c.h.b16 %v9947
        %v10584 = vunpack.c.l.b16 %v9948
        %v10585 = vunpack.c.h.b16 %v9948
        %v10586 = vunpack.c.l.b16 %v9949
        %v10587 = vunpack.c.h.b16 %v9949
        %v10588 = vunpack.c.l.b16 %v9950
        %v10589 = vunpack.c.h.b16 %v9950
        %v10590 = vunpack.c.l.b16 %v9951
        %v10591 = vunpack.c.h.b16 %v9951
        %v10592 = vunpack.c.l.b16 %v9952
        %v10593 = vunpack.c.h.b16 %v9952
        %v10594 = vunpack.c.l.b16 %v9953
        %v10595 = vunpack.c.h.b16 %v9953
        %v10596 = vunpack.c.l.b16 %v9954
        %v10597 = vunpack.c.h.b16 %v9954
        %v10598 = vunpack.c.l.b16 %v9955
        %v10599 = vunpack.c.h.b16 %v9955
        %v10600 = vunpack.c.l.b16 %v9956
        %v10601 = vunpack.c.h.b16 %v9956
        %v10602 = vunpack.c.l.b16 %v9957
        %v10603 = vunpack.c.h.b16 %v9957
        %v10604 = vunpack.c.l.b16 %v9958
        %v10605 = vunpack.c.h.b16 %v9958
        %v10606 = vunpack.c.l.b16 %v9959
        %v10607 = vunpack.c.h.b16 %v9959
        %v10608 = vunpack.c.l.b16 %v9960
        %v10609 = vunpack.c.h.b16 %v9960
        %v10610 = vunpack.c.l.b16 %v9961
        %v10611 = vunpack.c.h.b16 %v9961
        %v10612 = vunpack.c.l.b16 %v9962
        %v10613 = vunpack.c.h.b16 %v9962
        %v10614 = vunpack.c.l.b16 %v9963
        %v10615 = vunpack.c.h.b16 %v9963
        %v10616 = vunpack.c.l.b16 %v9964
        %v10617 = vunpack.c.h.b16 %v9964
        %v10618 = vunpack.c.l.b16 %v9965
        %v10619 = vunpack.c.h.b16 %v9965
        %v10620 = vunpack.c.l.b16 %v9966
        %v10621 = vunpack.c.h.b16 %v9966
        %v10622 = vunpack.c.l.b16 %v9967
        %v10623 = vunpack.c.h.b16 %v9967
        %v10624 = vunpack.c.l.b16 %v9968
        %v10625 = vunpack.c.h.b16 %v9968
        %v10626 = vunpack.c.l.b16 %v9969
        %v10627 = vunpack.c.h.b16 %v9969
        %v10628 = vunpack.c.l.b16 %v9970
        %v10629 = vunpack.c.h.b16 %v9970
        %v10630 = vunpack.c.l.b16 %v9971
        %v10631 = vunpack.c.h.b16 %v9971
        %v10632 = vunpack.c.l.b16 %v9972
        %v10633 = vunpack.c.h.b16 %v9972
        %v10634 = vunpack.c.l.b16 %v9973
        %v10635 = vunpack.c.h.b16 %v9973
        %v10636 = vunpack.c.l.b16 %v9974
        %v10637 = vunpack.c.h.b16 %v9974
        %v10638 = vunpack.c.l.b16 %v9975
        %v10639 = vunpack.c.h.b16 %v9975
        %v10640 = vunpack.c.l.b16 %v9976
        %v10641 = vunpack.c.h.b16 %v9976
        %v10642 = vunpack.c.l.b16 %v9977
        %v10643 = vunpack.c.h.b16 %v9977
        %v10644 = vunpack.c.l.b16 %v9978
        %v10645 = vunpack.c.h.b16 %v9978
        %v10646 = vunpack.c.l.b16 %v9979
        %v10647 = vunpack.c.h.b16 %v9979
        %v10648 = vunpack.c.l.b16 %v9980
        %v10649 = vunpack.c.h.b16 %v9980
        %v10650 = vunpack.c.l.b16 %v9981
        %v10651 = vunpack.c.h.b16 %v9981
        %v10652 = vunpack.c.l.b16 %v9982
        %v10653 = vunpack.c.h.b16 %v9982
        %v10654 = vunpack.c.l.b16 %v9983
        %v10655 = vunpack.c.h.b16 %v9983
        %v10656 = vunpack.c.l.b16 %v9984
        %v10657 = vunpack.c.h.b16 %v9984
        %v10658 = vunpack.c.l.b16 %v9985
        %v10659 = vunpack.c.h.b16 %v9985
        %v10660 = vunpack.c.l.b16 %v9986
        %v10661 = vunpack.c.h.b16 %v9986
        %v10662 = vunpack.c.l.b16 %v9987
        %v10663 = vunpack.c.h.b16 %v9987
        %v10664 = vunpack.c.l.b16 %v9988
        %v10665 = vunpack.c.h.b16 %v9988
        %v10666 = vunpack.c.l.b16 %v9989
        %v10667 = vunpack.c.h.b16 %v9989
        %v10668 = vunpack.c.l.b16 %v9990
        %v10669 = vunpack.c.h.b16 %v9990
        %v10670 = vunpack.c.l.b16 %v9991
        %v10671 = vunpack.c.h.b16 %v9991
        %v10672 = vunpack.c.l.b16 %v9992
        %v10673 = vunpack.c.h.b16 %v9992
        %v10674 = vunpack.c.l.b16 %v9993
        %v10675 = vunpack.c.h.b16 %v9993
        %v10676 = vunpack.c.l.b16 %v9994
        %v10677 = vunpack.c.h.b16 %v9994
        %v10678 = vunpack.c.l.b16 %v9995
        %v10679 = vunpack.c.h.b16 %v9995
        %v10680 = vunpack.c.l.b16 %v9996
        %v10681 = vunpack.c.h.b16 %v9996
        %v10682 = vunpack.c.l.b16 %v9997
        %v10683 = vunpack.c.h.b16 %v9997
        %v10684 = vunpack.c.l.b16 %v9998
        %v10685 = vunpack.c.h.b16 %v9998
        %v10686 = vunpack.c.l.b16 %v9999
        %v10687 = vunpack.c.h.b16 %v9999
        %v10688 = vunpack.c.l.b16 %v10000
        %v10689 = vunpack.c.h.b16 %v10000
        %v10690 = vunpack.c.l.b16 %v10001
        %v10691 = vunpack.c.h.b16 %v10001
        %v10692 = vunpack.c.l.b16 %v10002
        %v10693 = vunpack.c.h.b16 %v10002
        %v10694 = vunpack.c.l.b16 %v10003
        %v10695 = vunpack.c.h.b16 %v10003
        %v10696 = vunpack.c.l.b16 %v10004
        %v10697 = vunpack.c.h.b16 %v10004
        %v10698 = vunpack.c.l.b16 %v10005
        %v10699 = vunpack.c.h.b16 %v10005
        %v10700 = vunpack.c.l.b16 %v10006
        %v10701 = vunpack.c.h.b16 %v10006
        %v10702 = vunpack.c.l.b16 %v10007
        %v10703 = vunpack.c.h.b16 %v10007
        %v10704 = vunpack.c.l.b16 %v10008
        %v10705 = vunpack.c.h.b16 %v10008
        %v10706 = vunpack.c.l.b16 %v10009
        %v10707 = vunpack.c.h.b16 %v10009
        %v10708 = vunpack.c.l.b16 %v10010
        %v10709 = vunpack.c.h.b16 %v10010
        %v10710 = vunpack.c.l.b16 %v10011
        %v10711 = vunpack.c.h.b16 %v10011
        %v10712 = vunpack.c.l.b16 %v10012
        %v10713 = vunpack.c.h.b16 %v10012
        %v10714 = vunpack.c.l.b16 %v10013
        %v10715 = vunpack.c.h.b16 %v10013
        %v10716 = vunpack.c.l.b16 %v10014
        %v10717 = vunpack.c.h.b16 %v10014
        %v10718 = vunpack.c.l.b16 %v10015
        %v10719 = vunpack.c.h.b16 %v10015
        %v10720 = vunpack.c.l.b16 %v10016
        %v10721 = vunpack.c.h.b16 %v10016
        %v10722 = vunpack.c.l.b16 %v10017
        %v10723 = vunpack.c.h.b16 %v10017
        %v10724 = vunpack.c.l.b16 %v10018
        %v10725 = vunpack.c.h.b16 %v10018
        %v10726 = vunpack.c.l.b16 %v10019
        %v10727 = vunpack.c.h.b16 %v10019
        %v10728 = vunpack.c.l.b16 %v10020
        %v10729 = vunpack.c.h.b16 %v10020
        %v10730 = vunpack.c.l.b16 %v10021
        %v10731 = vunpack.c.h.b16 %v10021
        %v10732 = vunpack.c.l.b16 %v10022
        %v10733 = vunpack.c.h.b16 %v10022
        %v10734 = vunpack.c.l.b16 %v10023
        %v10735 = vunpack.c.h.b16 %v10023
        %v10736 = vunpack.c.l.b16 %v10024
        %v10737 = vunpack.c.h.b16 %v10024
        %v10738 = vunpack.c.l.b16 %v10025
        %v10739 = vunpack.c.h.b16 %v10025
        %v10740 = vunpack.c.l.b16 %v10026
        %v10741 = vunpack.c.h.b16 %v10026
        %v10742 = vunpack.c.l.b16 %v10027
        %v10743 = vunpack.c.h.b16 %v10027
        %v10744 = vunpack.c.l.b16 %v10028
        %v10745 = vunpack.c.h.b16 %v10028
        %v10746 = vunpack.c.l.b16 %v10029
        %v10747 = vunpack.c.h.b16 %v10029
        %v10748 = vunpack.c.l.b16 %v10030
        %v10749 = vunpack.c.h.b16 %v10030
        %v10750 = vunpack.c.l.b16 %v10031
        %v10751 = vunpack.c.h.b16 %v10031
        %v10752 = vunpack.c.l.b16 %v10032
        %v10753 = vunpack.c.h.b16 %v10032
        %v10754 = vunpack.c.l.b16 %v10033
        %v10755 = vunpack.c.h.b16 %v10033
        %v10756 = vunpack.c.l.b16 %v10034
        %v10757 = vunpack.c.h.b16 %v10034
        %v10758 = vunpack.c.l.b16 %v10035
        %v10759 = vunpack.c.h.b16 %v10035
        %v10760 = vunpack.c.l.b16 %v10036
        %v10761 = vunpack.c.h.b16 %v10036
        %v10762 = vunpack.c.l.b16 %v10037
        %v10763 = vunpack.c.h.b16 %v10037
        %v10764 = vunpack.c.l.b16 %v10038
        %v10765 = vunpack.c.h.b16 %v10038
        %v10766 = vunpack.c.l.b16 %v10039
        %v10767 = vunpack.c.h.b16 %v10039
        %v10768 = vunpack.c.l.b16 %v10040
        %v10769 = vunpack.c.h.b16 %v10040
        %v10770 = vunpack.c.l.b16 %v10041
        %v10771 = vunpack.c.h.b16 %v10041
        %v10772 = vunpack.c.l.b16 %v10042
        %v10773 = vunpack.c.h.b16 %v10042
        %v10774 = vunpack.c.l.b16 %v10043
        %v10775 = vunpack.c.h.b16 %v10043
        %v10776 = vunpack.c.l.b16 %v10044
        %v10777 = vunpack.c.h.b16 %v10044
        %v10778 = vunpack.c.l.b16 %v10045
        %v10779 = vunpack.c.h.b16 %v10045
        %v10780 = vunpack.c.l.b16 %v10046
        %v10781 = vunpack.c.h.b16 %v10046
        %v10782 = vunpack.c.l.b16 %v10047
        %v10783 = vunpack.c.h.b16 %v10047
        %v10784 = vunpack.c.l.b16 %v10048
        %v10785 = vunpack.c.h.b16 %v10048
        %v10786 = vunpack.c.l.b16 %v10049
        %v10787 = vunpack.c.h.b16 %v10049
        %v10788 = vunpack.c.l.b16 %v10050
        %v10789 = vunpack.c.h.b16 %v10050
        %v10790 = vunpack.c.l.b16 %v10051
        %v10791 = vunpack.c.h.b16 %v10051
        %v10792 = vunpack.c.l.b16 %v10052
        %v10793 = vunpack.c.h.b16 %v10052
        %v10794 = vunpack.c.l.b16 %v10053
        %v10795 = vunpack.c.h.b16 %v10053
        %v10796 = vunpack.c.l.b16 %v10054
        %v10797 = vunpack.c.h.b16 %v10054
        %v10798 = vunpack.c.l.b16 %v10055
        %v10799 = vunpack.c.h.b16 %v10055
        %v10800 = vunpack.c.l.b16 %v10056
        %v10801 = vunpack.c.h.b16 %v10056
        %v10802 = vunpack.c.l.b16 %v10057
        %v10803 = vunpack.c.h.b16 %v10057
        %v10804 = vunpack.c.l.b16 %v10058
        %v10805 = vunpack.c.h.b16 %v10058
        %v10806 = vunpack.c.l.b16 %v10059
        %v10807 = vunpack.c.h.b16 %v10059
        %v10808 = vunpack.c.l.b16 %v10060
        %v10809 = vunpack.c.h.b16 %v10060
        %v10810 = vunpack.c.l.b16 %v10061
        %v10811 = vunpack.c.h.b16 %v10061
        %v10812 = vunpack.c.l.b16 %v10062
        %v10813 = vunpack.c.h.b16 %v10062
        %v10814 = vunpack.c.l.b16 %v10063
        %v10815 = vunpack.c.h.b16 %v10063
        %v10816 = vunpack.c.l.b16 %v10064
        %v10817 = vunpack.c.h.b16 %v10064
        %v10818 = vunpack.c.l.b16 %v10065
        %v10819 = vunpack.c.h.b16 %v10065
        %v10820 = vunpack.c.l.b16 %v10066
        %v10821 = vunpack.c.h.b16 %v10066
        %v10822 = vunpack.c.l.b16 %v10067
        %v10823 = vunpack.c.h.b16 %v10067
        %v10824 = vunpack.c.l.b16 %v10068
        %v10825 = vunpack.c.h.b16 %v10068
        %v10826 = vunpack.c.l.b16 %v10069
        %v10827 = vunpack.c.h.b16 %v10069
        %v10828 = vunpack.c.l.b16 %v10070
        %v10829 = vunpack.c.h.b16 %v10070
        %v10830 = vunpack.c.l.b16 %v10071
        %v10831 = vunpack.c.h.b16 %v10071
        %v10832 = vunpack.c.l.b16 %v10072
        %v10833 = vunpack.c.h.b16 %v10072
        %v10834 = vunpack.c.l.b16 %v10073
        %v10835 = vunpack.c.h.b16 %v10073
        %v10836 = vunpack.c.l.b16 %v10074
        %v10837 = vunpack.c.h.b16 %v10074
        %v10838 = vunpack.c.l.b16 %v10075
        %v10839 = vunpack.c.h.b16 %v10075
        %v10840 = vunpack.c.l.b16 %v10076
        %v10841 = vunpack.c.h.b16 %v10076
        %v10842 = vunpack.c.l.b16 %v10077
        %v10843 = vunpack.c.h.b16 %v10077
        %v10844 = vunpack.c.l.b16 %v10078
        %v10845 = vunpack.c.h.b16 %v10078
        %v10846 = vunpack.c.l.b16 %v10079
        %v10847 = vunpack.c.h.b16 %v10079
        %v10848 = vunpack.c.l.b16 %v10080
        %v10849 = vunpack.c.h.b16 %v10080
        %v10850 = vunpack.c.l.b16 %v10081
        %v10851 = vunpack.c.h.b16 %v10081
        %v10852 = vunpack.c.l.b16 %v10082
        %v10853 = vunpack.c.h.b16 %v10082
        %v10854 = vunpack.c.l.b16 %v10083
        %v10855 = vunpack.c.h.b16 %v10083
        %v10856 = vunpack.c.l.b16 %v10084
        %v10857 = vunpack.c.h.b16 %v10084
        %v10858 = vunpack.c.l.b16 %v10085
        %v10859 = vunpack.c.h.b16 %v10085
        %v10860 = vunpack.c.l.b16 %v10086
        %v10861 = vunpack.c.h.b16 %v10086
        %v10862 = vunpack.c.l.b16 %v10087
        %v10863 = vunpack.c.h.b16 %v10087
        %v10864 = vunpack.c.l.b16 %v10088
        %v10865 = vunpack.c.h.b16 %v10088
        %v10866 = vunpack.c.l.b16 %v10089
        %v10867 = vunpack.c.h.b16 %v10089
        %v10868 = vunpack.c.l.b16 %v10090
        %v10869 = vunpack.c.h.b16 %v10090
        %v10870 = vunpack.c.l.b16 %v10091
        %v10871 = vunpack.c.h.b16 %v10091
        %v10872 = vunpack.c.l.b16 %v10092
        %v10873 = vunpack.c.h.b16 %v10092
        %v10874 = vunpack.c.l.b16 %v10093
        %v10875 = vunpack.c.h.b16 %v10093
        %v10876 = vunpack.c.l.b16 %v10094
        %v10877 = vunpack.c.h.b16 %v10094
        %v10878 = vunpack.c.l.b16 %v10095
        %v10879 = vunpack.c.h.b16 %v10095
        %v10880 = vunpack.c.l.b16 %v10096
        %v10881 = vunpack.c.h.b16 %v10096
        %v10882 = vunpack.c.l.b16 %v10097
        %v10883 = vunpack.c.h.b16 %v10097
        %v10884 = vunpack.c.l.b16 %v10098
        %v10885 = vunpack.c.h.b16 %v10098
        %v10886 = vunpack.c.l.b16 %v10099
        %v10887 = vunpack.c.h.b16 %v10099
        %v10888 = vunpack.c.l.b16 %v10100
        %v10889 = vunpack.c.h.b16 %v10100
        %v10890 = vunpack.c.l.b16 %v10101
        %v10891 = vunpack.c.h.b16 %v10101
        %v10892 = vunpack.c.l.b16 %v10102
        %v10893 = vunpack.c.h.b16 %v10102
        %v10894 = vunpack.c.l.b16 %v10103
        %v10895 = vunpack.c.h.b16 %v10103
        %v10896 = vunpack.c.l.b16 %v10104
        %v10897 = vunpack.c.h.b16 %v10104
        %v10898 = vunpack.c.l.b16 %v10105
        %v10899 = vunpack.c.h.b16 %v10105
        %v10900 = vunpack.c.l.b16 %v10106
        %v10901 = vunpack.c.h.b16 %v10106
        %v10902 = vunpack.c.l.b16 %v10107
        %v10903 = vunpack.c.h.b16 %v10107
        %v10904 = vunpack.c.l.b16 %v10108
        %v10905 = vunpack.c.h.b16 %v10108
        %v10906 = vunpack.c.l.b16 %v10109
        %v10907 = vunpack.c.h.b16 %v10109
        %v10908 = vunpack.c.l.b16 %v10110
        %v10909 = vunpack.c.h.b16 %v10110
        %v10910 = vunpack.c.l.b16 %v10111
        %v10911 = vunpack.c.h.b16 %v10111
        %v10912 = vunpack.c.l.b16 %v10112
        %v10913 = vunpack.c.h.b16 %v10112
        %v10914 = vunpack.c.l.b16 %v10113
        %v10915 = vunpack.c.h.b16 %v10113
        %v10916 = vunpack.c.l.b16 %v10114
        %v10917 = vunpack.c.h.b16 %v10114
        %v10918 = vunpack.c.l.b16 %v10115
        %v10919 = vunpack.c.h.b16 %v10115
        %v10920 = vunpack.c.l.b16 %v10116
        %v10921 = vunpack.c.h.b16 %v10116
        %v10922 = vunpack.c.l.b16 %v10117
        %v10923 = vunpack.c.h.b16 %v10117
        %v10924 = vunpack.c.l.b16 %v10118
        %v10925 = vunpack.c.h.b16 %v10118
        %v10926 = vunpack.c.l.b16 %v10119
        %v10927 = vunpack.c.h.b16 %v10119
        %v10928 = vunpack.c.l.b16 %v10120
        %v10929 = vunpack.c.h.b16 %v10120
        %v10930 = vunpack.c.l.b16 %v10121
        %v10931 = vunpack.c.h.b16 %v10121
        %v10932 = vunpack.c.l.b16 %v10122
        %v10933 = vunpack.c.h.b16 %v10122
        %v10934 = vunpack.c.l.b16 %v10123
        %v10935 = vunpack.c.h.b16 %v10123
        %v10936 = vunpack.c.l.b16 %v10124
        %v10937 = vunpack.c.h.b16 %v10124
        %v10938 = vunpack.c.l.b16 %v10125
        %v10939 = vunpack.c.h.b16 %v10125
        %v10940 = vunpack.c.l.b16 %v10126
        %v10941 = vunpack.c.h.b16 %v10126
        %v10942 = vunpack.c.l.b16 %v10127
        %v10943 = vunpack.c.h.b16 %v10127
        %v10944 = vunpack.c.l.b16 %v10128
        %v10945 = vunpack.c.h.b16 %v10128
        %v10946 = vunpack.c.l.b16 %v10129
        %v10947 = vunpack.c.h.b16 %v10129
        %v10948 = vunpack.c.l.b16 %v10130
        %v10949 = vunpack.c.h.b16 %v10130
        %v10950 = vunpack.c.l.b16 %v10131
        %v10951 = vunpack.c.h.b16 %v10131
        %v10952 = vunpack.c.l.b16 %v10132
        %v10953 = vunpack.c.h.b16 %v10132
        %v10954 = vunpack.c.l.b16 %v10133
        %v10955 = vunpack.c.h.b16 %v10133
        %v10956 = vunpack.c.l.b16 %v10134
        %v10957 = vunpack.c.h.b16 %v10134
        %v10958 = vunpack.c.l.b16 %v10135
        %v10959 = vunpack.c.h.b16 %v10135
        %v10960 = vunpack.c.l.b16 %v10136
        %v10961 = vunpack.c.h.b16 %v10136
        %v10962 = vunpack.c.l.b16 %v10137
        %v10963 = vunpack.c.h.b16 %v10137
        %v10964 = vunpack.c.l.b16 %v10138
        %v10965 = vunpack.c.h.b16 %v10138
        %v10966 = vunpack.c.l.b16 %v10139
        %v10967 = vunpack.c.h.b16 %v10139
        %v10968 = vunpack.c.l.b16 %v10140
        %v10969 = vunpack.c.h.b16 %v10140
        %v10970 = vunpack.c.l.b16 %v10141
        %v10971 = vunpack.c.h.b16 %v10141
        %v10972 = vunpack.c.l.b16 %v10142
        %v10973 = vunpack.c.h.b16 %v10142
        %v10974 = vunpack.c.l.b16 %v10143
        %v10975 = vunpack.c.h.b16 %v10143
        %v10976 = vunpack.c.l.b16 %v10144
        %v10977 = vunpack.c.h.b16 %v10144
        %v10978 = vunpack.c.l.b16 %v10145
        %v10979 = vunpack.c.h.b16 %v10145
        %v10980 = vunpack.c.l.b16 %v10146
        %v10981 = vunpack.c.h.b16 %v10146
        %v10982 = vunpack.c.l.b16 %v10147
        %v10983 = vunpack.c.h.b16 %v10147
        %v10984 = vunpack.c.l.b16 %v10148
        %v10985 = vunpack.c.h.b16 %v10148
        %v10986 = vunpack.c.l.b16 %v10149
        %v10987 = vunpack.c.h.b16 %v10149
        %v10988 = vunpack.c.l.b16 %v10150
        %v10989 = vunpack.c.h.b16 %v10150
        %v10990 = vunpack.c.l.b16 %v10151
        %v10991 = vunpack.c.h.b16 %v10151
        %v10992 = vunpack.c.l.b16 %v10152
        %v10993 = vunpack.c.h.b16 %v10152
        %v10994 = vunpack.c.l.b16 %v10153
        %v10995 = vunpack.c.h.b16 %v10153
        %v10996 = vunpack.c.l.b16 %v10154
        %v10997 = vunpack.c.h.b16 %v10154
        %v10998 = vunpack.c.l.b16 %v10155
        %v10999 = vunpack.c.h.b16 %v10155
        %v11000 = vunpack.c.l.b16 %v10156
        %v11001 = vunpack.c.h.b16 %v10156
        %v11002 = vunpack.c.l.b16 %v10157
        %v11003 = vunpack.c.h.b16 %v10157
        %v11004 = vunpack.c.l.b16 %v10158
        %v11005 = vunpack.c.h.b16 %v10158
        %v11006 = vunpack.c.l.b16 %v10159
        %v11007 = vunpack.c.h.b16 %v10159
        %v11008 = vunpack.c.l.b16 %v10160
        %v11009 = vunpack.c.h.b16 %v10160
        %v11010 = vunpack.c.l.b16 %v10161
        %v11011 = vunpack.c.h.b16 %v10161
        %v11012 = vunpack.c.l.b16 %v10162
        %v11013 = vunpack.c.h.b16 %v10162
        %v11014 = vunpack.c.l.b16 %v10163
        %v11015 = vunpack.c.h.b16 %v10163
        %v11016 = vunpack.c.l.b16 %v10164
        %v11017 = vunpack.c.h.b16 %v10164
        %v11018 = vunpack.c.l.b16 %v10165
        %v11019 = vunpack.c.h.b16 %v10165
        %v11020 = vunpack.c.l.b16 %v10166
        %v11021 = vunpack.c.h.b16 %v10166
        %v11022 = vunpack.c.l.b16 %v10167
        %v11023 = vunpack.c.h.b16 %v10167
        %v11024 = vunpack.c.l.b16 %v10168
        %v11025 = vunpack.c.h.b16 %v10168
        %v11026 = vunpack.c.l.b16 %v10169
        %v11027 = vunpack.c.h.b16 %v10169
        %v11028 = vunpack.c.l.b16 %v10170
        %v11029 = vunpack.c.h.b16 %v10170
        %v11030 = vunpack.c.l.b16 %v10171
        %v11031 = vunpack.c.h.b16 %v10171
        %v11032 = vunpack.c.l.b16 %v10172
        %v11033 = vunpack.c.h.b16 %v10172
        %v11034 = vunpack.c.l.b16 %v10173
        %v11035 = vunpack.c.h.b16 %v10173
        %v11036 = vunpack.c.l.b16 %v10174
        %v11037 = vunpack.c.h.b16 %v10174
        %v11038 = vunpack.c.l.b16 %v10175
        %v11039 = vunpack.c.h.b16 %v10175
        %v11040 = vunpack.c.l.b16 %v10176
        %v11041 = vunpack.c.h.b16 %v10176
        %v11042 = vunpack.c.l.b16 %v10177
        %v11043 = vunpack.c.h.b16 %v10177
        %v11044 = vunpack.c.l.b16 %v10178
        %v11045 = vunpack.c.h.b16 %v10178
        %v11046 = vunpack.c.l.b16 %v10179
        %v11047 = vunpack.c.h.b16 %v10179
        %v11048 = vunpack.c.l.b16 %v10180
        %v11049 = vunpack.c.h.b16 %v10180
        %v11050 = vunpack.c.l.b16 %v10181
        %v11051 = vunpack.c.h.b16 %v10181
        %v11052 = vunpack.c.l.b16 %v10182
        %v11053 = vunpack.c.h.b16 %v10182
        %v11054 = vunpack.c.l.b16 %v10183
        %v11055 = vunpack.c.h.b16 %v10183
        %v11056 = vunpack.c.l.b16 %v10184
        %v11057 = vunpack.c.h.b16 %v10184
        %v11058 = vunpack.c.l.b16 %v10185
        %v11059 = vunpack.c.h.b16 %v10185
        %v11060 = vunpack.c.l.b16 %v10186
        %v11061 = vunpack.c.h.b16 %v10186
        %v11062 = vunpack.c.l.b16 %v10187
        %v11063 = vunpack.c.h.b16 %v10187
        %v11064 = vunpack.c.l.b16 %v10188
        %v11065 = vunpack.c.h.b16 %v10188
        %v11066 = vunpack.c.l.b16 %v10189
        %v11067 = vunpack.c.h.b16 %v10189
        %v11068 = vunpack.c.l.b16 %v10190
        %v11069 = vunpack.c.h.b16 %v10190
        %v11070 = vunpack.c.l.b16 %v10191
        %v11071 = vunpack.c.h.b16 %v10191
        %v11072 = vunpack.c.l.b16 %v10192
        %v11073 = vunpack.c.h.b16 %v10192
        %v11074 = vunpack.c.l.b16 %v10193
        %v11075 = vunpack.c.h.b16 %v10193
        %v11076 = vunpack.c.l.b16 %v10194
        %v11077 = vunpack.c.h.b16 %v10194
        %v11078 = vunpack.c.l.b16 %v10195
        %v11079 = vunpack.c.h.b16 %v10195
        %v11080 = vunpack.c.l.b16 %v10196
        %v11081 = vunpack.c.h.b16 %v10196
        %v11082 = vunpack.c.l.b16 %v10197
        %v11083 = vunpack.c.h.b16 %v10197
        %v11084 = vunpack.c.l.b16 %v10198
        %v11085 = vunpack.c.h.b16 %v10198
        %v11086 = vunpack.c.l.b16 %v10199
        %v11087 = vunpack.c.h.b16 %v10199
        %v11088 = vunpack.c.l.b16 %v10200
        %v11089 = vunpack.c.h.b16 %v10200
        %v11090 = vunpack.c.l.b16 %v10201
        %v11091 = vunpack.c.h.b16 %v10201
        %v11092 = vunpack.c.l.b16 %v10202
        %v11093 = vunpack.c.h.b16 %v10202
        %v11094 = vunpack.c.l.b16 %v10203
        %v11095 = vunpack.c.h.b16 %v10203
        %v11096 = vunpack.c.l.b16 %v10204
        %v11097 = vunpack.c.h.b16 %v10204
        %v11098 = vunpack.c.l.b16 %v10205
        %v11099 = vunpack.c.h.b16 %v10205
        %v11100 = vunpack.c.l.b16 %v10206
        %v11101 = vunpack.c.h.b16 %v10206
        %v11102 = vunpack.c.l.b16 %v10207
        %v11103 = vunpack.c.h.b16 %v10207
        %v11104 = vpack.c.b16 %v10534, %v10528
        %v11105 = vpack.c.b16 %v10535, %v10529
        %v11106 = vpack.c.b16 %v10536, %v10530
        %v11107 = vpack.c.b16 %v10537, %v10531
        %v11108 = vpack.c.b16 %v10538, %v10532
        %v11109 = vpack.c.b16 %v10539, %v10533
        %v11110 = vpack.c.b16 %v10546, %v10540
        %v11111 = vpack.c.b16 %v10547, %v10541
        %v11112 = vpack.c.b16 %v10548, %v10542
        %v11113 = vpack.c.b16 %v10549, %v10543
        %v11114 = vpack.c.b16 %v10550, %v10544
        %v11115 = vpack.c.b16 %v10551, %v10545
        %v11116 = vpack.c.b16 %v10558, %v10552
        %v11117 = vpack.c.b16 %v10559, %v10553
        %v11118 = vpack.c.b16 %v10560, %v10554
        %v11119 = vpack.c.b16 %v10561, %v10555
        %v11120 = vpack.c.b16 %v10562, %v10556
        %v11121 = vpack.c.b16 %v10563, %v10557
        %v11122 = vpack.c.b16 %v10570, %v10564
        %v11123 = vpack.c.b16 %v10571, %v10565
        %v11124 = vpack.c.b16 %v10572, %v10566
        %v11125 = vpack.c.b16 %v10573, %v10567
        %v11126 = vpack.c.b16 %v10574, %v10568
        %v11127 = vpack.c.b16 %v10575, %v10569
        %v11128 = vpack.c.b16 %v10582, %v10576
        %v11129 = vpack.c.b16 %v10583, %v10577
        %v11130 = vpack.c.b16 %v10584, %v10578
        %v11131 = vpack.c.b16 %v10585, %v10579
        %v11132 = vpack.c.b16 %v10586, %v10580
        %v11133 = vpack.c.b16 %v10587, %v10581
        %v11134 = vpack.c.b16 %v10594, %v10588
        %v11135 = vpack.c.b16 %v10595, %v10589
        %v11136 = vpack.c.b16 %v10596, %v10590
        %v11137 = vpack.c.b16 %v10597, %v10591
        %v11138 = vpack.c.b16 %v10598, %v10592
        %v11139 = vpack.c.b16 %v10599, %v10593
        %v11140 = vpack.c.b16 %v10606, %v10600
        %v11141 = vpack.c.b16 %v10607, %v10601
        %v11142 = vpack.c.b16 %v10608, %v10602
        %v11143 = vpack.c.b16 %v10609, %v10603
        %v11144 = vpack.c.b16 %v10610, %v10604
        %v11145 = vpack.c.b16 %v10611, %v10605
        %v11146 = vpack.c.b16 %v10618, %v10612
        %v11147 = vpack.c.b16 %v10619, %v10613
        %v11148 = vpack.c.b16 %v10620, %v10614
        %v11149 = vpack.c.b16 %v10621, %v10615
        %v11150 = vpack.c.b16 %v10622, %v10616
        %v11151 = vpack.c.b16 %v10623, %v10617
        %v11152 = vpack.c.b16 %v10630, %v10624
        %v11153 = vpack.c.b16 %v10631, %v10625
        %v11154 = vpack.c.b16 %v10632, %v10626
        %v11155 = vpack.c.b16 %v10633, %v10627
        %v11156 = vpack.c.b16 %v10634, %v10628
        %v11157 = vpack.c.b16 %v10635, %v10629
        %v11158 = vpack.c.b16 %v10642, %v10636
        %v11159 = vpack.c.b16 %v10643, %v10637
        %v11160 = vpack.c.b16 %v10644, %v10638
        %v11161 = vpack.c.b16 %v10645, %v10639
        %v11162 = vpack.c.b16 %v10646, %v10640
        %v11163 = vpack.c.b16 %v10647, %v10641
        %v11164 = vpack.c.b16 %v10654, %v10648
        %v11165 = vpack.c.b16 %v10655, %v10649
        %v11166 = vpack.c.b16 %v10656, %v10650
        %v11167 = vpack.c.b16 %v10657, %v10651
        %v11168 = vpack.c.b16 %v10658, %v10652
        %v11169 = vpack.c.b16 %v10659, %v10653
        %v11170 = vpack.c.b16 %v10666, %v10660
        %v11171 = vpack.c.b16 %v10667, %v10661
        %v11172 = vpack.c.b16 %v10668, %v10662
        %v11173 = vpack.c.b16 %v10669, %v10663
        %v11174 = vpack.c.b16 %v10670, %v10664
        %v11175 = vpack.c.b16 %v10671, %v10665
        %v11176 = vpack.c.b16 %v10678, %v10672
        %v11177 = vpack.c.b16 %v10679, %v10673
        %v11178 = vpack.c.b16 %v10680, %v10674
        %v11179 = vpack.c.b16 %v10681, %v10675
        %v11180 = vpack.c.b16 %v10682, %v10676
        %v11181 = vpack.c.b16 %v10683, %v10677
        %v11182 = vpack.c.b16 %v10690, %v10684
        %v11183 = vpack.c.b16 %v10691, %v10685
        %v11184 = vpack.c.b16 %v10692, %v10686
        %v11185 = vpack.c.b16 %v10693, %v10687
        %v11186 = vpack.c.b16 %v10694, %v10688
        %v11187 = vpack.c.b16 %v10695, %v10689
        %v11188 = vpack.c.b16 %v10702, %v10696
        %v11189 = vpack.c.b16 %v10703, %v10697
        %v11190 = vpack.c.b16 %v10704, %v10698
        %v11191 = vpack.c.b16 %v10705, %v10699
        %v11192 = vpack.c.b16 %v10706, %v10700
        %v11193 = vpack.c.b16 %v10707, %v10701
        %v11194 = vpack.c.b16 %v10714, %v10708
        %v11195 = vpack.c.b16 %v10715, %v10709
        %v11196 = vpack.c.b16 %v10716, %v10710
        %v11197 = vpack.c.b16 %v10717, %v10711
        %v11198 = vpack.c.b16 %v10718, %v10712
        %v11199 = vpack.c.b16 %v10719, %v10713
        %v11200 = vpack.c.b16 %v10726, %v10720
        %v11201 = vpack.c.b16 %v10727, %v10721
        %v11202 = vpack.c.b16 %v10728, %v10722
        %v11203 = vpack.c.b16 %v10729, %v10723
        %v11204 = vpack.c.b16 %v10730, %v10724
        %v11205 = vpack.c.b16 %v10731, %v10725
        %v11206 = vpack.c.b16 %v10738, %v10732
        %v11207 = vpack.c.b16 %v10739, %v10733
        %v11208 = vpack.c.b16 %v10740, %v10734
        %v11209 = vpack.c.b16 %v10741, %v10735
        %v11210 = vpack.c.b16 %v10742, %v10736
        %v11211 = vpack.c.b16 %v10743, %v10737
        %v11212 = vpack.c.b16 %v10750, %v10744
        %v11213 = vpack.c.b16 %v10751, %v10745
        %v11214 = vpack.c.b16 %v10752, %v10746
        %v11215 = vpack.c.b16 %v10753, %v10747
        %v11216 = vpack.c.b16 %v10754, %v10748
        %v11217 = vpack.c.b16 %v10755, %v10749
        %v11218 = vpack.c.b16 %v10762, %v10756
        %v11219 = vpack.c.b16 %v10763, %v10757
        %v11220 = vpack.c.b16 %v10764, %v10758
        %v11221 = vpack.c.b16 %v10765, %v10759
        %v11222 = vpack.c.b16 %v10766, %v10760
        %v11223 = vpack.c.b16 %v10767, %v10761
        %v11224 = vpack.c.b16 %v10774, %v10768
        %v11225 = vpack.c.b16 %v10775, %v10769
        %v11226 = vpack.c.b16 %v10776, %v10770
        %v11227 = vpack.c.b16 %v10777, %v10771
        %v11228 = vpack.c.b16 %v10778, %v10772
        %v11229 = vpack.c.b16 %v10779, %v10773
        %v11230 = vpack.c.b16 %v10786, %v10780
        %v11231 = vpack.c.b16 %v10787, %v10781
        %v11232 = vpack.c.b16 %v10788, %v10782
        %v11233 = vpack.c.b16 %v10789, %v10783
        %v11234 = vpack.c.b16 %v10790, %v10784
        %v11235 = vpack.c.b16 %v10791, %v10785
        %v11236 = vpack.c.b16 %v10798, %v10792
        %v11237 = vpack.c.b16 %v10799, %v10793
        %v11238 = vpack.c.b16 %v10800, %v10794
        %v11239 = vpack.c.b16 %v10801, %v10795
        %v11240 = vpack.c.b16 %v10802, %v10796
        %v11241 = vpack.c.b16 %v10803, %v10797
        %v11242 = vpack.c.b16 %v10810, %v10804
        %v11243 = vpack.c.b16 %v10811, %v10805
        %v11244 = vpack.c.b16 %v10812, %v10806
        %v11245 = vpack.c.b16 %v10813, %v10807
        %v11246 = vpack.c.b16 %v10814, %v10808
        %v11247 = vpack.c.b16 %v10815, %v10809
        %v11248 = vpack.c.b16 %v10822, %v10816
        %v11249 = vpack.c.b16 %v10823, %v10817
        %v11250 = vpack.c.b16 %v10824, %v10818
        %v11251 = vpack.c.b16 %v10825, %v10819
        %v11252 = vpack.c.b16 %v10826, %v10820
        %v11253 = vpack.c.b16 %v10827, %v10821
        %v11254 = vpack.c.b16 %v10834, %v10828
        %v11255 = vpack.c.b16 %v10835, %v10829
        %v11256 = vpack.c.b16 %v10836, %v10830
        %v11257 = vpack.c.b16 %v10837, %v10831
        %v11258 = vpack.c.b16 %v10838, %v10832
        %v11259 = vpack.c.b16 %v10839, %v10833
        %v11260 = vpack.c.b16 %v10846, %v10840
        %v11261 = vpack.c.b16 %v10847, %v10841
        %v11262 = vpack.c.b16 %v10848, %v10842
        %v11263 = vpack.c.b16 %v10849, %v10843
        %v11264 = vpack.c.b16 %v10850, %v10844
        %v11265 = vpack.c.b16 %v10851, %v10845
        %v11266 = vpack.c.b16 %v10858, %v10852
        %v11267 = vpack.c.b16 %v10859, %v10853
        %v11268 = vpack.c.b16 %v10860, %v10854
        %v11269 = vpack.c.b16 %v10861, %v10855
        %v11270 = vpack.c.b16 %v10862, %v10856
        %v11271 = vpack.c.b16 %v10863, %v10857
        %v11272 = vpack.c.b16 %v10870, %v10864
        %v11273 = vpack.c.b16 %v10871, %v10865
        %v11274 = vpack.c.b16 %v10872, %v10866
        %v11275 = vpack.c.b16 %v10873, %v10867
        %v11276 = vpack.c.b16 %v10874, %v10868
        %v11277 = vpack.c.b16 %v10875, %v10869
        %v11278 = vpack.c.b16 %v10882, %v10876
        %v11279 = vpack.c.b16 %v10883, %v10877
        %v11280 = vpack.c.b16 %v10884, %v10878
        %v11281 = vpack.c.b16 %v10885, %v10879
        %v11282 = vpack.c.b16 %v10886, %v10880
        %v11283 = vpack.c.b16 %v10887, %v10881
        %v11284 = vpack.c.b16 %v10894, %v10888
        %v11285 = vpack.c.b16 %v10895, %v10889
        %v11286 = vpack.c.b16 %v10896, %v10890
        %v11287 = vpack.c.b16 %v10897, %v10891
        %v11288 = vpack.c.b16 %v10898, %v10892
        %v11289 = vpack.c.b16 %v10899, %v10893
        %v11290 = vpack.c.b16 %v10906, %v10900
        %v11291 = vpack.c.b16 %v10907, %v10901
        %v11292 = vpack.c.b16 %v10908, %v10902
        %v11293 = vpack.c.b16 %v10909, %v10903
        %v11294 = vpack.c.b16 %v10910, %v10904
        %v11295 = vpack.c.b16 %v10911, %v10905
        %v11296 = vpack.c.b16 %v10918, %v10912
        %v11297 = vpack.c.b16 %v10919, %v10913
        %v11298 = vpack.c.b16 %v10920, %v10914
        %v11299 = vpack.c.b16 %v10921, %v10915
        %v11300 = vpack.c.b16 %v10922, %v10916
        %v11301 = vpack.c.b16 %v10923, %v10917
        %v11302 = vpack.c.b16 %v10930, %v10924
        %v11303 = vpack.c.b16 %v10931, %v10925
        %v11304 = vpack.c.b16 %v10932, %v10926
        %v11305 = vpack.c.b16 %v10933, %v10927
        %v11306 = vpack.c.b16 %v10934, %v10928
        %v11307 = vpack.c.b16 %v10935, %v10929
        %v11308 = vpack.c.b16 %v10942, %v10936
        %v11309 = vpack.c.b16 %v10943, %v10937
        %v11310 = vpack.c.b16 %v10944, %v10938
        %v11311 = vpack.c.b16 %v10945, %v10939
        %v11312 = vpack.c.b16 %v10946, %v10940
        %v11313 = vpack.c.b16 %v10947, %v10941
        %v11314 = vpack.c.b16 %v10954, %v10948
        %v11315 = vpack.c.b16 %v10955, %v10949
        %v11316 = vpack.c.b16 %v10956, %v10950
        %v11317 = vpack.c.b16 %v10957, %v10951
        %v11318 = vpack.c.b16 %v10958, %v10952
        %v11319 = vpack.c.b16 %v10959, %v10953
        %v11320 = vpack.c.b16 %v10966, %v10960
        %v11321 = vpack.c.b16 %v10967, %v10961
        %v11322 = vpack.c.b16 %v10968, %v10962
        %v11323 = vpack.c.b16 %v10969, %v10963
        %v11324 = vpack.c.b16 %v10970, %v10964
        %v11325 = vpack.c.b16 %v10971, %v10965
        %v11326 = vpack.c.b16 %v10978, %v10972
        %v11327 = vpack.c.b16 %v10979, %v10973
        %v11328 = vpack.c.b16 %v10980, %v10974
        %v11329 = vpack.c.b16 %v10981, %v10975
        %v11330 = vpack.c.b16 %v10982, %v10976
        %v11331 = vpack.c.b16 %v10983, %v10977
        %v11332 = vpack.c.b16 %v10990, %v10984
        %v11333 = vpack.c.b16 %v10991, %v10985
        %v11334 = vpack.c.b16 %v10992, %v10986
        %v11335 = vpack.c.b16 %v10993, %v10987
        %v11336 = vpack.c.b16 %v10994, %v10988
        %v11337 = vpack.c.b16 %v10995, %v10989
        %v11338 = vpack.c.b16 %v11002, %v10996
        %v11339 = vpack.c.b16 %v11003, %v10997
        %v11340 = vpack.c.b16 %v11004, %v10998
        %v11341 = vpack.c.b16 %v11005, %v10999
        %v11342 = vpack.c.b16 %v11006, %v11000
        %v11343 = vpack.c.b16 %v11007, %v11001
        %v11344 = vpack.c.b16 %v11014, %v11008
        %v11345 = vpack.c.b16 %v11015, %v11009
        %v11346 = vpack.c.b16 %v11016, %v11010
        %v11347 = vpack.c.b16 %v11017, %v11011
        %v11348 = vpack.c.b16 %v11018, %v11012
        %v11349 = vpack.c.b16 %v11019, %v11013
        %v11350 = vpack.c.b16 %v11026, %v11020
        %v11351 = vpack.c.b16 %v11027, %v11021
        %v11352 = vpack.c.b16 %v11028, %v11022
        %v11353 = vpack.c.b16 %v11029, %v11023
        %v11354 = vpack.c.b16 %v11030, %v11024
        %v11355 = vpack.c.b16 %v11031, %v11025
        %v11356 = vpack.c.b16 %v11038, %v11032
        %v11357 = vpack.c.b16 %v11039, %v11033
        %v11358 = vpack.c.b16 %v11040, %v11034
        %v11359 = vpack.c.b16 %v11041, %v11035
        %v11360 = vpack.c.b16 %v11042, %v11036
        %v11361 = vpack.c.b16 %v11043, %v11037
        %v11362 = vpack.c.b16 %v11050, %v11044
        %v11363 = vpack.c.b16 %v11051, %v11045
        %v11364 = vpack.c.b16 %v11052, %v11046
        %v11365 = vpack.c.b16 %v11053, %v11047
        %v11366 = vpack.c.b16 %v11054, %v11048
        %v11367 = vpack.c.b16 %v11055, %v11049
        %v11368 = vpack.c.b16 %v11062, %v11056
        %v11369 = vpack.c.b16 %v11063, %v11057
        %v11370 = vpack.c.b16 %v11064, %v11058
        %v11371 = vpack.c.b16 %v11065, %v11059
        %v11372 = vpack.c.b16 %v11066, %v11060
        %v11373 = vpack.c.b16 %v11067, %v11061
        %v11374 = vpack.c.b16 %v11074, %v11068
        %v11375 = vpack.c.b16 %v11075, %v11069
        %v11376 = vpack.c.b16 %v11076, %v11070
        %v11377 = vpack.c.b16 %v11077, %v11071
        %v11378 = vpack.c.b16 %v11078, %v11072
        %v11379 = vpack.c.b16 %v11079, %v11073
        %v11380 = vpack.c.b16 %v11086, %v11080
        %v11381 = vpack.c.b16 %v11087, %v11081
        %v11382 = vpack.c.b16 %v11088, %v11082
        %v11383 = vpack.c.b16 %v11089, %v11083
        %v11384 = vpack.c.b16 %v11090, %v11084
        %v11385 = vpack.c.b16 %v11091, %v11085
        %v11386 = vpack.c.b16 %v11098, %v11092
        %v11387 = vpack.c.b16 %v11099, %v11093
        %v11388 = vpack.c.b16 %v11100, %v11094
        %v11389 = vpack.c.b16 %v11101, %v11095
        %v11390 = vpack.c.b16 %v11102, %v11096
        %v11391 = vpack.c.b16 %v11103, %v11097
        %11680 = vmatprep.subr.bf16.mxu0 %v11105
        %11681 = vmatpush1.bf16.msra.mxu0 %v11104
        %11682 = vmatprep.subr.bf16.mxu0 %v11111
        %11683 = vmatpush1.bf16.msra.mxu0 %v11110
        %11684 = vmatprep.subr.bf16.mxu0 %v11117
        %11685 = vmatpush1.bf16.msra.mxu0 %v11116
        %11686 = vmatprep.subr.bf16.mxu0 %v11123
        %11687 = vmatpush1.bf16.msra.mxu0 %v11122
        %11688 = vmatprep.subr.bf16.mxu0 %v11129
        %11689 = vmatpush1.bf16.msra.mxu0 %v11128
        %11690 = vmatprep.subr.bf16.mxu0 %v11135
        %11691 = vmatpush1.bf16.msra.mxu0 %v11134
        %11692 = vmatprep.subr.bf16.mxu0 %v11141
        %11693 = vmatpush1.bf16.msra.mxu0 %v11140
        %11694 = vmatprep.subr.bf16.mxu0 %v11147
        %11695 = vmatpush1.bf16.msra.mxu0 %v11146
        %11696 = vmatprep.subr.bf16.mxu0 %v11153
        %11697 = vmatpush1.bf16.msra.mxu0 %v11152
        %11698 = vmatprep.subr.bf16.mxu0 %v11159
        %11699 = vmatpush1.bf16.msra.mxu0 %v11158
        %11700 = vmatprep.subr.bf16.mxu0 %v11165
        %11701 = vmatpush1.bf16.msra.mxu0 %v11164
        %11702 = vmatprep.subr.bf16.mxu0 %v11171
        %11703 = vmatpush1.bf16.msra.mxu0 %v11170
        %11704 = vmatprep.subr.bf16.mxu0 %v11177
        %11705 = vmatpush1.bf16.msra.mxu0 %v11176
        %11706 = vmatprep.subr.bf16.mxu0 %v11183
        %11707 = vmatpush1.bf16.msra.mxu0 %v11182
        %11708 = vmatprep.subr.bf16.mxu0 %v11189
        %11709 = vmatpush1.bf16.msra.mxu0 %v11188
        %11710 = vmatprep.subr.bf16.mxu0 %v11195
        %11711 = vmatpush1.bf16.msra.mxu0 %v11194
        %11712 = vmatprep.mubr.bf16.mxu0 %v9915
        %11713 = vmatmul.mubr.bf16.gmra.mrb[0].mxu0 %v9914
        %v11714 = vpop.f32.mrb[0].mxu0
        %v11715 = vadd.f32 %v10213, %v11714
        %v11716 = vpop.f32.mrb[0].mxu0
        %v11717 = vadd.f32 %v10217, %v11716
        %v11718 = vpop.f32.mrb[0].mxu0
        %v11719 = vpop.f32.mrb[0].mxu0
        %11720 = vdwg.mxu0
        %11721 = vmatprep.subr.bf16.mxu0 %v11201
        %11722 = vmatpush1.bf16.msra.mxu0 %v11200
        %11723 = vmatprep.subr.bf16.mxu0 %v11207
        %11724 = vmatpush1.bf16.msra.mxu0 %v11206
        %11725 = vmatprep.subr.bf16.mxu0 %v11213
        %11726 = vmatpush1.bf16.msra.mxu0 %v11212
        %11727 = vmatprep.subr.bf16.mxu0 %v11219
        %11728 = vmatpush1.bf16.msra.mxu0 %v11218
        %11729 = vmatprep.subr.bf16.mxu0 %v11225
        %11730 = vmatpush1.bf16.msra.mxu0 %v11224
        %11731 = vmatprep.subr.bf16.mxu0 %v11231
        %11732 = vmatpush1.bf16.msra.mxu0 %v11230
        %11733 = vmatprep.subr.bf16.mxu0 %v11237
        %11734 = vmatpush1.bf16.msra.mxu0 %v11236
        %11735 = vmatprep.subr.bf16.mxu0 %v11243
        %11736 = vmatpush1.bf16.msra.mxu0 %v11242
        %11737 = vmatprep.subr.bf16.mxu0 %v11249
        %11738 = vmatpush1.bf16.msra.mxu0 %v11248
        %11739 = vmatprep.subr.bf16.mxu0 %v11255
        %11740 = vmatpush1.bf16.msra.mxu0 %v11254
        %11741 = vmatprep.subr.bf16.mxu0 %v11261
        %11742 = vmatpush1.bf16.msra.mxu0 %v11260
        %11743 = vmatprep.subr.bf16.mxu0 %v11267
        %11744 = vmatpush1.bf16.msra.mxu0 %v11266
        %11745 = vmatprep.subr.bf16.mxu0 %v11273
        %11746 = vmatpush1.bf16.msra.mxu0 %v11272
        %11747 = vmatprep.subr.bf16.mxu0 %v11279
        %11748 = vmatpush1.bf16.msra.mxu0 %v11278
        %11749 = vmatprep.subr.bf16.mxu0 %v11285
        %11750 = vmatpush1.bf16.msra.mxu0 %v11284
        %11751 = vmatprep.subr.bf16.mxu0 %v11291
        %11752 = vmatpush1.bf16.msra.mxu0 %v11290
        %11753 = vmatprep.mubr.bf16.mxu0 %v9917
        %11754 = vmatmul.mubr.bf16.gmra.mrb[0].mxu0 %v9916
        %v11755 = vpop.f32.mrb[0].mxu0
        %v11756 = vadd.f32 %v11715, %v11755
        %v11757 = vpop.f32.mrb[0].mxu0
        %v11758 = vadd.f32 %v11717, %v11757
        %v11759 = vpop.f32.mrb[0].mxu0
        %v11760 = vpop.f32.mrb[0].mxu0
        %11761 = vdwg.mxu0
        %11762 = vmatprep.subr.bf16.mxu0 %v11297
        %11763 = vmatpush1.bf16.msra.mxu0 %v11296
        %11764 = vmatprep.subr.bf16.mxu0 %v11303
        %11765 = vmatpush1.bf16.msra.mxu0 %v11302
        %11766 = vmatprep.subr.bf16.mxu0 %v11309
        %11767 = vmatpush1.bf16.msra.mxu0 %v11308
        %11768 = vmatprep.subr.bf16.mxu0 %v11315
        %11769 = vmatpush1.bf16.msra.mxu0 %v11314
        %11770 = vmatprep.subr.bf16.mxu0 %v11321
        %11771 = vmatpush1.bf16.msra.mxu0 %v11320
        %11772 = vmatprep.subr.bf16.mxu0 %v11327
        %11773 = vmatpush1.bf16.msra.mxu0 %v11326
        %11774 = vmatprep.subr.bf16.mxu0 %v11333
        %11775 = vmatpush1.bf16.msra.mxu0 %v11332
        %11776 = vmatprep.subr.bf16.mxu0 %v11339
        %11777 = vmatpush1.bf16.msra.mxu0 %v11338
        %11778 = vmatprep.subr.bf16.mxu0 %v11345
        %11779 = vmatpush1.bf16.msra.mxu0 %v11344
        %11780 = vmatprep.subr.bf16.mxu0 %v11351
        %11781 = vmatpush1.bf16.msra.mxu0 %v11350
        %11782 = vmatprep.subr.bf16.mxu0 %v11357
        %11783 = vmatpush1.bf16.msra.mxu0 %v11356
        %11784 = vmatprep.subr.bf16.mxu0 %v11363
        %11785 = vmatpush1.bf16.msra.mxu0 %v11362
        %11786 = vmatprep.subr.bf16.mxu0 %v11369
        %11787 = vmatpush1.bf16.msra.mxu0 %v11368
        %11788 = vmatprep.subr.bf16.mxu0 %v11375
        %11789 = vmatpush1.bf16.msra.mxu0 %v11374
        %11790 = vmatprep.subr.bf16.mxu0 %v11381
        %11791 = vmatpush1.bf16.msra.mxu0 %v11380
        %11792 = vmatprep.subr.bf16.mxu0 %v11387
        %11793 = vmatpush1.bf16.msra.mxu0 %v11386
        %11794 = vmatprep.mubr.bf16.mxu0 %v9919
        %11795 = vmatmul.mubr.bf16.gmra.mrb[0].mxu0 %v9918
        %v11796 = vpop.f32.mrb[0].mxu0
        %v11797 = vadd.f32 %v11756, %v11796
        %v11798 = vpop.f32.mrb[0].mxu0
        %v11799 = vadd.f32 %v11758, %v11798
        %v11800 = vpop.f32.mrb[0].mxu0
        %v11801 = vpop.f32.mrb[0].mxu0
        %11802 = vdwg.mxu0
        %11803 = vmatprep.subr.bf16.mxu0 %v11107
        %11804 = vmatpush1.bf16.msra.mxu0 %v11106
        %11805 = vmatprep.subr.bf16.mxu0 %v11113
        %11806 = vmatpush1.bf16.msra.mxu0 %v11112
        %11807 = vmatprep.subr.bf16.mxu0 %v11119
        %11808 = vmatpush1.bf16.msra.mxu0 %v11118
        %11809 = vmatprep.subr.bf16.mxu0 %v11125
        %11810 = vmatpush1.bf16.msra.mxu0 %v11124
        %11811 = vmatprep.subr.bf16.mxu0 %v11131
        %11812 = vmatpush1.bf16.msra.mxu0 %v11130
        %11813 = vmatprep.subr.bf16.mxu0 %v11137
        %11814 = vmatpush1.bf16.msra.mxu0 %v11136
        %11815 = vmatprep.subr.bf16.mxu0 %v11143
        %11816 = vmatpush1.bf16.msra.mxu0 %v11142
        %11817 = vmatprep.subr.bf16.mxu0 %v11149
        %11818 = vmatpush1.bf16.msra.mxu0 %v11148
        %11819 = vmatprep.subr.bf16.mxu0 %v11155
        %11820 = vmatpush1.bf16.msra.mxu0 %v11154
        %11821 = vmatprep.subr.bf16.mxu0 %v11161
        %11822 = vmatpush1.bf16.msra.mxu0 %v11160
        %11823 = vmatprep.subr.bf16.mxu0 %v11167
        %11824 = vmatpush1.bf16.msra.mxu0 %v11166
        %11825 = vmatprep.subr.bf16.mxu0 %v11173
        %11826 = vmatpush1.bf16.msra.mxu0 %v11172
        %11827 = vmatprep.subr.bf16.mxu0 %v11179
        %11828 = vmatpush1.bf16.msra.mxu0 %v11178
        %11829 = vmatprep.subr.bf16.mxu0 %v11185
        %11830 = vmatpush1.bf16.msra.mxu0 %v11184
        %11831 = vmatprep.subr.bf16.mxu0 %v11191
        %11832 = vmatpush1.bf16.msra.mxu0 %v11190
        %11833 = vmatprep.subr.bf16.mxu0 %v11197
        %11834 = vmatpush1.bf16.msra.mxu0 %v11196
        %11835 = vmatprep.mubr.bf16.mxu0 %v9915
        %11836 = vmatmul.mubr.bf16.gmra.mrb[0].mxu0 %v9914
        %v11837 = vpop.f32.mrb[0].mxu0
        %v11838 = vadd.f32 %v10221, %v11837
        %v11839 = vpop.f32.mrb[0].mxu0
        %v11840 = vadd.f32 %v10225, %v11839
        %v11841 = vpop.f32.mrb[0].mxu0
        %v11842 = vpop.f32.mrb[0].mxu0
        %11843 = vdwg.mxu0
        %11844 = vmatprep.subr.bf16.mxu0 %v11203
        %11845 = vmatpush1.bf16.msra.mxu0 %v11202
        %11846 = vmatprep.subr.bf16.mxu0 %v11209
        %11847 = vmatpush1.bf16.msra.mxu0 %v11208
        %11848 = vmatprep.subr.bf16.mxu0 %v11215
        %11849 = vmatpush1.bf16.msra.mxu0 %v11214
        %11850 = vmatprep.subr.bf16.mxu0 %v11221
        %11851 = vmatpush1.bf16.msra.mxu0 %v11220
        %11852 = vmatprep.subr.bf16.mxu0 %v11227
        %11853 = vmatpush1.bf16.msra.mxu0 %v11226
        %11854 = vmatprep.subr.bf16.mxu0 %v11233
        %11855 = vmatpush1.bf16.msra.mxu0 %v11232
        %11856 = vmatprep.subr.bf16.mxu0 %v11239
        %11857 = vmatpush1.bf16.msra.mxu0 %v11238
        %11858 = vmatprep.subr.bf16.mxu0 %v11245
        %11859 = vmatpush1.bf16.msra.mxu0 %v11244
        %11860 = vmatprep.subr.bf16.mxu0 %v11251
        %11861 = vmatpush1.bf16.msra.mxu0 %v11250
        %11862 = vmatprep.subr.bf16.mxu0 %v11257
        %11863 = vmatpush1.bf16.msra.mxu0 %v11256
        %11864 = vmatprep.subr.bf16.mxu0 %v11263
        %11865 = vmatpush1.bf16.msra.mxu0 %v11262
        %11866 = vmatprep.subr.bf16.mxu0 %v11269
        %11867 = vmatpush1.bf16.msra.mxu0 %v11268
        %11868 = vmatprep.subr.bf16.mxu0 %v11275
        %11869 = vmatpush1.bf16.msra.mxu0 %v11274
        %11870 = vmatprep.subr.bf16.mxu0 %v11281
        %11871 = vmatpush1.bf16.msra.mxu0 %v11280
        %11872 = vmatprep.subr.bf16.mxu0 %v11287
        %11873 = vmatpush1.bf16.msra.mxu0 %v11286
        %11874 = vmatprep.subr.bf16.mxu0 %v11293
        %11875 = vmatpush1.bf16.msra.mxu0 %v11292
        %11876 = vmatprep.mubr.bf16.mxu0 %v9917
        %11877 = vmatmul.mubr.bf16.gmra.mrb[0].mxu0 %v9916
        %v11878 = vpop.f32.mrb[0].mxu0
        %v11879 = vadd.f32 %v11838, %v11878
        %v11880 = vpop.f32.mrb[0].mxu0
        %v11881 = vadd.f32 %v11840, %v11880
        %v11882 = vpop.f32.mrb[0].mxu0
        %v11883 = vpop.f32.mrb[0].mxu0
        %11884 = vdwg.mxu0
        %11885 = vmatprep.subr.bf16.mxu0 %v11299
        %11886 = vmatpush1.bf16.msra.mxu0 %v11298
        %11887 = vmatprep.subr.bf16.mxu0 %v11305
        %11888 = vmatpush1.bf16.msra.mxu0 %v11304
        %11889 = vmatprep.subr.bf16.mxu0 %v11311
        %11890 = vmatpush1.bf16.msra.mxu0 %v11310
        %11891 = vmatprep.subr.bf16.mxu0 %v11317
        %11892 = vmatpush1.bf16.msra.mxu0 %v11316
        %11893 = vmatprep.subr.bf16.mxu0 %v11323
        %11894 = vmatpush1.bf16.msra.mxu0 %v11322
        %11895 = vmatprep.subr.bf16.mxu0 %v11329
        %11896 = vmatpush1.bf16.msra.mxu0 %v11328
        %11897 = vmatprep.subr.bf16.mxu0 %v11335
        %11898 = vmatpush1.bf16.msra.mxu0 %v11334
        %11899 = vmatprep.subr.bf16.mxu0 %v11341
        %11900 = vmatpush1.bf16.msra.mxu0 %v11340
        %11901 = vmatprep.subr.bf16.mxu0 %v11347
        %11902 = vmatpush1.bf16.msra.mxu0 %v11346
        %11903 = vmatprep.subr.bf16.mxu0 %v11353
        %11904 = vmatpush1.bf16.msra.mxu0 %v11352
        %11905 = vmatprep.subr.bf16.mxu0 %v11359
        %11906 = vmatpush1.bf16.msra.mxu0 %v11358
        %11907 = vmatprep.subr.bf16.mxu0 %v11365
        %11908 = vmatpush1.bf16.msra.mxu0 %v11364
        %11909 = vmatprep.subr.bf16.mxu0 %v11371
        %11910 = vmatpush1.bf16.msra.mxu0 %v11370
        %11911 = vmatprep.subr.bf16.mxu0 %v11377
        %11912 = vmatpush1.bf16.msra.mxu0 %v11376
        %11913 = vmatprep.subr.bf16.mxu0 %v11383
        %11914 = vmatpush1.bf16.msra.mxu0 %v11382
        %11915 = vmatprep.subr.bf16.mxu0 %v11389
        %11916 = vmatpush1.bf16.msra.mxu0 %v11388
        %11917 = vmatprep.mubr.bf16.mxu0 %v9919
        %11918 = vmatmul.mubr.bf16.gmra.mrb[0].mxu0 %v9918
        %v11919 = vpop.f32.mrb[0].mxu0
        %v11920 = vadd.f32 %v11879, %v11919
        %v11921 = vpop.f32.mrb[0].mxu0
        %v11922 = vadd.f32 %v11881, %v11921
        %v11923 = vpop.f32.mrb[0].mxu0
        %v11924 = vpop.f32.mrb[0].mxu0
        %11925 = vdwg.mxu0
        %11926 = vmatprep.subr.bf16.mxu0 %v11109
        %11927 = vmatpush1.bf16.msra.mxu0 %v11108
        %11928 = vmatprep.subr.bf16.mxu0 %v11115
        %11929 = vmatpush1.bf16.msra.mxu0 %v11114
        %11930 = vmatprep.subr.bf16.mxu0 %v11121
        %11931 = vmatpush1.bf16.msra.mxu0 %v11120
        %11932 = vmatprep.subr.bf16.mxu0 %v11127
        %11933 = vmatpush1.bf16.msra.mxu0 %v11126
        %11934 = vmatprep.subr.bf16.mxu0 %v11133
        %11935 = vmatpush1.bf16.msra.mxu0 %v11132
        %11936 = vmatprep.subr.bf16.mxu0 %v11139
        %11937 = vmatpush1.bf16.msra.mxu0 %v11138
        %11938 = vmatprep.subr.bf16.mxu0 %v11145
        %11939 = vmatpush1.bf16.msra.mxu0 %v11144
        %11940 = vmatprep.subr.bf16.mxu0 %v11151
        %11941 = vmatpush1.bf16.msra.mxu0 %v11150
        %11942 = vmatprep.subr.bf16.mxu0 %v11157
        %11943 = vmatpush1.bf16.msra.mxu0 %v11156
        %11944 = vmatprep.subr.bf16.mxu0 %v11163
        %11945 = vmatpush1.bf16.msra.mxu0 %v11162
        %11946 = vmatprep.subr.bf16.mxu0 %v11169
        %11947 = vmatpush1.bf16.msra.mxu0 %v11168
        %11948 = vmatprep.subr.bf16.mxu0 %v11175
        %11949 = vmatpush1.bf16.msra.mxu0 %v11174
        %11950 = vmatprep.subr.bf16.mxu0 %v11181
        %11951 = vmatpush1.bf16.msra.mxu0 %v11180
        %11952 = vmatprep.subr.bf16.mxu0 %v11187
        %11953 = vmatpush1.bf16.msra.mxu0 %v11186
        %11954 = vmatprep.subr.bf16.mxu0 %v11193
        %11955 = vmatpush1.bf16.msra.mxu0 %v11192
        %11956 = vmatprep.subr.bf16.mxu0 %v11199
        %11957 = vmatpush1.bf16.msra.mxu0 %v11198
        %11958 = vmatprep.mubr.bf16.mxu0 %v9915
        %11959 = vmatmul.mubr.bf16.gmra.mrb[0].mxu0 %v9914
        %v11960 = vpop.f32.mrb[0].mxu0
        %v11961 = vadd.f32 %v10229, %v11960
        %v11962 = vpop.f32.mrb[0].mxu0
        %v11963 = vadd.f32 %v10233, %v11962
        %v11964 = vpop.f32.mrb[0].mxu0
        %v11965 = vpop.f32.mrb[0].mxu0
        %11966 = vdwg.mxu0
        %11967 = vmatprep.subr.bf16.mxu0 %v11205
        %11968 = vmatpush1.bf16.msra.mxu0 %v11204
        %11969 = vmatprep.subr.bf16.mxu0 %v11211
        %11970 = vmatpush1.bf16.msra.mxu0 %v11210
        %11971 = vmatprep.subr.bf16.mxu0 %v11217
        %11972 = vmatpush1.bf16.msra.mxu0 %v11216
        %11973 = vmatprep.subr.bf16.mxu0 %v11223
        %11974 = vmatpush1.bf16.msra.mxu0 %v11222
        %11975 = vmatprep.subr.bf16.mxu0 %v11229
        %11976 = vmatpush1.bf16.msra.mxu0 %v11228
        %11977 = vmatprep.subr.bf16.mxu0 %v11235
        %11978 = vmatpush1.bf16.msra.mxu0 %v11234
        %11979 = vmatprep.subr.bf16.mxu0 %v11241
        %11980 = vmatpush1.bf16.msra.mxu0 %v11240
        %11981 = vmatprep.subr.bf16.mxu0 %v11247
        %11982 = vmatpush1.bf16.msra.mxu0 %v11246
        %11983 = vmatprep.subr.bf16.mxu0 %v11253
        %11984 = vmatpush1.bf16.msra.mxu0 %v11252
        %11985 = vmatprep.subr.bf16.mxu0 %v11259
        %11986 = vmatpush1.bf16.msra.mxu0 %v11258
        %11987 = vmatprep.subr.bf16.mxu0 %v11265
        %11988 = vmatpush1.bf16.msra.mxu0 %v11264
        %11989 = vmatprep.subr.bf16.mxu0 %v11271
        %11990 = vmatpush1.bf16.msra.mxu0 %v11270
        %11991 = vmatprep.subr.bf16.mxu0 %v11277
        %11992 = vmatpush1.bf16.msra.mxu0 %v11276
        %11993 = vmatprep.subr.bf16.mxu0 %v11283
        %11994 = vmatpush1.bf16.msra.mxu0 %v11282
        %11995 = vmatprep.subr.bf16.mxu0 %v11289
        %11996 = vmatpush1.bf16.msra.mxu0 %v11288
        %11997 = vmatprep.subr.bf16.mxu0 %v11295
        %11998 = vmatpush1.bf16.msra.mxu0 %v11294
        %11999 = vmatprep.mubr.bf16.mxu0 %v9917
        %12000 = vmatmul.mubr.bf16.gmra.mrb[0].mxu0 %v9916
        %v12001 = vpop.f32.mrb[0].mxu0
        %v12002 = vadd.f32 %v11961, %v12001
        %v12003 = vpop.f32.mrb[0].mxu0
        %v12004 = vadd.f32 %v11963, %v12003
        %v12005 = vpop.f32.mrb[0].mxu0
        %v12006 = vpop.f32.mrb[0].mxu0
        %12007 = vdwg.mxu0
        %12008 = vmatprep.subr.bf16.mxu0 %v11301
        %12009 = vmatpush1.bf16.msra.mxu0 %v11300
        %12010 = vmatprep.subr.bf16.mxu0 %v11307
        %12011 = vmatpush1.bf16.msra.mxu0 %v11306
        %12012 = vmatprep.subr.bf16.mxu0 %v11313
        %12013 = vmatpush1.bf16.msra.mxu0 %v11312
        %12014 = vmatprep.subr.bf16.mxu0 %v11319
        %12015 = vmatpush1.bf16.msra.mxu0 %v11318
        %12016 = vmatprep.subr.bf16.mxu0 %v11325
        %12017 = vmatpush1.bf16.msra.mxu0 %v11324
        %12018 = vmatprep.subr.bf16.mxu0 %v11331
        %12019 = vmatpush1.bf16.msra.mxu0 %v11330
        %12020 = vmatprep.subr.bf16.mxu0 %v11337
        %12021 = vmatpush1.bf16.msra.mxu0 %v11336
        %12022 = vmatprep.subr.bf16.mxu0 %v11343
        %12023 = vmatpush1.bf16.msra.mxu0 %v11342
        %12024 = vmatprep.subr.bf16.mxu0 %v11349
        %12025 = vmatpush1.bf16.msra.mxu0 %v11348
        %12026 = vmatprep.subr.bf16.mxu0 %v11355
        %12027 = vmatpush1.bf16.msra.mxu0 %v11354
        %12028 = vmatprep.subr.bf16.mxu0 %v11361
        %12029 = vmatpush1.bf16.msra.mxu0 %v11360
        %12030 = vmatprep.subr.bf16.mxu0 %v11367
        %12031 = vmatpush1.bf16.msra.mxu0 %v11366
        %12032 = vmatprep.subr.bf16.mxu0 %v11373
        %12033 = vmatpush1.bf16.msra.mxu0 %v11372
        %12034 = vmatprep.subr.bf16.mxu0 %v11379
        %12035 = vmatpush1.bf16.msra.mxu0 %v11378
        %12036 = vmatprep.subr.bf16.mxu0 %v11385
        %12037 = vmatpush1.bf16.msra.mxu0 %v11384
        %12038 = vmatprep.subr.bf16.mxu0 %v11391
        %12039 = vmatpush1.bf16.msra.mxu0 %v11390
        %12040 = vmatprep.mubr.bf16.mxu0 %v9919
        %12041 = vmatmul.mubr.bf16.gmra.mrb[0].mxu0 %v9918
        %v12042 = vpop.f32.mrb[0].mxu0
        %v12043 = vadd.f32 %v12002, %v12042
        %v12044 = vpop.f32.mrb[0].mxu0
        %v12045 = vadd.f32 %v12004, %v12044
        %v12046 = vpop.f32.mrb[0].mxu0
        %v12047 = vpop.f32.mrb[0].mxu0
        %12048 = vdwg.mxu0
        %v12049 = vadd.f32 %v375, %v11797
        %v12050 = vadd.f32 %v376, %v11799
        %v12051 = vadd.f32 %v377, %v11920
        %v12052 = vadd.f32 %v378, %v11922
        %v12053 = vadd.f32 %v379, %v12043
        %v12054 = vadd.f32 %v380, %v12045
        %12055 = vst [vmem:[%s373] sm:$0xff] %v12049
        %12056 = vst [vmem:[%s373 + $0x8] sm:$0xff] %v12050
        %12057 = vst [vmem:[%s373 + $0x10] sm:$0xff] %v12051
        %12058 = vst [vmem:[%s373 + $0x18] sm:$0xff] %v12052
        %12059 = vst [vmem:[%s373 + $0x20] sm:$0xff] %v12053
        %12060 = vst [vmem:[%s373 + $0x28] sm:$0xff] %v12054
        %s12061 = sand.u32 %s187, 1
        %s12062 = scalar_lea.sflag [#allocation4], %s12061
        %s12063 = sand.u32 %s187, 1
        %s12064 = smul.addr %s12063, 48
        %s12065 = scalar_lea.vmem [#allocation14], %s12064
        // Predicated region
        $region77: #{tpu_custom_call.1} parent=47 // pred_check
          %p12066 = pneg %p197
        $region78: #{tpu_custom_call.1} parent=47 // pred_check_branch
          %12068 = sbr.rel (%p12066) target = $region80
        $region79: #{tpu_custom_call.1} parent=47 // pred_region
          %s12070 = ssub.s32 768, 768
          %12071 = vsyncadd %s12062, %s12070
          %s12072 = smul.addr %s27, 6
          %s12073 = smul.addr %s12072, 128
          %s12074 = scalar_lea.hbm %s7, %s12073
          %s12076 = sshll.u32 %s12065, 4
          %s12077 = int_to_ptr.vmem [resolvable:$true] %s12076
          %12079 = dma.vmem_to_hbm [thread:$0]  %s12077, 768, %s12074, %s12062
        $region80: #{tpu_custom_call.1} parent=47 // pred_fallthru
          _
      $region48: #{tpu_custom_call.1} parent=5 // pred_fallthru
        _
      %p12080 = scmp.le.s32.totalorder 2, %s22
      // Predicated region
      $region81: #{tpu_custom_call.1} parent=5 // pred_check
        %p12081 = pneg %p12080
      $region82: #{tpu_custom_call.1} parent=5 // pred_check_branch
        %12083 = sbr.rel (%p12081) target = $region84
      $region83: #{tpu_custom_call.1} parent=5 // pred_region
        %s12084 = ssub.s32 %s22, 2
        // Predicated region
        $region85: #{tpu_custom_call.1} parent=83 // pred_check
          %p12085 = pneg %p203
        $region86: #{tpu_custom_call.1} parent=83 // pred_check_branch
          %12087 = sbr.rel (%p12085) target = $region88
        $region87: #{tpu_custom_call.1} parent=83 // pred_region
          %s12088 = sand.u32 %s188, 1
          %s12089 = scalar_lea.sflag [#allocation4], %s12088
          %s12090 = sand.u32 %s188, 1
          %s12091 = smul.addr %s12090, 48
          %s12092 = scalar_lea.vmem [#allocation14], %s12091
          %12093 = dma.done %s12089, 768
        $region88: #{tpu_custom_call.1} parent=83 // pred_fallthru
          _
      $region84: #{tpu_custom_call.1} parent=5 // pred_fallthru
        _
    $region6: #{tpu_custom_call.1} parent=1 // loop_footer
      %s26 = sadd.s32 1, %s22
    $region7: #{tpu_custom_call.1} parent=1 // loop_footer_branch
      %21 = sbr.rel target = $region3
    $region8: #{tpu_custom_call.1} parent=1 // loop_exit
      _
    %12094 = vsyncpa [#allocation3], 1
    %s12095 = scalar_lea.sflag [#allocation3], 1
    %12096 = vsyncpa %s12095, 1
    %12097 = vsyncpa [#allocation6], 1
    %12098 = vsyncpa [#allocation9], 1
    %12099 = vsyncpa [#allocation12], 1
    %12100 = vsyncpa [#allocation4], 1
    %s12101 = scalar_lea.sflag [#allocation4], 1
    %12102 = vsyncpa %s12101, 1

</llo_original>
